<compile_context>
chip_gen: v7x
topology: tpu7x:2x2x1
jax: 0.10.0
libtpu: 0.0.40
codegen_flags: <defaults>
</compile_context>

<pallas_src>
import functools

import jax
import jax.numpy as jnp
from jax import lax
from jax.experimental import pallas as pl
from jax.experimental.pallas import tpu as pltpu


def _round_up(x, m):
    return ((x + m - 1) // m) * m


def _interp_matrix(n_out, n_in):
    """Row-interpolation matrix for bilinear, align_corners=True."""
    if n_out == 1:
        # TODO(synk): degenerate n_out==1 hard-codes index 0; unused at these shapes.
        return jnp.zeros((1, n_in), jnp.float32).at[0, 0].set(1.0)
    src = jnp.arange(n_out, dtype=jnp.float32) * (n_in - 1) / (n_out - 1)
    i0 = jnp.clip(jnp.floor(src).astype(jnp.int32), 0, n_in - 1)
    i1 = jnp.clip(i0 + 1, 0, n_in - 1)
    frac = src - i0.astype(jnp.float32)
    A = jnp.zeros((n_out, n_in), jnp.float32)
    A = A.at[jnp.arange(n_out), i0].add(1.0 - frac)
    A = A.at[jnp.arange(n_out), i1].add(frac)
    return A


# -----------------------------------------------------------------------------
# Fused kernel: prep (channel sum-of-squares + bilinear upsample) + 5 conv layers.
# One batch element per grid step; activations resident in a VMEM scratch.
# -----------------------------------------------------------------------------
def _fused_kernel(res_ref, res2_ref, ws_ref, mt_ref, *rest,
                  H, W, OFF, layers, final_act, scale):
    n_layers = len(layers)
    wb = rest[:2 * n_layers]            # per layer: (K*K, Cout, Cin_p) bf16, (Cout,1) f32
    o_ref = rest[2 * n_layers]          # (1, 1, H*W) f32
    act_ref = rest[2 * n_layers + 1]    # (CMAX, L) f32 scratch, interior lanes [OFF, OFF+HW)
    HW = H * W

    # ---- prep: channel reduce on sublanes + bilinear upsample as one small matmul ----
    r1 = res_ref[0].astype(jnp.float32)                       # (C, HW)
    r2 = res2_ref[0].astype(jnp.float32)
    rtr1 = jnp.sum(r1 * r1, axis=0, keepdims=True)            # (1, HW)
    rtr2 = jnp.sum(r2 * r2, axis=0, keepdims=True)
    wl = jnp.dot(ws_ref[0].astype(jnp.float32), mt_ref[...],
                 preferred_element_type=jnp.float32)          # (1, Hs*Ws)@(Hs*Ws, HW)

    # Zero the scratch once: the lane halo stays zero for every layer because all
    # subsequent writes only touch interior lanes [OFF, OFF+HW).
    act_ref[...] = jnp.zeros_like(act_ref)
    act_ref[0:8, OFF:OFF + HW] = jnp.concatenate(
        [rtr1, rtr2, wl, jnp.zeros((5, HW), jnp.float32)], axis=0)

    # ---- column-wrap masks, one per distinct horizontal tap offset (trace-time dict) ----
    w_idx = lax.broadcasted_iota(jnp.int32, (1, HW), 1) % W
    masks = {}
    for (_, _, K, dil) in layers:
        for kw in range(K):
            dw = (kw - (K - 1) // 2) * dil
            if dw != 0 and dw not in masks:
                masks[dw] = (w_idx + dw >= 0) & (w_idx + dw < W)

    # ---- conv stack: per-tap (Cout,Cin) x (Cin,HW) bf16 matmuls, f32 accumulation ----
    for li, (cin_p, cout, K, dil) in enumerate(layers):
        w_ref = wb[2 * li]                                    # (K*K, cout, cin_p) bf16
        b_ref = wb[2 * li + 1]                                # (cout, 1) f32
        acc = jnp.broadcast_to(b_ref[...], (cout, HW))        # bias-initialised accumulator
        t = 0
        for kh in range(K):
            dh = (kh - (K - 1) // 2) * dil
            for kw in range(K):
                dw = (kw - (K - 1) // 2) * dil
                start = OFF + dh * W + dw                     # contiguous lane slice
                x = act_ref[0:cin_p, start:start + HW]        # (cin_p, HW) f32
                if dw != 0:
                    x = jnp.where(masks[dw], x, 0.0)          # zero column wrap-around
                acc = acc + jnp.dot(w_ref[t], x.astype(jnp.bfloat16),
                                    preferred_element_type=jnp.float32)
                t += 1
        if li < n_layers - 1:
            act_ref[0:cout, OFF:OFF + HW] = jnp.maximum(acc, 0.0)   # ReLU, stays in VMEM
        else:
            if final_act == "exp_clamp_scale":
                y = jnp.exp(jnp.clip(acc, -6.0, 6.0)) * scale
            else:                                             # sigmoid * scale
                y = jax.nn.sigmoid(acc) * scale
            o_ref[0] = y.astype(o_ref.dtype)                  # (1, HW) lane-dense store


class ScaleNetPallas:
    """JAX/Pallas re-implementation of ScaleNet (estimator with D == 3)."""

    # (Cin, Cout, kernel, dilation); Cin of layer 0 == D == 3
    _LAYERS = [(3, 16, 3, 1), (16, 32, 3, 2), (32, 64, 3, 4), (64, 16, 3, 1), (16, 1, 1, 1)]

    def __init__(self, estimator_type="MultiScale2w", scale=None, key=None):
        assert estimator_type in ("MultiScale2w", "expMultiScale")
        self.estimator_type = estimator_type
        self.scale = 0.01 if scale is None else scale
        key = jax.random.PRNGKey(0) if key is None else key

        self.tap_weights = []   # (K*K, Cout, Cin_p) bf16 (Cin zero-padded to multiple of 8)
        self.biases = []        # (Cout, 1) f32
        self.ref_weights = []   # (K, K, Cin, Cout) f32, for the pure-XLA reference
        self.layer_meta = []    # static (Cin_p, Cout, K, dil) for the kernel
        for (cin, cout, k, dil) in self._LAYERS:
            key, wk = jax.random.split(key)
            fan_in = cin * k * k
            w = jax.random.normal(wk, (k, k, cin, cout), jnp.float32) * (2.0 / fan_in) ** 0.5
            b = jnp.zeros((cout, 1), jnp.float32)
            cin_p = _round_up(max(cin, 8), 8)
            w_tap = jnp.transpose(w, (0, 1, 3, 2)).reshape(k * k, cout, cin)
            w_tap = jnp.pad(w_tap, ((0, 0), (0, 0), (0, cin_p - cin)))
            self.tap_weights.append(w_tap.astype(jnp.bfloat16))
            self.biases.append(b)
            self.ref_weights.append(w)
            self.layer_meta.append((cin_p, cout, k, dil))
        self.cmax = max(8, max(max(cp, co) for (cp, co, _, _) in self.layer_meta))

    def __call__(self, residual_nchw, another_residual_nchw, ws_nchw):
        B, C, H, W = residual_nchw.shape
        HW = H * W
        Hs, Ws = ws_nchw.shape[2], ws_nchw.shape[3]

        # Free (metadata-only) reshapes: stay NCHW, flatten H*W onto the lane axis.
        res = residual_nchw.reshape(B, C, HW)
        res2 = another_residual_nchw.reshape(B, C, HW)
        ws_flat = ws_nchw.reshape(B, 1, Hs * Ws)

        # Bilinear (align_corners=True) upsample as one (Hs*Ws, H*W) matrix: kron(Ah, Aw).
        Ah = _interp_matrix(H, Hs)
        Aw = _interp_matrix(W, Ws)
        mt = jnp.kron(Ah, Aw).T                                 # (Hs*Ws, H*W)

        # Halo geometry: interior lanes [OFF, OFF+HW); halo covers the largest dilated
        # 3x3 tap offset (pmax*W + pmax); OFF 128-aligned so interior stores are aligned.
        pmax = max(d * (k - 1) // 2 for (_, _, k, d) in self.layer_meta)
        halo = pmax * W + pmax
        OFF = _round_up(max(halo, 1), 128)
        L = _round_up(OFF + HW + halo, 128)

        final_act = ("exp_clamp_scale" if self.estimator_type == "expMultiScale"
                     else "sigmoid_scale")
        kern = functools.partial(
            _fused_kernel, H=H, W=W, OFF=OFF, layers=tuple(self.layer_meta),
            final_act=final_act, scale=self.scale)

        in_specs = [
            pl.BlockSpec((1, C, HW), lambda i: (i, 0, 0)),
            pl.BlockSpec((1, C, HW), lambda i: (i, 0, 0)),
            pl.BlockSpec((1, 1, Hs * Ws), lambda i: (i, 0, 0)),
            pl.BlockSpec((Hs * Ws, HW), lambda i: (0, 0)),
        ]
        args = [res, res2, ws_flat, mt]
        for w_tap, b in zip(self.tap_weights, self.biases):
            in_specs.append(pl.BlockSpec(w_tap.shape, lambda i: (0, 0, 0)))
            in_specs.append(pl.BlockSpec(b.shape, lambda i: (0, 0)))
            args += [w_tap, b]

        out = pl.pallas_call(
            kern,
            out_shape=jax.ShapeDtypeStruct((B, 1, HW), jnp.float32),
            grid=(B,),
            in_specs=in_specs,
            out_specs=pl.BlockSpec((1, 1, HW), lambda i: (i, 0, 0)),
            scratch_shapes=[pltpu.VMEM((self.cmax, L), jnp.float32)],
            compiler_params=pltpu.CompilerParams(dimension_semantics=("parallel",)),
        )(*args)
        # TODO(synk): for large H,W add a row-tile (+halo) grid axis so the activation
        # scratch fits v7x's 64 MiB VMEM / 32 MiB scoped default and the pipeline has
        # more than B steps; unnecessary at these toy sizes.
        return out.reshape(B, 1, H, W)

    # Pure-XLA reference (f32) used only for the correctness check below.
    def reference(self, residual_nchw, another_residual_nchw, ws_nchw):
        B, C, H, W = residual_nchw.shape
        rtr1 = jnp.sum(residual_nchw.astype(jnp.float32) ** 2, axis=1, keepdims=True)
        rtr2 = jnp.sum(another_residual_nchw.astype(jnp.float32) ** 2, axis=1, keepdims=True)
        Hs, Ws = ws_nchw.shape[2], ws_nchw.shape[3]
        Ah = _interp_matrix(H, Hs)
        Aw = _interp_matrix(W, Ws)
        wl = jnp.einsum("hi,bij,wj->bhw", Ah, ws_nchw[:, 0].astype(jnp.float32), Aw,
                        precision=lax.Precision.HIGHEST)
        x = jnp.concatenate([rtr1, rtr2, wl[:, None]], axis=1)       # (B, 3, H, W)
        n = len(self.ref_weights)
        for li, (w, b, (cin, cout, k, dil)) in enumerate(
                zip(self.ref_weights, self.biases, self._LAYERS)):
            pad = dil * (k - 1) // 2
            w_oihw = jnp.transpose(w, (3, 2, 0, 1))                  # (Cout, Cin, K, K)
            x = lax.conv_general_dilated(
                x, w_oihw, window_strides=(1, 1),
                padding=((pad, pad), (pad, pad)), rhs_dilation=(dil, dil),
                dimension_numbers=("NCHW", "OIHW", "NCHW"),
                precision=lax.Precision.HIGHEST)
            x = x + b.reshape(1, cout, 1, 1)
            if li < n - 1:
                x = jnp.maximum(x, 0.0)
        if self.estimator_type == "expMultiScale":
            return jnp.exp(jnp.clip(x, -6.0, 6.0)) * self.scale
        return jax.nn.sigmoid(x) * self.scale


if __name__ == "__main__":
    key = jax.random.PRNGKey(0)
    k1, k2, k3, kp = jax.random.split(key, 4)

    B, C, H, W = 2, 4, 16, 16
    residual = jax.random.normal(k1, (B, C, H, W), jnp.float32)
    another_residual = jax.random.normal(k2, (B, C, H, W), jnp.float32)
    ws = jax.random.uniform(k3, (B, 1, H // 2, W // 2), jnp.float32)   # low-res prior weights

    model = ScaleNetPallas("MultiScale2w", key=kp)
    out = jax.block_until_ready(model(residual, another_residual, ws))

    assert out.shape == (B, 1, H, W), out.shape
    assert bool(jnp.all(jnp.isfinite(out)))
    # sigmoid(.) * 0.01 must land in (0, 0.01]
    assert bool(jnp.all(out > 0.0)) and bool(jnp.all(out <= 0.01))

    # Numerical check against the pure-XLA f32 reference (kernel matmuls are bf16).
    ref = jax.block_until_ready(model.reference(residual, another_residual, ws))
    max_err = float(jnp.max(jnp.abs(out - ref)))
    assert max_err < 5e-4, f"max |pallas - ref| = {max_err}"

    print("KERNEL_OK")
</pallas_src>

<mosaic_0001>
module attributes {stable_mosaic.version = 11 : i64} {
  func.func @_fused_kernel(%arg0: i32, %arg1: memref<1x4x256xf32, #tpu.memory_space<vmem>>, %arg2: memref<1x4x256xf32, #tpu.memory_space<vmem>>, %arg3: memref<1x1x64xf32, #tpu.memory_space<vmem>>, %arg4: memref<64x256xf32, #tpu.memory_space<vmem>>, %arg5: memref<9x16x8xbf16, #tpu.memory_space<vmem>>, %arg6: memref<16x1xf32, #tpu.memory_space<vmem>>, %arg7: memref<9x32x16xbf16, #tpu.memory_space<vmem>>, %arg8: memref<32x1xf32, #tpu.memory_space<vmem>>, %arg9: memref<9x64x32xbf16, #tpu.memory_space<vmem>>, %arg10: memref<64x1xf32, #tpu.memory_space<vmem>>, %arg11: memref<9x16x64xbf16, #tpu.memory_space<vmem>>, %arg12: memref<16x1xf32, #tpu.memory_space<vmem>>, %arg13: memref<1x1x16xbf16, #tpu.memory_space<vmem>>, %arg14: memref<1x1xf32, #tpu.memory_space<vmem>>, %arg15: memref<1x1x256xf32, #tpu.memory_space<vmem>>, %arg16: memref<64x512xf32, #tpu.memory_space<vmem>>) attributes {dimension_semantics = [#tpu.dimension_semantics<parallel>], iteration_bounds = array<i64: 2>, scalar_prefetch = 0 : i64, scratch_operands = 1 : i64, tpu.core_type = #tpu.core_type<tc>, window_params = [{transform_indices = @transform_0, window_bounds = array<i64: 1, 4, 256>}, {transform_indices = @transform_1, window_bounds = array<i64: 1, 4, 256>}, {transform_indices = @transform_2, window_bounds = array<i64: 1, 1, 64>}, {pipeline_mode = #tpu.pipeline_mode<synchronous>, transform_indices = @transform_3, window_bounds = array<i64: 64, 256>}, {pipeline_mode = #tpu.pipeline_mode<synchronous>, transform_indices = @transform_4, window_bounds = array<i64: 9, 16, 8>}, {pipeline_mode = #tpu.pipeline_mode<synchronous>, transform_indices = @transform_5, window_bounds = array<i64: 16, 1>}, {pipeline_mode = #tpu.pipeline_mode<synchronous>, transform_indices = @transform_6, window_bounds = array<i64: 9, 32, 16>}, {pipeline_mode = #tpu.pipeline_mode<synchronous>, transform_indices = @transform_7, window_bounds = array<i64: 32, 1>}, {pipeline_mode = #tpu.pipeline_mode<synchronous>, transform_indices = @transform_8, window_bounds = array<i64: 9, 64, 32>}, {pipeline_mode = #tpu.pipeline_mode<synchronous>, transform_indices = @transform_9, window_bounds = array<i64: 64, 1>}, {pipeline_mode = #tpu.pipeline_mode<synchronous>, transform_indices = @transform_10, window_bounds = array<i64: 9, 16, 64>}, {pipeline_mode = #tpu.pipeline_mode<synchronous>, transform_indices = @transform_11, window_bounds = array<i64: 16, 1>}, {pipeline_mode = #tpu.pipeline_mode<synchronous>, transform_indices = @transform_12, window_bounds = array<i64: 1, 1, 16>}, {pipeline_mode = #tpu.pipeline_mode<synchronous>, transform_indices = @transform_13, window_bounds = array<i64: 1, 1>}, {transform_indices = @transform_14, window_bounds = array<i64: 1, 1, 256>}]} {
    %c0 = arith.constant 0 : index
    %c0_0 = arith.constant 0 : index
    %c0_1 = arith.constant 0 : index
    %0 = vector.load %arg1[%c0, %c0_0, %c0_1] : memref<1x4x256xf32, #tpu.memory_space<vmem>>, vector<1x4x256xf32>
    %1 = vector.shape_cast %0 : vector<1x4x256xf32> to vector<4x256xf32>
    %c0_2 = arith.constant 0 : index
    %c0_3 = arith.constant 0 : index
    %c0_4 = arith.constant 0 : index
    %2 = vector.load %arg2[%c0_2, %c0_3, %c0_4] : memref<1x4x256xf32, #tpu.memory_space<vmem>>, vector<1x4x256xf32>
    %3 = vector.shape_cast %2 : vector<1x4x256xf32> to vector<4x256xf32>
    %4 = arith.mulf %1, %1 : vector<4x256xf32>
    %cst = arith.constant dense<0.000000e+00> : vector<256xf32>
    %5 = vector.multi_reduction <add>, %4, %cst [0] : vector<4x256xf32> to vector<256xf32>
    %6 = vector.shape_cast %5 : vector<256xf32> to vector<1x256xf32>
    %7 = arith.mulf %3, %3 : vector<4x256xf32>
    %cst_5 = arith.constant dense<0.000000e+00> : vector<256xf32>
    %8 = vector.multi_reduction <add>, %7, %cst_5 [0] : vector<4x256xf32> to vector<256xf32>
    %9 = vector.shape_cast %8 : vector<256xf32> to vector<1x256xf32>
    %c0_6 = arith.constant 0 : index
    %c0_7 = arith.constant 0 : index
    %c0_8 = arith.constant 0 : index
    %10 = vector.load %arg3[%c0_6, %c0_7, %c0_8] : memref<1x1x64xf32, #tpu.memory_space<vmem>>, vector<1x1x64xf32>
    %11 = vector.shape_cast %10 : vector<1x1x64xf32> to vector<1x64xf32>
    %c0_9 = arith.constant 0 : index
    %c0_10 = arith.constant 0 : index
    %12 = vector.load %arg4[%c0_9, %c0_10] : memref<64x256xf32, #tpu.memory_space<vmem>>, vector<64x256xf32>
    %cst_11 = arith.constant dense<0.000000e+00> : vector<1x256xf32>
    %13 = tpu.matmul %11, %12, %cst_11 {dimension_numbers = #tpu.dot_dimension_numbers<[1], [0], [0], [1], [0, 0, 1, 1], [], []>} : vector<1x64xf32>, vector<64x256xf32>, vector<1x256xf32> -> vector<1x256xf32>
    %cst_12 = arith.constant 0.000000e+00 : f32
    %14 = vector.broadcast %cst_12 : f32 to vector<64x512xf32>
    %c0_13 = arith.constant 0 : index
    %c0_14 = arith.constant 0 : index
    %15 = vector.load %arg16[%c0_13, %c0_14] : memref<64x512xf32, #tpu.memory_space<vmem>>, vector<64x512xf32>
    tpu.vector_store %arg16[%c0_13, %c0_14], %14 {strides = array<i32>} : memref<64x512xf32, #tpu.memory_space<vmem>>, vector<64x512xf32>,
    %cst_15 = arith.constant 0.000000e+00 : f32
    %16 = vector.broadcast %cst_15 : f32 to vector<5x256xf32>
    %17 = tpu.concatenate %6, %9, %13, %16 in 0 : vector<1x256xf32>, vector<1x256xf32>, vector<1x256xf32>, vector<5x256xf32> -> vector<8x256xf32>
    %c0_16 = arith.constant 0 : index
    %c128 = arith.constant 128 : index
    %18 = vector.load %arg16[%c0_16, %c128] : memref<64x512xf32, #tpu.memory_space<vmem>>, vector<8x256xf32>
    tpu.vector_store %arg16[%c0_16, %c128], %17 {strides = array<i32>} : memref<64x512xf32, #tpu.memory_space<vmem>>, vector<8x256xf32>,
    %19 = tpu.iota {dimensions = array<i32: 1>} : vector<1x256xi32>
    %c16_i32 = arith.constant 16 : i32
    %c0_i32 = arith.constant 0 : i32
    %20 = arith.cmpi eq, %c16_i32, %c0_i32 : i32
    %c1_i32 = arith.constant 1 : i32
    %21 = arith.select %20, %c1_i32, %c16_i32 : i32
    %22 = vector.broadcast %21 : i32 to vector<1x256xi32>
    %23 = arith.remsi %19, %22 : vector<1x256xi32>
    %c0_i32_17 = arith.constant 0 : i32
    %24 = vector.broadcast %c0_i32_17 : i32 to vector<1x256xi32>
    %25 = arith.cmpi ne, %23, %24 : vector<1x256xi32>
    %c0_i32_18 = arith.constant 0 : i32
    %26 = vector.broadcast %c0_i32_18 : i32 to vector<1x256xi32>
    %27 = arith.cmpi slt, %23, %26 : vector<1x256xi32>
    %c0_i32_19 = arith.constant 0 : i32
    %28 = arith.cmpi slt, %21, %c0_i32_19 : i32
    %29 = vector.broadcast %28 : i1 to vector<1x256xi1>
    %30 = vector.broadcast %29 : vector<1x256xi1> to vector<1x256xi1>
    %31 = arith.xori %27, %30 : vector<1x256xi1>
    %32 = arith.andi %31, %25 : vector<1x256xi1>
    %33 = vector.broadcast %21 : i32 to vector<1x256xi32>
    %34 = arith.addi %23, %33 : vector<1x256xi32>
    %35 = arith.select %32, %34, %23 : vector<1x256xi1>, vector<1x256xi32>
    %c-1_i32 = arith.constant -1 : i32
    %36 = vector.broadcast %c-1_i32 : i32 to vector<1x256xi32>
    %37 = arith.addi %35, %36 : vector<1x256xi32>
    %c0_i32_20 = arith.constant 0 : i32
    %38 = vector.broadcast %c0_i32_20 : i32 to vector<1x256xi32>
    %39 = arith.cmpi sge, %37, %38 : vector<1x256xi32>
    %c-1_i32_21 = arith.constant -1 : i32
    %40 = vector.broadcast %c-1_i32_21 : i32 to vector<1x256xi32>
    %41 = arith.addi %35, %40 : vector<1x256xi32>
    %c16_i32_22 = arith.constant 16 : i32
    %42 = vector.broadcast %c16_i32_22 : i32 to vector<1x256xi32>
    %43 = arith.cmpi slt, %41, %42 : vector<1x256xi32>
    %44 = arith.andi %39, %43 : vector<1x256xi1>
    %c1_i32_23 = arith.constant 1 : i32
    %45 = vector.broadcast %c1_i32_23 : i32 to vector<1x256xi32>
    %46 = arith.addi %35, %45 : vector<1x256xi32>
    %c0_i32_24 = arith.constant 0 : i32
    %47 = vector.broadcast %c0_i32_24 : i32 to vector<1x256xi32>
    %48 = arith.cmpi sge, %46, %47 : vector<1x256xi32>
    %c1_i32_25 = arith.constant 1 : i32
    %49 = vector.broadcast %c1_i32_25 : i32 to vector<1x256xi32>
    %50 = arith.addi %35, %49 : vector<1x256xi32>
    %c16_i32_26 = arith.constant 16 : i32
    %51 = vector.broadcast %c16_i32_26 : i32 to vector<1x256xi32>
    %52 = arith.cmpi slt, %50, %51 : vector<1x256xi32>
    %53 = arith.andi %48, %52 : vector<1x256xi1>
    %c-2_i32 = arith.constant -2 : i32
    %54 = vector.broadcast %c-2_i32 : i32 to vector<1x256xi32>
    %55 = arith.addi %35, %54 : vector<1x256xi32>
    %c0_i32_27 = arith.constant 0 : i32
    %56 = vector.broadcast %c0_i32_27 : i32 to vector<1x256xi32>
    %57 = arith.cmpi sge, %55, %56 : vector<1x256xi32>
    %c-2_i32_28 = arith.constant -2 : i32
    %58 = vector.broadcast %c-2_i32_28 : i32 to vector<1x256xi32>
    %59 = arith.addi %35, %58 : vector<1x256xi32>
    %c16_i32_29 = arith.constant 16 : i32
    %60 = vector.broadcast %c16_i32_29 : i32 to vector<1x256xi32>
    %61 = arith.cmpi slt, %59, %60 : vector<1x256xi32>
    %62 = arith.andi %57, %61 : vector<1x256xi1>
    %c2_i32 = arith.constant 2 : i32
    %63 = vector.broadcast %c2_i32 : i32 to vector<1x256xi32>
    %64 = arith.addi %35, %63 : vector<1x256xi32>
    %c0_i32_30 = arith.constant 0 : i32
    %65 = vector.broadcast %c0_i32_30 : i32 to vector<1x256xi32>
    %66 = arith.cmpi sge, %64, %65 : vector<1x256xi32>
    %c2_i32_31 = arith.constant 2 : i32
    %67 = vector.broadcast %c2_i32_31 : i32 to vector<1x256xi32>
    %68 = arith.addi %35, %67 : vector<1x256xi32>
    %c16_i32_32 = arith.constant 16 : i32
    %69 = vector.broadcast %c16_i32_32 : i32 to vector<1x256xi32>
    %70 = arith.cmpi slt, %68, %69 : vector<1x256xi32>
    %71 = arith.andi %66, %70 : vector<1x256xi1>
    %c-4_i32 = arith.constant -4 : i32
    %72 = vector.broadcast %c-4_i32 : i32 to vector<1x256xi32>
    %73 = arith.addi %35, %72 : vector<1x256xi32>
    %c0_i32_33 = arith.constant 0 : i32
    %74 = vector.broadcast %c0_i32_33 : i32 to vector<1x256xi32>
    %75 = arith.cmpi sge, %73, %74 : vector<1x256xi32>
    %c-4_i32_34 = arith.constant -4 : i32
    %76 = vector.broadcast %c-4_i32_34 : i32 to vector<1x256xi32>
    %77 = arith.addi %35, %76 : vector<1x256xi32>
    %c16_i32_35 = arith.constant 16 : i32
    %78 = vector.broadcast %c16_i32_35 : i32 to vector<1x256xi32>
    %79 = arith.cmpi slt, %77, %78 : vector<1x256xi32>
    %80 = arith.andi %75, %79 : vector<1x256xi1>
    %c4_i32 = arith.constant 4 : i32
    %81 = vector.broadcast %c4_i32 : i32 to vector<1x256xi32>
    %82 = arith.addi %35, %81 : vector<1x256xi32>
    %c0_i32_36 = arith.constant 0 : i32
    %83 = vector.broadcast %c0_i32_36 : i32 to vector<1x256xi32>
    %84 = arith.cmpi sge, %82, %83 : vector<1x256xi32>
    %c4_i32_37 = arith.constant 4 : i32
    %85 = vector.broadcast %c4_i32_37 : i32 to vector<1x256xi32>
    %86 = arith.addi %35, %85 : vector<1x256xi32>
    %c16_i32_38 = arith.constant 16 : i32
    %87 = vector.broadcast %c16_i32_38 : i32 to vector<1x256xi32>
    %88 = arith.cmpi slt, %86, %87 : vector<1x256xi32>
    %89 = arith.andi %84, %88 : vector<1x256xi1>
    %c0_39 = arith.constant 0 : index
    %c0_40 = arith.constant 0 : index
    %90 = vector.load %arg6[%c0_39, %c0_40] : memref<16x1xf32, #tpu.memory_space<vmem>>, vector<16x1xf32>
    %91 = vector.shape_cast %90 : vector<16x1xf32> to vector<16x1xf32>
    %92 = vector.broadcast %91 : vector<16x1xf32> to vector<16x256xf32>
    %c0_41 = arith.constant 0 : index
    %c111 = arith.constant 111 : index
    %93 = vector.load %arg16[%c0_41, %c111] : memref<64x512xf32, #tpu.memory_space<vmem>>, vector<8x256xf32>
    %cst_42 = arith.constant 0.000000e+00 : f32
    %94 = vector.shape_cast %44 : vector<1x256xi1> to vector<1x256xi1>
    %95 = vector.broadcast %94 : vector<1x256xi1> to vector<8x256xi1>
    %96 = vector.broadcast %cst_42 : f32 to vector<8x256xf32>
    %97 = arith.select %95, %93, %96 : vector<8x256xi1>, vector<8x256xf32>
    %c0_43 = arith.constant 0 : index
    %c0_44 = arith.constant 0 : index
    %c0_45 = arith.constant 0 : index
    %98 = vector.load %arg5[%c0_43, %c0_44, %c0_45] : memref<9x16x8xbf16, #tpu.memory_space<vmem>>, vector<1x16x8xbf16>
    %99 = vector.shape_cast %98 : vector<1x16x8xbf16> to vector<16x8xbf16>
    %100 = arith.truncf %97 : vector<8x256xf32> to vector<8x256xbf16>
    %cst_46 = arith.constant dense<0.000000e+00> : vector<16x256xf32>
    %101 = tpu.matmul %99, %100, %cst_46 {dimension_numbers = #tpu.dot_dimension_numbers<[1], [0], [0], [1], [0, 0, 1, 1], [], []>} : vector<16x8xbf16>, vector<8x256xbf16>, vector<16x256xf32> -> vector<16x256xf32>
    %102 = arith.addf %92, %101 : vector<16x256xf32>
    %c0_47 = arith.constant 0 : index
    %c112 = arith.constant 112 : index
    %103 = vector.load %arg16[%c0_47, %c112] : memref<64x512xf32, #tpu.memory_space<vmem>>, vector<8x256xf32>
    %c1 = arith.constant 1 : index
    %c0_48 = arith.constant 0 : index
    %c0_49 = arith.constant 0 : index
    %104 = vector.load %arg5[%c1, %c0_48, %c0_49] : memref<9x16x8xbf16, #tpu.memory_space<vmem>>, vector<1x16x8xbf16>
    %105 = vector.shape_cast %104 : vector<1x16x8xbf16> to vector<16x8xbf16>
    %106 = arith.truncf %103 : vector<8x256xf32> to vector<8x256xbf16>
    %cst_50 = arith.constant dense<0.000000e+00> : vector<16x256xf32>
    %107 = tpu.matmul %105, %106, %cst_50 {dimension_numbers = #tpu.dot_dimension_numbers<[1], [0], [0], [1], [0, 0, 1, 1], [], []>} : vector<16x8xbf16>, vector<8x256xbf16>, vector<16x256xf32> -> vector<16x256xf32>
    %108 = arith.addf %102, %107 : vector<16x256xf32>
    %c0_51 = arith.constant 0 : index
    %c113 = arith.constant 113 : index
    %109 = vector.load %arg16[%c0_51, %c113] : memref<64x512xf32, #tpu.memory_space<vmem>>, vector<8x256xf32>
    %cst_52 = arith.constant 0.000000e+00 : f32
    %110 = vector.shape_cast %53 : vector<1x256xi1> to vector<1x256xi1>
    %111 = vector.broadcast %110 : vector<1x256xi1> to vector<8x256xi1>
    %112 = vector.broadcast %cst_52 : f32 to vector<8x256xf32>
    %113 = arith.select %111, %109, %112 : vector<8x256xi1>, vector<8x256xf32>
    %c2 = arith.constant 2 : index
    %c0_53 = arith.constant 0 : index
    %c0_54 = arith.constant 0 : index
    %114 = vector.load %arg5[%c2, %c0_53, %c0_54] : memref<9x16x8xbf16, #tpu.memory_space<vmem>>, vector<1x16x8xbf16>
    %115 = vector.shape_cast %114 : vector<1x16x8xbf16> to vector<16x8xbf16>
    %116 = arith.truncf %113 : vector<8x256xf32> to vector<8x256xbf16>
    %cst_55 = arith.constant dense<0.000000e+00> : vector<16x256xf32>
    %117 = tpu.matmul %115, %116, %cst_55 {dimension_numbers = #tpu.dot_dimension_numbers<[1], [0], [0], [1], [0, 0, 1, 1], [], []>} : vector<16x8xbf16>, vector<8x256xbf16>, vector<16x256xf32> -> vector<16x256xf32>
    %118 = arith.addf %108, %117 : vector<16x256xf32>
    %c0_56 = arith.constant 0 : index
    %c127 = arith.constant 127 : index
    %119 = vector.load %arg16[%c0_56, %c127] : memref<64x512xf32, #tpu.memory_space<vmem>>, vector<8x256xf32>
    %cst_57 = arith.constant 0.000000e+00 : f32
    %120 = vector.shape_cast %44 : vector<1x256xi1> to vector<1x256xi1>
    %121 = vector.broadcast %120 : vector<1x256xi1> to vector<8x256xi1>
    %122 = vector.broadcast %cst_57 : f32 to vector<8x256xf32>
    %123 = arith.select %121, %119, %122 : vector<8x256xi1>, vector<8x256xf32>
    %c3 = arith.constant 3 : index
    %c0_58 = arith.constant 0 : index
    %c0_59 = arith.constant 0 : index
    %124 = vector.load %arg5[%c3, %c0_58, %c0_59] : memref<9x16x8xbf16, #tpu.memory_space<vmem>>, vector<1x16x8xbf16>
    %125 = vector.shape_cast %124 : vector<1x16x8xbf16> to vector<16x8xbf16>
    %126 = arith.truncf %123 : vector<8x256xf32> to vector<8x256xbf16>
    %cst_60 = arith.constant dense<0.000000e+00> : vector<16x256xf32>
    %127 = tpu.matmul %125, %126, %cst_60 {dimension_numbers = #tpu.dot_dimension_numbers<[1], [0], [0], [1], [0, 0, 1, 1], [], []>} : vector<16x8xbf16>, vector<8x256xbf16>, vector<16x256xf32> -> vector<16x256xf32>
    %128 = arith.addf %118, %127 : vector<16x256xf32>
    %c0_61 = arith.constant 0 : index
    %c128_62 = arith.constant 128 : index
    %129 = vector.load %arg16[%c0_61, %c128_62] : memref<64x512xf32, #tpu.memory_space<vmem>>, vector<8x256xf32>
    %c4 = arith.constant 4 : index
    %c0_63 = arith.constant 0 : index
    %c0_64 = arith.constant 0 : index
    %130 = vector.load %arg5[%c4, %c0_63, %c0_64] : memref<9x16x8xbf16, #tpu.memory_space<vmem>>, vector<1x16x8xbf16>
    %131 = vector.shape_cast %130 : vector<1x16x8xbf16> to vector<16x8xbf16>
    %132 = arith.truncf %129 : vector<8x256xf32> to vector<8x256xbf16>
    %cst_65 = arith.constant dense<0.000000e+00> : vector<16x256xf32>
    %133 = tpu.matmul %131, %132, %cst_65 {dimension_numbers = #tpu.dot_dimension_numbers<[1], [0], [0], [1], [0, 0, 1, 1], [], []>} : vector<16x8xbf16>, vector<8x256xbf16>, vector<16x256xf32> -> vector<16x256xf32>
    %134 = arith.addf %128, %133 : vector<16x256xf32>
    %c0_66 = arith.constant 0 : index
    %c129 = arith.constant 129 : index
    %135 = vector.load %arg16[%c0_66, %c129] : memref<64x512xf32, #tpu.memory_space<vmem>>, vector<8x256xf32>
    %cst_67 = arith.constant 0.000000e+00 : f32
    %136 = vector.shape_cast %53 : vector<1x256xi1> to vector<1x256xi1>
    %137 = vector.broadcast %136 : vector<1x256xi1> to vector<8x256xi1>
    %138 = vector.broadcast %cst_67 : f32 to vector<8x256xf32>
    %139 = arith.select %137, %135, %138 : vector<8x256xi1>, vector<8x256xf32>
    %c5 = arith.constant 5 : index
    %c0_68 = arith.constant 0 : index
    %c0_69 = arith.constant 0 : index
    %140 = vector.load %arg5[%c5, %c0_68, %c0_69] : memref<9x16x8xbf16, #tpu.memory_space<vmem>>, vector<1x16x8xbf16>
    %141 = vector.shape_cast %140 : vector<1x16x8xbf16> to vector<16x8xbf16>
    %142 = arith.truncf %139 : vector<8x256xf32> to vector<8x256xbf16>
    %cst_70 = arith.constant dense<0.000000e+00> : vector<16x256xf32>
    %143 = tpu.matmul %141, %142, %cst_70 {dimension_numbers = #tpu.dot_dimension_numbers<[1], [0], [0], [1], [0, 0, 1, 1], [], []>} : vector<16x8xbf16>, vector<8x256xbf16>, vector<16x256xf32> -> vector<16x256xf32>
    %144 = arith.addf %134, %143 : vector<16x256xf32>
    %c0_71 = arith.constant 0 : index
    %c143 = arith.constant 143 : index
    %145 = vector.load %arg16[%c0_71, %c143] : memref<64x512xf32, #tpu.memory_space<vmem>>, vector<8x256xf32>
    %cst_72 = arith.constant 0.000000e+00 : f32
    %146 = vector.shape_cast %44 : vector<1x256xi1> to vector<1x256xi1>
    %147 = vector.broadcast %146 : vector<1x256xi1> to vector<8x256xi1>
    %148 = vector.broadcast %cst_72 : f32 to vector<8x256xf32>
    %149 = arith.select %147, %145, %148 : vector<8x256xi1>, vector<8x256xf32>
    %c6 = arith.constant 6 : index
    %c0_73 = arith.constant 0 : index
    %c0_74 = arith.constant 0 : index
    %150 = vector.load %arg5[%c6, %c0_73, %c0_74] : memref<9x16x8xbf16, #tpu.memory_space<vmem>>, vector<1x16x8xbf16>
    %151 = vector.shape_cast %150 : vector<1x16x8xbf16> to vector<16x8xbf16>
    %152 = arith.truncf %149 : vector<8x256xf32> to vector<8x256xbf16>
    %cst_75 = arith.constant dense<0.000000e+00> : vector<16x256xf32>
    %153 = tpu.matmul %151, %152, %cst_75 {dimension_numbers = #tpu.dot_dimension_numbers<[1], [0], [0], [1], [0, 0, 1, 1], [], []>} : vector<16x8xbf16>, vector<8x256xbf16>, vector<16x256xf32> -> vector<16x256xf32>
    %154 = arith.addf %144, %153 : vector<16x256xf32>
    %c0_76 = arith.constant 0 : index
    %c144 = arith.constant 144 : index
    %155 = vector.load %arg16[%c0_76, %c144] : memref<64x512xf32, #tpu.memory_space<vmem>>, vector<8x256xf32>
    %c7 = arith.constant 7 : index
    %c0_77 = arith.constant 0 : index
    %c0_78 = arith.constant 0 : index
    %156 = vector.load %arg5[%c7, %c0_77, %c0_78] : memref<9x16x8xbf16, #tpu.memory_space<vmem>>, vector<1x16x8xbf16>
    %157 = vector.shape_cast %156 : vector<1x16x8xbf16> to vector<16x8xbf16>
    %158 = arith.truncf %155 : vector<8x256xf32> to vector<8x256xbf16>
    %cst_79 = arith.constant dense<0.000000e+00> : vector<16x256xf32>
    %159 = tpu.matmul %157, %158, %cst_79 {dimension_numbers = #tpu.dot_dimension_numbers<[1], [0], [0], [1], [0, 0, 1, 1], [], []>} : vector<16x8xbf16>, vector<8x256xbf16>, vector<16x256xf32> -> vector<16x256xf32>
    %160 = arith.addf %154, %159 : vector<16x256xf32>
    %c0_80 = arith.constant 0 : index
    %c145 = arith.constant 145 : index
    %161 = vector.load %arg16[%c0_80, %c145] : memref<64x512xf32, #tpu.memory_space<vmem>>, vector<8x256xf32>
    %cst_81 = arith.constant 0.000000e+00 : f32
    %162 = vector.shape_cast %53 : vector<1x256xi1> to vector<1x256xi1>
    %163 = vector.broadcast %162 : vector<1x256xi1> to vector<8x256xi1>
    %164 = vector.broadcast %cst_81 : f32 to vector<8x256xf32>
    %165 = arith.select %163, %161, %164 : vector<8x256xi1>, vector<8x256xf32>
    %c8 = arith.constant 8 : index
    %c0_82 = arith.constant 0 : index
    %c0_83 = arith.constant 0 : index
    %166 = vector.load %arg5[%c8, %c0_82, %c0_83] : memref<9x16x8xbf16, #tpu.memory_space<vmem>>, vector<1x16x8xbf16>
    %167 = vector.shape_cast %166 : vector<1x16x8xbf16> to vector<16x8xbf16>
    %168 = arith.truncf %165 : vector<8x256xf32> to vector<8x256xbf16>
    %cst_84 = arith.constant dense<0.000000e+00> : vector<16x256xf32>
    %169 = tpu.matmul %167, %168, %cst_84 {dimension_numbers = #tpu.dot_dimension_numbers<[1], [0], [0], [1], [0, 0, 1, 1], [], []>} : vector<16x8xbf16>, vector<8x256xbf16>, vector<16x256xf32> -> vector<16x256xf32>
    %170 = arith.addf %160, %169 : vector<16x256xf32>
    %cst_85 = arith.constant 0.000000e+00 : f32
    %171 = vector.broadcast %cst_85 : f32 to vector<16x256xf32>
    %172 = arith.maximumf %170, %171 : vector<16x256xf32>
    %c0_86 = arith.constant 0 : index
    %c128_87 = arith.constant 128 : index
    %173 = vector.load %arg16[%c0_86, %c128_87] : memref<64x512xf32, #tpu.memory_space<vmem>>, vector<16x256xf32>
    tpu.vector_store %arg16[%c0_86, %c128_87], %172 {strides = array<i32>} : memref<64x512xf32, #tpu.memory_space<vmem>>, vector<16x256xf32>,
    %c0_88 = arith.constant 0 : index
    %c0_89 = arith.constant 0 : index
    %174 = vector.load %arg8[%c0_88, %c0_89] : memref<32x1xf32, #tpu.memory_space<vmem>>, vector<32x1xf32>
    %175 = vector.shape_cast %174 : vector<32x1xf32> to vector<32x1xf32>
    %176 = vector.broadcast %175 : vector<32x1xf32> to vector<32x256xf32>
    %c0_90 = arith.constant 0 : index
    %c94 = arith.constant 94 : index
    %177 = vector.load %arg16[%c0_90, %c94] : memref<64x512xf32, #tpu.memory_space<vmem>>, vector<16x256xf32>
    %cst_91 = arith.constant 0.000000e+00 : f32
    %178 = vector.shape_cast %62 : vector<1x256xi1> to vector<1x256xi1>
    %179 = vector.broadcast %178 : vector<1x256xi1> to vector<16x256xi1>
    %180 = vector.broadcast %cst_91 : f32 to vector<16x256xf32>
    %181 = arith.select %179, %177, %180 : vector<16x256xi1>, vector<16x256xf32>
    %c0_92 = arith.constant 0 : index
    %c0_93 = arith.constant 0 : index
    %c0_94 = arith.constant 0 : index
    %182 = vector.load %arg7[%c0_92, %c0_93, %c0_94] : memref<9x32x16xbf16, #tpu.memory_space<vmem>>, vector<1x32x16xbf16>
    %183 = vector.shape_cast %182 : vector<1x32x16xbf16> to vector<32x16xbf16>
    %184 = arith.truncf %181 : vector<16x256xf32> to vector<16x256xbf16>
    %cst_95 = arith.constant dense<0.000000e+00> : vector<32x256xf32>
    %185 = tpu.matmul %183, %184, %cst_95 {dimension_numbers = #tpu.dot_dimension_numbers<[1], [0], [0], [1], [0, 0, 1, 1], [], []>} : vector<32x16xbf16>, vector<16x256xbf16>, vector<32x256xf32> -> vector<32x256xf32>
    %186 = arith.addf %176, %185 : vector<32x256xf32>
    %c0_96 = arith.constant 0 : index
    %c96 = arith.constant 96 : index
    %187 = vector.load %arg16[%c0_96, %c96] : memref<64x512xf32, #tpu.memory_space<vmem>>, vector<16x256xf32>
    %c1_97 = arith.constant 1 : index
    %c0_98 = arith.constant 0 : index
    %c0_99 = arith.constant 0 : index
    %188 = vector.load %arg7[%c1_97, %c0_98, %c0_99] : memref<9x32x16xbf16, #tpu.memory_space<vmem>>, vector<1x32x16xbf16>
    %189 = vector.shape_cast %188 : vector<1x32x16xbf16> to vector<32x16xbf16>
    %190 = arith.truncf %187 : vector<16x256xf32> to vector<16x256xbf16>
    %cst_100 = arith.constant dense<0.000000e+00> : vector<32x256xf32>
    %191 = tpu.matmul %189, %190, %cst_100 {dimension_numbers = #tpu.dot_dimension_numbers<[1], [0], [0], [1], [0, 0, 1, 1], [], []>} : vector<32x16xbf16>, vector<16x256xbf16>, vector<32x256xf32> -> vector<32x256xf32>
    %192 = arith.addf %186, %191 : vector<32x256xf32>
    %c0_101 = arith.constant 0 : index
    %c98 = arith.constant 98 : index
    %193 = vector.load %arg16[%c0_101, %c98] : memref<64x512xf32, #tpu.memory_space<vmem>>, vector<16x256xf32>
    %cst_102 = arith.constant 0.000000e+00 : f32
    %194 = vector.shape_cast %71 : vector<1x256xi1> to vector<1x256xi1>
    %195 = vector.broadcast %194 : vector<1x256xi1> to vector<16x256xi1>
    %196 = vector.broadcast %cst_102 : f32 to vector<16x256xf32>
    %197 = arith.select %195, %193, %196 : vector<16x256xi1>, vector<16x256xf32>
    %c2_103 = arith.constant 2 : index
    %c0_104 = arith.constant 0 : index
    %c0_105 = arith.constant 0 : index
    %198 = vector.load %arg7[%c2_103, %c0_104, %c0_105] : memref<9x32x16xbf16, #tpu.memory_space<vmem>>, vector<1x32x16xbf16>
    %199 = vector.shape_cast %198 : vector<1x32x16xbf16> to vector<32x16xbf16>
    %200 = arith.truncf %197 : vector<16x256xf32> to vector<16x256xbf16>
    %cst_106 = arith.constant dense<0.000000e+00> : vector<32x256xf32>
    %201 = tpu.matmul %199, %200, %cst_106 {dimension_numbers = #tpu.dot_dimension_numbers<[1], [0], [0], [1], [0, 0, 1, 1], [], []>} : vector<32x16xbf16>, vector<16x256xbf16>, vector<32x256xf32> -> vector<32x256xf32>
    %202 = arith.addf %192, %201 : vector<32x256xf32>
    %c0_107 = arith.constant 0 : index
    %c126 = arith.constant 126 : index
    %203 = vector.load %arg16[%c0_107, %c126] : memref<64x512xf32, #tpu.memory_space<vmem>>, vector<16x256xf32>
    %cst_108 = arith.constant 0.000000e+00 : f32
    %204 = vector.shape_cast %62 : vector<1x256xi1> to vector<1x256xi1>
    %205 = vector.broadcast %204 : vector<1x256xi1> to vector<16x256xi1>
    %206 = vector.broadcast %cst_108 : f32 to vector<16x256xf32>
    %207 = arith.select %205, %203, %206 : vector<16x256xi1>, vector<16x256xf32>
    %c3_109 = arith.constant 3 : index
    %c0_110 = arith.constant 0 : index
    %c0_111 = arith.constant 0 : index
    %208 = vector.load %arg7[%c3_109, %c0_110, %c0_111] : memref<9x32x16xbf16, #tpu.memory_space<vmem>>, vector<1x32x16xbf16>
    %209 = vector.shape_cast %208 : vector<1x32x16xbf16> to vector<32x16xbf16>
    %210 = arith.truncf %207 : vector<16x256xf32> to vector<16x256xbf16>
    %cst_112 = arith.constant dense<0.000000e+00> : vector<32x256xf32>
    %211 = tpu.matmul %209, %210, %cst_112 {dimension_numbers = #tpu.dot_dimension_numbers<[1], [0], [0], [1], [0, 0, 1, 1], [], []>} : vector<32x16xbf16>, vector<16x256xbf16>, vector<32x256xf32> -> vector<32x256xf32>
    %212 = arith.addf %202, %211 : vector<32x256xf32>
    %c0_113 = arith.constant 0 : index
    %c128_114 = arith.constant 128 : index
    %213 = vector.load %arg16[%c0_113, %c128_114] : memref<64x512xf32, #tpu.memory_space<vmem>>, vector<16x256xf32>
    %c4_115 = arith.constant 4 : index
    %c0_116 = arith.constant 0 : index
    %c0_117 = arith.constant 0 : index
    %214 = vector.load %arg7[%c4_115, %c0_116, %c0_117] : memref<9x32x16xbf16, #tpu.memory_space<vmem>>, vector<1x32x16xbf16>
    %215 = vector.shape_cast %214 : vector<1x32x16xbf16> to vector<32x16xbf16>
    %216 = arith.truncf %213 : vector<16x256xf32> to vector<16x256xbf16>
    %cst_118 = arith.constant dense<0.000000e+00> : vector<32x256xf32>
    %217 = tpu.matmul %215, %216, %cst_118 {dimension_numbers = #tpu.dot_dimension_numbers<[1], [0], [0], [1], [0, 0, 1, 1], [], []>} : vector<32x16xbf16>, vector<16x256xbf16>, vector<32x256xf32> -> vector<32x256xf32>
    %218 = arith.addf %212, %217 : vector<32x256xf32>
    %c0_119 = arith.constant 0 : index
    %c130 = arith.constant 130 : index
    %219 = vector.load %arg16[%c0_119, %c130] : memref<64x512xf32, #tpu.memory_space<vmem>>, vector<16x256xf32>
    %cst_120 = arith.constant 0.000000e+00 : f32
    %220 = vector.shape_cast %71 : vector<1x256xi1> to vector<1x256xi1>
    %221 = vector.broadcast %220 : vector<1x256xi1> to vector<16x256xi1>
    %222 = vector.broadcast %cst_120 : f32 to vector<16x256xf32>
    %223 = arith.select %221, %219, %222 : vector<16x256xi1>, vector<16x256xf32>
    %c5_121 = arith.constant 5 : index
    %c0_122 = arith.constant 0 : index
    %c0_123 = arith.constant 0 : index
    %224 = vector.load %arg7[%c5_121, %c0_122, %c0_123] : memref<9x32x16xbf16, #tpu.memory_space<vmem>>, vector<1x32x16xbf16>
    %225 = vector.shape_cast %224 : vector<1x32x16xbf16> to vector<32x16xbf16>
    %226 = arith.truncf %223 : vector<16x256xf32> to vector<16x256xbf16>
    %cst_124 = arith.constant dense<0.000000e+00> : vector<32x256xf32>
    %227 = tpu.matmul %225, %226, %cst_124 {dimension_numbers = #tpu.dot_dimension_numbers<[1], [0], [0], [1], [0, 0, 1, 1], [], []>} : vector<32x16xbf16>, vector<16x256xbf16>, vector<32x256xf32> -> vector<32x256xf32>
    %228 = arith.addf %218, %227 : vector<32x256xf32>
    %c0_125 = arith.constant 0 : index
    %c158 = arith.constant 158 : index
    %229 = vector.load %arg16[%c0_125, %c158] : memref<64x512xf32, #tpu.memory_space<vmem>>, vector<16x256xf32>
    %cst_126 = arith.constant 0.000000e+00 : f32
    %230 = vector.shape_cast %62 : vector<1x256xi1> to vector<1x256xi1>
    %231 = vector.broadcast %230 : vector<1x256xi1> to vector<16x256xi1>
    %232 = vector.broadcast %cst_126 : f32 to vector<16x256xf32>
    %233 = arith.select %231, %229, %232 : vector<16x256xi1>, vector<16x256xf32>
    %c6_127 = arith.constant 6 : index
    %c0_128 = arith.constant 0 : index
    %c0_129 = arith.constant 0 : index
    %234 = vector.load %arg7[%c6_127, %c0_128, %c0_129] : memref<9x32x16xbf16, #tpu.memory_space<vmem>>, vector<1x32x16xbf16>
    %235 = vector.shape_cast %234 : vector<1x32x16xbf16> to vector<32x16xbf16>
    %236 = arith.truncf %233 : vector<16x256xf32> to vector<16x256xbf16>
    %cst_130 = arith.constant dense<0.000000e+00> : vector<32x256xf32>
    %237 = tpu.matmul %235, %236, %cst_130 {dimension_numbers = #tpu.dot_dimension_numbers<[1], [0], [0], [1], [0, 0, 1, 1], [], []>} : vector<32x16xbf16>, vector<16x256xbf16>, vector<32x256xf32> -> vector<32x256xf32>
    %238 = arith.addf %228, %237 : vector<32x256xf32>
    %c0_131 = arith.constant 0 : index
    %c160 = arith.constant 160 : index
    %239 = vector.load %arg16[%c0_131, %c160] : memref<64x512xf32, #tpu.memory_space<vmem>>, vector<16x256xf32>
    %c7_132 = arith.constant 7 : index
    %c0_133 = arith.constant 0 : index
    %c0_134 = arith.constant 0 : index
    %240 = vector.load %arg7[%c7_132, %c0_133, %c0_134] : memref<9x32x16xbf16, #tpu.memory_space<vmem>>, vector<1x32x16xbf16>
    %241 = vector.shape_cast %240 : vector<1x32x16xbf16> to vector<32x16xbf16>
    %242 = arith.truncf %239 : vector<16x256xf32> to vector<16x256xbf16>
    %cst_135 = arith.constant dense<0.000000e+00> : vector<32x256xf32>
    %243 = tpu.matmul %241, %242, %cst_135 {dimension_numbers = #tpu.dot_dimension_numbers<[1], [0], [0], [1], [0, 0, 1, 1], [], []>} : vector<32x16xbf16>, vector<16x256xbf16>, vector<32x256xf32> -> vector<32x256xf32>
    %244 = arith.addf %238, %243 : vector<32x256xf32>
    %c0_136 = arith.constant 0 : index
    %c162 = arith.constant 162 : index
    %245 = vector.load %arg16[%c0_136, %c162] : memref<64x512xf32, #tpu.memory_space<vmem>>, vector<16x256xf32>
    %cst_137 = arith.constant 0.000000e+00 : f32
    %246 = vector.shape_cast %71 : vector<1x256xi1> to vector<1x256xi1>
    %247 = vector.broadcast %246 : vector<1x256xi1> to vector<16x256xi1>
    %248 = vector.broadcast %cst_137 : f32 to vector<16x256xf32>
    %249 = arith.select %247, %245, %248 : vector<16x256xi1>, vector<16x256xf32>
    %c8_138 = arith.constant 8 : index
    %c0_139 = arith.constant 0 : index
    %c0_140 = arith.constant 0 : index
    %250 = vector.load %arg7[%c8_138, %c0_139, %c0_140] : memref<9x32x16xbf16, #tpu.memory_space<vmem>>, vector<1x32x16xbf16>
    %251 = vector.shape_cast %250 : vector<1x32x16xbf16> to vector<32x16xbf16>
    %252 = arith.truncf %249 : vector<16x256xf32> to vector<16x256xbf16>
    %cst_141 = arith.constant dense<0.000000e+00> : vector<32x256xf32>
    %253 = tpu.matmul %251, %252, %cst_141 {dimension_numbers = #tpu.dot_dimension_numbers<[1], [0], [0], [1], [0, 0, 1, 1], [], []>} : vector<32x16xbf16>, vector<16x256xbf16>, vector<32x256xf32> -> vector<32x256xf32>
    %254 = arith.addf %244, %253 : vector<32x256xf32>
    %cst_142 = arith.constant 0.000000e+00 : f32
    %255 = vector.broadcast %cst_142 : f32 to vector<32x256xf32>
    %256 = arith.maximumf %254, %255 : vector<32x256xf32>
    %c0_143 = arith.constant 0 : index
    %c128_144 = arith.constant 128 : index
    %257 = vector.load %arg16[%c0_143, %c128_144] : memref<64x512xf32, #tpu.memory_space<vmem>>, vector<32x256xf32>
    tpu.vector_store %arg16[%c0_143, %c128_144], %256 {strides = array<i32>} : memref<64x512xf32, #tpu.memory_space<vmem>>, vector<32x256xf32>,
    %c0_145 = arith.constant 0 : index
    %c0_146 = arith.constant 0 : index
    %258 = vector.load %arg10[%c0_145, %c0_146] : memref<64x1xf32, #tpu.memory_space<vmem>>, vector<64x1xf32>
    %259 = vector.shape_cast %258 : vector<64x1xf32> to vector<64x1xf32>
    %260 = vector.broadcast %259 : vector<64x1xf32> to vector<64x256xf32>
    %c0_147 = arith.constant 0 : index
    %c60 = arith.constant 60 : index
    %261 = vector.load %arg16[%c0_147, %c60] : memref<64x512xf32, #tpu.memory_space<vmem>>, vector<32x256xf32>
    %cst_148 = arith.constant 0.000000e+00 : f32
    %262 = vector.shape_cast %80 : vector<1x256xi1> to vector<1x256xi1>
    %263 = vector.broadcast %262 : vector<1x256xi1> to vector<32x256xi1>
    %264 = vector.broadcast %cst_148 : f32 to vector<32x256xf32>
    %265 = arith.select %263, %261, %264 : vector<32x256xi1>, vector<32x256xf32>
    %c0_149 = arith.constant 0 : index
    %c0_150 = arith.constant 0 : index
    %c0_151 = arith.constant 0 : index
    %266 = vector.load %arg9[%c0_149, %c0_150, %c0_151] : memref<9x64x32xbf16, #tpu.memory_space<vmem>>, vector<1x64x32xbf16>
    %267 = vector.shape_cast %266 : vector<1x64x32xbf16> to vector<64x32xbf16>
    %268 = arith.truncf %265 : vector<32x256xf32> to vector<32x256xbf16>
    %cst_152 = arith.constant dense<0.000000e+00> : vector<64x256xf32>
    %269 = tpu.matmul %267, %268, %cst_152 {dimension_numbers = #tpu.dot_dimension_numbers<[1], [0], [0], [1], [0, 0, 1, 1], [], []>} : vector<64x32xbf16>, vector<32x256xbf16>, vector<64x256xf32> -> vector<64x256xf32>
    %270 = arith.addf %260, %269 : vector<64x256xf32>
    %c0_153 = arith.constant 0 : index
    %c64 = arith.constant 64 : index
    %271 = vector.load %arg16[%c0_153, %c64] : memref<64x512xf32, #tpu.memory_space<vmem>>, vector<32x256xf32>
    %c1_154 = arith.constant 1 : index
    %c0_155 = arith.constant 0 : index
    %c0_156 = arith.constant 0 : index
    %272 = vector.load %arg9[%c1_154, %c0_155, %c0_156] : memref<9x64x32xbf16, #tpu.memory_space<vmem>>, vector<1x64x32xbf16>
    %273 = vector.shape_cast %272 : vector<1x64x32xbf16> to vector<64x32xbf16>
    %274 = arith.truncf %271 : vector<32x256xf32> to vector<32x256xbf16>
    %cst_157 = arith.constant dense<0.000000e+00> : vector<64x256xf32>
    %275 = tpu.matmul %273, %274, %cst_157 {dimension_numbers = #tpu.dot_dimension_numbers<[1], [0], [0], [1], [0, 0, 1, 1], [], []>} : vector<64x32xbf16>, vector<32x256xbf16>, vector<64x256xf32> -> vector<64x256xf32>
    %276 = arith.addf %270, %275 : vector<64x256xf32>
    %c0_158 = arith.constant 0 : index
    %c68 = arith.constant 68 : index
    %277 = vector.load %arg16[%c0_158, %c68] : memref<64x512xf32, #tpu.memory_space<vmem>>, vector<32x256xf32>
    %cst_159 = arith.constant 0.000000e+00 : f32
    %278 = vector.shape_cast %89 : vector<1x256xi1> to vector<1x256xi1>
    %279 = vector.broadcast %278 : vector<1x256xi1> to vector<32x256xi1>
    %280 = vector.broadcast %cst_159 : f32 to vector<32x256xf32>
    %281 = arith.select %279, %277, %280 : vector<32x256xi1>, vector<32x256xf32>
    %c2_160 = arith.constant 2 : index
    %c0_161 = arith.constant 0 : index
    %c0_162 = arith.constant 0 : index
    %282 = vector.load %arg9[%c2_160, %c0_161, %c0_162] : memref<9x64x32xbf16, #tpu.memory_space<vmem>>, vector<1x64x32xbf16>
    %283 = vector.shape_cast %282 : vector<1x64x32xbf16> to vector<64x32xbf16>
    %284 = arith.truncf %281 : vector<32x256xf32> to vector<32x256xbf16>
    %cst_163 = arith.constant dense<0.000000e+00> : vector<64x256xf32>
    %285 = tpu.matmul %283, %284, %cst_163 {dimension_numbers = #tpu.dot_dimension_numbers<[1], [0], [0], [1], [0, 0, 1, 1], [], []>} : vector<64x32xbf16>, vector<32x256xbf16>, vector<64x256xf32> -> vector<64x256xf32>
    %286 = arith.addf %276, %285 : vector<64x256xf32>
    %c0_164 = arith.constant 0 : index
    %c124 = arith.constant 124 : index
    %287 = vector.load %arg16[%c0_164, %c124] : memref<64x512xf32, #tpu.memory_space<vmem>>, vector<32x256xf32>
    %cst_165 = arith.constant 0.000000e+00 : f32
    %288 = vector.shape_cast %80 : vector<1x256xi1> to vector<1x256xi1>
    %289 = vector.broadcast %288 : vector<1x256xi1> to vector<32x256xi1>
    %290 = vector.broadcast %cst_165 : f32 to vector<32x256xf32>
    %291 = arith.select %289, %287, %290 : vector<32x256xi1>, vector<32x256xf32>
    %c3_166 = arith.constant 3 : index
    %c0_167 = arith.constant 0 : index
    %c0_168 = arith.constant 0 : index
    %292 = vector.load %arg9[%c3_166, %c0_167, %c0_168] : memref<9x64x32xbf16, #tpu.memory_space<vmem>>, vector<1x64x32xbf16>
    %293 = vector.shape_cast %292 : vector<1x64x32xbf16> to vector<64x32xbf16>
    %294 = arith.truncf %291 : vector<32x256xf32> to vector<32x256xbf16>
    %cst_169 = arith.constant dense<0.000000e+00> : vector<64x256xf32>
    %295 = tpu.matmul %293, %294, %cst_169 {dimension_numbers = #tpu.dot_dimension_numbers<[1], [0], [0], [1], [0, 0, 1, 1], [], []>} : vector<64x32xbf16>, vector<32x256xbf16>, vector<64x256xf32> -> vector<64x256xf32>
    %296 = arith.addf %286, %295 : vector<64x256xf32>
    %c0_170 = arith.constant 0 : index
    %c128_171 = arith.constant 128 : index
    %297 = vector.load %arg16[%c0_170, %c128_171] : memref<64x512xf32, #tpu.memory_space<vmem>>, vector<32x256xf32>
    %c4_172 = arith.constant 4 : index
    %c0_173 = arith.constant 0 : index
    %c0_174 = arith.constant 0 : index
    %298 = vector.load %arg9[%c4_172, %c0_173, %c0_174] : memref<9x64x32xbf16, #tpu.memory_space<vmem>>, vector<1x64x32xbf16>
    %299 = vector.shape_cast %298 : vector<1x64x32xbf16> to vector<64x32xbf16>
    %300 = arith.truncf %297 : vector<32x256xf32> to vector<32x256xbf16>
    %cst_175 = arith.constant dense<0.000000e+00> : vector<64x256xf32>
    %301 = tpu.matmul %299, %300, %cst_175 {dimension_numbers = #tpu.dot_dimension_numbers<[1], [0], [0], [1], [0, 0, 1, 1], [], []>} : vector<64x32xbf16>, vector<32x256xbf16>, vector<64x256xf32> -> vector<64x256xf32>
    %302 = arith.addf %296, %301 : vector<64x256xf32>
    %c0_176 = arith.constant 0 : index
    %c132 = arith.constant 132 : index
    %303 = vector.load %arg16[%c0_176, %c132] : memref<64x512xf32, #tpu.memory_space<vmem>>, vector<32x256xf32>
    %cst_177 = arith.constant 0.000000e+00 : f32
    %304 = vector.shape_cast %89 : vector<1x256xi1> to vector<1x256xi1>
    %305 = vector.broadcast %304 : vector<1x256xi1> to vector<32x256xi1>
    %306 = vector.broadcast %cst_177 : f32 to vector<32x256xf32>
    %307 = arith.select %305, %303, %306 : vector<32x256xi1>, vector<32x256xf32>
    %c5_178 = arith.constant 5 : index
    %c0_179 = arith.constant 0 : index
    %c0_180 = arith.constant 0 : index
    %308 = vector.load %arg9[%c5_178, %c0_179, %c0_180] : memref<9x64x32xbf16, #tpu.memory_space<vmem>>, vector<1x64x32xbf16>
    %309 = vector.shape_cast %308 : vector<1x64x32xbf16> to vector<64x32xbf16>
    %310 = arith.truncf %307 : vector<32x256xf32> to vector<32x256xbf16>
    %cst_181 = arith.constant dense<0.000000e+00> : vector<64x256xf32>
    %311 = tpu.matmul %309, %310, %cst_181 {dimension_numbers = #tpu.dot_dimension_numbers<[1], [0], [0], [1], [0, 0, 1, 1], [], []>} : vector<64x32xbf16>, vector<32x256xbf16>, vector<64x256xf32> -> vector<64x256xf32>
    %312 = arith.addf %302, %311 : vector<64x256xf32>
    %c0_182 = arith.constant 0 : index
    %c188 = arith.constant 188 : index
    %313 = vector.load %arg16[%c0_182, %c188] : memref<64x512xf32, #tpu.memory_space<vmem>>, vector<32x256xf32>
    %cst_183 = arith.constant 0.000000e+00 : f32
    %314 = vector.shape_cast %80 : vector<1x256xi1> to vector<1x256xi1>
    %315 = vector.broadcast %314 : vector<1x256xi1> to vector<32x256xi1>
    %316 = vector.broadcast %cst_183 : f32 to vector<32x256xf32>
    %317 = arith.select %315, %313, %316 : vector<32x256xi1>, vector<32x256xf32>
    %c6_184 = arith.constant 6 : index
    %c0_185 = arith.constant 0 : index
    %c0_186 = arith.constant 0 : index
    %318 = vector.load %arg9[%c6_184, %c0_185, %c0_186] : memref<9x64x32xbf16, #tpu.memory_space<vmem>>, vector<1x64x32xbf16>
    %319 = vector.shape_cast %318 : vector<1x64x32xbf16> to vector<64x32xbf16>
    %320 = arith.truncf %317 : vector<32x256xf32> to vector<32x256xbf16>
    %cst_187 = arith.constant dense<0.000000e+00> : vector<64x256xf32>
    %321 = tpu.matmul %319, %320, %cst_187 {dimension_numbers = #tpu.dot_dimension_numbers<[1], [0], [0], [1], [0, 0, 1, 1], [], []>} : vector<64x32xbf16>, vector<32x256xbf16>, vector<64x256xf32> -> vector<64x256xf32>
    %322 = arith.addf %312, %321 : vector<64x256xf32>
    %c0_188 = arith.constant 0 : index
    %c192 = arith.constant 192 : index
    %323 = vector.load %arg16[%c0_188, %c192] : memref<64x512xf32, #tpu.memory_space<vmem>>, vector<32x256xf32>
    %c7_189 = arith.constant 7 : index
    %c0_190 = arith.constant 0 : index
    %c0_191 = arith.constant 0 : index
    %324 = vector.load %arg9[%c7_189, %c0_190, %c0_191] : memref<9x64x32xbf16, #tpu.memory_space<vmem>>, vector<1x64x32xbf16>
    %325 = vector.shape_cast %324 : vector<1x64x32xbf16> to vector<64x32xbf16>
    %326 = arith.truncf %323 : vector<32x256xf32> to vector<32x256xbf16>
    %cst_192 = arith.constant dense<0.000000e+00> : vector<64x256xf32>
    %327 = tpu.matmul %325, %326, %cst_192 {dimension_numbers = #tpu.dot_dimension_numbers<[1], [0], [0], [1], [0, 0, 1, 1], [], []>} : vector<64x32xbf16>, vector<32x256xbf16>, vector<64x256xf32> -> vector<64x256xf32>
    %328 = arith.addf %322, %327 : vector<64x256xf32>
    %c0_193 = arith.constant 0 : index
    %c196 = arith.constant 196 : index
    %329 = vector.load %arg16[%c0_193, %c196] : memref<64x512xf32, #tpu.memory_space<vmem>>, vector<32x256xf32>
    %cst_194 = arith.constant 0.000000e+00 : f32
    %330 = vector.shape_cast %89 : vector<1x256xi1> to vector<1x256xi1>
    %331 = vector.broadcast %330 : vector<1x256xi1> to vector<32x256xi1>
    %332 = vector.broadcast %cst_194 : f32 to vector<32x256xf32>
    %333 = arith.select %331, %329, %332 : vector<32x256xi1>, vector<32x256xf32>
    %c8_195 = arith.constant 8 : index
    %c0_196 = arith.constant 0 : index
    %c0_197 = arith.constant 0 : index
    %334 = vector.load %arg9[%c8_195, %c0_196, %c0_197] : memref<9x64x32xbf16, #tpu.memory_space<vmem>>, vector<1x64x32xbf16>
    %335 = vector.shape_cast %334 : vector<1x64x32xbf16> to vector<64x32xbf16>
    %336 = arith.truncf %333 : vector<32x256xf32> to vector<32x256xbf16>
    %cst_198 = arith.constant dense<0.000000e+00> : vector<64x256xf32>
    %337 = tpu.matmul %335, %336, %cst_198 {dimension_numbers = #tpu.dot_dimension_numbers<[1], [0], [0], [1], [0, 0, 1, 1], [], []>} : vector<64x32xbf16>, vector<32x256xbf16>, vector<64x256xf32> -> vector<64x256xf32>
    %338 = arith.addf %328, %337 : vector<64x256xf32>
    %cst_199 = arith.constant 0.000000e+00 : f32
    %339 = vector.broadcast %cst_199 : f32 to vector<64x256xf32>
    %340 = arith.maximumf %338, %339 : vector<64x256xf32>
    %c0_200 = arith.constant 0 : index
    %c128_201 = arith.constant 128 : index
    %341 = vector.load %arg16[%c0_200, %c128_201] : memref<64x512xf32, #tpu.memory_space<vmem>>, vector<64x256xf32>
    tpu.vector_store %arg16[%c0_200, %c128_201], %340 {strides = array<i32>} : memref<64x512xf32, #tpu.memory_space<vmem>>, vector<64x256xf32>,
    %c0_202 = arith.constant 0 : index
    %c0_203 = arith.constant 0 : index
    %342 = vector.load %arg12[%c0_202, %c0_203] : memref<16x1xf32, #tpu.memory_space<vmem>>, vector<16x1xf32>
    %343 = vector.shape_cast %342 : vector<16x1xf32> to vector<16x1xf32>
    %344 = vector.broadcast %343 : vector<16x1xf32> to vector<16x256xf32>
    %c0_204 = arith.constant 0 : index
    %c111_205 = arith.constant 111 : index
    %345 = vector.load %arg16[%c0_204, %c111_205] : memref<64x512xf32, #tpu.memory_space<vmem>>, vector<64x256xf32>
    %cst_206 = arith.constant 0.000000e+00 : f32
    %346 = vector.shape_cast %44 : vector<1x256xi1> to vector<1x256xi1>
    %347 = vector.broadcast %346 : vector<1x256xi1> to vector<64x256xi1>
    %348 = vector.broadcast %cst_206 : f32 to vector<64x256xf32>
    %349 = arith.select %347, %345, %348 : vector<64x256xi1>, vector<64x256xf32>
    %c0_207 = arith.constant 0 : index
    %c0_208 = arith.constant 0 : index
    %c0_209 = arith.constant 0 : index
    %350 = vector.load %arg11[%c0_207, %c0_208, %c0_209] : memref<9x16x64xbf16, #tpu.memory_space<vmem>>, vector<1x16x64xbf16>
    %351 = vector.shape_cast %350 : vector<1x16x64xbf16> to vector<16x64xbf16>
    %352 = arith.truncf %349 : vector<64x256xf32> to vector<64x256xbf16>
    %cst_210 = arith.constant dense<0.000000e+00> : vector<16x256xf32>
    %353 = tpu.matmul %351, %352, %cst_210 {dimension_numbers = #tpu.dot_dimension_numbers<[1], [0], [0], [1], [0, 0, 1, 1], [], []>} : vector<16x64xbf16>, vector<64x256xbf16>, vector<16x256xf32> -> vector<16x256xf32>
    %354 = arith.addf %344, %353 : vector<16x256xf32>
    %c0_211 = arith.constant 0 : index
    %c112_212 = arith.constant 112 : index
    %355 = vector.load %arg16[%c0_211, %c112_212] : memref<64x512xf32, #tpu.memory_space<vmem>>, vector<64x256xf32>
    %c1_213 = arith.constant 1 : index
    %c0_214 = arith.constant 0 : index
    %c0_215 = arith.constant 0 : index
    %356 = vector.load %arg11[%c1_213, %c0_214, %c0_215] : memref<9x16x64xbf16, #tpu.memory_space<vmem>>, vector<1x16x64xbf16>
    %357 = vector.shape_cast %356 : vector<1x16x64xbf16> to vector<16x64xbf16>
    %358 = arith.truncf %355 : vector<64x256xf32> to vector<64x256xbf16>
    %cst_216 = arith.constant dense<0.000000e+00> : vector<16x256xf32>
    %359 = tpu.matmul %357, %358, %cst_216 {dimension_numbers = #tpu.dot_dimension_numbers<[1], [0], [0], [1], [0, 0, 1, 1], [], []>} : vector<16x64xbf16>, vector<64x256xbf16>, vector<16x256xf32> -> vector<16x256xf32>
    %360 = arith.addf %354, %359 : vector<16x256xf32>
    %c0_217 = arith.constant 0 : index
    %c113_218 = arith.constant 113 : index
    %361 = vector.load %arg16[%c0_217, %c113_218] : memref<64x512xf32, #tpu.memory_space<vmem>>, vector<64x256xf32>
    %cst_219 = arith.constant 0.000000e+00 : f32
    %362 = vector.shape_cast %53 : vector<1x256xi1> to vector<1x256xi1>
    %363 = vector.broadcast %362 : vector<1x256xi1> to vector<64x256xi1>
    %364 = vector.broadcast %cst_219 : f32 to vector<64x256xf32>
    %365 = arith.select %363, %361, %364 : vector<64x256xi1>, vector<64x256xf32>
    %c2_220 = arith.constant 2 : index
    %c0_221 = arith.constant 0 : index
    %c0_222 = arith.constant 0 : index
    %366 = vector.load %arg11[%c2_220, %c0_221, %c0_222] : memref<9x16x64xbf16, #tpu.memory_space<vmem>>, vector<1x16x64xbf16>
    %367 = vector.shape_cast %366 : vector<1x16x64xbf16> to vector<16x64xbf16>
    %368 = arith.truncf %365 : vector<64x256xf32> to vector<64x256xbf16>
    %cst_223 = arith.constant dense<0.000000e+00> : vector<16x256xf32>
    %369 = tpu.matmul %367, %368, %cst_223 {dimension_numbers = #tpu.dot_dimension_numbers<[1], [0], [0], [1], [0, 0, 1, 1], [], []>} : vector<16x64xbf16>, vector<64x256xbf16>, vector<16x256xf32> -> vector<16x256xf32>
    %370 = arith.addf %360, %369 : vector<16x256xf32>
    %c0_224 = arith.constant 0 : index
    %c127_225 = arith.constant 127 : index
    %371 = vector.load %arg16[%c0_224, %c127_225] : memref<64x512xf32, #tpu.memory_space<vmem>>, vector<64x256xf32>
    %cst_226 = arith.constant 0.000000e+00 : f32
    %372 = vector.shape_cast %44 : vector<1x256xi1> to vector<1x256xi1>
    %373 = vector.broadcast %372 : vector<1x256xi1> to vector<64x256xi1>
    %374 = vector.broadcast %cst_226 : f32 to vector<64x256xf32>
    %375 = arith.select %373, %371, %374 : vector<64x256xi1>, vector<64x256xf32>
    %c3_227 = arith.constant 3 : index
    %c0_228 = arith.constant 0 : index
    %c0_229 = arith.constant 0 : index
    %376 = vector.load %arg11[%c3_227, %c0_228, %c0_229] : memref<9x16x64xbf16, #tpu.memory_space<vmem>>, vector<1x16x64xbf16>
    %377 = vector.shape_cast %376 : vector<1x16x64xbf16> to vector<16x64xbf16>
    %378 = arith.truncf %375 : vector<64x256xf32> to vector<64x256xbf16>
    %cst_230 = arith.constant dense<0.000000e+00> : vector<16x256xf32>
    %379 = tpu.matmul %377, %378, %cst_230 {dimension_numbers = #tpu.dot_dimension_numbers<[1], [0], [0], [1], [0, 0, 1, 1], [], []>} : vector<16x64xbf16>, vector<64x256xbf16>, vector<16x256xf32> -> vector<16x256xf32>
    %380 = arith.addf %370, %379 : vector<16x256xf32>
    %c0_231 = arith.constant 0 : index
    %c128_232 = arith.constant 128 : index
    %381 = vector.load %arg16[%c0_231, %c128_232] : memref<64x512xf32, #tpu.memory_space<vmem>>, vector<64x256xf32>
    %c4_233 = arith.constant 4 : index
    %c0_234 = arith.constant 0 : index
    %c0_235 = arith.constant 0 : index
    %382 = vector.load %arg11[%c4_233, %c0_234, %c0_235] : memref<9x16x64xbf16, #tpu.memory_space<vmem>>, vector<1x16x64xbf16>
    %383 = vector.shape_cast %382 : vector<1x16x64xbf16> to vector<16x64xbf16>
    %384 = arith.truncf %381 : vector<64x256xf32> to vector<64x256xbf16>
    %cst_236 = arith.constant dense<0.000000e+00> : vector<16x256xf32>
    %385 = tpu.matmul %383, %384, %cst_236 {dimension_numbers = #tpu.dot_dimension_numbers<[1], [0], [0], [1], [0, 0, 1, 1], [], []>} : vector<16x64xbf16>, vector<64x256xbf16>, vector<16x256xf32> -> vector<16x256xf32>
    %386 = arith.addf %380, %385 : vector<16x256xf32>
    %c0_237 = arith.constant 0 : index
    %c129_238 = arith.constant 129 : index
    %387 = vector.load %arg16[%c0_237, %c129_238] : memref<64x512xf32, #tpu.memory_space<vmem>>, vector<64x256xf32>
    %cst_239 = arith.constant 0.000000e+00 : f32
    %388 = vector.shape_cast %53 : vector<1x256xi1> to vector<1x256xi1>
    %389 = vector.broadcast %388 : vector<1x256xi1> to vector<64x256xi1>
    %390 = vector.broadcast %cst_239 : f32 to vector<64x256xf32>
    %391 = arith.select %389, %387, %390 : vector<64x256xi1>, vector<64x256xf32>
    %c5_240 = arith.constant 5 : index
    %c0_241 = arith.constant 0 : index
    %c0_242 = arith.constant 0 : index
    %392 = vector.load %arg11[%c5_240, %c0_241, %c0_242] : memref<9x16x64xbf16, #tpu.memory_space<vmem>>, vector<1x16x64xbf16>
    %393 = vector.shape_cast %392 : vector<1x16x64xbf16> to vector<16x64xbf16>
    %394 = arith.truncf %391 : vector<64x256xf32> to vector<64x256xbf16>
    %cst_243 = arith.constant dense<0.000000e+00> : vector<16x256xf32>
    %395 = tpu.matmul %393, %394, %cst_243 {dimension_numbers = #tpu.dot_dimension_numbers<[1], [0], [0], [1], [0, 0, 1, 1], [], []>} : vector<16x64xbf16>, vector<64x256xbf16>, vector<16x256xf32> -> vector<16x256xf32>
    %396 = arith.addf %386, %395 : vector<16x256xf32>
    %c0_244 = arith.constant 0 : index
    %c143_245 = arith.constant 143 : index
    %397 = vector.load %arg16[%c0_244, %c143_245] : memref<64x512xf32, #tpu.memory_space<vmem>>, vector<64x256xf32>
    %cst_246 = arith.constant 0.000000e+00 : f32
    %398 = vector.shape_cast %44 : vector<1x256xi1> to vector<1x256xi1>
    %399 = vector.broadcast %398 : vector<1x256xi1> to vector<64x256xi1>
    %400 = vector.broadcast %cst_246 : f32 to vector<64x256xf32>
    %401 = arith.select %399, %397, %400 : vector<64x256xi1>, vector<64x256xf32>
    %c6_247 = arith.constant 6 : index
    %c0_248 = arith.constant 0 : index
    %c0_249 = arith.constant 0 : index
    %402 = vector.load %arg11[%c6_247, %c0_248, %c0_249] : memref<9x16x64xbf16, #tpu.memory_space<vmem>>, vector<1x16x64xbf16>
    %403 = vector.shape_cast %402 : vector<1x16x64xbf16> to vector<16x64xbf16>
    %404 = arith.truncf %401 : vector<64x256xf32> to vector<64x256xbf16>
    %cst_250 = arith.constant dense<0.000000e+00> : vector<16x256xf32>
    %405 = tpu.matmul %403, %404, %cst_250 {dimension_numbers = #tpu.dot_dimension_numbers<[1], [0], [0], [1], [0, 0, 1, 1], [], []>} : vector<16x64xbf16>, vector<64x256xbf16>, vector<16x256xf32> -> vector<16x256xf32>
    %406 = arith.addf %396, %405 : vector<16x256xf32>
    %c0_251 = arith.constant 0 : index
    %c144_252 = arith.constant 144 : index
    %407 = vector.load %arg16[%c0_251, %c144_252] : memref<64x512xf32, #tpu.memory_space<vmem>>, vector<64x256xf32>
    %c7_253 = arith.constant 7 : index
    %c0_254 = arith.constant 0 : index
    %c0_255 = arith.constant 0 : index
    %408 = vector.load %arg11[%c7_253, %c0_254, %c0_255] : memref<9x16x64xbf16, #tpu.memory_space<vmem>>, vector<1x16x64xbf16>
    %409 = vector.shape_cast %408 : vector<1x16x64xbf16> to vector<16x64xbf16>
    %410 = arith.truncf %407 : vector<64x256xf32> to vector<64x256xbf16>
    %cst_256 = arith.constant dense<0.000000e+00> : vector<16x256xf32>
    %411 = tpu.matmul %409, %410, %cst_256 {dimension_numbers = #tpu.dot_dimension_numbers<[1], [0], [0], [1], [0, 0, 1, 1], [], []>} : vector<16x64xbf16>, vector<64x256xbf16>, vector<16x256xf32> -> vector<16x256xf32>
    %412 = arith.addf %406, %411 : vector<16x256xf32>
    %c0_257 = arith.constant 0 : index
    %c145_258 = arith.constant 145 : index
    %413 = vector.load %arg16[%c0_257, %c145_258] : memref<64x512xf32, #tpu.memory_space<vmem>>, vector<64x256xf32>
    %cst_259 = arith.constant 0.000000e+00 : f32
    %414 = vector.shape_cast %53 : vector<1x256xi1> to vector<1x256xi1>
    %415 = vector.broadcast %414 : vector<1x256xi1> to vector<64x256xi1>
    %416 = vector.broadcast %cst_259 : f32 to vector<64x256xf32>
    %417 = arith.select %415, %413, %416 : vector<64x256xi1>, vector<64x256xf32>
    %c8_260 = arith.constant 8 : index
    %c0_261 = arith.constant 0 : index
    %c0_262 = arith.constant 0 : index
    %418 = vector.load %arg11[%c8_260, %c0_261, %c0_262] : memref<9x16x64xbf16, #tpu.memory_space<vmem>>, vector<1x16x64xbf16>
    %419 = vector.shape_cast %418 : vector<1x16x64xbf16> to vector<16x64xbf16>
    %420 = arith.truncf %417 : vector<64x256xf32> to vector<64x256xbf16>
    %cst_263 = arith.constant dense<0.000000e+00> : vector<16x256xf32>
    %421 = tpu.matmul %419, %420, %cst_263 {dimension_numbers = #tpu.dot_dimension_numbers<[1], [0], [0], [1], [0, 0, 1, 1], [], []>} : vector<16x64xbf16>, vector<64x256xbf16>, vector<16x256xf32> -> vector<16x256xf32>
    %422 = arith.addf %412, %421 : vector<16x256xf32>
    %cst_264 = arith.constant 0.000000e+00 : f32
    %423 = vector.broadcast %cst_264 : f32 to vector<16x256xf32>
    %424 = arith.maximumf %422, %423 : vector<16x256xf32>
    %c0_265 = arith.constant 0 : index
    %c128_266 = arith.constant 128 : index
    %425 = vector.load %arg16[%c0_265, %c128_266] : memref<64x512xf32, #tpu.memory_space<vmem>>, vector<16x256xf32>
    tpu.vector_store %arg16[%c0_265, %c128_266], %424 {strides = array<i32>} : memref<64x512xf32, #tpu.memory_space<vmem>>, vector<16x256xf32>,
    %c0_267 = arith.constant 0 : index
    %c0_268 = arith.constant 0 : index
    %426 = vector.load %arg14[%c0_267, %c0_268] : memref<1x1xf32, #tpu.memory_space<vmem>>, vector<1x1xf32>
    %427 = vector.shape_cast %426 : vector<1x1xf32> to vector<1x1xf32>
    %428 = vector.broadcast %427 : vector<1x1xf32> to vector<1x256xf32>
    %c0_269 = arith.constant 0 : index
    %c128_270 = arith.constant 128 : index
    %429 = vector.load %arg16[%c0_269, %c128_270] : memref<64x512xf32, #tpu.memory_space<vmem>>, vector<16x256xf32>
    %c0_271 = arith.constant 0 : index
    %c0_272 = arith.constant 0 : index
    %c0_273 = arith.constant 0 : index
    %430 = vector.load %arg13[%c0_271, %c0_272, %c0_273] : memref<1x1x16xbf16, #tpu.memory_space<vmem>>, vector<1x1x16xbf16>
    %431 = vector.shape_cast %430 : vector<1x1x16xbf16> to vector<1x16xbf16>
    %432 = arith.truncf %429 : vector<16x256xf32> to vector<16x256xbf16>
    %cst_274 = arith.constant dense<0.000000e+00> : vector<1x256xf32>
    %433 = tpu.matmul %431, %432, %cst_274 {dimension_numbers = #tpu.dot_dimension_numbers<[1], [0], [0], [1], [0, 0, 1, 1], [], []>} : vector<1x16xbf16>, vector<16x256xbf16>, vector<1x256xf32> -> vector<1x256xf32>
    %434 = arith.addf %428, %433 : vector<1x256xf32>
    %435 = arith.negf %434 : vector<1x256xf32>
    %436 = math.exp %435 : vector<1x256xf32>
    %cst_275 = arith.constant 1.000000e+00 : f32
    %437 = vector.broadcast %cst_275 : f32 to vector<1x256xf32>
    %438 = arith.addf %437, %436 : vector<1x256xf32>
    %439 = arith.divf %437, %438 : vector<1x256xf32>
    %cst_276 = arith.constant 0.00999999977 : f32
    %440 = vector.broadcast %cst_276 : f32 to vector<1x256xf32>
    %441 = arith.mulf %439, %440 : vector<1x256xf32>
    %c0_277 = arith.constant 0 : index
    %c0_278 = arith.constant 0 : index
    %c0_279 = arith.constant 0 : index
    %442 = vector.load %arg15[%c0_277, %c0_278, %c0_279] : memref<1x1x256xf32, #tpu.memory_space<vmem>>, vector<1x1x256xf32>
    %443 = vector.shape_cast %442 : vector<1x1x256xf32> to vector<1x256xf32>
    %444 = vector.shape_cast %441 : vector<1x256xf32> to vector<1x1x256xf32>
    tpu.vector_store %arg15[%c0_277, %c0_278, %c0_279], %444 {strides = array<i32>} : memref<1x1x256xf32, #tpu.memory_space<vmem>>, vector<1x1x256xf32>,
    return
  }
  func.func @transform_0(%arg0: i32) -> (i32, i32, i32) {
    %c0_i32 = arith.constant 0 : i32
    %c0_i32_0 = arith.constant 0 : i32
    %c0_i32_1 = arith.constant 0 : i32
    return %arg0, %c0_i32, %c0_i32_0 : i32, i32, i32
  }
  func.func @transform_1(%arg0: i32) -> (i32, i32, i32) {
    %c0_i32 = arith.constant 0 : i32
    %c0_i32_0 = arith.constant 0 : i32
    %c0_i32_1 = arith.constant 0 : i32
    return %arg0, %c0_i32, %c0_i32_0 : i32, i32, i32
  }
  func.func @transform_2(%arg0: i32) -> (i32, i32, i32) {
    %c0_i32 = arith.constant 0 : i32
    %c0_i32_0 = arith.constant 0 : i32
    %c0_i32_1 = arith.constant 0 : i32
    return %arg0, %c0_i32, %c0_i32_0 : i32, i32, i32
  }
  func.func @transform_3(%arg0: i32) -> (i32, i32) {
    %c0_i32 = arith.constant 0 : i32
    %c0_i32_0 = arith.constant 0 : i32
    %c0_i32_1 = arith.constant 0 : i32
    return %c0_i32, %c0_i32_0 : i32, i32
  }
  func.func @transform_4(%arg0: i32) -> (i32, i32, i32) {
    %c0_i32 = arith.constant 0 : i32
    %c0_i32_0 = arith.constant 0 : i32
    %c0_i32_1 = arith.constant 0 : i32
    %c0_i32_2 = arith.constant 0 : i32
    return %c0_i32, %c0_i32_0, %c0_i32_1 : i32, i32, i32
  }
  func.func @transform_5(%arg0: i32) -> (i32, i32) {
    %c0_i32 = arith.constant 0 : i32
    %c0_i32_0 = arith.constant 0 : i32
    %c0_i32_1 = arith.constant 0 : i32
    return %c0_i32, %c0_i32_0 : i32, i32
  }
  func.func @transform_6(%arg0: i32) -> (i32, i32, i32) {
    %c0_i32 = arith.constant 0 : i32
    %c0_i32_0 = arith.constant 0 : i32
    %c0_i32_1 = arith.constant 0 : i32
    %c0_i32_2 = arith.constant 0 : i32
    return %c0_i32, %c0_i32_0, %c0_i32_1 : i32, i32, i32
  }
  func.func @transform_7(%arg0: i32) -> (i32, i32) {
    %c0_i32 = arith.constant 0 : i32
    %c0_i32_0 = arith.constant 0 : i32
    %c0_i32_1 = arith.constant 0 : i32
    return %c0_i32, %c0_i32_0 : i32, i32
  }
  func.func @transform_8(%arg0: i32) -> (i32, i32, i32) {
    %c0_i32 = arith.constant 0 : i32
    %c0_i32_0 = arith.constant 0 : i32
    %c0_i32_1 = arith.constant 0 : i32
    %c0_i32_2 = arith.constant 0 : i32
    return %c0_i32, %c0_i32_0, %c0_i32_1 : i32, i32, i32
  }
  func.func @transform_9(%arg0: i32) -> (i32, i32) {
    %c0_i32 = arith.constant 0 : i32
    %c0_i32_0 = arith.constant 0 : i32
    %c0_i32_1 = arith.constant 0 : i32
    return %c0_i32, %c0_i32_0 : i32, i32
  }
  func.func @transform_10(%arg0: i32) -> (i32, i32, i32) {
    %c0_i32 = arith.constant 0 : i32
    %c0_i32_0 = arith.constant 0 : i32
    %c0_i32_1 = arith.constant 0 : i32
    %c0_i32_2 = arith.constant 0 : i32
    return %c0_i32, %c0_i32_0, %c0_i32_1 : i32, i32, i32
  }
  func.func @transform_11(%arg0: i32) -> (i32, i32) {
    %c0_i32 = arith.constant 0 : i32
    %c0_i32_0 = arith.constant 0 : i32
    %c0_i32_1 = arith.constant 0 : i32
    return %c0_i32, %c0_i32_0 : i32, i32
  }
  func.func @transform_12(%arg0: i32) -> (i32, i32, i32) {
    %c0_i32 = arith.constant 0 : i32
    %c0_i32_0 = arith.constant 0 : i32
    %c0_i32_1 = arith.constant 0 : i32
    %c0_i32_2 = arith.constant 0 : i32
    return %c0_i32, %c0_i32_0, %c0_i32_1 : i32, i32, i32
  }
  func.func @transform_13(%arg0: i32) -> (i32, i32) {
    %c0_i32 = arith.constant 0 : i32
    %c0_i32_0 = arith.constant 0 : i32
    %c0_i32_1 = arith.constant 0 : i32
    return %c0_i32, %c0_i32_0 : i32, i32
  }
  func.func @transform_14(%arg0: i32) -> (i32, i32, i32) {
    %c0_i32 = arith.constant 0 : i32
    %c0_i32_0 = arith.constant 0 : i32
    %c0_i32_1 = arith.constant 0 : i32
    return %arg0, %c0_i32, %c0_i32_0 : i32, i32, i32
  }
}

</mosaic_0001>

<llo_original>
// kernel: tpu_custom_call.1
$region0: #{tpu_custom_call.1}
  #allocation0 [shape = 'u32[]', space=smem, size = 0x4, offset = 0x4, fixed_abs, tag = 'smem constant byte address 0x4 - core index']
  #allocation1 [shape = 'u32[144,128]{1,0:T(1,128)}', space=vmem, size = 0x12000, scoped, tag = 'internal scratch']
  #allocation2 [shape = 'f32[64,512]{1,0:T(8,128)}', space=vmem, size = 0x20000, scoped, tag = 'scratch operand']
  #allocation3 [shape = 'f32[1,1]{1,0:T(1,128)S(1)}', space=vmem, size = 0x200, scoped, tag = 'scoped memory for tpu_custom_call.1']
  %s0 = inlined_call_operand.vmem [shape: f32[2,4,256], index: 0, kind: input, shape index: {}]
  %s1 = inlined_call_operand.vmem [shape: f32[2,4,256], index: 1, kind: input, shape index: {}]
  %s2 = inlined_call_operand.vmem [shape: f32[2,1,64], index: 2, kind: input, shape index: {}]
  %s3 = inlined_call_operand.vmem [shape: f32[64,256], index: 3, kind: input, shape index: {}]
  %s4 = inlined_call_operand.vmem [shape: bf16[9,16,8], index: 4, kind: input, shape index: {}]
  %s5 = inlined_call_operand.vmem [shape: f32[16,1], index: 5, kind: input, shape index: {}]
  %s6 = inlined_call_operand.vmem [shape: bf16[9,32,16], index: 6, kind: input, shape index: {}]
  %s7 = inlined_call_operand.vmem [shape: f32[32,1], index: 7, kind: input, shape index: {}]
  %s8 = inlined_call_operand.vmem [shape: bf16[9,64,32], index: 8, kind: input, shape index: {}]
  %s9 = inlined_call_operand.vmem [shape: f32[64,1], index: 9, kind: input, shape index: {}]
  %s10 = inlined_call_operand.vmem [shape: bf16[9,16,64], index: 10, kind: input, shape index: {}]
  %s11 = inlined_call_operand.vmem [shape: f32[16,1], index: 11, kind: input, shape index: {}]
  %s12 = inlined_call_operand.vmem [shape: bf16[1,1,16], index: 12, kind: input, shape index: {}]
  %s13 = inlined_call_operand.<no memory space> [shape: f32[1,1], index: 13, kind: input, shape index: {}]
  %s14 = inlined_call_operand.hbm [shape: f32[2,1,256], index: 14, kind: output, shape index: {}]
  %s15 = sld [smem:[#allocation0]]
  $region89: #{tpu_custom_call.1} parent=0
    _
  %s17 = ssub.s32 1, %s15
  %s18 = scalar_select 0, %s17, %s15
  %v19 = vstv %s13
  %20 = vst [vmem:[#allocation3] sm:$0x1] %v19
  $region1: #{tpu_custom_call.1} parent=0
    #allocation4 [shape = 'u8[2048]{0}', space=vmem, size = 0x800, scoped, tag = 'output window, operand 0']
    #allocation5 [shape = 's32[2]{0}', space=sflag, size = 0x8, scoped, tag = 'scoped memory for tpu_custom_call.1']
    %21 = vsyncpa [#allocation5], 0
    %s22 = scalar_lea.sflag [#allocation5], 1
    %23 = vsyncpa %s22, 0
    loop: start=0, step=1, limit=4
    $region2: #{tpu_custom_call.1} parent=1 // loop_pre_header
      _
    $region3: #{tpu_custom_call.1} parent=1 // loop_header
      %s25 = sphi 0, %s29
      %p26 = scmp.ge.s32.totalorder %s25, 4
      %s35 = sphi 0, %s37
      %s38 = sphi 0, %s35
      %s39 = sphi 0, %s38
      %s55 = sphi 0, %s39
      %s61 = sphi 0, %s63
      %s64 = sphi 0, %s61
      %s65 = sphi 0, %s64
      %s81 = sphi 0, %s65
      %s87 = sphi 0, %s89
      %s90 = sphi 0, %s87
      %s91 = sphi 0, %s90
      %s107 = sphi 0, %s91
      %s111 = sphi 0, %s111
      %s113 = sphi 0, %s111
      %s114 = sphi 0, %s113
      %s128 = sphi 0, %s114
      %s132 = sphi 0, %s132
      %s134 = sphi 0, %s132
      %s135 = sphi 0, %s134
      %s149 = sphi 0, %s135
      %s153 = sphi 0, %s153
      %s155 = sphi 0, %s153
      %s156 = sphi 0, %s155
      %s170 = sphi 0, %s156
      %s174 = sphi 0, %s174
      %s176 = sphi 0, %s174
      %s177 = sphi 0, %s176
      %s191 = sphi 0, %s177
      %s195 = sphi 0, %s195
      %s197 = sphi 0, %s195
      %s198 = sphi 0, %s197
      %s212 = sphi 0, %s198
      %s216 = sphi 0, %s216
      %s218 = sphi 0, %s216
      %s219 = sphi 0, %s218
      %s233 = sphi 0, %s219
      %s237 = sphi 0, %s237
      %s239 = sphi 0, %s237
      %s240 = sphi 0, %s239
      %s254 = sphi 0, %s240
      %s258 = sphi 0, %s258
      %s260 = sphi 0, %s258
      %s261 = sphi 0, %s260
      %s275 = sphi 0, %s261
      %s279 = sphi 0, %s279
      %s281 = sphi 0, %s279
      %s282 = sphi 0, %s281
      %s296 = sphi 0, %s282
      %s300 = sphi 0, %s300
      %s302 = sphi 0, %s300
      %s303 = sphi 0, %s302
      %s317 = sphi 0, %s303
      %s321 = sphi 0, %s321
      %s323 = sphi 0, %s321
      %s324 = sphi 0, %s323
      %s338 = sphi 0, %s324
      %s344 = sphi 0, %s346
      %s347 = sphi 0, %s344
      %s348 = sphi 0, %s347
      %s364 = sphi 0, %s348
    $region4: #{tpu_custom_call.1} parent=1 // loop_header_branch
      %28 = sbr.rel (%p26) target = $region8
    $region5: #{tpu_custom_call.1} parent=1 // loop_body
      %s30 = ssub.s32 %s25, 1
      %s31 = ssub.s32 %s25, 2
      %s32 = sadd.s32 %s25, 1
      %s33 = ssub.s32 %s25, %s32
      %p34 = scmp.eq.s32.totalorder %s33, 0
      %s36 = sadd.s32 %s35, 1
      %s37 = scalar_select %p34, %s35, %s36
      %p40 = pneg %p34
      %p41 = scmp.eq.s32.totalorder %s25, 1
      %p42 = por %p40, %p41
      %p43 = scmp.ne.s32.totalorder %s35, %s38
      %p44 = scmp.eq.s32.totalorder %s25, 0
      %p45 = por %p43, %p44
      %p46 = scmp.ne.s32.totalorder %s35, %s38
      %p47 = scmp.eq.s32.totalorder %s30, 1
      %p48 = por %p46, %p47
      %p49 = scmp.ne.s32.totalorder %s38, %s39
      %p50 = scmp.eq.s32.totalorder %s30, 0
      %p51 = por %p49, %p50
      %p52 = scmp.ne.s32.totalorder %s38, %s39
      %p53 = scmp.eq.s32.totalorder %s31, 1
      %p54 = por %p52, %p53
      %p56 = scmp.ne.s32.totalorder %s39, %s55
      %p57 = scmp.eq.s32.totalorder %s31, 0
      %p58 = por %p56, %p57
      %s59 = ssub.s32 %s25, %s32
      %p60 = scmp.eq.s32.totalorder %s59, 0
      %s62 = sadd.s32 %s61, 1
      %s63 = scalar_select %p60, %s61, %s62
      %p66 = pneg %p60
      %p67 = scmp.eq.s32.totalorder %s25, 1
      %p68 = por %p66, %p67
      %p69 = scmp.ne.s32.totalorder %s61, %s64
      %p70 = scmp.eq.s32.totalorder %s25, 0
      %p71 = por %p69, %p70
      %p72 = scmp.ne.s32.totalorder %s61, %s64
      %p73 = scmp.eq.s32.totalorder %s30, 1
      %p74 = por %p72, %p73
      %p75 = scmp.ne.s32.totalorder %s64, %s65
      %p76 = scmp.eq.s32.totalorder %s30, 0
      %p77 = por %p75, %p76
      %p78 = scmp.ne.s32.totalorder %s64, %s65
      %p79 = scmp.eq.s32.totalorder %s31, 1
      %p80 = por %p78, %p79
      %p82 = scmp.ne.s32.totalorder %s65, %s81
      %p83 = scmp.eq.s32.totalorder %s31, 0
      %p84 = por %p82, %p83
      %s85 = ssub.s32 %s25, %s32
      %p86 = scmp.eq.s32.totalorder %s85, 0
      %s88 = sadd.s32 %s87, 1
      %s89 = scalar_select %p86, %s87, %s88
      %p92 = pneg %p86
      %p93 = scmp.eq.s32.totalorder %s25, 1
      %p94 = por %p92, %p93
      %p95 = scmp.ne.s32.totalorder %s87, %s90
      %p96 = scmp.eq.s32.totalorder %s25, 0
      %p97 = por %p95, %p96
      %p98 = scmp.ne.s32.totalorder %s87, %s90
      %p99 = scmp.eq.s32.totalorder %s30, 1
      %p100 = por %p98, %p99
      %p101 = scmp.ne.s32.totalorder %s90, %s91
      %p102 = scmp.eq.s32.totalorder %s30, 0
      %p103 = por %p101, %p102
      %p104 = scmp.ne.s32.totalorder %s90, %s91
      %p105 = scmp.eq.s32.totalorder %s31, 1
      %p106 = por %p104, %p105
      %p108 = scmp.ne.s32.totalorder %s91, %s107
      %p109 = scmp.eq.s32.totalorder %s31, 0
      %p110 = por %p108, %p109
      %s112 = sadd.s32 %s111, 1
      %p115 = scmp.eq.s32.totalorder %s25, 1
      %p116 = scmp.ne.s32.totalorder %s111, %s113
      %p117 = scmp.eq.s32.totalorder %s25, 0
      %p118 = por %p116, %p117
      %p119 = scmp.ne.s32.totalorder %s111, %s113
      %p120 = scmp.eq.s32.totalorder %s30, 1
      %p121 = por %p119, %p120
      %p122 = scmp.ne.s32.totalorder %s113, %s114
      %p123 = scmp.eq.s32.totalorder %s30, 0
      %p124 = por %p122, %p123
      %p125 = scmp.ne.s32.totalorder %s113, %s114
      %p126 = scmp.eq.s32.totalorder %s31, 1
      %p127 = por %p125, %p126
      %p129 = scmp.ne.s32.totalorder %s114, %s128
      %p130 = scmp.eq.s32.totalorder %s31, 0
      %p131 = por %p129, %p130
      %s133 = sadd.s32 %s132, 1
      %p136 = scmp.eq.s32.totalorder %s25, 1
      %p137 = scmp.ne.s32.totalorder %s132, %s134
      %p138 = scmp.eq.s32.totalorder %s25, 0
      %p139 = por %p137, %p138
      %p140 = scmp.ne.s32.totalorder %s132, %s134
      %p141 = scmp.eq.s32.totalorder %s30, 1
      %p142 = por %p140, %p141
      %p143 = scmp.ne.s32.totalorder %s134, %s135
      %p144 = scmp.eq.s32.totalorder %s30, 0
      %p145 = por %p143, %p144
      %p146 = scmp.ne.s32.totalorder %s134, %s135
      %p147 = scmp.eq.s32.totalorder %s31, 1
      %p148 = por %p146, %p147
      %p150 = scmp.ne.s32.totalorder %s135, %s149
      %p151 = scmp.eq.s32.totalorder %s31, 0
      %p152 = por %p150, %p151
      %s154 = sadd.s32 %s153, 1
      %p157 = scmp.eq.s32.totalorder %s25, 1
      %p158 = scmp.ne.s32.totalorder %s153, %s155
      %p159 = scmp.eq.s32.totalorder %s25, 0
      %p160 = por %p158, %p159
      %p161 = scmp.ne.s32.totalorder %s153, %s155
      %p162 = scmp.eq.s32.totalorder %s30, 1
      %p163 = por %p161, %p162
      %p164 = scmp.ne.s32.totalorder %s155, %s156
      %p165 = scmp.eq.s32.totalorder %s30, 0
      %p166 = por %p164, %p165
      %p167 = scmp.ne.s32.totalorder %s155, %s156
      %p168 = scmp.eq.s32.totalorder %s31, 1
      %p169 = por %p167, %p168
      %p171 = scmp.ne.s32.totalorder %s156, %s170
      %p172 = scmp.eq.s32.totalorder %s31, 0
      %p173 = por %p171, %p172
      %s175 = sadd.s32 %s174, 1
      %p178 = scmp.eq.s32.totalorder %s25, 1
      %p179 = scmp.ne.s32.totalorder %s174, %s176
      %p180 = scmp.eq.s32.totalorder %s25, 0
      %p181 = por %p179, %p180
      %p182 = scmp.ne.s32.totalorder %s174, %s176
      %p183 = scmp.eq.s32.totalorder %s30, 1
      %p184 = por %p182, %p183
      %p185 = scmp.ne.s32.totalorder %s176, %s177
      %p186 = scmp.eq.s32.totalorder %s30, 0
      %p187 = por %p185, %p186
      %p188 = scmp.ne.s32.totalorder %s176, %s177
      %p189 = scmp.eq.s32.totalorder %s31, 1
      %p190 = por %p188, %p189
      %p192 = scmp.ne.s32.totalorder %s177, %s191
      %p193 = scmp.eq.s32.totalorder %s31, 0
      %p194 = por %p192, %p193
      %s196 = sadd.s32 %s195, 1
      %p199 = scmp.eq.s32.totalorder %s25, 1
      %p200 = scmp.ne.s32.totalorder %s195, %s197
      %p201 = scmp.eq.s32.totalorder %s25, 0
      %p202 = por %p200, %p201
      %p203 = scmp.ne.s32.totalorder %s195, %s197
      %p204 = scmp.eq.s32.totalorder %s30, 1
      %p205 = por %p203, %p204
      %p206 = scmp.ne.s32.totalorder %s197, %s198
      %p207 = scmp.eq.s32.totalorder %s30, 0
      %p208 = por %p206, %p207
      %p209 = scmp.ne.s32.totalorder %s197, %s198
      %p210 = scmp.eq.s32.totalorder %s31, 1
      %p211 = por %p209, %p210
      %p213 = scmp.ne.s32.totalorder %s198, %s212
      %p214 = scmp.eq.s32.totalorder %s31, 0
      %p215 = por %p213, %p214
      %s217 = sadd.s32 %s216, 1
      %p220 = scmp.eq.s32.totalorder %s25, 1
      %p221 = scmp.ne.s32.totalorder %s216, %s218
      %p222 = scmp.eq.s32.totalorder %s25, 0
      %p223 = por %p221, %p222
      %p224 = scmp.ne.s32.totalorder %s216, %s218
      %p225 = scmp.eq.s32.totalorder %s30, 1
      %p226 = por %p224, %p225
      %p227 = scmp.ne.s32.totalorder %s218, %s219
      %p228 = scmp.eq.s32.totalorder %s30, 0
      %p229 = por %p227, %p228
      %p230 = scmp.ne.s32.totalorder %s218, %s219
      %p231 = scmp.eq.s32.totalorder %s31, 1
      %p232 = por %p230, %p231
      %p234 = scmp.ne.s32.totalorder %s219, %s233
      %p235 = scmp.eq.s32.totalorder %s31, 0
      %p236 = por %p234, %p235
      %s238 = sadd.s32 %s237, 1
      %p241 = scmp.eq.s32.totalorder %s25, 1
      %p242 = scmp.ne.s32.totalorder %s237, %s239
      %p243 = scmp.eq.s32.totalorder %s25, 0
      %p244 = por %p242, %p243
      %p245 = scmp.ne.s32.totalorder %s237, %s239
      %p246 = scmp.eq.s32.totalorder %s30, 1
      %p247 = por %p245, %p246
      %p248 = scmp.ne.s32.totalorder %s239, %s240
      %p249 = scmp.eq.s32.totalorder %s30, 0
      %p250 = por %p248, %p249
      %p251 = scmp.ne.s32.totalorder %s239, %s240
      %p252 = scmp.eq.s32.totalorder %s31, 1
      %p253 = por %p251, %p252
      %p255 = scmp.ne.s32.totalorder %s240, %s254
      %p256 = scmp.eq.s32.totalorder %s31, 0
      %p257 = por %p255, %p256
      %s259 = sadd.s32 %s258, 1
      %p262 = scmp.eq.s32.totalorder %s25, 1
      %p263 = scmp.ne.s32.totalorder %s258, %s260
      %p264 = scmp.eq.s32.totalorder %s25, 0
      %p265 = por %p263, %p264
      %p266 = scmp.ne.s32.totalorder %s258, %s260
      %p267 = scmp.eq.s32.totalorder %s30, 1
      %p268 = por %p266, %p267
      %p269 = scmp.ne.s32.totalorder %s260, %s261
      %p270 = scmp.eq.s32.totalorder %s30, 0
      %p271 = por %p269, %p270
      %p272 = scmp.ne.s32.totalorder %s260, %s261
      %p273 = scmp.eq.s32.totalorder %s31, 1
      %p274 = por %p272, %p273
      %p276 = scmp.ne.s32.totalorder %s261, %s275
      %p277 = scmp.eq.s32.totalorder %s31, 0
      %p278 = por %p276, %p277
      %s280 = sadd.s32 %s279, 1
      %p283 = scmp.eq.s32.totalorder %s25, 1
      %p284 = scmp.ne.s32.totalorder %s279, %s281
      %p285 = scmp.eq.s32.totalorder %s25, 0
      %p286 = por %p284, %p285
      %p287 = scmp.ne.s32.totalorder %s279, %s281
      %p288 = scmp.eq.s32.totalorder %s30, 1
      %p289 = por %p287, %p288
      %p290 = scmp.ne.s32.totalorder %s281, %s282
      %p291 = scmp.eq.s32.totalorder %s30, 0
      %p292 = por %p290, %p291
      %p293 = scmp.ne.s32.totalorder %s281, %s282
      %p294 = scmp.eq.s32.totalorder %s31, 1
      %p295 = por %p293, %p294
      %p297 = scmp.ne.s32.totalorder %s282, %s296
      %p298 = scmp.eq.s32.totalorder %s31, 0
      %p299 = por %p297, %p298
      %s301 = sadd.s32 %s300, 1
      %p304 = scmp.eq.s32.totalorder %s25, 1
      %p305 = scmp.ne.s32.totalorder %s300, %s302
      %p306 = scmp.eq.s32.totalorder %s25, 0
      %p307 = por %p305, %p306
      %p308 = scmp.ne.s32.totalorder %s300, %s302
      %p309 = scmp.eq.s32.totalorder %s30, 1
      %p310 = por %p308, %p309
      %p311 = scmp.ne.s32.totalorder %s302, %s303
      %p312 = scmp.eq.s32.totalorder %s30, 0
      %p313 = por %p311, %p312
      %p314 = scmp.ne.s32.totalorder %s302, %s303
      %p315 = scmp.eq.s32.totalorder %s31, 1
      %p316 = por %p314, %p315
      %p318 = scmp.ne.s32.totalorder %s303, %s317
      %p319 = scmp.eq.s32.totalorder %s31, 0
      %p320 = por %p318, %p319
      %s322 = sadd.s32 %s321, 1
      %p325 = scmp.eq.s32.totalorder %s25, 1
      %p326 = scmp.ne.s32.totalorder %s321, %s323
      %p327 = scmp.eq.s32.totalorder %s25, 0
      %p328 = por %p326, %p327
      %p329 = scmp.ne.s32.totalorder %s321, %s323
      %p330 = scmp.eq.s32.totalorder %s30, 1
      %p331 = por %p329, %p330
      %p332 = scmp.ne.s32.totalorder %s323, %s324
      %p333 = scmp.eq.s32.totalorder %s30, 0
      %p334 = por %p332, %p333
      %p335 = scmp.ne.s32.totalorder %s323, %s324
      %p336 = scmp.eq.s32.totalorder %s31, 1
      %p337 = por %p335, %p336
      %p339 = scmp.ne.s32.totalorder %s324, %s338
      %p340 = scmp.eq.s32.totalorder %s31, 0
      %p341 = por %p339, %p340
      %s342 = ssub.s32 %s25, %s32
      %p343 = scmp.eq.s32.totalorder %s342, 0
      %s345 = sadd.s32 %s344, 1
      %s346 = scalar_select %p343, %s344, %s345
      %p349 = pneg %p343
      %p350 = scmp.eq.s32.totalorder %s25, 1
      %p351 = por %p349, %p350
      %p352 = scmp.ne.s32.totalorder %s344, %s347
      %p353 = scmp.eq.s32.totalorder %s25, 0
      %p354 = por %p352, %p353
      %p355 = scmp.ne.s32.totalorder %s344, %s347
      %p356 = scmp.eq.s32.totalorder %s30, 1
      %p357 = por %p355, %p356
      %p358 = scmp.ne.s32.totalorder %s347, %s348
      %p359 = scmp.eq.s32.totalorder %s30, 0
      %p360 = por %p358, %p359
      %p361 = scmp.ne.s32.totalorder %s347, %s348
      %p362 = scmp.eq.s32.totalorder %s31, 1
      %p363 = por %p361, %p362
      %p365 = scmp.ne.s32.totalorder %s348, %s364
      %p366 = scmp.eq.s32.totalorder %s31, 0
      %p367 = por %p365, %p366
      %p368 = scmp.le.s32.totalorder 1, %s25
      %p369 = scmp.lt.s32.totalorder %s25, 3
      %p370 = pnand %p368, %p369
      %p371 = pneg %p370
      // Predicated region
      $region9: #{tpu_custom_call.1} parent=5 // pred_check
        _
      $region10: #{tpu_custom_call.1} parent=5 // pred_check_branch
        %373 = sbr.rel (%p370) target = $region12
      $region11: #{tpu_custom_call.1} parent=5 // pred_region
        %s374 = ssub.s32 %s25, 1
        // Predicated region
        $region13: #{tpu_custom_call.1} parent=11 // pred_check
          %p375 = pneg %p124
        $region14: #{tpu_custom_call.1} parent=11 // pred_check_branch
          %377 = sbr.rel (%p375) target = $region16
        $region15: #{tpu_custom_call.1} parent=11 // pred_region
          _
        $region16: #{tpu_custom_call.1} parent=11 // pred_fallthru
          _
        // Predicated region
        $region17: #{tpu_custom_call.1} parent=11 // pred_check
          %p378 = pneg %p145
        $region18: #{tpu_custom_call.1} parent=11 // pred_check_branch
          %380 = sbr.rel (%p378) target = $region20
        $region19: #{tpu_custom_call.1} parent=11 // pred_region
          _
        $region20: #{tpu_custom_call.1} parent=11 // pred_fallthru
          _
        // Predicated region
        $region21: #{tpu_custom_call.1} parent=11 // pred_check
          %p381 = pneg %p166
        $region22: #{tpu_custom_call.1} parent=11 // pred_check_branch
          %383 = sbr.rel (%p381) target = $region24
        $region23: #{tpu_custom_call.1} parent=11 // pred_region
          _
        $region24: #{tpu_custom_call.1} parent=11 // pred_fallthru
          _
        // Predicated region
        $region25: #{tpu_custom_call.1} parent=11 // pred_check
          %p384 = pneg %p187
        $region26: #{tpu_custom_call.1} parent=11 // pred_check_branch
          %386 = sbr.rel (%p384) target = $region28
        $region27: #{tpu_custom_call.1} parent=11 // pred_region
          _
        $region28: #{tpu_custom_call.1} parent=11 // pred_fallthru
          _
        // Predicated region
        $region29: #{tpu_custom_call.1} parent=11 // pred_check
          %p387 = pneg %p208
        $region30: #{tpu_custom_call.1} parent=11 // pred_check_branch
          %389 = sbr.rel (%p387) target = $region32
        $region31: #{tpu_custom_call.1} parent=11 // pred_region
          _
        $region32: #{tpu_custom_call.1} parent=11 // pred_fallthru
          _
        // Predicated region
        $region33: #{tpu_custom_call.1} parent=11 // pred_check
          %p390 = pneg %p229
        $region34: #{tpu_custom_call.1} parent=11 // pred_check_branch
          %392 = sbr.rel (%p390) target = $region36
        $region35: #{tpu_custom_call.1} parent=11 // pred_region
          _
        $region36: #{tpu_custom_call.1} parent=11 // pred_fallthru
          _
        // Predicated region
        $region37: #{tpu_custom_call.1} parent=11 // pred_check
          %p393 = pneg %p250
        $region38: #{tpu_custom_call.1} parent=11 // pred_check_branch
          %395 = sbr.rel (%p393) target = $region40
        $region39: #{tpu_custom_call.1} parent=11 // pred_region
          _
        $region40: #{tpu_custom_call.1} parent=11 // pred_fallthru
          _
        // Predicated region
        $region41: #{tpu_custom_call.1} parent=11 // pred_check
          %p396 = pneg %p271
        $region42: #{tpu_custom_call.1} parent=11 // pred_check_branch
          %398 = sbr.rel (%p396) target = $region44
        $region43: #{tpu_custom_call.1} parent=11 // pred_region
          _
        $region44: #{tpu_custom_call.1} parent=11 // pred_fallthru
          _
        // Predicated region
        $region45: #{tpu_custom_call.1} parent=11 // pred_check
          %p399 = pneg %p292
        $region46: #{tpu_custom_call.1} parent=11 // pred_check_branch
          %401 = sbr.rel (%p399) target = $region48
        $region47: #{tpu_custom_call.1} parent=11 // pred_region
          _
        $region48: #{tpu_custom_call.1} parent=11 // pred_fallthru
          _
        // Predicated region
        $region49: #{tpu_custom_call.1} parent=11 // pred_check
          %p402 = pneg %p313
        $region50: #{tpu_custom_call.1} parent=11 // pred_check_branch
          %404 = sbr.rel (%p402) target = $region52
        $region51: #{tpu_custom_call.1} parent=11 // pred_region
          _
        $region52: #{tpu_custom_call.1} parent=11 // pred_fallthru
          _
        // Predicated region
        $region53: #{tpu_custom_call.1} parent=11 // pred_check
          %p405 = pneg %p334
        $region54: #{tpu_custom_call.1} parent=11 // pred_check_branch
          %407 = sbr.rel (%p405) target = $region56
        $region55: #{tpu_custom_call.1} parent=11 // pred_region
          _
        $region56: #{tpu_custom_call.1} parent=11 // pred_fallthru
          _
      $region12: #{tpu_custom_call.1} parent=5 // pred_fallthru
        _
      %p408 = scmp.lt.s32.totalorder %s25, 2
      // Predicated region
      $region57: #{tpu_custom_call.1} parent=5 // pred_check
        %p409 = pneg %p408
      $region58: #{tpu_custom_call.1} parent=5 // pred_check_branch
        %411 = sbr.rel (%p409) target = $region60
      $region59: #{tpu_custom_call.1} parent=5 // pred_region
        // Predicated region
        $region61: #{tpu_custom_call.1} parent=59 // pred_check
          %p412 = pneg %p45
        $region62: #{tpu_custom_call.1} parent=59 // pred_check_branch
          %414 = sbr.rel (%p412) target = $region64
        $region63: #{tpu_custom_call.1} parent=59 // pred_region
          %p415 = scmp.lt.s32.totalorder %s25, 1
          %s416 = scalar_select %p415, %s25, 1
          %s417 = smul.addr %s416, 2
          %s418 = smul.addr %s417, 4
          %s419 = scalar_lea.vmem %s0, %s418
        $region64: #{tpu_custom_call.1} parent=59 // pred_fallthru
          _
        // Predicated region
        $region65: #{tpu_custom_call.1} parent=59 // pred_check
          %p420 = pneg %p71
        $region66: #{tpu_custom_call.1} parent=59 // pred_check_branch
          %422 = sbr.rel (%p420) target = $region68
        $region67: #{tpu_custom_call.1} parent=59 // pred_region
          %p423 = scmp.lt.s32.totalorder %s25, 1
          %s424 = scalar_select %p423, %s25, 1
          %s425 = smul.addr %s424, 2
          %s426 = smul.addr %s425, 4
          %s427 = scalar_lea.vmem %s1, %s426
        $region68: #{tpu_custom_call.1} parent=59 // pred_fallthru
          _
        // Predicated region
        $region69: #{tpu_custom_call.1} parent=59 // pred_check
          %p428 = pneg %p97
        $region70: #{tpu_custom_call.1} parent=59 // pred_check_branch
          %430 = sbr.rel (%p428) target = $region72
        $region71: #{tpu_custom_call.1} parent=59 // pred_region
          %p431 = scmp.lt.s32.totalorder %s25, 1
          %s432 = scalar_select %p431, %s25, 1
          %s433 = scalar_lea.vmem %s2, %s432
        $region72: #{tpu_custom_call.1} parent=59 // pred_fallthru
          _
      $region60: #{tpu_custom_call.1} parent=5 // pred_fallthru
        _
      %p434 = scmp.le.s32.totalorder 1, %s25
      %p435 = scmp.lt.s32.totalorder %s25, 3
      %p436 = pnand %p434, %p435
      %p437 = pneg %p436
      // Predicated region
      $region73: #{tpu_custom_call.1} parent=5 // pred_check
        _
      $region74: #{tpu_custom_call.1} parent=5 // pred_check_branch
        %439 = sbr.rel (%p436) target = $region76
      $region75: #{tpu_custom_call.1} parent=5 // pred_region
        %s440 = ssub.s32 %s25, 1
        %p441 = scmp.lt.s32.totalorder %s30, 1
        %s442 = scalar_select %p441, %s30, 1
        %s443 = smul.addr %s442, 2
        %s444 = smul.addr %s443, 4
        %s445 = scalar_lea.vmem %s0, %s444
        %p446 = pneg %p51
        %p447 = pneg %p48
        %p448 = scmp.lt.s32.totalorder %s30, 1
        %s449 = scalar_select %p448, %s30, 1
        %s450 = smul.addr %s449, 2
        %s451 = smul.addr %s450, 4
        %s452 = scalar_lea.vmem %s1, %s451
        %p453 = pneg %p77
        %p454 = pneg %p74
        %p455 = scmp.lt.s32.totalorder %s30, 1
        %s456 = scalar_select %p455, %s30, 1
        %s457 = scalar_lea.vmem %s2, %s456
        %p458 = pneg %p103
        %p459 = pneg %p100
        %p460 = pneg %p124
        %p461 = pneg %p121
        %p462 = pneg %p145
        %p463 = pneg %p142
        %p464 = pneg %p166
        %p465 = pneg %p163
        %p466 = pneg %p187
        %p467 = pneg %p184
        %p468 = pneg %p208
        %p469 = pneg %p205
        %p470 = pneg %p229
        %p471 = pneg %p226
        %p472 = pneg %p250
        %p473 = pneg %p247
        %p474 = pneg %p271
        %p475 = pneg %p268
        %p476 = pneg %p292
        %p477 = pneg %p289
        %p478 = pneg %p313
        %p479 = pneg %p310
        %p480 = pneg %p334
        %p481 = pneg %p331
        %p482 = pneg %p360
        %p483 = pneg %p357
        %s484 = sand.u32 %s347, 1
        %s485 = scalar_lea.sflag [#allocation5], %s484
        %s486 = sand.u32 %s347, 1
        %s487 = smul.addr %s486, 2
        %s488 = scalar_lea.vmem [#allocation4], %s487
        %p489 = scmp.lt.s32.totalorder %s30, 1
        %s490 = scalar_select %p489, %s30, 1
        %s491 = smul.addr %s490, 2
        %s492 = smul.addr %s491, 4
        %s493 = scalar_lea.vmem %s0, %s492
        %p494 = scmp.lt.s32.totalorder %s30, 1
        %s495 = scalar_select %p494, %s30, 1
        %s496 = smul.addr %s495, 2
        %s497 = smul.addr %s496, 4
        %s498 = scalar_lea.vmem %s1, %s497
        %p499 = scmp.lt.s32.totalorder %s30, 1
        %s500 = scalar_select %p499, %s30, 1
        %s501 = scalar_lea.vmem %s2, %s500
        %v503 = vld [vmem:[%s493] sm:$0xff]
        %v504 = vld [vmem:[%s498] sm:$0xff]
        %v505 = vmul.f32 %v503, %v503
        %v507 = vcombine.high %v505, %v505
        %vm509 = vcmask 1043456
        %v510 = vsel %vm509, %v505, 0.0
        %v511 = vrot.slane %v510, 4
        %v512 = vadd.f32 %v510, %v511
        %v513 = vrot.slane %v512, 2
        %v514 = vadd.f32 %v512, %v513
        %v515 = vrot.slane %v514, 1
        %v516 = vadd.f32 %v514, %v515
        %v517 = vsel %vm509, %v507, 0.0
        %v518 = vrot.slane %v517, 4
        %v519 = vadd.f32 %v517, %v518
        %v520 = vrot.slane %v519, 2
        %v521 = vadd.f32 %v519, %v520
        %v522 = vrot.slane %v521, 1
        %v523 = vadd.f32 %v521, %v522
        %v524 = vmul.f32 %v504, %v504
        %v526 = vcombine.high %v524, %v524
        %v528 = vsel %vm509, %v524, 0.0
        %v529 = vrot.slane %v528, 4
        %v530 = vadd.f32 %v528, %v529
        %v531 = vrot.slane %v530, 2
        %v532 = vadd.f32 %v530, %v531
        %v533 = vrot.slane %v532, 1
        %v534 = vadd.f32 %v532, %v533
        %v535 = vsel %vm509, %v526, 0.0
        %v536 = vrot.slane %v535, 4
        %v537 = vadd.f32 %v535, %v536
        %v538 = vrot.slane %v537, 2
        %v539 = vadd.f32 %v537, %v538
        %v540 = vrot.slane %v539, 1
        %v541 = vadd.f32 %v539, %v540
        %v542 = vld [vmem:[%s501] sm:$0x1]
        %v543 = vld [vmem:[%s3] sm:$0xff]
        %v544 = vld [vmem:[%s3 + $0x8] sm:$0xff]
        %v545 = vld [vmem:[%s3 + $0x10] sm:$0xff]
        %v546 = vld [vmem:[%s3 + $0x18] sm:$0xff]
        %v547 = vld [vmem:[%s3 + $0x20] sm:$0xff]
        %v548 = vld [vmem:[%s3 + $0x28] sm:$0xff]
        %v549 = vld [vmem:[%s3 + $0x30] sm:$0xff]
        %v550 = vld [vmem:[%s3 + $0x38] sm:$0xff]
        %v551 = vld [vmem:[%s3 + $0x40] sm:$0xff]
        %v552 = vld [vmem:[%s3 + $0x48] sm:$0xff]
        %v553 = vld [vmem:[%s3 + $0x50] sm:$0xff]
        %v554 = vld [vmem:[%s3 + $0x58] sm:$0xff]
        %v555 = vld [vmem:[%s3 + $0x60] sm:$0xff]
        %v556 = vld [vmem:[%s3 + $0x68] sm:$0xff]
        %v557 = vld [vmem:[%s3 + $0x70] sm:$0xff]
        %v558 = vld [vmem:[%s3 + $0x78] sm:$0xff]
        %vm559 = vcmask 523264
        %v561 = vsel %vm559, %v542, 0
        %563 = vmatprep.subr.mxu0 %v544
        %564 = vmatpush1.msra.mxu0 %v543
        %565 = vmatprep.subr.mxu0 %v546
        %566 = vmatpush1.msra.mxu0 %v545
        %567 = vmatprep.subr.mxu0 %v548
        %568 = vmatpush1.msra.mxu0 %v547
        %569 = vmatprep.subr.mxu0 %v550
        %570 = vmatpush1.msra.mxu0 %v549
        %571 = vmatprep.subr.mxu0 %v552
        %572 = vmatpush1.msra.mxu0 %v551
        %573 = vmatprep.subr.mxu0 %v554
        %574 = vmatpush1.msra.mxu0 %v553
        %575 = vmatprep.subr.mxu0 %v556
        %576 = vmatpush1.msra.mxu0 %v555
        %577 = vmatprep.subr.mxu0 %v558
        %578 = vmatpush1.msra.mxu0 %v557
        %579 = vmatprep.subr.mxu0 0.0
        %580 = vmatpush1.msra.mxu0 0.0
        %581 = vmatprep.subr.mxu0 0.0
        %582 = vmatpush1.msra.mxu0 0.0
        %583 = vmatprep.subr.mxu0 0.0
        %584 = vmatpush1.msra.mxu0 0.0
        %585 = vmatprep.subr.mxu0 0.0
        %586 = vmatpush1.msra.mxu0 0.0
        %587 = vmatprep.subr.mxu0 0.0
        %588 = vmatpush1.msra.mxu0 0.0
        %589 = vmatprep.subr.mxu0 0.0
        %590 = vmatpush1.msra.mxu0 0.0
        %591 = vmatprep.subr.mxu0 0.0
        %592 = vmatpush1.msra.mxu0 0.0
        %593 = vmatprep.subr.mxu0 0.0
        %594 = vmatpush1.msra.mxu0 0.0
        %595 = vmatprep.subr.mxu0 0.0
        %596 = vmatpush1.msra.mxu0 0.0
        %597 = vmatprep.subr.mxu0 0.0
        %598 = vmatpush1.msra.mxu0 0.0
        %599 = vmatprep.subr.mxu0 0.0
        %600 = vmatpush1.msra.mxu0 0.0
        %601 = vmatprep.subr.mxu0 0.0
        %602 = vmatpush1.msra.mxu0 0.0
        %603 = vmatprep.subr.mxu0 0.0
        %604 = vmatpush1.msra.mxu0 0.0
        %605 = vmatprep.subr.mxu0 0.0
        %606 = vmatpush1.msra.mxu0 0.0
        %607 = vmatprep.subr.mxu0 0.0
        %608 = vmatpush1.msra.mxu0 0.0
        %609 = vmatprep.subr.mxu0 0.0
        %610 = vmatpush1.msra.mxu0 0.0
        %611 = vmatprep.subr.mxu0 0.0
        %612 = vmatpush1.msra.mxu0 0.0
        %613 = vmatprep.subr.mxu0 0.0
        %614 = vmatpush1.msra.mxu0 0.0
        %615 = vmatprep.subr.mxu0 0.0
        %616 = vmatpush1.msra.mxu0 0.0
        %617 = vmatprep.subr.mxu0 0.0
        %618 = vmatpush1.msra.mxu0 0.0
        %619 = vmatprep.subr.mxu0 0.0
        %620 = vmatpush1.msra.mxu0 0.0
        %621 = vmatprep.subr.mxu0 0.0
        %622 = vmatpush1.msra.mxu0 0.0
        %623 = vmatprep.subr.mxu0 0.0
        %624 = vmatpush1.msra.mxu0 0.0
        %625 = vmatprep.subr.mxu0 0.0
        %626 = vmatpush1.msra.mxu0 0.0
        %627 = vmatprep.mubr.f32.mxu0 0.0
        %628 = vmatmul.mubr.f32.gmra.mrb[0].mxu0 %v561
        %v629 = vpop.f32.mrb[0].mxu0
        %v630 = vadd.f32 0.0, %v629
        %v631 = vpop.f32.mrb[0].mxu0
        %v632 = vadd.f32 0.0, %v631
        %633 = vdwg.mxu0
        %634 = vst [vmem:[#allocation2] sm:$0xff] 0.0
        %635 = vst [vmem:[#allocation2 + $0x8] sm:$0xff] 0.0
        %636 = vst [vmem:[#allocation2 + $0x10] sm:$0xff] 0.0
        %637 = vst [vmem:[#allocation2 + $0x18] sm:$0xff] 0.0
        %638 = vst [vmem:[#allocation2 + $0x20] sm:$0xff] 0.0
        %639 = vst [vmem:[#allocation2 + $0x28] sm:$0xff] 0.0
        %640 = vst [vmem:[#allocation2 + $0x30] sm:$0xff] 0.0
        %641 = vst [vmem:[#allocation2 + $0x38] sm:$0xff] 0.0
        %642 = vst [vmem:[#allocation2 + $0x40] sm:$0xff] 0.0
        %643 = vst [vmem:[#allocation2 + $0x48] sm:$0xff] 0.0
        %644 = vst [vmem:[#allocation2 + $0x50] sm:$0xff] 0.0
        %645 = vst [vmem:[#allocation2 + $0x58] sm:$0xff] 0.0
        %646 = vst [vmem:[#allocation2 + $0x60] sm:$0xff] 0.0
        %647 = vst [vmem:[#allocation2 + $0x68] sm:$0xff] 0.0
        %648 = vst [vmem:[#allocation2 + $0x70] sm:$0xff] 0.0
        %649 = vst [vmem:[#allocation2 + $0x78] sm:$0xff] 0.0
        %650 = vst [vmem:[#allocation2 + $0x80] sm:$0xff] 0.0
        %651 = vst [vmem:[#allocation2 + $0x88] sm:$0xff] 0.0
        %652 = vst [vmem:[#allocation2 + $0x90] sm:$0xff] 0.0
        %653 = vst [vmem:[#allocation2 + $0x98] sm:$0xff] 0.0
        %654 = vst [vmem:[#allocation2 + $0xa0] sm:$0xff] 0.0
        %655 = vst [vmem:[#allocation2 + $0xa8] sm:$0xff] 0.0
        %656 = vst [vmem:[#allocation2 + $0xb0] sm:$0xff] 0.0
        %657 = vst [vmem:[#allocation2 + $0xb8] sm:$0xff] 0.0
        %658 = vst [vmem:[#allocation2 + $0xc0] sm:$0xff] 0.0
        %659 = vst [vmem:[#allocation2 + $0xc8] sm:$0xff] 0.0
        %660 = vst [vmem:[#allocation2 + $0xd0] sm:$0xff] 0.0
        %661 = vst [vmem:[#allocation2 + $0xd8] sm:$0xff] 0.0
        %662 = vst [vmem:[#allocation2 + $0xe0] sm:$0xff] 0.0
        %663 = vst [vmem:[#allocation2 + $0xe8] sm:$0xff] 0.0
        %664 = vst [vmem:[#allocation2 + $0xf0] sm:$0xff] 0.0
        %665 = vst [vmem:[#allocation2 + $0xf8] sm:$0xff] 0.0
        %v668 = vrot.slane %v630, 6
        %v669 = vrot.slane %v632, 6
        %vm672 = vcmask 1040384
        %v673 = vsel %vm672, %v516, %v534
        %v674 = vsel %vm672, %v523, %v541
        %vm675 = vcmask 1041408
        %v676 = vsel %vm675, %v673, %v668
        %v677 = vsel %vm675, %v674, %v669
        %vm678 = vcmask 1042432
        %v679 = vsel %vm678, %v676, 0.0
        %v680 = vsel %vm678, %v677, 0.0
        %681 = vst [vmem:[#allocation2 + $0x8] sm:$0xff] %v679
        %682 = vst [vmem:[#allocation2 + $0x10] sm:$0xff] %v680
        %v683 = vlaneseq
        %v684 = vand.u32 %v683, 127
        %v685 = vadd.s32 %v684, 128
        %vm686 = vcmp.lt.s32.totalorder %v684, 0
        %v687 = vsub.s32 0, %v684
        %v688 = vsel %vm686, %v687, %v684
        %v689 = vshrl.u32 %v688, 4
        %v690 = vand.u32 %v688, 15
        %v691 = vsub.s32 0, %v690
        %v692 = vsel %vm686, %v691, %v690
        %vm693 = vcmp.lt.s32.totalorder %v685, 0
        %v694 = vsub.s32 0, %v685
        %v695 = vsel %vm693, %v694, %v685
        %v696 = vshrl.u32 %v695, 4
        %v697 = vand.u32 %v695, 15
        %v698 = vsub.s32 0, %v697
        %v699 = vsel %vm693, %v698, %v697
        %vm700 = vcmp.ne.s32.totalorder %v692, 0
        %vm701 = vcmp.ne.s32.totalorder %v699, 0
        %vm702 = vcmp.lt.s32.totalorder %v692, 0
        %vm703 = vcmp.lt.s32.totalorder %v699, 0
        %vm704 = vmand %vm702, %vm700
        %vm705 = vmand %vm703, %vm701
        %v706 = vadd.s32 %v692, 16
        %v707 = vadd.s32 %v699, 16
        %v708 = vsel %vm704, %v706, %v692
        %v709 = vsel %vm705, %v707, %v699
        %v710 = vadd.s32 %v708, 4294967295
        %v711 = vadd.s32 %v709, 4294967295
        %vm712 = vcmp.ge.s32.totalorder %v710, 0
        %vm713 = vcmp.ge.s32.totalorder %v711, 0
        %vm714 = vcmp.lt.s32.totalorder %v710, 16
        %vm715 = vcmp.lt.s32.totalorder %v711, 16
        %vm716 = vmand %vm712, %vm714
        %vm717 = vmand %vm713, %vm715
        %v718 = vadd.s32 %v708, 1
        %v719 = vadd.s32 %v709, 1
        %vm720 = vcmp.ge.s32.totalorder %v718, 0
        %vm721 = vcmp.ge.s32.totalorder %v719, 0
        %vm722 = vcmp.lt.s32.totalorder %v718, 16
        %vm723 = vcmp.lt.s32.totalorder %v719, 16
        %vm724 = vmand %vm720, %vm722
        %vm725 = vmand %vm721, %vm723
        %v726 = vadd.s32 %v708, 4294967294
        %v727 = vadd.s32 %v709, 4294967294
        %vm728 = vcmp.ge.s32.totalorder %v726, 0
        %vm729 = vcmp.ge.s32.totalorder %v727, 0
        %vm730 = vcmp.lt.s32.totalorder %v726, 16
        %vm731 = vcmp.lt.s32.totalorder %v727, 16
        %vm732 = vmand %vm728, %vm730
        %vm733 = vmand %vm729, %vm731
        %v734 = vadd.s32 %v708, 2
        %v735 = vadd.s32 %v709, 2
        %vm736 = vcmp.ge.s32.totalorder %v734, 0
        %vm737 = vcmp.ge.s32.totalorder %v735, 0
        %vm738 = vcmp.lt.s32.totalorder %v734, 16
        %vm739 = vcmp.lt.s32.totalorder %v735, 16
        %vm740 = vmand %vm736, %vm738
        %vm741 = vmand %vm737, %vm739
        %v742 = vadd.s32 %v708, 4294967292
        %v743 = vadd.s32 %v709, 4294967292
        %vm744 = vcmp.ge.s32.totalorder %v742, 0
        %vm745 = vcmp.ge.s32.totalorder %v743, 0
        %vm746 = vcmp.lt.s32.totalorder %v742, 16
        %vm747 = vcmp.lt.s32.totalorder %v743, 16
        %vm748 = vmand %vm744, %vm746
        %vm749 = vmand %vm745, %vm747
        %v750 = vadd.s32 %v708, 4
        %v751 = vadd.s32 %v709, 4
        %vm752 = vcmp.ge.s32.totalorder %v750, 0
        %vm753 = vcmp.ge.s32.totalorder %v751, 0
        %vm754 = vcmp.lt.s32.totalorder %v750, 16
        %vm755 = vcmp.lt.s32.totalorder %v751, 16
        %vm756 = vmand %vm752, %vm754
        %vm757 = vmand %vm753, %vm755
        %v758 = vld [vmem:[%s5] sm:$0xff]
        %v759 = vld [vmem:[%s5 + $0x8] sm:$0xff]
        %761 = vset.pattern.permute.xlu0 0
        %762 = vperm.xlu0 %761, %v758
        %v763 = vpop.permute.xlu0 %762
        %766 = vset.pattern.permute.xlu0 0
        %767 = vperm.xlu0 %766, %v759
        %v768 = vpop.permute.xlu0 %767
        %v770 = vld [vmem:[#allocation2] sm:$0xff]
        %v771 = vld [vmem:[#allocation2 + $0x8] sm:$0xff]
        %v772 = vld [vmem:[#allocation2 + $0x10] sm:$0xff]
        %v773 = vsel %vm716, 1, 0
        %v774 = vsel %vm717, 1, 0
        %vm775 = vcmp.eq.s32.totalorder %v773, 1
        %vm776 = vcmp.eq.s32.totalorder %v774, 1
        %780 = vrot.lane.b32.xlu0 %v770, 17
        %v781 = vpop.permute.xlu0 %780
        %782 = vrot.lane.b32.xlu0 %v771, 17
        %v783 = vpop.permute.xlu0 %782
        %784 = vrot.lane.b32.xlu0 %v772, 17
        %v785 = vpop.permute.xlu0 %784
        %vm786 = vcmask 138240
        %v787 = vsel %vm786, %v781, %v783
        %v788 = vsel %vm786, %v783, %v785
        %v791 = vsel %vm775, %v787, 0.0
        %v792 = vsel %vm776, %v788, 0.0
        %v793 = vld [vmem:[%s4] sm:$0xf]
        %v794 = vld [vmem:[%s4 + $0x4] sm:$0xf]
        %v795 = vpack.c.bf16 %v791, %v791
        %v796 = vpack.c.bf16 %v792, %v792
        %v799 = vunpack.c.l.b16 %v793
        %v800 = vunpack.c.l.b16 %v794
        %v801 = vpack.c.b16 %v800, %v799
        %vm802 = vcmask 64512
        %v804 = vsel %vm802, %v801, 0
        %v807 = vsel %vm509, %v795, 0
        %v810 = vsel %vm509, %v796, 0
        %812 = vmatprep.subr.bf16.mxu0 %v810
        %813 = vmatpush1.bf16.msra.mxu0 %v807
        %814 = vmatprep.subr.bf16.mxu0 0
        %815 = vmatpush1.bf16.msra.mxu0 0
        %816 = vmatprep.subr.bf16.mxu0 0
        %817 = vmatpush1.bf16.msra.mxu0 0
        %818 = vmatprep.subr.bf16.mxu0 0
        %819 = vmatpush1.bf16.msra.mxu0 0
        %820 = vmatprep.subr.bf16.mxu0 0
        %821 = vmatpush1.bf16.msra.mxu0 0
        %822 = vmatprep.subr.bf16.mxu0 0
        %823 = vmatpush1.bf16.msra.mxu0 0
        %824 = vmatprep.subr.bf16.mxu0 0
        %825 = vmatpush1.bf16.msra.mxu0 0
        %826 = vmatprep.subr.bf16.mxu0 0
        %827 = vmatpush1.bf16.msra.mxu0 0
        %828 = vmatprep.subr.bf16.mxu0 0
        %829 = vmatpush1.bf16.msra.mxu0 0
        %830 = vmatprep.subr.bf16.mxu0 0
        %831 = vmatpush1.bf16.msra.mxu0 0
        %832 = vmatprep.subr.bf16.mxu0 0
        %833 = vmatpush1.bf16.msra.mxu0 0
        %834 = vmatprep.subr.bf16.mxu0 0
        %835 = vmatpush1.bf16.msra.mxu0 0
        %836 = vmatprep.subr.bf16.mxu0 0
        %837 = vmatpush1.bf16.msra.mxu0 0
        %838 = vmatprep.subr.bf16.mxu0 0
        %839 = vmatpush1.bf16.msra.mxu0 0
        %840 = vmatprep.subr.bf16.mxu0 0
        %841 = vmatpush1.bf16.msra.mxu0 0
        %842 = vmatprep.subr.bf16.mxu0 0
        %843 = vmatpush1.bf16.msra.mxu0 0
        %844 = vmatprep.mubr.bf16.mxu0 0
        %845 = vmatmul.mubr.bf16.gmra.mrb[0].mxu0 %v804
        %v846 = vpop.f32.mrb[0].mxu0
        %v847 = vadd.f32 0.0, %v846
        %v848 = vpop.f32.mrb[0].mxu0
        %v849 = vadd.f32 0.0, %v848
        %v850 = vpop.f32.mrb[0].mxu0
        %v851 = vadd.f32 0.0, %v850
        %v852 = vpop.f32.mrb[0].mxu0
        %v853 = vadd.f32 0.0, %v852
        %854 = vdwg.mxu0
        %v855 = vadd.f32 %v763, %v847
        %v856 = vadd.f32 %v763, %v849
        %v857 = vadd.f32 %v768, %v851
        %v858 = vadd.f32 %v768, %v853
        %s859 = scalar_lea.vmem %s4, 8
        %v860 = vld [vmem:[%s859] sm:$0xf]
        %v861 = vld [vmem:[%s859 + $0x4] sm:$0xf]
        %v862 = vpack.c.bf16 %v770, %v770
        %v863 = vpack.c.bf16 %v771, %v771
        %v864 = vpack.c.bf16 %v772, %v772
        %v867 = vunpack.c.l.b16 %v860
        %v868 = vunpack.c.l.b16 %v861
        %v869 = vpack.c.b16 %v868, %v867
        %873 = vrot.lane.b32.xlu0 %v862, 16
        %v874 = vpop.permute.xlu0 %873
        %875 = vrot.lane.b32.xlu0 %v863, 16
        %v876 = vpop.permute.xlu0 %875
        %877 = vrot.lane.b32.xlu0 %v864, 16
        %v878 = vpop.permute.xlu0 %877
        %vm879 = vcmask 130048
        %v880 = vsel %vm879, %v874, %v876
        %v881 = vsel %vm879, %v876, %v878
        %v883 = vsel %vm802, %v869, 0
        %v886 = vsel %vm509, %v880, 0
        %v889 = vsel %vm509, %v881, 0
        %891 = vmatprep.subr.bf16.mxu0 %v889
        %892 = vmatpush1.bf16.msra.mxu0 %v886
        %893 = vmatprep.subr.bf16.mxu0 0
        %894 = vmatpush1.bf16.msra.mxu0 0
        %895 = vmatprep.subr.bf16.mxu0 0
        %896 = vmatpush1.bf16.msra.mxu0 0
        %897 = vmatprep.subr.bf16.mxu0 0
        %898 = vmatpush1.bf16.msra.mxu0 0
        %899 = vmatprep.subr.bf16.mxu0 0
        %900 = vmatpush1.bf16.msra.mxu0 0
        %901 = vmatprep.subr.bf16.mxu0 0
        %902 = vmatpush1.bf16.msra.mxu0 0
        %903 = vmatprep.subr.bf16.mxu0 0
        %904 = vmatpush1.bf16.msra.mxu0 0
        %905 = vmatprep.subr.bf16.mxu0 0
        %906 = vmatpush1.bf16.msra.mxu0 0
        %907 = vmatprep.subr.bf16.mxu0 0
        %908 = vmatpush1.bf16.msra.mxu0 0
        %909 = vmatprep.subr.bf16.mxu0 0
        %910 = vmatpush1.bf16.msra.mxu0 0
        %911 = vmatprep.subr.bf16.mxu0 0
        %912 = vmatpush1.bf16.msra.mxu0 0
        %913 = vmatprep.subr.bf16.mxu0 0
        %914 = vmatpush1.bf16.msra.mxu0 0
        %915 = vmatprep.subr.bf16.mxu0 0
        %916 = vmatpush1.bf16.msra.mxu0 0
        %917 = vmatprep.subr.bf16.mxu0 0
        %918 = vmatpush1.bf16.msra.mxu0 0
        %919 = vmatprep.subr.bf16.mxu0 0
        %920 = vmatpush1.bf16.msra.mxu0 0
        %921 = vmatprep.subr.bf16.mxu0 0
        %922 = vmatpush1.bf16.msra.mxu0 0
        %923 = vmatprep.mubr.bf16.mxu0 0
        %924 = vmatmul.mubr.bf16.gmra.mrb[0].mxu0 %v883
        %v925 = vpop.f32.mrb[0].mxu0
        %v926 = vadd.f32 0.0, %v925
        %v927 = vpop.f32.mrb[0].mxu0
        %v928 = vadd.f32 0.0, %v927
        %v929 = vpop.f32.mrb[0].mxu0
        %v930 = vadd.f32 0.0, %v929
        %v931 = vpop.f32.mrb[0].mxu0
        %v932 = vadd.f32 0.0, %v931
        %933 = vdwg.mxu0
        %v934 = vadd.f32 %v855, %v926
        %v935 = vadd.f32 %v856, %v928
        %v936 = vadd.f32 %v857, %v930
        %v937 = vadd.f32 %v858, %v932
        %v938 = vsel %vm724, 1, 0
        %v939 = vsel %vm725, 1, 0
        %vm940 = vcmp.eq.s32.totalorder %v938, 1
        %vm941 = vcmp.eq.s32.totalorder %v939, 1
        %942 = vrot.lane.b32.xlu0 %v770, 15
        %v943 = vpop.permute.xlu0 %942
        %944 = vrot.lane.b32.xlu0 %v771, 15
        %v945 = vpop.permute.xlu0 %944
        %946 = vrot.lane.b32.xlu0 %v772, 15
        %v947 = vpop.permute.xlu0 %946
        %vm948 = vcmask 121856
        %v949 = vsel %vm948, %v943, %v945
        %v950 = vsel %vm948, %v945, %v947
        %v953 = vsel %vm940, %v949, 0.0
        %v954 = vsel %vm941, %v950, 0.0
        %s955 = scalar_lea.vmem %s4, 16
        %v956 = vld [vmem:[%s955] sm:$0xf]
        %v957 = vld [vmem:[%s955 + $0x4] sm:$0xf]
        %v958 = vpack.c.bf16 %v953, %v953
        %v959 = vpack.c.bf16 %v954, %v954
        %v962 = vunpack.c.l.b16 %v956
        %v963 = vunpack.c.l.b16 %v957
        %v964 = vpack.c.b16 %v963, %v962
        %v966 = vsel %vm802, %v964, 0
        %v969 = vsel %vm509, %v958, 0
        %v972 = vsel %vm509, %v959, 0
        %974 = vmatprep.subr.bf16.mxu0 %v972
        %975 = vmatpush1.bf16.msra.mxu0 %v969
        %976 = vmatprep.subr.bf16.mxu0 0
        %977 = vmatpush1.bf16.msra.mxu0 0
        %978 = vmatprep.subr.bf16.mxu0 0
        %979 = vmatpush1.bf16.msra.mxu0 0
        %980 = vmatprep.subr.bf16.mxu0 0
        %981 = vmatpush1.bf16.msra.mxu0 0
        %982 = vmatprep.subr.bf16.mxu0 0
        %983 = vmatpush1.bf16.msra.mxu0 0
        %984 = vmatprep.subr.bf16.mxu0 0
        %985 = vmatpush1.bf16.msra.mxu0 0
        %986 = vmatprep.subr.bf16.mxu0 0
        %987 = vmatpush1.bf16.msra.mxu0 0
        %988 = vmatprep.subr.bf16.mxu0 0
        %989 = vmatpush1.bf16.msra.mxu0 0
        %990 = vmatprep.subr.bf16.mxu0 0
        %991 = vmatpush1.bf16.msra.mxu0 0
        %992 = vmatprep.subr.bf16.mxu0 0
        %993 = vmatpush1.bf16.msra.mxu0 0
        %994 = vmatprep.subr.bf16.mxu0 0
        %995 = vmatpush1.bf16.msra.mxu0 0
        %996 = vmatprep.subr.bf16.mxu0 0
        %997 = vmatpush1.bf16.msra.mxu0 0
        %998 = vmatprep.subr.bf16.mxu0 0
        %999 = vmatpush1.bf16.msra.mxu0 0
        %1000 = vmatprep.subr.bf16.mxu0 0
        %1001 = vmatpush1.bf16.msra.mxu0 0
        %1002 = vmatprep.subr.bf16.mxu0 0
        %1003 = vmatpush1.bf16.msra.mxu0 0
        %1004 = vmatprep.subr.bf16.mxu0 0
        %1005 = vmatpush1.bf16.msra.mxu0 0
        %1006 = vmatprep.mubr.bf16.mxu0 0
        %1007 = vmatmul.mubr.bf16.gmra.mrb[0].mxu0 %v966
        %v1008 = vpop.f32.mrb[0].mxu0
        %v1009 = vadd.f32 0.0, %v1008
        %v1010 = vpop.f32.mrb[0].mxu0
        %v1011 = vadd.f32 0.0, %v1010
        %v1012 = vpop.f32.mrb[0].mxu0
        %v1013 = vadd.f32 0.0, %v1012
        %v1014 = vpop.f32.mrb[0].mxu0
        %v1015 = vadd.f32 0.0, %v1014
        %1016 = vdwg.mxu0
        %v1017 = vadd.f32 %v934, %v1009
        %v1018 = vadd.f32 %v935, %v1011
        %v1019 = vadd.f32 %v936, %v1013
        %v1020 = vadd.f32 %v937, %v1015
        %1021 = vrot.lane.b32.xlu0 %v770, 1
        %v1022 = vpop.permute.xlu0 %1021
        %1023 = vrot.lane.b32.xlu0 %v771, 1
        %v1024 = vpop.permute.xlu0 %1023
        %1025 = vrot.lane.b32.xlu0 %v772, 1
        %v1026 = vpop.permute.xlu0 %1025
        %vm1027 = vcmask 7168
        %v1028 = vsel %vm1027, %v1022, %v1024
        %v1029 = vsel %vm1027, %v1024, %v1026
        %v1032 = vsel %vm775, %v1028, 0.0
        %v1033 = vsel %vm776, %v1029, 0.0
        %s1034 = scalar_lea.vmem %s4, 24
        %v1035 = vld [vmem:[%s1034] sm:$0xf]
        %v1036 = vld [vmem:[%s1034 + $0x4] sm:$0xf]
        %v1037 = vpack.c.bf16 %v1032, %v1032
        %v1038 = vpack.c.bf16 %v1033, %v1033
        %v1041 = vunpack.c.l.b16 %v1035
        %v1042 = vunpack.c.l.b16 %v1036
        %v1043 = vpack.c.b16 %v1042, %v1041
        %v1045 = vsel %vm802, %v1043, 0
        %v1048 = vsel %vm509, %v1037, 0
        %v1051 = vsel %vm509, %v1038, 0
        %1053 = vmatprep.subr.bf16.mxu0 %v1051
        %1054 = vmatpush1.bf16.msra.mxu0 %v1048
        %1055 = vmatprep.subr.bf16.mxu0 0
        %1056 = vmatpush1.bf16.msra.mxu0 0
        %1057 = vmatprep.subr.bf16.mxu0 0
        %1058 = vmatpush1.bf16.msra.mxu0 0
        %1059 = vmatprep.subr.bf16.mxu0 0
        %1060 = vmatpush1.bf16.msra.mxu0 0
        %1061 = vmatprep.subr.bf16.mxu0 0
        %1062 = vmatpush1.bf16.msra.mxu0 0
        %1063 = vmatprep.subr.bf16.mxu0 0
        %1064 = vmatpush1.bf16.msra.mxu0 0
        %1065 = vmatprep.subr.bf16.mxu0 0
        %1066 = vmatpush1.bf16.msra.mxu0 0
        %1067 = vmatprep.subr.bf16.mxu0 0
        %1068 = vmatpush1.bf16.msra.mxu0 0
        %1069 = vmatprep.subr.bf16.mxu0 0
        %1070 = vmatpush1.bf16.msra.mxu0 0
        %1071 = vmatprep.subr.bf16.mxu0 0
        %1072 = vmatpush1.bf16.msra.mxu0 0
        %1073 = vmatprep.subr.bf16.mxu0 0
        %1074 = vmatpush1.bf16.msra.mxu0 0
        %1075 = vmatprep.subr.bf16.mxu0 0
        %1076 = vmatpush1.bf16.msra.mxu0 0
        %1077 = vmatprep.subr.bf16.mxu0 0
        %1078 = vmatpush1.bf16.msra.mxu0 0
        %1079 = vmatprep.subr.bf16.mxu0 0
        %1080 = vmatpush1.bf16.msra.mxu0 0
        %1081 = vmatprep.subr.bf16.mxu0 0
        %1082 = vmatpush1.bf16.msra.mxu0 0
        %1083 = vmatprep.subr.bf16.mxu0 0
        %1084 = vmatpush1.bf16.msra.mxu0 0
        %1085 = vmatprep.mubr.bf16.mxu0 0
        %1086 = vmatmul.mubr.bf16.gmra.mrb[0].mxu0 %v1045
        %v1087 = vpop.f32.mrb[0].mxu0
        %v1088 = vadd.f32 0.0, %v1087
        %v1089 = vpop.f32.mrb[0].mxu0
        %v1090 = vadd.f32 0.0, %v1089
        %v1091 = vpop.f32.mrb[0].mxu0
        %v1092 = vadd.f32 0.0, %v1091
        %v1093 = vpop.f32.mrb[0].mxu0
        %v1094 = vadd.f32 0.0, %v1093
        %1095 = vdwg.mxu0
        %v1096 = vadd.f32 %v1017, %v1088
        %v1097 = vadd.f32 %v1018, %v1090
        %v1098 = vadd.f32 %v1019, %v1092
        %v1099 = vadd.f32 %v1020, %v1094
        %s1100 = scalar_lea.vmem %s4, 32
        %v1101 = vld [vmem:[%s1100] sm:$0xf]
        %v1102 = vld [vmem:[%s1100 + $0x4] sm:$0xf]
        %v1105 = vunpack.c.l.b16 %v1101
        %v1106 = vunpack.c.l.b16 %v1102
        %v1107 = vpack.c.b16 %v1106, %v1105
        %v1109 = vsel %vm802, %v1107, 0
        %v1112 = vsel %vm509, %v863, 0
        %v1115 = vsel %vm509, %v864, 0
        %1117 = vmatprep.subr.bf16.mxu0 %v1115
        %1118 = vmatpush1.bf16.msra.mxu0 %v1112
        %1119 = vmatprep.subr.bf16.mxu0 0
        %1120 = vmatpush1.bf16.msra.mxu0 0
        %1121 = vmatprep.subr.bf16.mxu0 0
        %1122 = vmatpush1.bf16.msra.mxu0 0
        %1123 = vmatprep.subr.bf16.mxu0 0
        %1124 = vmatpush1.bf16.msra.mxu0 0
        %1125 = vmatprep.subr.bf16.mxu0 0
        %1126 = vmatpush1.bf16.msra.mxu0 0
        %1127 = vmatprep.subr.bf16.mxu0 0
        %1128 = vmatpush1.bf16.msra.mxu0 0
        %1129 = vmatprep.subr.bf16.mxu0 0
        %1130 = vmatpush1.bf16.msra.mxu0 0
        %1131 = vmatprep.subr.bf16.mxu0 0
        %1132 = vmatpush1.bf16.msra.mxu0 0
        %1133 = vmatprep.subr.bf16.mxu0 0
        %1134 = vmatpush1.bf16.msra.mxu0 0
        %1135 = vmatprep.subr.bf16.mxu0 0
        %1136 = vmatpush1.bf16.msra.mxu0 0
        %1137 = vmatprep.subr.bf16.mxu0 0
        %1138 = vmatpush1.bf16.msra.mxu0 0
        %1139 = vmatprep.subr.bf16.mxu0 0
        %1140 = vmatpush1.bf16.msra.mxu0 0
        %1141 = vmatprep.subr.bf16.mxu0 0
        %1142 = vmatpush1.bf16.msra.mxu0 0
        %1143 = vmatprep.subr.bf16.mxu0 0
        %1144 = vmatpush1.bf16.msra.mxu0 0
        %1145 = vmatprep.subr.bf16.mxu0 0
        %1146 = vmatpush1.bf16.msra.mxu0 0
        %1147 = vmatprep.subr.bf16.mxu0 0
        %1148 = vmatpush1.bf16.msra.mxu0 0
        %1149 = vmatprep.mubr.bf16.mxu0 0
        %1150 = vmatmul.mubr.bf16.gmra.mrb[0].mxu0 %v1109
        %v1151 = vpop.f32.mrb[0].mxu0
        %v1152 = vadd.f32 0.0, %v1151
        %v1153 = vpop.f32.mrb[0].mxu0
        %v1154 = vadd.f32 0.0, %v1153
        %v1155 = vpop.f32.mrb[0].mxu0
        %v1156 = vadd.f32 0.0, %v1155
        %v1157 = vpop.f32.mrb[0].mxu0
        %v1158 = vadd.f32 0.0, %v1157
        %1159 = vdwg.mxu0
        %v1160 = vadd.f32 %v1096, %v1152
        %v1161 = vadd.f32 %v1097, %v1154
        %v1162 = vadd.f32 %v1098, %v1156
        %v1163 = vadd.f32 %v1099, %v1158
        %v1164 = vld [vmem:[#allocation2 + $0x8] sm:$0xff]
        %v1165 = vld [vmem:[#allocation2 + $0x10] sm:$0xff]
        %v1166 = vld [vmem:[#allocation2 + $0x18] sm:$0xff]
        %1170 = vrot.lane.b32.xlu0 %v1164, 127
        %v1171 = vpop.permute.xlu0 %1170
        %1172 = vrot.lane.b32.xlu0 %v1165, 127
        %v1173 = vpop.permute.xlu0 %1172
        %1174 = vrot.lane.b32.xlu0 %v1166, 127
        %v1175 = vpop.permute.xlu0 %1174
        %vm1176 = vcmask 1039360
        %v1177 = vsel %vm1176, %v1171, %v1173
        %v1178 = vsel %vm1176, %v1173, %v1175
        %v1181 = vsel %vm940, %v1177, 0.0
        %v1182 = vsel %vm941, %v1178, 0.0
        %s1183 = scalar_lea.vmem %s4, 40
        %v1184 = vld [vmem:[%s1183] sm:$0xf]
        %v1185 = vld [vmem:[%s1183 + $0x4] sm:$0xf]
        %v1186 = vpack.c.bf16 %v1181, %v1181
        %v1187 = vpack.c.bf16 %v1182, %v1182
        %v1190 = vunpack.c.l.b16 %v1184
        %v1191 = vunpack.c.l.b16 %v1185
        %v1192 = vpack.c.b16 %v1191, %v1190
        %v1194 = vsel %vm802, %v1192, 0
        %v1197 = vsel %vm509, %v1186, 0
        %v1200 = vsel %vm509, %v1187, 0
        %1202 = vmatprep.subr.bf16.mxu0 %v1200
        %1203 = vmatpush1.bf16.msra.mxu0 %v1197
        %1204 = vmatprep.subr.bf16.mxu0 0
        %1205 = vmatpush1.bf16.msra.mxu0 0
        %1206 = vmatprep.subr.bf16.mxu0 0
        %1207 = vmatpush1.bf16.msra.mxu0 0
        %1208 = vmatprep.subr.bf16.mxu0 0
        %1209 = vmatpush1.bf16.msra.mxu0 0
        %1210 = vmatprep.subr.bf16.mxu0 0
        %1211 = vmatpush1.bf16.msra.mxu0 0
        %1212 = vmatprep.subr.bf16.mxu0 0
        %1213 = vmatpush1.bf16.msra.mxu0 0
        %1214 = vmatprep.subr.bf16.mxu0 0
        %1215 = vmatpush1.bf16.msra.mxu0 0
        %1216 = vmatprep.subr.bf16.mxu0 0
        %1217 = vmatpush1.bf16.msra.mxu0 0
        %1218 = vmatprep.subr.bf16.mxu0 0
        %1219 = vmatpush1.bf16.msra.mxu0 0
        %1220 = vmatprep.subr.bf16.mxu0 0
        %1221 = vmatpush1.bf16.msra.mxu0 0
        %1222 = vmatprep.subr.bf16.mxu0 0
        %1223 = vmatpush1.bf16.msra.mxu0 0
        %1224 = vmatprep.subr.bf16.mxu0 0
        %1225 = vmatpush1.bf16.msra.mxu0 0
        %1226 = vmatprep.subr.bf16.mxu0 0
        %1227 = vmatpush1.bf16.msra.mxu0 0
        %1228 = vmatprep.subr.bf16.mxu0 0
        %1229 = vmatpush1.bf16.msra.mxu0 0
        %1230 = vmatprep.subr.bf16.mxu0 0
        %1231 = vmatpush1.bf16.msra.mxu0 0
        %1232 = vmatprep.subr.bf16.mxu0 0
        %1233 = vmatpush1.bf16.msra.mxu0 0
        %1234 = vmatprep.mubr.bf16.mxu0 0
        %1235 = vmatmul.mubr.bf16.gmra.mrb[0].mxu0 %v1194
        %v1236 = vpop.f32.mrb[0].mxu0
        %v1237 = vadd.f32 0.0, %v1236
        %v1238 = vpop.f32.mrb[0].mxu0
        %v1239 = vadd.f32 0.0, %v1238
        %v1240 = vpop.f32.mrb[0].mxu0
        %v1241 = vadd.f32 0.0, %v1240
        %v1242 = vpop.f32.mrb[0].mxu0
        %v1243 = vadd.f32 0.0, %v1242
        %1244 = vdwg.mxu0
        %v1245 = vadd.f32 %v1160, %v1237
        %v1246 = vadd.f32 %v1161, %v1239
        %v1247 = vadd.f32 %v1162, %v1241
        %v1248 = vadd.f32 %v1163, %v1243
        %1249 = vrot.lane.b32.xlu0 %v1164, 113
        %v1250 = vpop.permute.xlu0 %1249
        %1251 = vrot.lane.b32.xlu0 %v1165, 113
        %v1252 = vpop.permute.xlu0 %1251
        %1253 = vrot.lane.b32.xlu0 %v1166, 113
        %v1254 = vpop.permute.xlu0 %1253
        %vm1255 = vcmask 924672
        %v1256 = vsel %vm1255, %v1250, %v1252
        %v1257 = vsel %vm1255, %v1252, %v1254
        %v1260 = vsel %vm775, %v1256, 0.0
        %v1261 = vsel %vm776, %v1257, 0.0
        %s1262 = scalar_lea.vmem %s4, 48
        %v1263 = vld [vmem:[%s1262] sm:$0xf]
        %v1264 = vld [vmem:[%s1262 + $0x4] sm:$0xf]
        %v1265 = vpack.c.bf16 %v1260, %v1260
        %v1266 = vpack.c.bf16 %v1261, %v1261
        %v1269 = vunpack.c.l.b16 %v1263
        %v1270 = vunpack.c.l.b16 %v1264
        %v1271 = vpack.c.b16 %v1270, %v1269
        %v1273 = vsel %vm802, %v1271, 0
        %v1276 = vsel %vm509, %v1265, 0
        %v1279 = vsel %vm509, %v1266, 0
        %1281 = vmatprep.subr.bf16.mxu0 %v1279
        %1282 = vmatpush1.bf16.msra.mxu0 %v1276
        %1283 = vmatprep.subr.bf16.mxu0 0
        %1284 = vmatpush1.bf16.msra.mxu0 0
        %1285 = vmatprep.subr.bf16.mxu0 0
        %1286 = vmatpush1.bf16.msra.mxu0 0
        %1287 = vmatprep.subr.bf16.mxu0 0
        %1288 = vmatpush1.bf16.msra.mxu0 0
        %1289 = vmatprep.subr.bf16.mxu0 0
        %1290 = vmatpush1.bf16.msra.mxu0 0
        %1291 = vmatprep.subr.bf16.mxu0 0
        %1292 = vmatpush1.bf16.msra.mxu0 0
        %1293 = vmatprep.subr.bf16.mxu0 0
        %1294 = vmatpush1.bf16.msra.mxu0 0
        %1295 = vmatprep.subr.bf16.mxu0 0
        %1296 = vmatpush1.bf16.msra.mxu0 0
        %1297 = vmatprep.subr.bf16.mxu0 0
        %1298 = vmatpush1.bf16.msra.mxu0 0
        %1299 = vmatprep.subr.bf16.mxu0 0
        %1300 = vmatpush1.bf16.msra.mxu0 0
        %1301 = vmatprep.subr.bf16.mxu0 0
        %1302 = vmatpush1.bf16.msra.mxu0 0
        %1303 = vmatprep.subr.bf16.mxu0 0
        %1304 = vmatpush1.bf16.msra.mxu0 0
        %1305 = vmatprep.subr.bf16.mxu0 0
        %1306 = vmatpush1.bf16.msra.mxu0 0
        %1307 = vmatprep.subr.bf16.mxu0 0
        %1308 = vmatpush1.bf16.msra.mxu0 0
        %1309 = vmatprep.subr.bf16.mxu0 0
        %1310 = vmatpush1.bf16.msra.mxu0 0
        %1311 = vmatprep.subr.bf16.mxu0 0
        %1312 = vmatpush1.bf16.msra.mxu0 0
        %1313 = vmatprep.mubr.bf16.mxu0 0
        %1314 = vmatmul.mubr.bf16.gmra.mrb[0].mxu0 %v1273
        %v1315 = vpop.f32.mrb[0].mxu0
        %v1316 = vadd.f32 0.0, %v1315
        %v1317 = vpop.f32.mrb[0].mxu0
        %v1318 = vadd.f32 0.0, %v1317
        %v1319 = vpop.f32.mrb[0].mxu0
        %v1320 = vadd.f32 0.0, %v1319
        %v1321 = vpop.f32.mrb[0].mxu0
        %v1322 = vadd.f32 0.0, %v1321
        %1323 = vdwg.mxu0
        %v1324 = vadd.f32 %v1245, %v1316
        %v1325 = vadd.f32 %v1246, %v1318
        %v1326 = vadd.f32 %v1247, %v1320
        %v1327 = vadd.f32 %v1248, %v1322
        %s1328 = scalar_lea.vmem %s4, 56
        %v1329 = vld [vmem:[%s1328] sm:$0xf]
        %v1330 = vld [vmem:[%s1328 + $0x4] sm:$0xf]
        %v1331 = vpack.c.bf16 %v1164, %v1164
        %v1332 = vpack.c.bf16 %v1165, %v1165
        %v1333 = vpack.c.bf16 %v1166, %v1166
        %v1336 = vunpack.c.l.b16 %v1329
        %v1337 = vunpack.c.l.b16 %v1330
        %v1338 = vpack.c.b16 %v1337, %v1336
        %1342 = vrot.lane.b32.xlu0 %v1331, 112
        %v1343 = vpop.permute.xlu0 %1342
        %1344 = vrot.lane.b32.xlu0 %v1332, 112
        %v1345 = vpop.permute.xlu0 %1344
        %1346 = vrot.lane.b32.xlu0 %v1333, 112
        %v1347 = vpop.permute.xlu0 %1346
        %vm1348 = vcmask 916480
        %v1349 = vsel %vm1348, %v1343, %v1345
        %v1350 = vsel %vm1348, %v1345, %v1347
        %v1352 = vsel %vm802, %v1338, 0
        %v1355 = vsel %vm509, %v1349, 0
        %v1358 = vsel %vm509, %v1350, 0
        %1360 = vmatprep.subr.bf16.mxu0 %v1358
        %1361 = vmatpush1.bf16.msra.mxu0 %v1355
        %1362 = vmatprep.subr.bf16.mxu0 0
        %1363 = vmatpush1.bf16.msra.mxu0 0
        %1364 = vmatprep.subr.bf16.mxu0 0
        %1365 = vmatpush1.bf16.msra.mxu0 0
        %1366 = vmatprep.subr.bf16.mxu0 0
        %1367 = vmatpush1.bf16.msra.mxu0 0
        %1368 = vmatprep.subr.bf16.mxu0 0
        %1369 = vmatpush1.bf16.msra.mxu0 0
        %1370 = vmatprep.subr.bf16.mxu0 0
        %1371 = vmatpush1.bf16.msra.mxu0 0
        %1372 = vmatprep.subr.bf16.mxu0 0
        %1373 = vmatpush1.bf16.msra.mxu0 0
        %1374 = vmatprep.subr.bf16.mxu0 0
        %1375 = vmatpush1.bf16.msra.mxu0 0
        %1376 = vmatprep.subr.bf16.mxu0 0
        %1377 = vmatpush1.bf16.msra.mxu0 0
        %1378 = vmatprep.subr.bf16.mxu0 0
        %1379 = vmatpush1.bf16.msra.mxu0 0
        %1380 = vmatprep.subr.bf16.mxu0 0
        %1381 = vmatpush1.bf16.msra.mxu0 0
        %1382 = vmatprep.subr.bf16.mxu0 0
        %1383 = vmatpush1.bf16.msra.mxu0 0
        %1384 = vmatprep.subr.bf16.mxu0 0
        %1385 = vmatpush1.bf16.msra.mxu0 0
        %1386 = vmatprep.subr.bf16.mxu0 0
        %1387 = vmatpush1.bf16.msra.mxu0 0
        %1388 = vmatprep.subr.bf16.mxu0 0
        %1389 = vmatpush1.bf16.msra.mxu0 0
        %1390 = vmatprep.subr.bf16.mxu0 0
        %1391 = vmatpush1.bf16.msra.mxu0 0
        %1392 = vmatprep.mubr.bf16.mxu0 0
        %1393 = vmatmul.mubr.bf16.gmra.mrb[0].mxu0 %v1352
        %v1394 = vpop.f32.mrb[0].mxu0
        %v1395 = vadd.f32 0.0, %v1394
        %v1396 = vpop.f32.mrb[0].mxu0
        %v1397 = vadd.f32 0.0, %v1396
        %v1398 = vpop.f32.mrb[0].mxu0
        %v1399 = vadd.f32 0.0, %v1398
        %v1400 = vpop.f32.mrb[0].mxu0
        %v1401 = vadd.f32 0.0, %v1400
        %1402 = vdwg.mxu0
        %v1403 = vadd.f32 %v1324, %v1395
        %v1404 = vadd.f32 %v1325, %v1397
        %v1405 = vadd.f32 %v1326, %v1399
        %v1406 = vadd.f32 %v1327, %v1401
        %1407 = vrot.lane.b32.xlu0 %v1164, 111
        %v1408 = vpop.permute.xlu0 %1407
        %1409 = vrot.lane.b32.xlu0 %v1165, 111
        %v1410 = vpop.permute.xlu0 %1409
        %1411 = vrot.lane.b32.xlu0 %v1166, 111
        %v1412 = vpop.permute.xlu0 %1411
        %vm1413 = vcmask 908288
        %v1414 = vsel %vm1413, %v1408, %v1410
        %v1415 = vsel %vm1413, %v1410, %v1412
        %v1418 = vsel %vm940, %v1414, 0.0
        %v1419 = vsel %vm941, %v1415, 0.0
        %s1420 = scalar_lea.vmem %s4, 64
        %v1421 = vld [vmem:[%s1420] sm:$0xf]
        %v1422 = vld [vmem:[%s1420 + $0x4] sm:$0xf]
        %v1423 = vpack.c.bf16 %v1418, %v1418
        %v1424 = vpack.c.bf16 %v1419, %v1419
        %v1427 = vunpack.c.l.b16 %v1421
        %v1428 = vunpack.c.l.b16 %v1422
        %v1429 = vpack.c.b16 %v1428, %v1427
        %v1431 = vsel %vm802, %v1429, 0
        %v1434 = vsel %vm509, %v1423, 0
        %v1437 = vsel %vm509, %v1424, 0
        %1439 = vmatprep.subr.bf16.mxu0 %v1437
        %1440 = vmatpush1.bf16.msra.mxu0 %v1434
        %1441 = vmatprep.subr.bf16.mxu0 0
        %1442 = vmatpush1.bf16.msra.mxu0 0
        %1443 = vmatprep.subr.bf16.mxu0 0
        %1444 = vmatpush1.bf16.msra.mxu0 0
        %1445 = vmatprep.subr.bf16.mxu0 0
        %1446 = vmatpush1.bf16.msra.mxu0 0
        %1447 = vmatprep.subr.bf16.mxu0 0
        %1448 = vmatpush1.bf16.msra.mxu0 0
        %1449 = vmatprep.subr.bf16.mxu0 0
        %1450 = vmatpush1.bf16.msra.mxu0 0
        %1451 = vmatprep.subr.bf16.mxu0 0
        %1452 = vmatpush1.bf16.msra.mxu0 0
        %1453 = vmatprep.subr.bf16.mxu0 0
        %1454 = vmatpush1.bf16.msra.mxu0 0
        %1455 = vmatprep.subr.bf16.mxu0 0
        %1456 = vmatpush1.bf16.msra.mxu0 0
        %1457 = vmatprep.subr.bf16.mxu0 0
        %1458 = vmatpush1.bf16.msra.mxu0 0
        %1459 = vmatprep.subr.bf16.mxu0 0
        %1460 = vmatpush1.bf16.msra.mxu0 0
        %1461 = vmatprep.subr.bf16.mxu0 0
        %1462 = vmatpush1.bf16.msra.mxu0 0
        %1463 = vmatprep.subr.bf16.mxu0 0
        %1464 = vmatpush1.bf16.msra.mxu0 0
        %1465 = vmatprep.subr.bf16.mxu0 0
        %1466 = vmatpush1.bf16.msra.mxu0 0
        %1467 = vmatprep.subr.bf16.mxu0 0
        %1468 = vmatpush1.bf16.msra.mxu0 0
        %1469 = vmatprep.subr.bf16.mxu0 0
        %1470 = vmatpush1.bf16.msra.mxu0 0
        %1471 = vmatprep.mubr.bf16.mxu0 0
        %1472 = vmatmul.mubr.bf16.gmra.mrb[0].mxu0 %v1431
        %v1473 = vpop.f32.mrb[0].mxu0
        %v1474 = vadd.f32 0.0, %v1473
        %v1475 = vpop.f32.mrb[0].mxu0
        %v1476 = vadd.f32 0.0, %v1475
        %v1477 = vpop.f32.mrb[0].mxu0
        %v1478 = vadd.f32 0.0, %v1477
        %v1479 = vpop.f32.mrb[0].mxu0
        %v1480 = vadd.f32 0.0, %v1479
        %1481 = vdwg.mxu0
        %v1482 = vadd.f32 %v1403, %v1474
        %v1483 = vadd.f32 %v1404, %v1476
        %v1484 = vadd.f32 %v1405, %v1478
        %v1485 = vadd.f32 %v1406, %v1480
        %v1486 = vmax.f32 %v1482, 0.0
        %v1487 = vmax.f32 %v1483, 0.0
        %v1488 = vmax.f32 %v1484, 0.0
        %v1489 = vmax.f32 %v1485, 0.0
        %1490 = vst [vmem:[#allocation2 + $0x8] sm:$0xff] %v1486
        %1491 = vst [vmem:[#allocation2 + $0x10] sm:$0xff] %v1487
        %1492 = vst [vmem:[#allocation2 + $0x28] sm:$0xff] %v1488
        %1493 = vst [vmem:[#allocation2 + $0x30] sm:$0xff] %v1489
        %v1494 = vld [vmem:[%s7] sm:$0xff]
        %v1495 = vld [vmem:[%s7 + $0x8] sm:$0xff]
        %v1496 = vld [vmem:[%s7 + $0x10] sm:$0xff]
        %v1497 = vld [vmem:[%s7 + $0x18] sm:$0xff]
        %1499 = vset.pattern.permute.xlu0 0
        %1500 = vperm.xlu0 %1499, %v1494
        %v1501 = vpop.permute.xlu0 %1500
        %1504 = vset.pattern.permute.xlu0 0
        %1505 = vperm.xlu0 %1504, %v1495
        %v1506 = vpop.permute.xlu0 %1505
        %1509 = vset.pattern.permute.xlu0 0
        %1510 = vperm.xlu0 %1509, %v1496
        %v1511 = vpop.permute.xlu0 %1510
        %1514 = vset.pattern.permute.xlu0 0
        %1515 = vperm.xlu0 %1514, %v1497
        %v1516 = vpop.permute.xlu0 %1515
        %v1518 = vld [vmem:[#allocation2] sm:$0xff]
        %v1519 = vld [vmem:[#allocation2 + $0x8] sm:$0xff]
        %v1520 = vld [vmem:[#allocation2 + $0x10] sm:$0xff]
        %v1521 = vld [vmem:[#allocation2 + $0x20] sm:$0xff]
        %v1522 = vld [vmem:[#allocation2 + $0x28] sm:$0xff]
        %v1523 = vld [vmem:[#allocation2 + $0x30] sm:$0xff]
        %v1524 = vsel %vm732, 1, 0
        %v1525 = vsel %vm733, 1, 0
        %vm1526 = vcmp.eq.s32.totalorder %v1524, 1
        %vm1527 = vcmp.eq.s32.totalorder %v1525, 1
        %1534 = vrot.lane.b32.xlu0 %v1518, 34
        %v1535 = vpop.permute.xlu0 %1534
        %1536 = vrot.lane.b32.xlu0 %v1519, 34
        %v1537 = vpop.permute.xlu0 %1536
        %1538 = vrot.lane.b32.xlu0 %v1520, 34
        %v1539 = vpop.permute.xlu0 %1538
        %1540 = vrot.lane.b32.xlu0 %v1521, 34
        %v1541 = vpop.permute.xlu0 %1540
        %1542 = vrot.lane.b32.xlu0 %v1522, 34
        %v1543 = vpop.permute.xlu0 %1542
        %1544 = vrot.lane.b32.xlu0 %v1523, 34
        %v1545 = vpop.permute.xlu0 %1544
        %vm1546 = vcmask 277504
        %v1547 = vsel %vm1546, %v1535, %v1537
        %v1548 = vsel %vm1546, %v1537, %v1539
        %v1549 = vsel %vm1546, %v1541, %v1543
        %v1550 = vsel %vm1546, %v1543, %v1545
        %v1555 = vsel %vm1526, %v1547, 0.0
        %v1556 = vsel %vm1527, %v1548, 0.0
        %v1557 = vsel %vm1526, %v1549, 0.0
        %v1558 = vsel %vm1527, %v1550, 0.0
        %v1559 = vld [vmem:[%s6] sm:$0xf]
        %v1560 = vld [vmem:[%s6 + $0x4] sm:$0xf]
        %v1561 = vld [vmem:[%s6 + $0x8] sm:$0xf]
        %v1562 = vld [vmem:[%s6 + $0xc] sm:$0xf]
        %v1563 = vpack.c.bf16 %v1557, %v1555
        %v1564 = vpack.c.bf16 %v1558, %v1556
        %v1569 = vunpack.c.l.b16 %v1559
        %v1570 = vunpack.c.l.b16 %v1560
        %v1571 = vunpack.c.l.b16 %v1561
        %v1572 = vunpack.c.l.b16 %v1562
        %v1573 = vpack.c.b16 %v1570, %v1569
        %v1574 = vpack.c.b16 %v1572, %v1571
        %vm1575 = vcmask 130048
        %v1577 = vsel %vm1575, %v1573, 0
        %v1580 = vsel %vm1575, %v1574, 0
        %1582 = vmatprep.subr.bf16.mxu0 %v1564
        %1583 = vmatpush1.bf16.msra.mxu0 %v1563
        %1584 = vmatprep.subr.bf16.mxu0 0
        %1585 = vmatpush1.bf16.msra.mxu0 0
        %1586 = vmatprep.subr.bf16.mxu0 0
        %1587 = vmatpush1.bf16.msra.mxu0 0
        %1588 = vmatprep.subr.bf16.mxu0 0
        %1589 = vmatpush1.bf16.msra.mxu0 0
        %1590 = vmatprep.subr.bf16.mxu0 0
        %1591 = vmatpush1.bf16.msra.mxu0 0
        %1592 = vmatprep.subr.bf16.mxu0 0
        %1593 = vmatpush1.bf16.msra.mxu0 0
        %1594 = vmatprep.subr.bf16.mxu0 0
        %1595 = vmatpush1.bf16.msra.mxu0 0
        %1596 = vmatprep.subr.bf16.mxu0 0
        %1597 = vmatpush1.bf16.msra.mxu0 0
        %1598 = vmatprep.subr.bf16.mxu0 0
        %1599 = vmatpush1.bf16.msra.mxu0 0
        %1600 = vmatprep.subr.bf16.mxu0 0
        %1601 = vmatpush1.bf16.msra.mxu0 0
        %1602 = vmatprep.subr.bf16.mxu0 0
        %1603 = vmatpush1.bf16.msra.mxu0 0
        %1604 = vmatprep.subr.bf16.mxu0 0
        %1605 = vmatpush1.bf16.msra.mxu0 0
        %1606 = vmatprep.subr.bf16.mxu0 0
        %1607 = vmatpush1.bf16.msra.mxu0 0
        %1608 = vmatprep.subr.bf16.mxu0 0
        %1609 = vmatpush1.bf16.msra.mxu0 0
        %1610 = vmatprep.subr.bf16.mxu0 0
        %1611 = vmatpush1.bf16.msra.mxu0 0
        %1612 = vmatprep.subr.bf16.mxu0 0
        %1613 = vmatpush1.bf16.msra.mxu0 0
        %1614 = vmatprep.mubr.bf16.mxu0 0
        %1615 = vmatmul.mubr.bf16.gmra.mrb[0].mxu0 %v1577
        %v1616 = vpop.f32.mrb[0].mxu0
        %v1617 = vadd.f32 0.0, %v1616
        %v1618 = vpop.f32.mrb[0].mxu0
        %v1619 = vadd.f32 0.0, %v1618
        %v1620 = vpop.f32.mrb[0].mxu0
        %v1621 = vadd.f32 0.0, %v1620
        %v1622 = vpop.f32.mrb[0].mxu0
        %v1623 = vadd.f32 0.0, %v1622
        %1624 = vmatprep.mubr.bf16.mxu0 0
        %1625 = vmatmul.mubr.bf16.gmra.mrb[0].mxu0 %v1580
        %v1626 = vpop.f32.mrb[0].mxu0
        %v1627 = vadd.f32 0.0, %v1626
        %v1628 = vpop.f32.mrb[0].mxu0
        %v1629 = vadd.f32 0.0, %v1628
        %v1630 = vpop.f32.mrb[0].mxu0
        %v1631 = vadd.f32 0.0, %v1630
        %v1632 = vpop.f32.mrb[0].mxu0
        %v1633 = vadd.f32 0.0, %v1632
        %1634 = vdwg.mxu0
        %v1635 = vadd.f32 %v1501, %v1617
        %v1636 = vadd.f32 %v1501, %v1619
        %v1637 = vadd.f32 %v1506, %v1621
        %v1638 = vadd.f32 %v1506, %v1623
        %v1639 = vadd.f32 %v1511, %v1627
        %v1640 = vadd.f32 %v1511, %v1629
        %v1641 = vadd.f32 %v1516, %v1631
        %v1642 = vadd.f32 %v1516, %v1633
        %s1643 = scalar_lea.vmem %s6, 16
        %v1644 = vld [vmem:[%s1643] sm:$0xf]
        %v1645 = vld [vmem:[%s1643 + $0x4] sm:$0xf]
        %v1646 = vld [vmem:[%s1643 + $0x8] sm:$0xf]
        %v1647 = vld [vmem:[%s1643 + $0xc] sm:$0xf]
        %v1648 = vpack.c.bf16 %v1521, %v1518
        %v1649 = vpack.c.bf16 %v1522, %v1519
        %v1650 = vpack.c.bf16 %v1523, %v1520
        %v1655 = vunpack.c.l.b16 %v1644
        %v1656 = vunpack.c.l.b16 %v1645
        %v1657 = vunpack.c.l.b16 %v1646
        %v1658 = vunpack.c.l.b16 %v1647
        %v1659 = vpack.c.b16 %v1656, %v1655
        %v1660 = vpack.c.b16 %v1658, %v1657
        %1664 = vrot.lane.b32.xlu0 %v1648, 32
        %v1665 = vpop.permute.xlu0 %1664
        %1666 = vrot.lane.b32.xlu0 %v1649, 32
        %v1667 = vpop.permute.xlu0 %1666
        %1668 = vrot.lane.b32.xlu0 %v1650, 32
        %v1669 = vpop.permute.xlu0 %1668
        %vm1670 = vcmask 261120
        %v1671 = vsel %vm1670, %v1665, %v1667
        %v1672 = vsel %vm1670, %v1667, %v1669
        %v1676 = vsel %vm1575, %v1659, 0
        %v1679 = vsel %vm1575, %v1660, 0
        %1681 = vmatprep.subr.bf16.mxu0 %v1672
        %1682 = vmatpush1.bf16.msra.mxu0 %v1671
        %1683 = vmatprep.subr.bf16.mxu0 0
        %1684 = vmatpush1.bf16.msra.mxu0 0
        %1685 = vmatprep.subr.bf16.mxu0 0
        %1686 = vmatpush1.bf16.msra.mxu0 0
        %1687 = vmatprep.subr.bf16.mxu0 0
        %1688 = vmatpush1.bf16.msra.mxu0 0
        %1689 = vmatprep.subr.bf16.mxu0 0
        %1690 = vmatpush1.bf16.msra.mxu0 0
        %1691 = vmatprep.subr.bf16.mxu0 0
        %1692 = vmatpush1.bf16.msra.mxu0 0
        %1693 = vmatprep.subr.bf16.mxu0 0
        %1694 = vmatpush1.bf16.msra.mxu0 0
        %1695 = vmatprep.subr.bf16.mxu0 0
        %1696 = vmatpush1.bf16.msra.mxu0 0
        %1697 = vmatprep.subr.bf16.mxu0 0
        %1698 = vmatpush1.bf16.msra.mxu0 0
        %1699 = vmatprep.subr.bf16.mxu0 0
        %1700 = vmatpush1.bf16.msra.mxu0 0
        %1701 = vmatprep.subr.bf16.mxu0 0
        %1702 = vmatpush1.bf16.msra.mxu0 0
        %1703 = vmatprep.subr.bf16.mxu0 0
        %1704 = vmatpush1.bf16.msra.mxu0 0
        %1705 = vmatprep.subr.bf16.mxu0 0
        %1706 = vmatpush1.bf16.msra.mxu0 0
        %1707 = vmatprep.subr.bf16.mxu0 0
        %1708 = vmatpush1.bf16.msra.mxu0 0
        %1709 = vmatprep.subr.bf16.mxu0 0
        %1710 = vmatpush1.bf16.msra.mxu0 0
        %1711 = vmatprep.subr.bf16.mxu0 0
        %1712 = vmatpush1.bf16.msra.mxu0 0
        %1713 = vmatprep.mubr.bf16.mxu0 0
        %1714 = vmatmul.mubr.bf16.gmra.mrb[0].mxu0 %v1676
        %v1715 = vpop.f32.mrb[0].mxu0
        %v1716 = vadd.f32 0.0, %v1715
        %v1717 = vpop.f32.mrb[0].mxu0
        %v1718 = vadd.f32 0.0, %v1717
        %v1719 = vpop.f32.mrb[0].mxu0
        %v1720 = vadd.f32 0.0, %v1719
        %v1721 = vpop.f32.mrb[0].mxu0
        %v1722 = vadd.f32 0.0, %v1721
        %1723 = vmatprep.mubr.bf16.mxu0 0
        %1724 = vmatmul.mubr.bf16.gmra.mrb[0].mxu0 %v1679
        %v1725 = vpop.f32.mrb[0].mxu0
        %v1726 = vadd.f32 0.0, %v1725
        %v1727 = vpop.f32.mrb[0].mxu0
        %v1728 = vadd.f32 0.0, %v1727
        %v1729 = vpop.f32.mrb[0].mxu0
        %v1730 = vadd.f32 0.0, %v1729
        %v1731 = vpop.f32.mrb[0].mxu0
        %v1732 = vadd.f32 0.0, %v1731
        %1733 = vdwg.mxu0
        %v1734 = vadd.f32 %v1635, %v1716
        %v1735 = vadd.f32 %v1636, %v1718
        %v1736 = vadd.f32 %v1637, %v1720
        %v1737 = vadd.f32 %v1638, %v1722
        %v1738 = vadd.f32 %v1639, %v1726
        %v1739 = vadd.f32 %v1640, %v1728
        %v1740 = vadd.f32 %v1641, %v1730
        %v1741 = vadd.f32 %v1642, %v1732
        %v1742 = vsel %vm740, 1, 0
        %v1743 = vsel %vm741, 1, 0
        %vm1744 = vcmp.eq.s32.totalorder %v1742, 1
        %vm1745 = vcmp.eq.s32.totalorder %v1743, 1
        %1746 = vrot.lane.b32.xlu0 %v1518, 30
        %v1747 = vpop.permute.xlu0 %1746
        %1748 = vrot.lane.b32.xlu0 %v1519, 30
        %v1749 = vpop.permute.xlu0 %1748
        %1750 = vrot.lane.b32.xlu0 %v1520, 30
        %v1751 = vpop.permute.xlu0 %1750
        %1752 = vrot.lane.b32.xlu0 %v1521, 30
        %v1753 = vpop.permute.xlu0 %1752
        %1754 = vrot.lane.b32.xlu0 %v1522, 30
        %v1755 = vpop.permute.xlu0 %1754
        %1756 = vrot.lane.b32.xlu0 %v1523, 30
        %v1757 = vpop.permute.xlu0 %1756
        %vm1758 = vcmask 244736
        %v1759 = vsel %vm1758, %v1747, %v1749
        %v1760 = vsel %vm1758, %v1749, %v1751
        %v1761 = vsel %vm1758, %v1753, %v1755
        %v1762 = vsel %vm1758, %v1755, %v1757
        %v1767 = vsel %vm1744, %v1759, 0.0
        %v1768 = vsel %vm1745, %v1760, 0.0
        %v1769 = vsel %vm1744, %v1761, 0.0
        %v1770 = vsel %vm1745, %v1762, 0.0
        %s1771 = scalar_lea.vmem %s6, 32
        %v1772 = vld [vmem:[%s1771] sm:$0xf]
        %v1773 = vld [vmem:[%s1771 + $0x4] sm:$0xf]
        %v1774 = vld [vmem:[%s1771 + $0x8] sm:$0xf]
        %v1775 = vld [vmem:[%s1771 + $0xc] sm:$0xf]
        %v1776 = vpack.c.bf16 %v1769, %v1767
        %v1777 = vpack.c.bf16 %v1770, %v1768
        %v1782 = vunpack.c.l.b16 %v1772
        %v1783 = vunpack.c.l.b16 %v1773
        %v1784 = vunpack.c.l.b16 %v1774
        %v1785 = vunpack.c.l.b16 %v1775
        %v1786 = vpack.c.b16 %v1783, %v1782
        %v1787 = vpack.c.b16 %v1785, %v1784
        %v1789 = vsel %vm1575, %v1786, 0
        %v1792 = vsel %vm1575, %v1787, 0
        %1794 = vmatprep.subr.bf16.mxu0 %v1777
        %1795 = vmatpush1.bf16.msra.mxu0 %v1776
        %1796 = vmatprep.subr.bf16.mxu0 0
        %1797 = vmatpush1.bf16.msra.mxu0 0
        %1798 = vmatprep.subr.bf16.mxu0 0
        %1799 = vmatpush1.bf16.msra.mxu0 0
        %1800 = vmatprep.subr.bf16.mxu0 0
        %1801 = vmatpush1.bf16.msra.mxu0 0
        %1802 = vmatprep.subr.bf16.mxu0 0
        %1803 = vmatpush1.bf16.msra.mxu0 0
        %1804 = vmatprep.subr.bf16.mxu0 0
        %1805 = vmatpush1.bf16.msra.mxu0 0
        %1806 = vmatprep.subr.bf16.mxu0 0
        %1807 = vmatpush1.bf16.msra.mxu0 0
        %1808 = vmatprep.subr.bf16.mxu0 0
        %1809 = vmatpush1.bf16.msra.mxu0 0
        %1810 = vmatprep.subr.bf16.mxu0 0
        %1811 = vmatpush1.bf16.msra.mxu0 0
        %1812 = vmatprep.subr.bf16.mxu0 0
        %1813 = vmatpush1.bf16.msra.mxu0 0
        %1814 = vmatprep.subr.bf16.mxu0 0
        %1815 = vmatpush1.bf16.msra.mxu0 0
        %1816 = vmatprep.subr.bf16.mxu0 0
        %1817 = vmatpush1.bf16.msra.mxu0 0
        %1818 = vmatprep.subr.bf16.mxu0 0
        %1819 = vmatpush1.bf16.msra.mxu0 0
        %1820 = vmatprep.subr.bf16.mxu0 0
        %1821 = vmatpush1.bf16.msra.mxu0 0
        %1822 = vmatprep.subr.bf16.mxu0 0
        %1823 = vmatpush1.bf16.msra.mxu0 0
        %1824 = vmatprep.subr.bf16.mxu0 0
        %1825 = vmatpush1.bf16.msra.mxu0 0
        %1826 = vmatprep.mubr.bf16.mxu0 0
        %1827 = vmatmul.mubr.bf16.gmra.mrb[0].mxu0 %v1789
        %v1828 = vpop.f32.mrb[0].mxu0
        %v1829 = vadd.f32 0.0, %v1828
        %v1830 = vpop.f32.mrb[0].mxu0
        %v1831 = vadd.f32 0.0, %v1830
        %v1832 = vpop.f32.mrb[0].mxu0
        %v1833 = vadd.f32 0.0, %v1832
        %v1834 = vpop.f32.mrb[0].mxu0
        %v1835 = vadd.f32 0.0, %v1834
        %1836 = vmatprep.mubr.bf16.mxu0 0
        %1837 = vmatmul.mubr.bf16.gmra.mrb[0].mxu0 %v1792
        %v1838 = vpop.f32.mrb[0].mxu0
        %v1839 = vadd.f32 0.0, %v1838
        %v1840 = vpop.f32.mrb[0].mxu0
        %v1841 = vadd.f32 0.0, %v1840
        %v1842 = vpop.f32.mrb[0].mxu0
        %v1843 = vadd.f32 0.0, %v1842
        %v1844 = vpop.f32.mrb[0].mxu0
        %v1845 = vadd.f32 0.0, %v1844
        %1846 = vdwg.mxu0
        %v1847 = vadd.f32 %v1734, %v1829
        %v1848 = vadd.f32 %v1735, %v1831
        %v1849 = vadd.f32 %v1736, %v1833
        %v1850 = vadd.f32 %v1737, %v1835
        %v1851 = vadd.f32 %v1738, %v1839
        %v1852 = vadd.f32 %v1739, %v1841
        %v1853 = vadd.f32 %v1740, %v1843
        %v1854 = vadd.f32 %v1741, %v1845
        %1855 = vrot.lane.b32.xlu0 %v1518, 2
        %v1856 = vpop.permute.xlu0 %1855
        %1857 = vrot.lane.b32.xlu0 %v1519, 2
        %v1858 = vpop.permute.xlu0 %1857
        %1859 = vrot.lane.b32.xlu0 %v1520, 2
        %v1860 = vpop.permute.xlu0 %1859
        %1861 = vrot.lane.b32.xlu0 %v1521, 2
        %v1862 = vpop.permute.xlu0 %1861
        %1863 = vrot.lane.b32.xlu0 %v1522, 2
        %v1864 = vpop.permute.xlu0 %1863
        %1865 = vrot.lane.b32.xlu0 %v1523, 2
        %v1866 = vpop.permute.xlu0 %1865
        %vm1867 = vcmask 15360
        %v1868 = vsel %vm1867, %v1856, %v1858
        %v1869 = vsel %vm1867, %v1858, %v1860
        %v1870 = vsel %vm1867, %v1862, %v1864
        %v1871 = vsel %vm1867, %v1864, %v1866
        %v1876 = vsel %vm1526, %v1868, 0.0
        %v1877 = vsel %vm1527, %v1869, 0.0
        %v1878 = vsel %vm1526, %v1870, 0.0
        %v1879 = vsel %vm1527, %v1871, 0.0
        %s1880 = scalar_lea.vmem %s6, 48
        %v1881 = vld [vmem:[%s1880] sm:$0xf]
        %v1882 = vld [vmem:[%s1880 + $0x4] sm:$0xf]
        %v1883 = vld [vmem:[%s1880 + $0x8] sm:$0xf]
        %v1884 = vld [vmem:[%s1880 + $0xc] sm:$0xf]
        %v1885 = vpack.c.bf16 %v1878, %v1876
        %v1886 = vpack.c.bf16 %v1879, %v1877
        %v1891 = vunpack.c.l.b16 %v1881
        %v1892 = vunpack.c.l.b16 %v1882
        %v1893 = vunpack.c.l.b16 %v1883
        %v1894 = vunpack.c.l.b16 %v1884
        %v1895 = vpack.c.b16 %v1892, %v1891
        %v1896 = vpack.c.b16 %v1894, %v1893
        %v1898 = vsel %vm1575, %v1895, 0
        %v1901 = vsel %vm1575, %v1896, 0
        %1903 = vmatprep.subr.bf16.mxu0 %v1886
        %1904 = vmatpush1.bf16.msra.mxu0 %v1885
        %1905 = vmatprep.subr.bf16.mxu0 0
        %1906 = vmatpush1.bf16.msra.mxu0 0
        %1907 = vmatprep.subr.bf16.mxu0 0
        %1908 = vmatpush1.bf16.msra.mxu0 0
        %1909 = vmatprep.subr.bf16.mxu0 0
        %1910 = vmatpush1.bf16.msra.mxu0 0
        %1911 = vmatprep.subr.bf16.mxu0 0
        %1912 = vmatpush1.bf16.msra.mxu0 0
        %1913 = vmatprep.subr.bf16.mxu0 0
        %1914 = vmatpush1.bf16.msra.mxu0 0
        %1915 = vmatprep.subr.bf16.mxu0 0
        %1916 = vmatpush1.bf16.msra.mxu0 0
        %1917 = vmatprep.subr.bf16.mxu0 0
        %1918 = vmatpush1.bf16.msra.mxu0 0
        %1919 = vmatprep.subr.bf16.mxu0 0
        %1920 = vmatpush1.bf16.msra.mxu0 0
        %1921 = vmatprep.subr.bf16.mxu0 0
        %1922 = vmatpush1.bf16.msra.mxu0 0
        %1923 = vmatprep.subr.bf16.mxu0 0
        %1924 = vmatpush1.bf16.msra.mxu0 0
        %1925 = vmatprep.subr.bf16.mxu0 0
        %1926 = vmatpush1.bf16.msra.mxu0 0
        %1927 = vmatprep.subr.bf16.mxu0 0
        %1928 = vmatpush1.bf16.msra.mxu0 0
        %1929 = vmatprep.subr.bf16.mxu0 0
        %1930 = vmatpush1.bf16.msra.mxu0 0
        %1931 = vmatprep.subr.bf16.mxu0 0
        %1932 = vmatpush1.bf16.msra.mxu0 0
        %1933 = vmatprep.subr.bf16.mxu0 0
        %1934 = vmatpush1.bf16.msra.mxu0 0
        %1935 = vmatprep.mubr.bf16.mxu0 0
        %1936 = vmatmul.mubr.bf16.gmra.mrb[0].mxu0 %v1898
        %v1937 = vpop.f32.mrb[0].mxu0
        %v1938 = vadd.f32 0.0, %v1937
        %v1939 = vpop.f32.mrb[0].mxu0
        %v1940 = vadd.f32 0.0, %v1939
        %v1941 = vpop.f32.mrb[0].mxu0
        %v1942 = vadd.f32 0.0, %v1941
        %v1943 = vpop.f32.mrb[0].mxu0
        %v1944 = vadd.f32 0.0, %v1943
        %1945 = vmatprep.mubr.bf16.mxu0 0
        %1946 = vmatmul.mubr.bf16.gmra.mrb[0].mxu0 %v1901
        %v1947 = vpop.f32.mrb[0].mxu0
        %v1948 = vadd.f32 0.0, %v1947
        %v1949 = vpop.f32.mrb[0].mxu0
        %v1950 = vadd.f32 0.0, %v1949
        %v1951 = vpop.f32.mrb[0].mxu0
        %v1952 = vadd.f32 0.0, %v1951
        %v1953 = vpop.f32.mrb[0].mxu0
        %v1954 = vadd.f32 0.0, %v1953
        %1955 = vdwg.mxu0
        %v1956 = vadd.f32 %v1847, %v1938
        %v1957 = vadd.f32 %v1848, %v1940
        %v1958 = vadd.f32 %v1849, %v1942
        %v1959 = vadd.f32 %v1850, %v1944
        %v1960 = vadd.f32 %v1851, %v1948
        %v1961 = vadd.f32 %v1852, %v1950
        %v1962 = vadd.f32 %v1853, %v1952
        %v1963 = vadd.f32 %v1854, %v1954
        %s1964 = scalar_lea.vmem %s6, 64
        %v1965 = vld [vmem:[%s1964] sm:$0xf]
        %v1966 = vld [vmem:[%s1964 + $0x4] sm:$0xf]
        %v1967 = vld [vmem:[%s1964 + $0x8] sm:$0xf]
        %v1968 = vld [vmem:[%s1964 + $0xc] sm:$0xf]
        %v1973 = vunpack.c.l.b16 %v1965
        %v1974 = vunpack.c.l.b16 %v1966
        %v1975 = vunpack.c.l.b16 %v1967
        %v1976 = vunpack.c.l.b16 %v1968
        %v1977 = vpack.c.b16 %v1974, %v1973
        %v1978 = vpack.c.b16 %v1976, %v1975
        %v1980 = vsel %vm1575, %v1977, 0
        %v1983 = vsel %vm1575, %v1978, 0
        %1985 = vmatprep.subr.bf16.mxu0 %v1650
        %1986 = vmatpush1.bf16.msra.mxu0 %v1649
        %1987 = vmatprep.subr.bf16.mxu0 0
        %1988 = vmatpush1.bf16.msra.mxu0 0
        %1989 = vmatprep.subr.bf16.mxu0 0
        %1990 = vmatpush1.bf16.msra.mxu0 0
        %1991 = vmatprep.subr.bf16.mxu0 0
        %1992 = vmatpush1.bf16.msra.mxu0 0
        %1993 = vmatprep.subr.bf16.mxu0 0
        %1994 = vmatpush1.bf16.msra.mxu0 0
        %1995 = vmatprep.subr.bf16.mxu0 0
        %1996 = vmatpush1.bf16.msra.mxu0 0
        %1997 = vmatprep.subr.bf16.mxu0 0
        %1998 = vmatpush1.bf16.msra.mxu0 0
        %1999 = vmatprep.subr.bf16.mxu0 0
        %2000 = vmatpush1.bf16.msra.mxu0 0
        %2001 = vmatprep.subr.bf16.mxu0 0
        %2002 = vmatpush1.bf16.msra.mxu0 0
        %2003 = vmatprep.subr.bf16.mxu0 0
        %2004 = vmatpush1.bf16.msra.mxu0 0
        %2005 = vmatprep.subr.bf16.mxu0 0
        %2006 = vmatpush1.bf16.msra.mxu0 0
        %2007 = vmatprep.subr.bf16.mxu0 0
        %2008 = vmatpush1.bf16.msra.mxu0 0
        %2009 = vmatprep.subr.bf16.mxu0 0
        %2010 = vmatpush1.bf16.msra.mxu0 0
        %2011 = vmatprep.subr.bf16.mxu0 0
        %2012 = vmatpush1.bf16.msra.mxu0 0
        %2013 = vmatprep.subr.bf16.mxu0 0
        %2014 = vmatpush1.bf16.msra.mxu0 0
        %2015 = vmatprep.subr.bf16.mxu0 0
        %2016 = vmatpush1.bf16.msra.mxu0 0
        %2017 = vmatprep.mubr.bf16.mxu0 0
        %2018 = vmatmul.mubr.bf16.gmra.mrb[0].mxu0 %v1980
        %v2019 = vpop.f32.mrb[0].mxu0
        %v2020 = vadd.f32 0.0, %v2019
        %v2021 = vpop.f32.mrb[0].mxu0
        %v2022 = vadd.f32 0.0, %v2021
        %v2023 = vpop.f32.mrb[0].mxu0
        %v2024 = vadd.f32 0.0, %v2023
        %v2025 = vpop.f32.mrb[0].mxu0
        %v2026 = vadd.f32 0.0, %v2025
        %2027 = vmatprep.mubr.bf16.mxu0 0
        %2028 = vmatmul.mubr.bf16.gmra.mrb[0].mxu0 %v1983
        %v2029 = vpop.f32.mrb[0].mxu0
        %v2030 = vadd.f32 0.0, %v2029
        %v2031 = vpop.f32.mrb[0].mxu0
        %v2032 = vadd.f32 0.0, %v2031
        %v2033 = vpop.f32.mrb[0].mxu0
        %v2034 = vadd.f32 0.0, %v2033
        %v2035 = vpop.f32.mrb[0].mxu0
        %v2036 = vadd.f32 0.0, %v2035
        %2037 = vdwg.mxu0
        %v2038 = vadd.f32 %v1956, %v2020
        %v2039 = vadd.f32 %v1957, %v2022
        %v2040 = vadd.f32 %v1958, %v2024
        %v2041 = vadd.f32 %v1959, %v2026
        %v2042 = vadd.f32 %v1960, %v2030
        %v2043 = vadd.f32 %v1961, %v2032
        %v2044 = vadd.f32 %v1962, %v2034
        %v2045 = vadd.f32 %v1963, %v2036
        %v2046 = vld [vmem:[#allocation2 + $0x8] sm:$0xff]
        %v2047 = vld [vmem:[#allocation2 + $0x10] sm:$0xff]
        %v2048 = vld [vmem:[#allocation2 + $0x18] sm:$0xff]
        %v2049 = vld [vmem:[#allocation2 + $0x28] sm:$0xff]
        %v2050 = vld [vmem:[#allocation2 + $0x30] sm:$0xff]
        %v2051 = vld [vmem:[#allocation2 + $0x38] sm:$0xff]
        %2058 = vrot.lane.b32.xlu0 %v2046, 126
        %v2059 = vpop.permute.xlu0 %2058
        %2060 = vrot.lane.b32.xlu0 %v2047, 126
        %v2061 = vpop.permute.xlu0 %2060
        %2062 = vrot.lane.b32.xlu0 %v2048, 126
        %v2063 = vpop.permute.xlu0 %2062
        %2064 = vrot.lane.b32.xlu0 %v2049, 126
        %v2065 = vpop.permute.xlu0 %2064
        %2066 = vrot.lane.b32.xlu0 %v2050, 126
        %v2067 = vpop.permute.xlu0 %2066
        %2068 = vrot.lane.b32.xlu0 %v2051, 126
        %v2069 = vpop.permute.xlu0 %2068
        %vm2070 = vcmask 1031168
        %v2071 = vsel %vm2070, %v2059, %v2061
        %v2072 = vsel %vm2070, %v2061, %v2063
        %v2073 = vsel %vm2070, %v2065, %v2067
        %v2074 = vsel %vm2070, %v2067, %v2069
        %v2079 = vsel %vm1744, %v2071, 0.0
        %v2080 = vsel %vm1745, %v2072, 0.0
        %v2081 = vsel %vm1744, %v2073, 0.0
        %v2082 = vsel %vm1745, %v2074, 0.0
        %s2083 = scalar_lea.vmem %s6, 80
        %v2084 = vld [vmem:[%s2083] sm:$0xf]
        %v2085 = vld [vmem:[%s2083 + $0x4] sm:$0xf]
        %v2086 = vld [vmem:[%s2083 + $0x8] sm:$0xf]
        %v2087 = vld [vmem:[%s2083 + $0xc] sm:$0xf]
        %v2088 = vpack.c.bf16 %v2081, %v2079
        %v2089 = vpack.c.bf16 %v2082, %v2080
        %v2094 = vunpack.c.l.b16 %v2084
        %v2095 = vunpack.c.l.b16 %v2085
        %v2096 = vunpack.c.l.b16 %v2086
        %v2097 = vunpack.c.l.b16 %v2087
        %v2098 = vpack.c.b16 %v2095, %v2094
        %v2099 = vpack.c.b16 %v2097, %v2096
        %v2101 = vsel %vm1575, %v2098, 0
        %v2104 = vsel %vm1575, %v2099, 0
        %2106 = vmatprep.subr.bf16.mxu0 %v2089
        %2107 = vmatpush1.bf16.msra.mxu0 %v2088
        %2108 = vmatprep.subr.bf16.mxu0 0
        %2109 = vmatpush1.bf16.msra.mxu0 0
        %2110 = vmatprep.subr.bf16.mxu0 0
        %2111 = vmatpush1.bf16.msra.mxu0 0
        %2112 = vmatprep.subr.bf16.mxu0 0
        %2113 = vmatpush1.bf16.msra.mxu0 0
        %2114 = vmatprep.subr.bf16.mxu0 0
        %2115 = vmatpush1.bf16.msra.mxu0 0
        %2116 = vmatprep.subr.bf16.mxu0 0
        %2117 = vmatpush1.bf16.msra.mxu0 0
        %2118 = vmatprep.subr.bf16.mxu0 0
        %2119 = vmatpush1.bf16.msra.mxu0 0
        %2120 = vmatprep.subr.bf16.mxu0 0
        %2121 = vmatpush1.bf16.msra.mxu0 0
        %2122 = vmatprep.subr.bf16.mxu0 0
        %2123 = vmatpush1.bf16.msra.mxu0 0
        %2124 = vmatprep.subr.bf16.mxu0 0
        %2125 = vmatpush1.bf16.msra.mxu0 0
        %2126 = vmatprep.subr.bf16.mxu0 0
        %2127 = vmatpush1.bf16.msra.mxu0 0
        %2128 = vmatprep.subr.bf16.mxu0 0
        %2129 = vmatpush1.bf16.msra.mxu0 0
        %2130 = vmatprep.subr.bf16.mxu0 0
        %2131 = vmatpush1.bf16.msra.mxu0 0
        %2132 = vmatprep.subr.bf16.mxu0 0
        %2133 = vmatpush1.bf16.msra.mxu0 0
        %2134 = vmatprep.subr.bf16.mxu0 0
        %2135 = vmatpush1.bf16.msra.mxu0 0
        %2136 = vmatprep.subr.bf16.mxu0 0
        %2137 = vmatpush1.bf16.msra.mxu0 0
        %2138 = vmatprep.mubr.bf16.mxu0 0
        %2139 = vmatmul.mubr.bf16.gmra.mrb[0].mxu0 %v2101
        %v2140 = vpop.f32.mrb[0].mxu0
        %v2141 = vadd.f32 0.0, %v2140
        %v2142 = vpop.f32.mrb[0].mxu0
        %v2143 = vadd.f32 0.0, %v2142
        %v2144 = vpop.f32.mrb[0].mxu0
        %v2145 = vadd.f32 0.0, %v2144
        %v2146 = vpop.f32.mrb[0].mxu0
        %v2147 = vadd.f32 0.0, %v2146
        %2148 = vmatprep.mubr.bf16.mxu0 0
        %2149 = vmatmul.mubr.bf16.gmra.mrb[0].mxu0 %v2104
        %v2150 = vpop.f32.mrb[0].mxu0
        %v2151 = vadd.f32 0.0, %v2150
        %v2152 = vpop.f32.mrb[0].mxu0
        %v2153 = vadd.f32 0.0, %v2152
        %v2154 = vpop.f32.mrb[0].mxu0
        %v2155 = vadd.f32 0.0, %v2154
        %v2156 = vpop.f32.mrb[0].mxu0
        %v2157 = vadd.f32 0.0, %v2156
        %2158 = vdwg.mxu0
        %v2159 = vadd.f32 %v2038, %v2141
        %v2160 = vadd.f32 %v2039, %v2143
        %v2161 = vadd.f32 %v2040, %v2145
        %v2162 = vadd.f32 %v2041, %v2147
        %v2163 = vadd.f32 %v2042, %v2151
        %v2164 = vadd.f32 %v2043, %v2153
        %v2165 = vadd.f32 %v2044, %v2155
        %v2166 = vadd.f32 %v2045, %v2157
        %2167 = vrot.lane.b32.xlu0 %v2046, 98
        %v2168 = vpop.permute.xlu0 %2167
        %2169 = vrot.lane.b32.xlu0 %v2047, 98
        %v2170 = vpop.permute.xlu0 %2169
        %2171 = vrot.lane.b32.xlu0 %v2048, 98
        %v2172 = vpop.permute.xlu0 %2171
        %2173 = vrot.lane.b32.xlu0 %v2049, 98
        %v2174 = vpop.permute.xlu0 %2173
        %2175 = vrot.lane.b32.xlu0 %v2050, 98
        %v2176 = vpop.permute.xlu0 %2175
        %2177 = vrot.lane.b32.xlu0 %v2051, 98
        %v2178 = vpop.permute.xlu0 %2177
        %vm2179 = vcmask 801792
        %v2180 = vsel %vm2179, %v2168, %v2170
        %v2181 = vsel %vm2179, %v2170, %v2172
        %v2182 = vsel %vm2179, %v2174, %v2176
        %v2183 = vsel %vm2179, %v2176, %v2178
        %v2188 = vsel %vm1526, %v2180, 0.0
        %v2189 = vsel %vm1527, %v2181, 0.0
        %v2190 = vsel %vm1526, %v2182, 0.0
        %v2191 = vsel %vm1527, %v2183, 0.0
        %s2192 = scalar_lea.vmem %s6, 96
        %v2193 = vld [vmem:[%s2192] sm:$0xf]
        %v2194 = vld [vmem:[%s2192 + $0x4] sm:$0xf]
        %v2195 = vld [vmem:[%s2192 + $0x8] sm:$0xf]
        %v2196 = vld [vmem:[%s2192 + $0xc] sm:$0xf]
        %v2197 = vpack.c.bf16 %v2190, %v2188
        %v2198 = vpack.c.bf16 %v2191, %v2189
        %v2203 = vunpack.c.l.b16 %v2193
        %v2204 = vunpack.c.l.b16 %v2194
        %v2205 = vunpack.c.l.b16 %v2195
        %v2206 = vunpack.c.l.b16 %v2196
        %v2207 = vpack.c.b16 %v2204, %v2203
        %v2208 = vpack.c.b16 %v2206, %v2205
        %v2210 = vsel %vm1575, %v2207, 0
        %v2213 = vsel %vm1575, %v2208, 0
        %2215 = vmatprep.subr.bf16.mxu0 %v2198
        %2216 = vmatpush1.bf16.msra.mxu0 %v2197
        %2217 = vmatprep.subr.bf16.mxu0 0
        %2218 = vmatpush1.bf16.msra.mxu0 0
        %2219 = vmatprep.subr.bf16.mxu0 0
        %2220 = vmatpush1.bf16.msra.mxu0 0
        %2221 = vmatprep.subr.bf16.mxu0 0
        %2222 = vmatpush1.bf16.msra.mxu0 0
        %2223 = vmatprep.subr.bf16.mxu0 0
        %2224 = vmatpush1.bf16.msra.mxu0 0
        %2225 = vmatprep.subr.bf16.mxu0 0
        %2226 = vmatpush1.bf16.msra.mxu0 0
        %2227 = vmatprep.subr.bf16.mxu0 0
        %2228 = vmatpush1.bf16.msra.mxu0 0
        %2229 = vmatprep.subr.bf16.mxu0 0
        %2230 = vmatpush1.bf16.msra.mxu0 0
        %2231 = vmatprep.subr.bf16.mxu0 0
        %2232 = vmatpush1.bf16.msra.mxu0 0
        %2233 = vmatprep.subr.bf16.mxu0 0
        %2234 = vmatpush1.bf16.msra.mxu0 0
        %2235 = vmatprep.subr.bf16.mxu0 0
        %2236 = vmatpush1.bf16.msra.mxu0 0
        %2237 = vmatprep.subr.bf16.mxu0 0
        %2238 = vmatpush1.bf16.msra.mxu0 0
        %2239 = vmatprep.subr.bf16.mxu0 0
        %2240 = vmatpush1.bf16.msra.mxu0 0
        %2241 = vmatprep.subr.bf16.mxu0 0
        %2242 = vmatpush1.bf16.msra.mxu0 0
        %2243 = vmatprep.subr.bf16.mxu0 0
        %2244 = vmatpush1.bf16.msra.mxu0 0
        %2245 = vmatprep.subr.bf16.mxu0 0
        %2246 = vmatpush1.bf16.msra.mxu0 0
        %2247 = vmatprep.mubr.bf16.mxu0 0
        %2248 = vmatmul.mubr.bf16.gmra.mrb[0].mxu0 %v2210
        %v2249 = vpop.f32.mrb[0].mxu0
        %v2250 = vadd.f32 0.0, %v2249
        %v2251 = vpop.f32.mrb[0].mxu0
        %v2252 = vadd.f32 0.0, %v2251
        %v2253 = vpop.f32.mrb[0].mxu0
        %v2254 = vadd.f32 0.0, %v2253
        %v2255 = vpop.f32.mrb[0].mxu0
        %v2256 = vadd.f32 0.0, %v2255
        %2257 = vmatprep.mubr.bf16.mxu0 0
        %2258 = vmatmul.mubr.bf16.gmra.mrb[0].mxu0 %v2213
        %v2259 = vpop.f32.mrb[0].mxu0
        %v2260 = vadd.f32 0.0, %v2259
        %v2261 = vpop.f32.mrb[0].mxu0
        %v2262 = vadd.f32 0.0, %v2261
        %v2263 = vpop.f32.mrb[0].mxu0
        %v2264 = vadd.f32 0.0, %v2263
        %v2265 = vpop.f32.mrb[0].mxu0
        %v2266 = vadd.f32 0.0, %v2265
        %2267 = vdwg.mxu0
        %v2268 = vadd.f32 %v2159, %v2250
        %v2269 = vadd.f32 %v2160, %v2252
        %v2270 = vadd.f32 %v2161, %v2254
        %v2271 = vadd.f32 %v2162, %v2256
        %v2272 = vadd.f32 %v2163, %v2260
        %v2273 = vadd.f32 %v2164, %v2262
        %v2274 = vadd.f32 %v2165, %v2264
        %v2275 = vadd.f32 %v2166, %v2266
        %s2276 = scalar_lea.vmem %s6, 112
        %v2277 = vld [vmem:[%s2276] sm:$0xf]
        %v2278 = vld [vmem:[%s2276 + $0x4] sm:$0xf]
        %v2279 = vld [vmem:[%s2276 + $0x8] sm:$0xf]
        %v2280 = vld [vmem:[%s2276 + $0xc] sm:$0xf]
        %v2281 = vpack.c.bf16 %v2049, %v2046
        %v2282 = vpack.c.bf16 %v2050, %v2047
        %v2283 = vpack.c.bf16 %v2051, %v2048
        %v2288 = vunpack.c.l.b16 %v2277
        %v2289 = vunpack.c.l.b16 %v2278
        %v2290 = vunpack.c.l.b16 %v2279
        %v2291 = vunpack.c.l.b16 %v2280
        %v2292 = vpack.c.b16 %v2289, %v2288
        %v2293 = vpack.c.b16 %v2291, %v2290
        %2297 = vrot.lane.b32.xlu0 %v2281, 96
        %v2298 = vpop.permute.xlu0 %2297
        %2299 = vrot.lane.b32.xlu0 %v2282, 96
        %v2300 = vpop.permute.xlu0 %2299
        %2301 = vrot.lane.b32.xlu0 %v2283, 96
        %v2302 = vpop.permute.xlu0 %2301
        %vm2303 = vcmask 785408
        %v2304 = vsel %vm2303, %v2298, %v2300
        %v2305 = vsel %vm2303, %v2300, %v2302
        %v2309 = vsel %vm1575, %v2292, 0
        %v2312 = vsel %vm1575, %v2293, 0
        %2314 = vmatprep.subr.bf16.mxu0 %v2305
        %2315 = vmatpush1.bf16.msra.mxu0 %v2304
        %2316 = vmatprep.subr.bf16.mxu0 0
        %2317 = vmatpush1.bf16.msra.mxu0 0
        %2318 = vmatprep.subr.bf16.mxu0 0
        %2319 = vmatpush1.bf16.msra.mxu0 0
        %2320 = vmatprep.subr.bf16.mxu0 0
        %2321 = vmatpush1.bf16.msra.mxu0 0
        %2322 = vmatprep.subr.bf16.mxu0 0
        %2323 = vmatpush1.bf16.msra.mxu0 0
        %2324 = vmatprep.subr.bf16.mxu0 0
        %2325 = vmatpush1.bf16.msra.mxu0 0
        %2326 = vmatprep.subr.bf16.mxu0 0
        %2327 = vmatpush1.bf16.msra.mxu0 0
        %2328 = vmatprep.subr.bf16.mxu0 0
        %2329 = vmatpush1.bf16.msra.mxu0 0
        %2330 = vmatprep.subr.bf16.mxu0 0
        %2331 = vmatpush1.bf16.msra.mxu0 0
        %2332 = vmatprep.subr.bf16.mxu0 0
        %2333 = vmatpush1.bf16.msra.mxu0 0
        %2334 = vmatprep.subr.bf16.mxu0 0
        %2335 = vmatpush1.bf16.msra.mxu0 0
        %2336 = vmatprep.subr.bf16.mxu0 0
        %2337 = vmatpush1.bf16.msra.mxu0 0
        %2338 = vmatprep.subr.bf16.mxu0 0
        %2339 = vmatpush1.bf16.msra.mxu0 0
        %2340 = vmatprep.subr.bf16.mxu0 0
        %2341 = vmatpush1.bf16.msra.mxu0 0
        %2342 = vmatprep.subr.bf16.mxu0 0
        %2343 = vmatpush1.bf16.msra.mxu0 0
        %2344 = vmatprep.subr.bf16.mxu0 0
        %2345 = vmatpush1.bf16.msra.mxu0 0
        %2346 = vmatprep.mubr.bf16.mxu0 0
        %2347 = vmatmul.mubr.bf16.gmra.mrb[0].mxu0 %v2309
        %v2348 = vpop.f32.mrb[0].mxu0
        %v2349 = vadd.f32 0.0, %v2348
        %v2350 = vpop.f32.mrb[0].mxu0
        %v2351 = vadd.f32 0.0, %v2350
        %v2352 = vpop.f32.mrb[0].mxu0
        %v2353 = vadd.f32 0.0, %v2352
        %v2354 = vpop.f32.mrb[0].mxu0
        %v2355 = vadd.f32 0.0, %v2354
        %2356 = vmatprep.mubr.bf16.mxu0 0
        %2357 = vmatmul.mubr.bf16.gmra.mrb[0].mxu0 %v2312
        %v2358 = vpop.f32.mrb[0].mxu0
        %v2359 = vadd.f32 0.0, %v2358
        %v2360 = vpop.f32.mrb[0].mxu0
        %v2361 = vadd.f32 0.0, %v2360
        %v2362 = vpop.f32.mrb[0].mxu0
        %v2363 = vadd.f32 0.0, %v2362
        %v2364 = vpop.f32.mrb[0].mxu0
        %v2365 = vadd.f32 0.0, %v2364
        %2366 = vdwg.mxu0
        %v2367 = vadd.f32 %v2268, %v2349
        %v2368 = vadd.f32 %v2269, %v2351
        %v2369 = vadd.f32 %v2270, %v2353
        %v2370 = vadd.f32 %v2271, %v2355
        %v2371 = vadd.f32 %v2272, %v2359
        %v2372 = vadd.f32 %v2273, %v2361
        %v2373 = vadd.f32 %v2274, %v2363
        %v2374 = vadd.f32 %v2275, %v2365
        %2375 = vrot.lane.b32.xlu0 %v2046, 94
        %v2376 = vpop.permute.xlu0 %2375
        %2377 = vrot.lane.b32.xlu0 %v2047, 94
        %v2378 = vpop.permute.xlu0 %2377
        %2379 = vrot.lane.b32.xlu0 %v2048, 94
        %v2380 = vpop.permute.xlu0 %2379
        %2381 = vrot.lane.b32.xlu0 %v2049, 94
        %v2382 = vpop.permute.xlu0 %2381
        %2383 = vrot.lane.b32.xlu0 %v2050, 94
        %v2384 = vpop.permute.xlu0 %2383
        %2385 = vrot.lane.b32.xlu0 %v2051, 94
        %v2386 = vpop.permute.xlu0 %2385
        %vm2387 = vcmask 769024
        %v2388 = vsel %vm2387, %v2376, %v2378
        %v2389 = vsel %vm2387, %v2378, %v2380
        %v2390 = vsel %vm2387, %v2382, %v2384
        %v2391 = vsel %vm2387, %v2384, %v2386
        %v2396 = vsel %vm1744, %v2388, 0.0
        %v2397 = vsel %vm1745, %v2389, 0.0
        %v2398 = vsel %vm1744, %v2390, 0.0
        %v2399 = vsel %vm1745, %v2391, 0.0
        %s2400 = scalar_lea.vmem %s6, 128
        %v2401 = vld [vmem:[%s2400] sm:$0xf]
        %v2402 = vld [vmem:[%s2400 + $0x4] sm:$0xf]
        %v2403 = vld [vmem:[%s2400 + $0x8] sm:$0xf]
        %v2404 = vld [vmem:[%s2400 + $0xc] sm:$0xf]
        %v2405 = vpack.c.bf16 %v2398, %v2396
        %v2406 = vpack.c.bf16 %v2399, %v2397
        %v2411 = vunpack.c.l.b16 %v2401
        %v2412 = vunpack.c.l.b16 %v2402
        %v2413 = vunpack.c.l.b16 %v2403
        %v2414 = vunpack.c.l.b16 %v2404
        %v2415 = vpack.c.b16 %v2412, %v2411
        %v2416 = vpack.c.b16 %v2414, %v2413
        %v2418 = vsel %vm1575, %v2415, 0
        %v2421 = vsel %vm1575, %v2416, 0
        %2423 = vmatprep.subr.bf16.mxu0 %v2406
        %2424 = vmatpush1.bf16.msra.mxu0 %v2405
        %2425 = vmatprep.subr.bf16.mxu0 0
        %2426 = vmatpush1.bf16.msra.mxu0 0
        %2427 = vmatprep.subr.bf16.mxu0 0
        %2428 = vmatpush1.bf16.msra.mxu0 0
        %2429 = vmatprep.subr.bf16.mxu0 0
        %2430 = vmatpush1.bf16.msra.mxu0 0
        %2431 = vmatprep.subr.bf16.mxu0 0
        %2432 = vmatpush1.bf16.msra.mxu0 0
        %2433 = vmatprep.subr.bf16.mxu0 0
        %2434 = vmatpush1.bf16.msra.mxu0 0
        %2435 = vmatprep.subr.bf16.mxu0 0
        %2436 = vmatpush1.bf16.msra.mxu0 0
        %2437 = vmatprep.subr.bf16.mxu0 0
        %2438 = vmatpush1.bf16.msra.mxu0 0
        %2439 = vmatprep.subr.bf16.mxu0 0
        %2440 = vmatpush1.bf16.msra.mxu0 0
        %2441 = vmatprep.subr.bf16.mxu0 0
        %2442 = vmatpush1.bf16.msra.mxu0 0
        %2443 = vmatprep.subr.bf16.mxu0 0
        %2444 = vmatpush1.bf16.msra.mxu0 0
        %2445 = vmatprep.subr.bf16.mxu0 0
        %2446 = vmatpush1.bf16.msra.mxu0 0
        %2447 = vmatprep.subr.bf16.mxu0 0
        %2448 = vmatpush1.bf16.msra.mxu0 0
        %2449 = vmatprep.subr.bf16.mxu0 0
        %2450 = vmatpush1.bf16.msra.mxu0 0
        %2451 = vmatprep.subr.bf16.mxu0 0
        %2452 = vmatpush1.bf16.msra.mxu0 0
        %2453 = vmatprep.subr.bf16.mxu0 0
        %2454 = vmatpush1.bf16.msra.mxu0 0
        %2455 = vmatprep.mubr.bf16.mxu0 0
        %2456 = vmatmul.mubr.bf16.gmra.mrb[0].mxu0 %v2418
        %v2457 = vpop.f32.mrb[0].mxu0
        %v2458 = vadd.f32 0.0, %v2457
        %v2459 = vpop.f32.mrb[0].mxu0
        %v2460 = vadd.f32 0.0, %v2459
        %v2461 = vpop.f32.mrb[0].mxu0
        %v2462 = vadd.f32 0.0, %v2461
        %v2463 = vpop.f32.mrb[0].mxu0
        %v2464 = vadd.f32 0.0, %v2463
        %2465 = vmatprep.mubr.bf16.mxu0 0
        %2466 = vmatmul.mubr.bf16.gmra.mrb[0].mxu0 %v2421
        %v2467 = vpop.f32.mrb[0].mxu0
        %v2468 = vadd.f32 0.0, %v2467
        %v2469 = vpop.f32.mrb[0].mxu0
        %v2470 = vadd.f32 0.0, %v2469
        %v2471 = vpop.f32.mrb[0].mxu0
        %v2472 = vadd.f32 0.0, %v2471
        %v2473 = vpop.f32.mrb[0].mxu0
        %v2474 = vadd.f32 0.0, %v2473
        %2475 = vdwg.mxu0
        %v2476 = vadd.f32 %v2367, %v2458
        %v2477 = vadd.f32 %v2368, %v2460
        %v2478 = vadd.f32 %v2369, %v2462
        %v2479 = vadd.f32 %v2370, %v2464
        %v2480 = vadd.f32 %v2371, %v2468
        %v2481 = vadd.f32 %v2372, %v2470
        %v2482 = vadd.f32 %v2373, %v2472
        %v2483 = vadd.f32 %v2374, %v2474
        %v2484 = vmax.f32 %v2476, 0.0
        %v2485 = vmax.f32 %v2477, 0.0
        %v2486 = vmax.f32 %v2478, 0.0
        %v2487 = vmax.f32 %v2479, 0.0
        %v2488 = vmax.f32 %v2480, 0.0
        %v2489 = vmax.f32 %v2481, 0.0
        %v2490 = vmax.f32 %v2482, 0.0
        %v2491 = vmax.f32 %v2483, 0.0
        %2492 = vst [vmem:[#allocation2 + $0x8] sm:$0xff] %v2484
        %2493 = vst [vmem:[#allocation2 + $0x10] sm:$0xff] %v2485
        %2494 = vst [vmem:[#allocation2 + $0x28] sm:$0xff] %v2486
        %2495 = vst [vmem:[#allocation2 + $0x30] sm:$0xff] %v2487
        %2496 = vst [vmem:[#allocation2 + $0x48] sm:$0xff] %v2488
        %2497 = vst [vmem:[#allocation2 + $0x50] sm:$0xff] %v2489
        %2498 = vst [vmem:[#allocation2 + $0x68] sm:$0xff] %v2490
        %2499 = vst [vmem:[#allocation2 + $0x70] sm:$0xff] %v2491
        %v2500 = vld [vmem:[%s9] sm:$0xff]
        %v2501 = vld [vmem:[%s9 + $0x8] sm:$0xff]
        %v2502 = vld [vmem:[%s9 + $0x10] sm:$0xff]
        %v2503 = vld [vmem:[%s9 + $0x18] sm:$0xff]
        %v2504 = vld [vmem:[%s9 + $0x20] sm:$0xff]
        %v2505 = vld [vmem:[%s9 + $0x28] sm:$0xff]
        %v2506 = vld [vmem:[%s9 + $0x30] sm:$0xff]
        %v2507 = vld [vmem:[%s9 + $0x38] sm:$0xff]
        %2509 = vset.pattern.permute.xlu0 0
        %2510 = vperm.xlu0 %2509, %v2500
        %v2511 = vpop.permute.xlu0 %2510
        %2514 = vset.pattern.permute.xlu0 0
        %2515 = vperm.xlu0 %2514, %v2501
        %v2516 = vpop.permute.xlu0 %2515
        %2519 = vset.pattern.permute.xlu0 0
        %2520 = vperm.xlu0 %2519, %v2502
        %v2521 = vpop.permute.xlu0 %2520
        %2524 = vset.pattern.permute.xlu0 0
        %2525 = vperm.xlu0 %2524, %v2503
        %v2526 = vpop.permute.xlu0 %2525
        %2529 = vset.pattern.permute.xlu0 0
        %2530 = vperm.xlu0 %2529, %v2504
        %v2531 = vpop.permute.xlu0 %2530
        %2534 = vset.pattern.permute.xlu0 0
        %2535 = vperm.xlu0 %2534, %v2505
        %v2536 = vpop.permute.xlu0 %2535
        %2539 = vset.pattern.permute.xlu0 0
        %2540 = vperm.xlu0 %2539, %v2506
        %v2541 = vpop.permute.xlu0 %2540
        %2544 = vset.pattern.permute.xlu0 0
        %2545 = vperm.xlu0 %2544, %v2507
        %v2546 = vpop.permute.xlu0 %2545
        %v2548 = vld [vmem:[#allocation2] sm:$0xff]
        %v2549 = vld [vmem:[#allocation2 + $0x8] sm:$0xff]
        %v2550 = vld [vmem:[#allocation2 + $0x10] sm:$0xff]
        %v2551 = vld [vmem:[#allocation2 + $0x20] sm:$0xff]
        %v2552 = vld [vmem:[#allocation2 + $0x28] sm:$0xff]
        %v2553 = vld [vmem:[#allocation2 + $0x30] sm:$0xff]
        %v2554 = vld [vmem:[#allocation2 + $0x40] sm:$0xff]
        %v2555 = vld [vmem:[#allocation2 + $0x48] sm:$0xff]
        %v2556 = vld [vmem:[#allocation2 + $0x50] sm:$0xff]
        %v2557 = vld [vmem:[#allocation2 + $0x60] sm:$0xff]
        %v2558 = vld [vmem:[#allocation2 + $0x68] sm:$0xff]
        %v2559 = vld [vmem:[#allocation2 + $0x70] sm:$0xff]
        %v2560 = vsel %vm748, 1, 0
        %v2561 = vsel %vm749, 1, 0
        %vm2562 = vcmp.eq.s32.totalorder %v2560, 1
        %vm2563 = vcmp.eq.s32.totalorder %v2561, 1
        %2576 = vrot.lane.b32.xlu0 %v2548, 68
        %v2577 = vpop.permute.xlu0 %2576
        %2578 = vrot.lane.b32.xlu0 %v2549, 68
        %v2579 = vpop.permute.xlu0 %2578
        %2580 = vrot.lane.b32.xlu0 %v2550, 68
        %v2581 = vpop.permute.xlu0 %2580
        %2582 = vrot.lane.b32.xlu0 %v2551, 68
        %v2583 = vpop.permute.xlu0 %2582
        %2584 = vrot.lane.b32.xlu0 %v2552, 68
        %v2585 = vpop.permute.xlu0 %2584
        %2586 = vrot.lane.b32.xlu0 %v2553, 68
        %v2587 = vpop.permute.xlu0 %2586
        %2588 = vrot.lane.b32.xlu0 %v2554, 68
        %v2589 = vpop.permute.xlu0 %2588
        %2590 = vrot.lane.b32.xlu0 %v2555, 68
        %v2591 = vpop.permute.xlu0 %2590
        %2592 = vrot.lane.b32.xlu0 %v2556, 68
        %v2593 = vpop.permute.xlu0 %2592
        %2594 = vrot.lane.b32.xlu0 %v2557, 68
        %v2595 = vpop.permute.xlu0 %2594
        %2596 = vrot.lane.b32.xlu0 %v2558, 68
        %v2597 = vpop.permute.xlu0 %2596
        %2598 = vrot.lane.b32.xlu0 %v2559, 68
        %v2599 = vpop.permute.xlu0 %2598
        %vm2600 = vcmask 556032
        %v2601 = vsel %vm2600, %v2577, %v2579
        %v2602 = vsel %vm2600, %v2579, %v2581
        %v2603 = vsel %vm2600, %v2583, %v2585
        %v2604 = vsel %vm2600, %v2585, %v2587
        %v2605 = vsel %vm2600, %v2589, %v2591
        %v2606 = vsel %vm2600, %v2591, %v2593
        %v2607 = vsel %vm2600, %v2595, %v2597
        %v2608 = vsel %vm2600, %v2597, %v2599
        %v2617 = vsel %vm2562, %v2601, 0.0
        %v2618 = vsel %vm2563, %v2602, 0.0
        %v2619 = vsel %vm2562, %v2603, 0.0
        %v2620 = vsel %vm2563, %v2604, 0.0
        %v2621 = vsel %vm2562, %v2605, 0.0
        %v2622 = vsel %vm2563, %v2606, 0.0
        %v2623 = vsel %vm2562, %v2607, 0.0
        %v2624 = vsel %vm2563, %v2608, 0.0
        %v2625 = vld [vmem:[%s8] sm:$0xf]
        %v2626 = vld [vmem:[%s8 + $0x4] sm:$0xf]
        %v2627 = vld [vmem:[%s8 + $0x8] sm:$0xf]
        %v2628 = vld [vmem:[%s8 + $0xc] sm:$0xf]
        %v2629 = vld [vmem:[%s8 + $0x10] sm:$0xf]
        %v2630 = vld [vmem:[%s8 + $0x14] sm:$0xf]
        %v2631 = vld [vmem:[%s8 + $0x18] sm:$0xf]
        %v2632 = vld [vmem:[%s8 + $0x1c] sm:$0xf]
        %v2633 = vpack.c.bf16 %v2619, %v2617
        %v2634 = vpack.c.bf16 %v2620, %v2618
        %v2635 = vpack.c.bf16 %v2623, %v2621
        %v2636 = vpack.c.bf16 %v2624, %v2622
        %v2645 = vunpack.c.l.b16 %v2625
        %v2646 = vunpack.c.l.b16 %v2626
        %v2647 = vunpack.c.l.b16 %v2627
        %v2648 = vunpack.c.l.b16 %v2628
        %v2649 = vunpack.c.l.b16 %v2629
        %v2650 = vunpack.c.l.b16 %v2630
        %v2651 = vunpack.c.l.b16 %v2631
        %v2652 = vunpack.c.l.b16 %v2632
        %v2653 = vpack.c.b16 %v2646, %v2645
        %v2654 = vpack.c.b16 %v2648, %v2647
        %v2655 = vpack.c.b16 %v2650, %v2649
        %v2656 = vpack.c.b16 %v2652, %v2651
        %vm2657 = vcmask 261120
        %v2659 = vsel %vm2657, %v2653, 0
        %v2662 = vsel %vm2657, %v2654, 0
        %v2665 = vsel %vm2657, %v2655, 0
        %v2668 = vsel %vm2657, %v2656, 0
        %2670 = vmatprep.subr.bf16.mxu0 %v2634
        %2671 = vmatpush1.bf16.msra.mxu0 %v2633
        %2672 = vmatprep.subr.bf16.mxu0 %v2636
        %2673 = vmatpush1.bf16.msra.mxu0 %v2635
        %2674 = vmatprep.subr.bf16.mxu0 0
        %2675 = vmatpush1.bf16.msra.mxu0 0
        %2676 = vmatprep.subr.bf16.mxu0 0
        %2677 = vmatpush1.bf16.msra.mxu0 0
        %2678 = vmatprep.subr.bf16.mxu0 0
        %2679 = vmatpush1.bf16.msra.mxu0 0
        %2680 = vmatprep.subr.bf16.mxu0 0
        %2681 = vmatpush1.bf16.msra.mxu0 0
        %2682 = vmatprep.subr.bf16.mxu0 0
        %2683 = vmatpush1.bf16.msra.mxu0 0
        %2684 = vmatprep.subr.bf16.mxu0 0
        %2685 = vmatpush1.bf16.msra.mxu0 0
        %2686 = vmatprep.subr.bf16.mxu0 0
        %2687 = vmatpush1.bf16.msra.mxu0 0
        %2688 = vmatprep.subr.bf16.mxu0 0
        %2689 = vmatpush1.bf16.msra.mxu0 0
        %2690 = vmatprep.subr.bf16.mxu0 0
        %2691 = vmatpush1.bf16.msra.mxu0 0
        %2692 = vmatprep.subr.bf16.mxu0 0
        %2693 = vmatpush1.bf16.msra.mxu0 0
        %2694 = vmatprep.subr.bf16.mxu0 0
        %2695 = vmatpush1.bf16.msra.mxu0 0
        %2696 = vmatprep.subr.bf16.mxu0 0
        %2697 = vmatpush1.bf16.msra.mxu0 0
        %2698 = vmatprep.subr.bf16.mxu0 0
        %2699 = vmatpush1.bf16.msra.mxu0 0
        %2700 = vmatprep.subr.bf16.mxu0 0
        %2701 = vmatpush1.bf16.msra.mxu0 0
        %2702 = vmatprep.mubr.bf16.mxu0 0
        %2703 = vmatmul.mubr.bf16.gmra.mrb[0].mxu0 %v2659
        %v2704 = vpop.f32.mrb[0].mxu0
        %v2705 = vadd.f32 0.0, %v2704
        %v2706 = vpop.f32.mrb[0].mxu0
        %v2707 = vadd.f32 0.0, %v2706
        %v2708 = vpop.f32.mrb[0].mxu0
        %v2709 = vadd.f32 0.0, %v2708
        %v2710 = vpop.f32.mrb[0].mxu0
        %v2711 = vadd.f32 0.0, %v2710
        %2712 = vmatprep.mubr.bf16.mxu0 0
        %2713 = vmatmul.mubr.bf16.gmra.mrb[0].mxu0 %v2662
        %v2714 = vpop.f32.mrb[0].mxu0
        %v2715 = vadd.f32 0.0, %v2714
        %v2716 = vpop.f32.mrb[0].mxu0
        %v2717 = vadd.f32 0.0, %v2716
        %v2718 = vpop.f32.mrb[0].mxu0
        %v2719 = vadd.f32 0.0, %v2718
        %v2720 = vpop.f32.mrb[0].mxu0
        %v2721 = vadd.f32 0.0, %v2720
        %2722 = vmatprep.mubr.bf16.mxu0 0
        %2723 = vmatmul.mubr.bf16.gmra.mrb[0].mxu0 %v2665
        %v2724 = vpop.f32.mrb[0].mxu0
        %v2725 = vadd.f32 0.0, %v2724
        %v2726 = vpop.f32.mrb[0].mxu0
        %v2727 = vadd.f32 0.0, %v2726
        %v2728 = vpop.f32.mrb[0].mxu0
        %v2729 = vadd.f32 0.0, %v2728
        %v2730 = vpop.f32.mrb[0].mxu0
        %v2731 = vadd.f32 0.0, %v2730
        %2732 = vmatprep.mubr.bf16.mxu0 0
        %2733 = vmatmul.mubr.bf16.gmra.mrb[0].mxu0 %v2668
        %v2734 = vpop.f32.mrb[0].mxu0
        %v2735 = vadd.f32 0.0, %v2734
        %v2736 = vpop.f32.mrb[0].mxu0
        %v2737 = vadd.f32 0.0, %v2736
        %v2738 = vpop.f32.mrb[0].mxu0
        %v2739 = vadd.f32 0.0, %v2738
        %v2740 = vpop.f32.mrb[0].mxu0
        %v2741 = vadd.f32 0.0, %v2740
        %2742 = vdwg.mxu0
        %v2743 = vadd.f32 %v2511, %v2705
        %v2744 = vadd.f32 %v2511, %v2707
        %v2745 = vadd.f32 %v2516, %v2709
        %v2746 = vadd.f32 %v2516, %v2711
        %v2747 = vadd.f32 %v2521, %v2715
        %v2748 = vadd.f32 %v2521, %v2717
        %v2749 = vadd.f32 %v2526, %v2719
        %v2750 = vadd.f32 %v2526, %v2721
        %v2751 = vadd.f32 %v2531, %v2725
        %v2752 = vadd.f32 %v2531, %v2727
        %v2753 = vadd.f32 %v2536, %v2729
        %v2754 = vadd.f32 %v2536, %v2731
        %v2755 = vadd.f32 %v2541, %v2735
        %v2756 = vadd.f32 %v2541, %v2737
        %v2757 = vadd.f32 %v2546, %v2739
        %v2758 = vadd.f32 %v2546, %v2741
        %s2759 = scalar_lea.vmem %s8, 32
        %v2760 = vld [vmem:[%s2759] sm:$0xf]
        %v2761 = vld [vmem:[%s2759 + $0x4] sm:$0xf]
        %v2762 = vld [vmem:[%s2759 + $0x8] sm:$0xf]
        %v2763 = vld [vmem:[%s2759 + $0xc] sm:$0xf]
        %v2764 = vld [vmem:[%s2759 + $0x10] sm:$0xf]
        %v2765 = vld [vmem:[%s2759 + $0x14] sm:$0xf]
        %v2766 = vld [vmem:[%s2759 + $0x18] sm:$0xf]
        %v2767 = vld [vmem:[%s2759 + $0x1c] sm:$0xf]
        %v2768 = vpack.c.bf16 %v2551, %v2548
        %v2769 = vpack.c.bf16 %v2552, %v2549
        %v2770 = vpack.c.bf16 %v2553, %v2550
        %v2771 = vpack.c.bf16 %v2557, %v2554
        %v2772 = vpack.c.bf16 %v2558, %v2555
        %v2773 = vpack.c.bf16 %v2559, %v2556
        %v2782 = vunpack.c.l.b16 %v2760
        %v2783 = vunpack.c.l.b16 %v2761
        %v2784 = vunpack.c.l.b16 %v2762
        %v2785 = vunpack.c.l.b16 %v2763
        %v2786 = vunpack.c.l.b16 %v2764
        %v2787 = vunpack.c.l.b16 %v2765
        %v2788 = vunpack.c.l.b16 %v2766
        %v2789 = vunpack.c.l.b16 %v2767
        %v2790 = vpack.c.b16 %v2783, %v2782
        %v2791 = vpack.c.b16 %v2785, %v2784
        %v2792 = vpack.c.b16 %v2787, %v2786
        %v2793 = vpack.c.b16 %v2789, %v2788
        %2800 = vrot.lane.b32.xlu0 %v2768, 64
        %v2801 = vpop.permute.xlu0 %2800
        %2802 = vrot.lane.b32.xlu0 %v2769, 64
        %v2803 = vpop.permute.xlu0 %2802
        %2804 = vrot.lane.b32.xlu0 %v2770, 64
        %v2805 = vpop.permute.xlu0 %2804
        %2806 = vrot.lane.b32.xlu0 %v2771, 64
        %v2807 = vpop.permute.xlu0 %2806
        %2808 = vrot.lane.b32.xlu0 %v2772, 64
        %v2809 = vpop.permute.xlu0 %2808
        %2810 = vrot.lane.b32.xlu0 %v2773, 64
        %v2811 = vpop.permute.xlu0 %2810
        %vm2812 = vcmask 523264
        %v2813 = vsel %vm2812, %v2801, %v2803
        %v2814 = vsel %vm2812, %v2803, %v2805
        %v2815 = vsel %vm2812, %v2807, %v2809
        %v2816 = vsel %vm2812, %v2809, %v2811
        %v2822 = vsel %vm2657, %v2790, 0
        %v2825 = vsel %vm2657, %v2791, 0
        %v2828 = vsel %vm2657, %v2792, 0
        %v2831 = vsel %vm2657, %v2793, 0
        %2833 = vmatprep.subr.bf16.mxu0 %v2814
        %2834 = vmatpush1.bf16.msra.mxu0 %v2813
        %2835 = vmatprep.subr.bf16.mxu0 %v2816
        %2836 = vmatpush1.bf16.msra.mxu0 %v2815
        %2837 = vmatprep.subr.bf16.mxu0 0
        %2838 = vmatpush1.bf16.msra.mxu0 0
        %2839 = vmatprep.subr.bf16.mxu0 0
        %2840 = vmatpush1.bf16.msra.mxu0 0
        %2841 = vmatprep.subr.bf16.mxu0 0
        %2842 = vmatpush1.bf16.msra.mxu0 0
        %2843 = vmatprep.subr.bf16.mxu0 0
        %2844 = vmatpush1.bf16.msra.mxu0 0
        %2845 = vmatprep.subr.bf16.mxu0 0
        %2846 = vmatpush1.bf16.msra.mxu0 0
        %2847 = vmatprep.subr.bf16.mxu0 0
        %2848 = vmatpush1.bf16.msra.mxu0 0
        %2849 = vmatprep.subr.bf16.mxu0 0
        %2850 = vmatpush1.bf16.msra.mxu0 0
        %2851 = vmatprep.subr.bf16.mxu0 0
        %2852 = vmatpush1.bf16.msra.mxu0 0
        %2853 = vmatprep.subr.bf16.mxu0 0
        %2854 = vmatpush1.bf16.msra.mxu0 0
        %2855 = vmatprep.subr.bf16.mxu0 0
        %2856 = vmatpush1.bf16.msra.mxu0 0
        %2857 = vmatprep.subr.bf16.mxu0 0
        %2858 = vmatpush1.bf16.msra.mxu0 0
        %2859 = vmatprep.subr.bf16.mxu0 0
        %2860 = vmatpush1.bf16.msra.mxu0 0
        %2861 = vmatprep.subr.bf16.mxu0 0
        %2862 = vmatpush1.bf16.msra.mxu0 0
        %2863 = vmatprep.subr.bf16.mxu0 0
        %2864 = vmatpush1.bf16.msra.mxu0 0
        %2865 = vmatprep.mubr.bf16.mxu0 0
        %2866 = vmatmul.mubr.bf16.gmra.mrb[0].mxu0 %v2822
        %v2867 = vpop.f32.mrb[0].mxu0
        %v2868 = vadd.f32 0.0, %v2867
        %v2869 = vpop.f32.mrb[0].mxu0
        %v2870 = vadd.f32 0.0, %v2869
        %v2871 = vpop.f32.mrb[0].mxu0
        %v2872 = vadd.f32 0.0, %v2871
        %v2873 = vpop.f32.mrb[0].mxu0
        %v2874 = vadd.f32 0.0, %v2873
        %2875 = vmatprep.mubr.bf16.mxu0 0
        %2876 = vmatmul.mubr.bf16.gmra.mrb[0].mxu0 %v2825
        %v2877 = vpop.f32.mrb[0].mxu0
        %v2878 = vadd.f32 0.0, %v2877
        %v2879 = vpop.f32.mrb[0].mxu0
        %v2880 = vadd.f32 0.0, %v2879
        %v2881 = vpop.f32.mrb[0].mxu0
        %v2882 = vadd.f32 0.0, %v2881
        %v2883 = vpop.f32.mrb[0].mxu0
        %v2884 = vadd.f32 0.0, %v2883
        %2885 = vmatprep.mubr.bf16.mxu0 0
        %2886 = vmatmul.mubr.bf16.gmra.mrb[0].mxu0 %v2828
        %v2887 = vpop.f32.mrb[0].mxu0
        %v2888 = vadd.f32 0.0, %v2887
        %v2889 = vpop.f32.mrb[0].mxu0
        %v2890 = vadd.f32 0.0, %v2889
        %v2891 = vpop.f32.mrb[0].mxu0
        %v2892 = vadd.f32 0.0, %v2891
        %v2893 = vpop.f32.mrb[0].mxu0
        %v2894 = vadd.f32 0.0, %v2893
        %2895 = vmatprep.mubr.bf16.mxu0 0
        %2896 = vmatmul.mubr.bf16.gmra.mrb[0].mxu0 %v2831
        %v2897 = vpop.f32.mrb[0].mxu0
        %v2898 = vadd.f32 0.0, %v2897
        %v2899 = vpop.f32.mrb[0].mxu0
        %v2900 = vadd.f32 0.0, %v2899
        %v2901 = vpop.f32.mrb[0].mxu0
        %v2902 = vadd.f32 0.0, %v2901
        %v2903 = vpop.f32.mrb[0].mxu0
        %v2904 = vadd.f32 0.0, %v2903
        %2905 = vdwg.mxu0
        %v2906 = vadd.f32 %v2743, %v2868
        %v2907 = vadd.f32 %v2744, %v2870
        %v2908 = vadd.f32 %v2745, %v2872
        %v2909 = vadd.f32 %v2746, %v2874
        %v2910 = vadd.f32 %v2747, %v2878
        %v2911 = vadd.f32 %v2748, %v2880
        %v2912 = vadd.f32 %v2749, %v2882
        %v2913 = vadd.f32 %v2750, %v2884
        %v2914 = vadd.f32 %v2751, %v2888
        %v2915 = vadd.f32 %v2752, %v2890
        %v2916 = vadd.f32 %v2753, %v2892
        %v2917 = vadd.f32 %v2754, %v2894
        %v2918 = vadd.f32 %v2755, %v2898
        %v2919 = vadd.f32 %v2756, %v2900
        %v2920 = vadd.f32 %v2757, %v2902
        %v2921 = vadd.f32 %v2758, %v2904
        %v2922 = vsel %vm756, 1, 0
        %v2923 = vsel %vm757, 1, 0
        %vm2924 = vcmp.eq.s32.totalorder %v2922, 1
        %vm2925 = vcmp.eq.s32.totalorder %v2923, 1
        %2926 = vrot.lane.b32.xlu0 %v2548, 60
        %v2927 = vpop.permute.xlu0 %2926
        %2928 = vrot.lane.b32.xlu0 %v2549, 60
        %v2929 = vpop.permute.xlu0 %2928
        %2930 = vrot.lane.b32.xlu0 %v2550, 60
        %v2931 = vpop.permute.xlu0 %2930
        %2932 = vrot.lane.b32.xlu0 %v2551, 60
        %v2933 = vpop.permute.xlu0 %2932
        %2934 = vrot.lane.b32.xlu0 %v2552, 60
        %v2935 = vpop.permute.xlu0 %2934
        %2936 = vrot.lane.b32.xlu0 %v2553, 60
        %v2937 = vpop.permute.xlu0 %2936
        %2938 = vrot.lane.b32.xlu0 %v2554, 60
        %v2939 = vpop.permute.xlu0 %2938
        %2940 = vrot.lane.b32.xlu0 %v2555, 60
        %v2941 = vpop.permute.xlu0 %2940
        %2942 = vrot.lane.b32.xlu0 %v2556, 60
        %v2943 = vpop.permute.xlu0 %2942
        %2944 = vrot.lane.b32.xlu0 %v2557, 60
        %v2945 = vpop.permute.xlu0 %2944
        %2946 = vrot.lane.b32.xlu0 %v2558, 60
        %v2947 = vpop.permute.xlu0 %2946
        %2948 = vrot.lane.b32.xlu0 %v2559, 60
        %v2949 = vpop.permute.xlu0 %2948
        %vm2950 = vcmask 490496
        %v2951 = vsel %vm2950, %v2927, %v2929
        %v2952 = vsel %vm2950, %v2929, %v2931
        %v2953 = vsel %vm2950, %v2933, %v2935
        %v2954 = vsel %vm2950, %v2935, %v2937
        %v2955 = vsel %vm2950, %v2939, %v2941
        %v2956 = vsel %vm2950, %v2941, %v2943
        %v2957 = vsel %vm2950, %v2945, %v2947
        %v2958 = vsel %vm2950, %v2947, %v2949
        %v2967 = vsel %vm2924, %v2951, 0.0
        %v2968 = vsel %vm2925, %v2952, 0.0
        %v2969 = vsel %vm2924, %v2953, 0.0
        %v2970 = vsel %vm2925, %v2954, 0.0
        %v2971 = vsel %vm2924, %v2955, 0.0
        %v2972 = vsel %vm2925, %v2956, 0.0
        %v2973 = vsel %vm2924, %v2957, 0.0
        %v2974 = vsel %vm2925, %v2958, 0.0
        %s2975 = scalar_lea.vmem %s8, 64
        %v2976 = vld [vmem:[%s2975] sm:$0xf]
        %v2977 = vld [vmem:[%s2975 + $0x4] sm:$0xf]
        %v2978 = vld [vmem:[%s2975 + $0x8] sm:$0xf]
        %v2979 = vld [vmem:[%s2975 + $0xc] sm:$0xf]
        %v2980 = vld [vmem:[%s2975 + $0x10] sm:$0xf]
        %v2981 = vld [vmem:[%s2975 + $0x14] sm:$0xf]
        %v2982 = vld [vmem:[%s2975 + $0x18] sm:$0xf]
        %v2983 = vld [vmem:[%s2975 + $0x1c] sm:$0xf]
        %v2984 = vpack.c.bf16 %v2969, %v2967
        %v2985 = vpack.c.bf16 %v2970, %v2968
        %v2986 = vpack.c.bf16 %v2973, %v2971
        %v2987 = vpack.c.bf16 %v2974, %v2972
        %v2996 = vunpack.c.l.b16 %v2976
        %v2997 = vunpack.c.l.b16 %v2977
        %v2998 = vunpack.c.l.b16 %v2978
        %v2999 = vunpack.c.l.b16 %v2979
        %v3000 = vunpack.c.l.b16 %v2980
        %v3001 = vunpack.c.l.b16 %v2981
        %v3002 = vunpack.c.l.b16 %v2982
        %v3003 = vunpack.c.l.b16 %v2983
        %v3004 = vpack.c.b16 %v2997, %v2996
        %v3005 = vpack.c.b16 %v2999, %v2998
        %v3006 = vpack.c.b16 %v3001, %v3000
        %v3007 = vpack.c.b16 %v3003, %v3002
        %v3009 = vsel %vm2657, %v3004, 0
        %v3012 = vsel %vm2657, %v3005, 0
        %v3015 = vsel %vm2657, %v3006, 0
        %v3018 = vsel %vm2657, %v3007, 0
        %3020 = vmatprep.subr.bf16.mxu0 %v2985
        %3021 = vmatpush1.bf16.msra.mxu0 %v2984
        %3022 = vmatprep.subr.bf16.mxu0 %v2987
        %3023 = vmatpush1.bf16.msra.mxu0 %v2986
        %3024 = vmatprep.subr.bf16.mxu0 0
        %3025 = vmatpush1.bf16.msra.mxu0 0
        %3026 = vmatprep.subr.bf16.mxu0 0
        %3027 = vmatpush1.bf16.msra.mxu0 0
        %3028 = vmatprep.subr.bf16.mxu0 0
        %3029 = vmatpush1.bf16.msra.mxu0 0
        %3030 = vmatprep.subr.bf16.mxu0 0
        %3031 = vmatpush1.bf16.msra.mxu0 0
        %3032 = vmatprep.subr.bf16.mxu0 0
        %3033 = vmatpush1.bf16.msra.mxu0 0
        %3034 = vmatprep.subr.bf16.mxu0 0
        %3035 = vmatpush1.bf16.msra.mxu0 0
        %3036 = vmatprep.subr.bf16.mxu0 0
        %3037 = vmatpush1.bf16.msra.mxu0 0
        %3038 = vmatprep.subr.bf16.mxu0 0
        %3039 = vmatpush1.bf16.msra.mxu0 0
        %3040 = vmatprep.subr.bf16.mxu0 0
        %3041 = vmatpush1.bf16.msra.mxu0 0
        %3042 = vmatprep.subr.bf16.mxu0 0
        %3043 = vmatpush1.bf16.msra.mxu0 0
        %3044 = vmatprep.subr.bf16.mxu0 0
        %3045 = vmatpush1.bf16.msra.mxu0 0
        %3046 = vmatprep.subr.bf16.mxu0 0
        %3047 = vmatpush1.bf16.msra.mxu0 0
        %3048 = vmatprep.subr.bf16.mxu0 0
        %3049 = vmatpush1.bf16.msra.mxu0 0
        %3050 = vmatprep.subr.bf16.mxu0 0
        %3051 = vmatpush1.bf16.msra.mxu0 0
        %3052 = vmatprep.mubr.bf16.mxu0 0
        %3053 = vmatmul.mubr.bf16.gmra.mrb[0].mxu0 %v3009
        %v3054 = vpop.f32.mrb[0].mxu0
        %v3055 = vadd.f32 0.0, %v3054
        %v3056 = vpop.f32.mrb[0].mxu0
        %v3057 = vadd.f32 0.0, %v3056
        %v3058 = vpop.f32.mrb[0].mxu0
        %v3059 = vadd.f32 0.0, %v3058
        %v3060 = vpop.f32.mrb[0].mxu0
        %v3061 = vadd.f32 0.0, %v3060
        %3062 = vmatprep.mubr.bf16.mxu0 0
        %3063 = vmatmul.mubr.bf16.gmra.mrb[0].mxu0 %v3012
        %v3064 = vpop.f32.mrb[0].mxu0
        %v3065 = vadd.f32 0.0, %v3064
        %v3066 = vpop.f32.mrb[0].mxu0
        %v3067 = vadd.f32 0.0, %v3066
        %v3068 = vpop.f32.mrb[0].mxu0
        %v3069 = vadd.f32 0.0, %v3068
        %v3070 = vpop.f32.mrb[0].mxu0
        %v3071 = vadd.f32 0.0, %v3070
        %3072 = vmatprep.mubr.bf16.mxu0 0
        %3073 = vmatmul.mubr.bf16.gmra.mrb[0].mxu0 %v3015
        %v3074 = vpop.f32.mrb[0].mxu0
        %v3075 = vadd.f32 0.0, %v3074
        %v3076 = vpop.f32.mrb[0].mxu0
        %v3077 = vadd.f32 0.0, %v3076
        %v3078 = vpop.f32.mrb[0].mxu0
        %v3079 = vadd.f32 0.0, %v3078
        %v3080 = vpop.f32.mrb[0].mxu0
        %v3081 = vadd.f32 0.0, %v3080
        %3082 = vmatprep.mubr.bf16.mxu0 0
        %3083 = vmatmul.mubr.bf16.gmra.mrb[0].mxu0 %v3018
        %v3084 = vpop.f32.mrb[0].mxu0
        %v3085 = vadd.f32 0.0, %v3084
        %v3086 = vpop.f32.mrb[0].mxu0
        %v3087 = vadd.f32 0.0, %v3086
        %v3088 = vpop.f32.mrb[0].mxu0
        %v3089 = vadd.f32 0.0, %v3088
        %v3090 = vpop.f32.mrb[0].mxu0
        %v3091 = vadd.f32 0.0, %v3090
        %3092 = vdwg.mxu0
        %v3093 = vadd.f32 %v2906, %v3055
        %v3094 = vadd.f32 %v2907, %v3057
        %v3095 = vadd.f32 %v2908, %v3059
        %v3096 = vadd.f32 %v2909, %v3061
        %v3097 = vadd.f32 %v2910, %v3065
        %v3098 = vadd.f32 %v2911, %v3067
        %v3099 = vadd.f32 %v2912, %v3069
        %v3100 = vadd.f32 %v2913, %v3071
        %v3101 = vadd.f32 %v2914, %v3075
        %v3102 = vadd.f32 %v2915, %v3077
        %v3103 = vadd.f32 %v2916, %v3079
        %v3104 = vadd.f32 %v2917, %v3081
        %v3105 = vadd.f32 %v2918, %v3085
        %v3106 = vadd.f32 %v2919, %v3087
        %v3107 = vadd.f32 %v2920, %v3089
        %v3108 = vadd.f32 %v2921, %v3091
        %3109 = vrot.lane.b32.xlu0 %v2548, 4
        %v3110 = vpop.permute.xlu0 %3109
        %3111 = vrot.lane.b32.xlu0 %v2549, 4
        %v3112 = vpop.permute.xlu0 %3111
        %3113 = vrot.lane.b32.xlu0 %v2550, 4
        %v3114 = vpop.permute.xlu0 %3113
        %3115 = vrot.lane.b32.xlu0 %v2551, 4
        %v3116 = vpop.permute.xlu0 %3115
        %3117 = vrot.lane.b32.xlu0 %v2552, 4
        %v3118 = vpop.permute.xlu0 %3117
        %3119 = vrot.lane.b32.xlu0 %v2553, 4
        %v3120 = vpop.permute.xlu0 %3119
        %3121 = vrot.lane.b32.xlu0 %v2554, 4
        %v3122 = vpop.permute.xlu0 %3121
        %3123 = vrot.lane.b32.xlu0 %v2555, 4
        %v3124 = vpop.permute.xlu0 %3123
        %3125 = vrot.lane.b32.xlu0 %v2556, 4
        %v3126 = vpop.permute.xlu0 %3125
        %3127 = vrot.lane.b32.xlu0 %v2557, 4
        %v3128 = vpop.permute.xlu0 %3127
        %3129 = vrot.lane.b32.xlu0 %v2558, 4
        %v3130 = vpop.permute.xlu0 %3129
        %3131 = vrot.lane.b32.xlu0 %v2559, 4
        %v3132 = vpop.permute.xlu0 %3131
        %vm3133 = vcmask 31744
        %v3134 = vsel %vm3133, %v3110, %v3112
        %v3135 = vsel %vm3133, %v3112, %v3114
        %v3136 = vsel %vm3133, %v3116, %v3118
        %v3137 = vsel %vm3133, %v3118, %v3120
        %v3138 = vsel %vm3133, %v3122, %v3124
        %v3139 = vsel %vm3133, %v3124, %v3126
        %v3140 = vsel %vm3133, %v3128, %v3130
        %v3141 = vsel %vm3133, %v3130, %v3132
        %v3150 = vsel %vm2562, %v3134, 0.0
        %v3151 = vsel %vm2563, %v3135, 0.0
        %v3152 = vsel %vm2562, %v3136, 0.0
        %v3153 = vsel %vm2563, %v3137, 0.0
        %v3154 = vsel %vm2562, %v3138, 0.0
        %v3155 = vsel %vm2563, %v3139, 0.0
        %v3156 = vsel %vm2562, %v3140, 0.0
        %v3157 = vsel %vm2563, %v3141, 0.0
        %s3158 = scalar_lea.vmem %s8, 96
        %v3159 = vld [vmem:[%s3158] sm:$0xf]
        %v3160 = vld [vmem:[%s3158 + $0x4] sm:$0xf]
        %v3161 = vld [vmem:[%s3158 + $0x8] sm:$0xf]
        %v3162 = vld [vmem:[%s3158 + $0xc] sm:$0xf]
        %v3163 = vld [vmem:[%s3158 + $0x10] sm:$0xf]
        %v3164 = vld [vmem:[%s3158 + $0x14] sm:$0xf]
        %v3165 = vld [vmem:[%s3158 + $0x18] sm:$0xf]
        %v3166 = vld [vmem:[%s3158 + $0x1c] sm:$0xf]
        %v3167 = vpack.c.bf16 %v3152, %v3150
        %v3168 = vpack.c.bf16 %v3153, %v3151
        %v3169 = vpack.c.bf16 %v3156, %v3154
        %v3170 = vpack.c.bf16 %v3157, %v3155
        %v3179 = vunpack.c.l.b16 %v3159
        %v3180 = vunpack.c.l.b16 %v3160
        %v3181 = vunpack.c.l.b16 %v3161
        %v3182 = vunpack.c.l.b16 %v3162
        %v3183 = vunpack.c.l.b16 %v3163
        %v3184 = vunpack.c.l.b16 %v3164
        %v3185 = vunpack.c.l.b16 %v3165
        %v3186 = vunpack.c.l.b16 %v3166
        %v3187 = vpack.c.b16 %v3180, %v3179
        %v3188 = vpack.c.b16 %v3182, %v3181
        %v3189 = vpack.c.b16 %v3184, %v3183
        %v3190 = vpack.c.b16 %v3186, %v3185
        %v3192 = vsel %vm2657, %v3187, 0
        %v3195 = vsel %vm2657, %v3188, 0
        %v3198 = vsel %vm2657, %v3189, 0
        %v3201 = vsel %vm2657, %v3190, 0
        %3203 = vmatprep.subr.bf16.mxu0 %v3168
        %3204 = vmatpush1.bf16.msra.mxu0 %v3167
        %3205 = vmatprep.subr.bf16.mxu0 %v3170
        %3206 = vmatpush1.bf16.msra.mxu0 %v3169
        %3207 = vmatprep.subr.bf16.mxu0 0
        %3208 = vmatpush1.bf16.msra.mxu0 0
        %3209 = vmatprep.subr.bf16.mxu0 0
        %3210 = vmatpush1.bf16.msra.mxu0 0
        %3211 = vmatprep.subr.bf16.mxu0 0
        %3212 = vmatpush1.bf16.msra.mxu0 0
        %3213 = vmatprep.subr.bf16.mxu0 0
        %3214 = vmatpush1.bf16.msra.mxu0 0
        %3215 = vmatprep.subr.bf16.mxu0 0
        %3216 = vmatpush1.bf16.msra.mxu0 0
        %3217 = vmatprep.subr.bf16.mxu0 0
        %3218 = vmatpush1.bf16.msra.mxu0 0
        %3219 = vmatprep.subr.bf16.mxu0 0
        %3220 = vmatpush1.bf16.msra.mxu0 0
        %3221 = vmatprep.subr.bf16.mxu0 0
        %3222 = vmatpush1.bf16.msra.mxu0 0
        %3223 = vmatprep.subr.bf16.mxu0 0
        %3224 = vmatpush1.bf16.msra.mxu0 0
        %3225 = vmatprep.subr.bf16.mxu0 0
        %3226 = vmatpush1.bf16.msra.mxu0 0
        %3227 = vmatprep.subr.bf16.mxu0 0
        %3228 = vmatpush1.bf16.msra.mxu0 0
        %3229 = vmatprep.subr.bf16.mxu0 0
        %3230 = vmatpush1.bf16.msra.mxu0 0
        %3231 = vmatprep.subr.bf16.mxu0 0
        %3232 = vmatpush1.bf16.msra.mxu0 0
        %3233 = vmatprep.subr.bf16.mxu0 0
        %3234 = vmatpush1.bf16.msra.mxu0 0
        %3235 = vmatprep.mubr.bf16.mxu0 0
        %3236 = vmatmul.mubr.bf16.gmra.mrb[0].mxu0 %v3192
        %v3237 = vpop.f32.mrb[0].mxu0
        %v3238 = vadd.f32 0.0, %v3237
        %v3239 = vpop.f32.mrb[0].mxu0
        %v3240 = vadd.f32 0.0, %v3239
        %v3241 = vpop.f32.mrb[0].mxu0
        %v3242 = vadd.f32 0.0, %v3241
        %v3243 = vpop.f32.mrb[0].mxu0
        %v3244 = vadd.f32 0.0, %v3243
        %3245 = vmatprep.mubr.bf16.mxu0 0
        %3246 = vmatmul.mubr.bf16.gmra.mrb[0].mxu0 %v3195
        %v3247 = vpop.f32.mrb[0].mxu0
        %v3248 = vadd.f32 0.0, %v3247
        %v3249 = vpop.f32.mrb[0].mxu0
        %v3250 = vadd.f32 0.0, %v3249
        %v3251 = vpop.f32.mrb[0].mxu0
        %v3252 = vadd.f32 0.0, %v3251
        %v3253 = vpop.f32.mrb[0].mxu0
        %v3254 = vadd.f32 0.0, %v3253
        %3255 = vmatprep.mubr.bf16.mxu0 0
        %3256 = vmatmul.mubr.bf16.gmra.mrb[0].mxu0 %v3198
        %v3257 = vpop.f32.mrb[0].mxu0
        %v3258 = vadd.f32 0.0, %v3257
        %v3259 = vpop.f32.mrb[0].mxu0
        %v3260 = vadd.f32 0.0, %v3259
        %v3261 = vpop.f32.mrb[0].mxu0
        %v3262 = vadd.f32 0.0, %v3261
        %v3263 = vpop.f32.mrb[0].mxu0
        %v3264 = vadd.f32 0.0, %v3263
        %3265 = vmatprep.mubr.bf16.mxu0 0
        %3266 = vmatmul.mubr.bf16.gmra.mrb[0].mxu0 %v3201
        %v3267 = vpop.f32.mrb[0].mxu0
        %v3268 = vadd.f32 0.0, %v3267
        %v3269 = vpop.f32.mrb[0].mxu0
        %v3270 = vadd.f32 0.0, %v3269
        %v3271 = vpop.f32.mrb[0].mxu0
        %v3272 = vadd.f32 0.0, %v3271
        %v3273 = vpop.f32.mrb[0].mxu0
        %v3274 = vadd.f32 0.0, %v3273
        %3275 = vdwg.mxu0
        %v3276 = vadd.f32 %v3093, %v3238
        %v3277 = vadd.f32 %v3094, %v3240
        %v3278 = vadd.f32 %v3095, %v3242
        %v3279 = vadd.f32 %v3096, %v3244
        %v3280 = vadd.f32 %v3097, %v3248
        %v3281 = vadd.f32 %v3098, %v3250
        %v3282 = vadd.f32 %v3099, %v3252
        %v3283 = vadd.f32 %v3100, %v3254
        %v3284 = vadd.f32 %v3101, %v3258
        %v3285 = vadd.f32 %v3102, %v3260
        %v3286 = vadd.f32 %v3103, %v3262
        %v3287 = vadd.f32 %v3104, %v3264
        %v3288 = vadd.f32 %v3105, %v3268
        %v3289 = vadd.f32 %v3106, %v3270
        %v3290 = vadd.f32 %v3107, %v3272
        %v3291 = vadd.f32 %v3108, %v3274
        %s3292 = scalar_lea.vmem %s8, 128
        %v3293 = vld [vmem:[%s3292] sm:$0xf]
        %v3294 = vld [vmem:[%s3292 + $0x4] sm:$0xf]
        %v3295 = vld [vmem:[%s3292 + $0x8] sm:$0xf]
        %v3296 = vld [vmem:[%s3292 + $0xc] sm:$0xf]
        %v3297 = vld [vmem:[%s3292 + $0x10] sm:$0xf]
        %v3298 = vld [vmem:[%s3292 + $0x14] sm:$0xf]
        %v3299 = vld [vmem:[%s3292 + $0x18] sm:$0xf]
        %v3300 = vld [vmem:[%s3292 + $0x1c] sm:$0xf]
        %v3309 = vunpack.c.l.b16 %v3293
        %v3310 = vunpack.c.l.b16 %v3294
        %v3311 = vunpack.c.l.b16 %v3295
        %v3312 = vunpack.c.l.b16 %v3296
        %v3313 = vunpack.c.l.b16 %v3297
        %v3314 = vunpack.c.l.b16 %v3298
        %v3315 = vunpack.c.l.b16 %v3299
        %v3316 = vunpack.c.l.b16 %v3300
        %v3317 = vpack.c.b16 %v3310, %v3309
        %v3318 = vpack.c.b16 %v3312, %v3311
        %v3319 = vpack.c.b16 %v3314, %v3313
        %v3320 = vpack.c.b16 %v3316, %v3315
        %v3322 = vsel %vm2657, %v3317, 0
        %v3325 = vsel %vm2657, %v3318, 0
        %v3328 = vsel %vm2657, %v3319, 0
        %v3331 = vsel %vm2657, %v3320, 0
        %3333 = vmatprep.subr.bf16.mxu0 %v2770
        %3334 = vmatpush1.bf16.msra.mxu0 %v2769
        %3335 = vmatprep.subr.bf16.mxu0 %v2773
        %3336 = vmatpush1.bf16.msra.mxu0 %v2772
        %3337 = vmatprep.subr.bf16.mxu0 0
        %3338 = vmatpush1.bf16.msra.mxu0 0
        %3339 = vmatprep.subr.bf16.mxu0 0
        %3340 = vmatpush1.bf16.msra.mxu0 0
        %3341 = vmatprep.subr.bf16.mxu0 0
        %3342 = vmatpush1.bf16.msra.mxu0 0
        %3343 = vmatprep.subr.bf16.mxu0 0
        %3344 = vmatpush1.bf16.msra.mxu0 0
        %3345 = vmatprep.subr.bf16.mxu0 0
        %3346 = vmatpush1.bf16.msra.mxu0 0
        %3347 = vmatprep.subr.bf16.mxu0 0
        %3348 = vmatpush1.bf16.msra.mxu0 0
        %3349 = vmatprep.subr.bf16.mxu0 0
        %3350 = vmatpush1.bf16.msra.mxu0 0
        %3351 = vmatprep.subr.bf16.mxu0 0
        %3352 = vmatpush1.bf16.msra.mxu0 0
        %3353 = vmatprep.subr.bf16.mxu0 0
        %3354 = vmatpush1.bf16.msra.mxu0 0
        %3355 = vmatprep.subr.bf16.mxu0 0
        %3356 = vmatpush1.bf16.msra.mxu0 0
        %3357 = vmatprep.subr.bf16.mxu0 0
        %3358 = vmatpush1.bf16.msra.mxu0 0
        %3359 = vmatprep.subr.bf16.mxu0 0
        %3360 = vmatpush1.bf16.msra.mxu0 0
        %3361 = vmatprep.subr.bf16.mxu0 0
        %3362 = vmatpush1.bf16.msra.mxu0 0
        %3363 = vmatprep.subr.bf16.mxu0 0
        %3364 = vmatpush1.bf16.msra.mxu0 0
        %3365 = vmatprep.mubr.bf16.mxu0 0
        %3366 = vmatmul.mubr.bf16.gmra.mrb[0].mxu0 %v3322
        %v3367 = vpop.f32.mrb[0].mxu0
        %v3368 = vadd.f32 0.0, %v3367
        %v3369 = vpop.f32.mrb[0].mxu0
        %v3370 = vadd.f32 0.0, %v3369
        %v3371 = vpop.f32.mrb[0].mxu0
        %v3372 = vadd.f32 0.0, %v3371
        %v3373 = vpop.f32.mrb[0].mxu0
        %v3374 = vadd.f32 0.0, %v3373
        %3375 = vmatprep.mubr.bf16.mxu0 0
        %3376 = vmatmul.mubr.bf16.gmra.mrb[0].mxu0 %v3325
        %v3377 = vpop.f32.mrb[0].mxu0
        %v3378 = vadd.f32 0.0, %v3377
        %v3379 = vpop.f32.mrb[0].mxu0
        %v3380 = vadd.f32 0.0, %v3379
        %v3381 = vpop.f32.mrb[0].mxu0
        %v3382 = vadd.f32 0.0, %v3381
        %v3383 = vpop.f32.mrb[0].mxu0
        %v3384 = vadd.f32 0.0, %v3383
        %3385 = vmatprep.mubr.bf16.mxu0 0
        %3386 = vmatmul.mubr.bf16.gmra.mrb[0].mxu0 %v3328
        %v3387 = vpop.f32.mrb[0].mxu0
        %v3388 = vadd.f32 0.0, %v3387
        %v3389 = vpop.f32.mrb[0].mxu0
        %v3390 = vadd.f32 0.0, %v3389
        %v3391 = vpop.f32.mrb[0].mxu0
        %v3392 = vadd.f32 0.0, %v3391
        %v3393 = vpop.f32.mrb[0].mxu0
        %v3394 = vadd.f32 0.0, %v3393
        %3395 = vmatprep.mubr.bf16.mxu0 0
        %3396 = vmatmul.mubr.bf16.gmra.mrb[0].mxu0 %v3331
        %v3397 = vpop.f32.mrb[0].mxu0
        %v3398 = vadd.f32 0.0, %v3397
        %v3399 = vpop.f32.mrb[0].mxu0
        %v3400 = vadd.f32 0.0, %v3399
        %v3401 = vpop.f32.mrb[0].mxu0
        %v3402 = vadd.f32 0.0, %v3401
        %v3403 = vpop.f32.mrb[0].mxu0
        %v3404 = vadd.f32 0.0, %v3403
        %3405 = vdwg.mxu0
        %v3406 = vadd.f32 %v3276, %v3368
        %v3407 = vadd.f32 %v3277, %v3370
        %v3408 = vadd.f32 %v3278, %v3372
        %v3409 = vadd.f32 %v3279, %v3374
        %v3410 = vadd.f32 %v3280, %v3378
        %v3411 = vadd.f32 %v3281, %v3380
        %v3412 = vadd.f32 %v3282, %v3382
        %v3413 = vadd.f32 %v3283, %v3384
        %v3414 = vadd.f32 %v3284, %v3388
        %v3415 = vadd.f32 %v3285, %v3390
        %v3416 = vadd.f32 %v3286, %v3392
        %v3417 = vadd.f32 %v3287, %v3394
        %v3418 = vadd.f32 %v3288, %v3398
        %v3419 = vadd.f32 %v3289, %v3400
        %v3420 = vadd.f32 %v3290, %v3402
        %v3421 = vadd.f32 %v3291, %v3404
        %v3422 = vld [vmem:[#allocation2 + $0x8] sm:$0xff]
        %v3423 = vld [vmem:[#allocation2 + $0x10] sm:$0xff]
        %v3424 = vld [vmem:[#allocation2 + $0x18] sm:$0xff]
        %v3425 = vld [vmem:[#allocation2 + $0x28] sm:$0xff]
        %v3426 = vld [vmem:[#allocation2 + $0x30] sm:$0xff]
        %v3427 = vld [vmem:[#allocation2 + $0x38] sm:$0xff]
        %v3428 = vld [vmem:[#allocation2 + $0x48] sm:$0xff]
        %v3429 = vld [vmem:[#allocation2 + $0x50] sm:$0xff]
        %v3430 = vld [vmem:[#allocation2 + $0x58] sm:$0xff]
        %v3431 = vld [vmem:[#allocation2 + $0x68] sm:$0xff]
        %v3432 = vld [vmem:[#allocation2 + $0x70] sm:$0xff]
        %v3433 = vld [vmem:[#allocation2 + $0x78] sm:$0xff]
        %3446 = vrot.lane.b32.xlu0 %v3422, 124
        %v3447 = vpop.permute.xlu0 %3446
        %3448 = vrot.lane.b32.xlu0 %v3423, 124
        %v3449 = vpop.permute.xlu0 %3448
        %3450 = vrot.lane.b32.xlu0 %v3424, 124
        %v3451 = vpop.permute.xlu0 %3450
        %3452 = vrot.lane.b32.xlu0 %v3425, 124
        %v3453 = vpop.permute.xlu0 %3452
        %3454 = vrot.lane.b32.xlu0 %v3426, 124
        %v3455 = vpop.permute.xlu0 %3454
        %3456 = vrot.lane.b32.xlu0 %v3427, 124
        %v3457 = vpop.permute.xlu0 %3456
        %3458 = vrot.lane.b32.xlu0 %v3428, 124
        %v3459 = vpop.permute.xlu0 %3458
        %3460 = vrot.lane.b32.xlu0 %v3429, 124
        %v3461 = vpop.permute.xlu0 %3460
        %3462 = vrot.lane.b32.xlu0 %v3430, 124
        %v3463 = vpop.permute.xlu0 %3462
        %3464 = vrot.lane.b32.xlu0 %v3431, 124
        %v3465 = vpop.permute.xlu0 %3464
        %3466 = vrot.lane.b32.xlu0 %v3432, 124
        %v3467 = vpop.permute.xlu0 %3466
        %3468 = vrot.lane.b32.xlu0 %v3433, 124
        %v3469 = vpop.permute.xlu0 %3468
        %vm3470 = vcmask 1014784
        %v3471 = vsel %vm3470, %v3447, %v3449
        %v3472 = vsel %vm3470, %v3449, %v3451
        %v3473 = vsel %vm3470, %v3453, %v3455
        %v3474 = vsel %vm3470, %v3455, %v3457
        %v3475 = vsel %vm3470, %v3459, %v3461
        %v3476 = vsel %vm3470, %v3461, %v3463
        %v3477 = vsel %vm3470, %v3465, %v3467
        %v3478 = vsel %vm3470, %v3467, %v3469
        %v3487 = vsel %vm2924, %v3471, 0.0
        %v3488 = vsel %vm2925, %v3472, 0.0
        %v3489 = vsel %vm2924, %v3473, 0.0
        %v3490 = vsel %vm2925, %v3474, 0.0
        %v3491 = vsel %vm2924, %v3475, 0.0
        %v3492 = vsel %vm2925, %v3476, 0.0
        %v3493 = vsel %vm2924, %v3477, 0.0
        %v3494 = vsel %vm2925, %v3478, 0.0
        %s3495 = scalar_lea.vmem %s8, 160
        %v3496 = vld [vmem:[%s3495] sm:$0xf]
        %v3497 = vld [vmem:[%s3495 + $0x4] sm:$0xf]
        %v3498 = vld [vmem:[%s3495 + $0x8] sm:$0xf]
        %v3499 = vld [vmem:[%s3495 + $0xc] sm:$0xf]
        %v3500 = vld [vmem:[%s3495 + $0x10] sm:$0xf]
        %v3501 = vld [vmem:[%s3495 + $0x14] sm:$0xf]
        %v3502 = vld [vmem:[%s3495 + $0x18] sm:$0xf]
        %v3503 = vld [vmem:[%s3495 + $0x1c] sm:$0xf]
        %v3504 = vpack.c.bf16 %v3489, %v3487
        %v3505 = vpack.c.bf16 %v3490, %v3488
        %v3506 = vpack.c.bf16 %v3493, %v3491
        %v3507 = vpack.c.bf16 %v3494, %v3492
        %v3516 = vunpack.c.l.b16 %v3496
        %v3517 = vunpack.c.l.b16 %v3497
        %v3518 = vunpack.c.l.b16 %v3498
        %v3519 = vunpack.c.l.b16 %v3499
        %v3520 = vunpack.c.l.b16 %v3500
        %v3521 = vunpack.c.l.b16 %v3501
        %v3522 = vunpack.c.l.b16 %v3502
        %v3523 = vunpack.c.l.b16 %v3503
        %v3524 = vpack.c.b16 %v3517, %v3516
        %v3525 = vpack.c.b16 %v3519, %v3518
        %v3526 = vpack.c.b16 %v3521, %v3520
        %v3527 = vpack.c.b16 %v3523, %v3522
        %v3529 = vsel %vm2657, %v3524, 0
        %v3532 = vsel %vm2657, %v3525, 0
        %v3535 = vsel %vm2657, %v3526, 0
        %v3538 = vsel %vm2657, %v3527, 0
        %3540 = vmatprep.subr.bf16.mxu0 %v3505
        %3541 = vmatpush1.bf16.msra.mxu0 %v3504
        %3542 = vmatprep.subr.bf16.mxu0 %v3507
        %3543 = vmatpush1.bf16.msra.mxu0 %v3506
        %3544 = vmatprep.subr.bf16.mxu0 0
        %3545 = vmatpush1.bf16.msra.mxu0 0
        %3546 = vmatprep.subr.bf16.mxu0 0
        %3547 = vmatpush1.bf16.msra.mxu0 0
        %3548 = vmatprep.subr.bf16.mxu0 0
        %3549 = vmatpush1.bf16.msra.mxu0 0
        %3550 = vmatprep.subr.bf16.mxu0 0
        %3551 = vmatpush1.bf16.msra.mxu0 0
        %3552 = vmatprep.subr.bf16.mxu0 0
        %3553 = vmatpush1.bf16.msra.mxu0 0
        %3554 = vmatprep.subr.bf16.mxu0 0
        %3555 = vmatpush1.bf16.msra.mxu0 0
        %3556 = vmatprep.subr.bf16.mxu0 0
        %3557 = vmatpush1.bf16.msra.mxu0 0
        %3558 = vmatprep.subr.bf16.mxu0 0
        %3559 = vmatpush1.bf16.msra.mxu0 0
        %3560 = vmatprep.subr.bf16.mxu0 0
        %3561 = vmatpush1.bf16.msra.mxu0 0
        %3562 = vmatprep.subr.bf16.mxu0 0
        %3563 = vmatpush1.bf16.msra.mxu0 0
        %3564 = vmatprep.subr.bf16.mxu0 0
        %3565 = vmatpush1.bf16.msra.mxu0 0
        %3566 = vmatprep.subr.bf16.mxu0 0
        %3567 = vmatpush1.bf16.msra.mxu0 0
        %3568 = vmatprep.subr.bf16.mxu0 0
        %3569 = vmatpush1.bf16.msra.mxu0 0
        %3570 = vmatprep.subr.bf16.mxu0 0
        %3571 = vmatpush1.bf16.msra.mxu0 0
        %3572 = vmatprep.mubr.bf16.mxu0 0
        %3573 = vmatmul.mubr.bf16.gmra.mrb[0].mxu0 %v3529
        %v3574 = vpop.f32.mrb[0].mxu0
        %v3575 = vadd.f32 0.0, %v3574
        %v3576 = vpop.f32.mrb[0].mxu0
        %v3577 = vadd.f32 0.0, %v3576
        %v3578 = vpop.f32.mrb[0].mxu0
        %v3579 = vadd.f32 0.0, %v3578
        %v3580 = vpop.f32.mrb[0].mxu0
        %v3581 = vadd.f32 0.0, %v3580
        %3582 = vmatprep.mubr.bf16.mxu0 0
        %3583 = vmatmul.mubr.bf16.gmra.mrb[0].mxu0 %v3532
        %v3584 = vpop.f32.mrb[0].mxu0
        %v3585 = vadd.f32 0.0, %v3584
        %v3586 = vpop.f32.mrb[0].mxu0
        %v3587 = vadd.f32 0.0, %v3586
        %v3588 = vpop.f32.mrb[0].mxu0
        %v3589 = vadd.f32 0.0, %v3588
        %v3590 = vpop.f32.mrb[0].mxu0
        %v3591 = vadd.f32 0.0, %v3590
        %3592 = vmatprep.mubr.bf16.mxu0 0
        %3593 = vmatmul.mubr.bf16.gmra.mrb[0].mxu0 %v3535
        %v3594 = vpop.f32.mrb[0].mxu0
        %v3595 = vadd.f32 0.0, %v3594
        %v3596 = vpop.f32.mrb[0].mxu0
        %v3597 = vadd.f32 0.0, %v3596
        %v3598 = vpop.f32.mrb[0].mxu0
        %v3599 = vadd.f32 0.0, %v3598
        %v3600 = vpop.f32.mrb[0].mxu0
        %v3601 = vadd.f32 0.0, %v3600
        %3602 = vmatprep.mubr.bf16.mxu0 0
        %3603 = vmatmul.mubr.bf16.gmra.mrb[0].mxu0 %v3538
        %v3604 = vpop.f32.mrb[0].mxu0
        %v3605 = vadd.f32 0.0, %v3604
        %v3606 = vpop.f32.mrb[0].mxu0
        %v3607 = vadd.f32 0.0, %v3606
        %v3608 = vpop.f32.mrb[0].mxu0
        %v3609 = vadd.f32 0.0, %v3608
        %v3610 = vpop.f32.mrb[0].mxu0
        %v3611 = vadd.f32 0.0, %v3610
        %3612 = vdwg.mxu0
        %v3613 = vadd.f32 %v3406, %v3575
        %v3614 = vadd.f32 %v3407, %v3577
        %v3615 = vadd.f32 %v3408, %v3579
        %v3616 = vadd.f32 %v3409, %v3581
        %v3617 = vadd.f32 %v3410, %v3585
        %v3618 = vadd.f32 %v3411, %v3587
        %v3619 = vadd.f32 %v3412, %v3589
        %v3620 = vadd.f32 %v3413, %v3591
        %v3621 = vadd.f32 %v3414, %v3595
        %v3622 = vadd.f32 %v3415, %v3597
        %v3623 = vadd.f32 %v3416, %v3599
        %v3624 = vadd.f32 %v3417, %v3601
        %v3625 = vadd.f32 %v3418, %v3605
        %v3626 = vadd.f32 %v3419, %v3607
        %v3627 = vadd.f32 %v3420, %v3609
        %v3628 = vadd.f32 %v3421, %v3611
        %3629 = vrot.lane.b32.xlu0 %v3422, 68
        %v3630 = vpop.permute.xlu0 %3629
        %3631 = vrot.lane.b32.xlu0 %v3423, 68
        %v3632 = vpop.permute.xlu0 %3631
        %3633 = vrot.lane.b32.xlu0 %v3424, 68
        %v3634 = vpop.permute.xlu0 %3633
        %3635 = vrot.lane.b32.xlu0 %v3425, 68
        %v3636 = vpop.permute.xlu0 %3635
        %3637 = vrot.lane.b32.xlu0 %v3426, 68
        %v3638 = vpop.permute.xlu0 %3637
        %3639 = vrot.lane.b32.xlu0 %v3427, 68
        %v3640 = vpop.permute.xlu0 %3639
        %3641 = vrot.lane.b32.xlu0 %v3428, 68
        %v3642 = vpop.permute.xlu0 %3641
        %3643 = vrot.lane.b32.xlu0 %v3429, 68
        %v3644 = vpop.permute.xlu0 %3643
        %3645 = vrot.lane.b32.xlu0 %v3430, 68
        %v3646 = vpop.permute.xlu0 %3645
        %3647 = vrot.lane.b32.xlu0 %v3431, 68
        %v3648 = vpop.permute.xlu0 %3647
        %3649 = vrot.lane.b32.xlu0 %v3432, 68
        %v3650 = vpop.permute.xlu0 %3649
        %3651 = vrot.lane.b32.xlu0 %v3433, 68
        %v3652 = vpop.permute.xlu0 %3651
        %v3653 = vsel %vm2600, %v3630, %v3632
        %v3654 = vsel %vm2600, %v3632, %v3634
        %v3655 = vsel %vm2600, %v3636, %v3638
        %v3656 = vsel %vm2600, %v3638, %v3640
        %v3657 = vsel %vm2600, %v3642, %v3644
        %v3658 = vsel %vm2600, %v3644, %v3646
        %v3659 = vsel %vm2600, %v3648, %v3650
        %v3660 = vsel %vm2600, %v3650, %v3652
        %v3669 = vsel %vm2562, %v3653, 0.0
        %v3670 = vsel %vm2563, %v3654, 0.0
        %v3671 = vsel %vm2562, %v3655, 0.0
        %v3672 = vsel %vm2563, %v3656, 0.0
        %v3673 = vsel %vm2562, %v3657, 0.0
        %v3674 = vsel %vm2563, %v3658, 0.0
        %v3675 = vsel %vm2562, %v3659, 0.0
        %v3676 = vsel %vm2563, %v3660, 0.0
        %s3677 = scalar_lea.vmem %s8, 192
        %v3678 = vld [vmem:[%s3677] sm:$0xf]
        %v3679 = vld [vmem:[%s3677 + $0x4] sm:$0xf]
        %v3680 = vld [vmem:[%s3677 + $0x8] sm:$0xf]
        %v3681 = vld [vmem:[%s3677 + $0xc] sm:$0xf]
        %v3682 = vld [vmem:[%s3677 + $0x10] sm:$0xf]
        %v3683 = vld [vmem:[%s3677 + $0x14] sm:$0xf]
        %v3684 = vld [vmem:[%s3677 + $0x18] sm:$0xf]
        %v3685 = vld [vmem:[%s3677 + $0x1c] sm:$0xf]
        %v3686 = vpack.c.bf16 %v3671, %v3669
        %v3687 = vpack.c.bf16 %v3672, %v3670
        %v3688 = vpack.c.bf16 %v3675, %v3673
        %v3689 = vpack.c.bf16 %v3676, %v3674
        %v3698 = vunpack.c.l.b16 %v3678
        %v3699 = vunpack.c.l.b16 %v3679
        %v3700 = vunpack.c.l.b16 %v3680
        %v3701 = vunpack.c.l.b16 %v3681
        %v3702 = vunpack.c.l.b16 %v3682
        %v3703 = vunpack.c.l.b16 %v3683
        %v3704 = vunpack.c.l.b16 %v3684
        %v3705 = vunpack.c.l.b16 %v3685
        %v3706 = vpack.c.b16 %v3699, %v3698
        %v3707 = vpack.c.b16 %v3701, %v3700
        %v3708 = vpack.c.b16 %v3703, %v3702
        %v3709 = vpack.c.b16 %v3705, %v3704
        %v3711 = vsel %vm2657, %v3706, 0
        %v3714 = vsel %vm2657, %v3707, 0
        %v3717 = vsel %vm2657, %v3708, 0
        %v3720 = vsel %vm2657, %v3709, 0
        %3722 = vmatprep.subr.bf16.mxu0 %v3687
        %3723 = vmatpush1.bf16.msra.mxu0 %v3686
        %3724 = vmatprep.subr.bf16.mxu0 %v3689
        %3725 = vmatpush1.bf16.msra.mxu0 %v3688
        %3726 = vmatprep.subr.bf16.mxu0 0
        %3727 = vmatpush1.bf16.msra.mxu0 0
        %3728 = vmatprep.subr.bf16.mxu0 0
        %3729 = vmatpush1.bf16.msra.mxu0 0
        %3730 = vmatprep.subr.bf16.mxu0 0
        %3731 = vmatpush1.bf16.msra.mxu0 0
        %3732 = vmatprep.subr.bf16.mxu0 0
        %3733 = vmatpush1.bf16.msra.mxu0 0
        %3734 = vmatprep.subr.bf16.mxu0 0
        %3735 = vmatpush1.bf16.msra.mxu0 0
        %3736 = vmatprep.subr.bf16.mxu0 0
        %3737 = vmatpush1.bf16.msra.mxu0 0
        %3738 = vmatprep.subr.bf16.mxu0 0
        %3739 = vmatpush1.bf16.msra.mxu0 0
        %3740 = vmatprep.subr.bf16.mxu0 0
        %3741 = vmatpush1.bf16.msra.mxu0 0
        %3742 = vmatprep.subr.bf16.mxu0 0
        %3743 = vmatpush1.bf16.msra.mxu0 0
        %3744 = vmatprep.subr.bf16.mxu0 0
        %3745 = vmatpush1.bf16.msra.mxu0 0
        %3746 = vmatprep.subr.bf16.mxu0 0
        %3747 = vmatpush1.bf16.msra.mxu0 0
        %3748 = vmatprep.subr.bf16.mxu0 0
        %3749 = vmatpush1.bf16.msra.mxu0 0
        %3750 = vmatprep.subr.bf16.mxu0 0
        %3751 = vmatpush1.bf16.msra.mxu0 0
        %3752 = vmatprep.subr.bf16.mxu0 0
        %3753 = vmatpush1.bf16.msra.mxu0 0
        %3754 = vmatprep.mubr.bf16.mxu0 0
        %3755 = vmatmul.mubr.bf16.gmra.mrb[0].mxu0 %v3711
        %v3756 = vpop.f32.mrb[0].mxu0
        %v3757 = vadd.f32 0.0, %v3756
        %v3758 = vpop.f32.mrb[0].mxu0
        %v3759 = vadd.f32 0.0, %v3758
        %v3760 = vpop.f32.mrb[0].mxu0
        %v3761 = vadd.f32 0.0, %v3760
        %v3762 = vpop.f32.mrb[0].mxu0
        %v3763 = vadd.f32 0.0, %v3762
        %3764 = vmatprep.mubr.bf16.mxu0 0
        %3765 = vmatmul.mubr.bf16.gmra.mrb[0].mxu0 %v3714
        %v3766 = vpop.f32.mrb[0].mxu0
        %v3767 = vadd.f32 0.0, %v3766
        %v3768 = vpop.f32.mrb[0].mxu0
        %v3769 = vadd.f32 0.0, %v3768
        %v3770 = vpop.f32.mrb[0].mxu0
        %v3771 = vadd.f32 0.0, %v3770
        %v3772 = vpop.f32.mrb[0].mxu0
        %v3773 = vadd.f32 0.0, %v3772
        %3774 = vmatprep.mubr.bf16.mxu0 0
        %3775 = vmatmul.mubr.bf16.gmra.mrb[0].mxu0 %v3717
        %v3776 = vpop.f32.mrb[0].mxu0
        %v3777 = vadd.f32 0.0, %v3776
        %v3778 = vpop.f32.mrb[0].mxu0
        %v3779 = vadd.f32 0.0, %v3778
        %v3780 = vpop.f32.mrb[0].mxu0
        %v3781 = vadd.f32 0.0, %v3780
        %v3782 = vpop.f32.mrb[0].mxu0
        %v3783 = vadd.f32 0.0, %v3782
        %3784 = vmatprep.mubr.bf16.mxu0 0
        %3785 = vmatmul.mubr.bf16.gmra.mrb[0].mxu0 %v3720
        %v3786 = vpop.f32.mrb[0].mxu0
        %v3787 = vadd.f32 0.0, %v3786
        %v3788 = vpop.f32.mrb[0].mxu0
        %v3789 = vadd.f32 0.0, %v3788
        %v3790 = vpop.f32.mrb[0].mxu0
        %v3791 = vadd.f32 0.0, %v3790
        %v3792 = vpop.f32.mrb[0].mxu0
        %v3793 = vadd.f32 0.0, %v3792
        %3794 = vdwg.mxu0
        %v3795 = vadd.f32 %v3613, %v3757
        %v3796 = vadd.f32 %v3614, %v3759
        %v3797 = vadd.f32 %v3615, %v3761
        %v3798 = vadd.f32 %v3616, %v3763
        %v3799 = vadd.f32 %v3617, %v3767
        %v3800 = vadd.f32 %v3618, %v3769
        %v3801 = vadd.f32 %v3619, %v3771
        %v3802 = vadd.f32 %v3620, %v3773
        %v3803 = vadd.f32 %v3621, %v3777
        %v3804 = vadd.f32 %v3622, %v3779
        %v3805 = vadd.f32 %v3623, %v3781
        %v3806 = vadd.f32 %v3624, %v3783
        %v3807 = vadd.f32 %v3625, %v3787
        %v3808 = vadd.f32 %v3626, %v3789
        %v3809 = vadd.f32 %v3627, %v3791
        %v3810 = vadd.f32 %v3628, %v3793
        %s3811 = scalar_lea.vmem %s8, 224
        %v3812 = vld [vmem:[%s3811] sm:$0xf]
        %v3813 = vld [vmem:[%s3811 + $0x4] sm:$0xf]
        %v3814 = vld [vmem:[%s3811 + $0x8] sm:$0xf]
        %v3815 = vld [vmem:[%s3811 + $0xc] sm:$0xf]
        %v3816 = vld [vmem:[%s3811 + $0x10] sm:$0xf]
        %v3817 = vld [vmem:[%s3811 + $0x14] sm:$0xf]
        %v3818 = vld [vmem:[%s3811 + $0x18] sm:$0xf]
        %v3819 = vld [vmem:[%s3811 + $0x1c] sm:$0xf]
        %v3820 = vpack.c.bf16 %v3425, %v3422
        %v3821 = vpack.c.bf16 %v3426, %v3423
        %v3822 = vpack.c.bf16 %v3427, %v3424
        %v3823 = vpack.c.bf16 %v3431, %v3428
        %v3824 = vpack.c.bf16 %v3432, %v3429
        %v3825 = vpack.c.bf16 %v3433, %v3430
        %v3834 = vunpack.c.l.b16 %v3812
        %v3835 = vunpack.c.l.b16 %v3813
        %v3836 = vunpack.c.l.b16 %v3814
        %v3837 = vunpack.c.l.b16 %v3815
        %v3838 = vunpack.c.l.b16 %v3816
        %v3839 = vunpack.c.l.b16 %v3817
        %v3840 = vunpack.c.l.b16 %v3818
        %v3841 = vunpack.c.l.b16 %v3819
        %v3842 = vpack.c.b16 %v3835, %v3834
        %v3843 = vpack.c.b16 %v3837, %v3836
        %v3844 = vpack.c.b16 %v3839, %v3838
        %v3845 = vpack.c.b16 %v3841, %v3840
        %3852 = vrot.lane.b32.xlu0 %v3820, 64
        %v3853 = vpop.permute.xlu0 %3852
        %3854 = vrot.lane.b32.xlu0 %v3821, 64
        %v3855 = vpop.permute.xlu0 %3854
        %3856 = vrot.lane.b32.xlu0 %v3822, 64
        %v3857 = vpop.permute.xlu0 %3856
        %3858 = vrot.lane.b32.xlu0 %v3823, 64
        %v3859 = vpop.permute.xlu0 %3858
        %3860 = vrot.lane.b32.xlu0 %v3824, 64
        %v3861 = vpop.permute.xlu0 %3860
        %3862 = vrot.lane.b32.xlu0 %v3825, 64
        %v3863 = vpop.permute.xlu0 %3862
        %v3864 = vsel %vm2812, %v3853, %v3855
        %v3865 = vsel %vm2812, %v3855, %v3857
        %v3866 = vsel %vm2812, %v3859, %v3861
        %v3867 = vsel %vm2812, %v3861, %v3863
        %v3873 = vsel %vm2657, %v3842, 0
        %v3876 = vsel %vm2657, %v3843, 0
        %v3879 = vsel %vm2657, %v3844, 0
        %v3882 = vsel %vm2657, %v3845, 0
        %3884 = vmatprep.subr.bf16.mxu0 %v3865
        %3885 = vmatpush1.bf16.msra.mxu0 %v3864
        %3886 = vmatprep.subr.bf16.mxu0 %v3867
        %3887 = vmatpush1.bf16.msra.mxu0 %v3866
        %3888 = vmatprep.subr.bf16.mxu0 0
        %3889 = vmatpush1.bf16.msra.mxu0 0
        %3890 = vmatprep.subr.bf16.mxu0 0
        %3891 = vmatpush1.bf16.msra.mxu0 0
        %3892 = vmatprep.subr.bf16.mxu0 0
        %3893 = vmatpush1.bf16.msra.mxu0 0
        %3894 = vmatprep.subr.bf16.mxu0 0
        %3895 = vmatpush1.bf16.msra.mxu0 0
        %3896 = vmatprep.subr.bf16.mxu0 0
        %3897 = vmatpush1.bf16.msra.mxu0 0
        %3898 = vmatprep.subr.bf16.mxu0 0
        %3899 = vmatpush1.bf16.msra.mxu0 0
        %3900 = vmatprep.subr.bf16.mxu0 0
        %3901 = vmatpush1.bf16.msra.mxu0 0
        %3902 = vmatprep.subr.bf16.mxu0 0
        %3903 = vmatpush1.bf16.msra.mxu0 0
        %3904 = vmatprep.subr.bf16.mxu0 0
        %3905 = vmatpush1.bf16.msra.mxu0 0
        %3906 = vmatprep.subr.bf16.mxu0 0
        %3907 = vmatpush1.bf16.msra.mxu0 0
        %3908 = vmatprep.subr.bf16.mxu0 0
        %3909 = vmatpush1.bf16.msra.mxu0 0
        %3910 = vmatprep.subr.bf16.mxu0 0
        %3911 = vmatpush1.bf16.msra.mxu0 0
        %3912 = vmatprep.subr.bf16.mxu0 0
        %3913 = vmatpush1.bf16.msra.mxu0 0
        %3914 = vmatprep.subr.bf16.mxu0 0
        %3915 = vmatpush1.bf16.msra.mxu0 0
        %3916 = vmatprep.mubr.bf16.mxu0 0
        %3917 = vmatmul.mubr.bf16.gmra.mrb[0].mxu0 %v3873
        %v3918 = vpop.f32.mrb[0].mxu0
        %v3919 = vadd.f32 0.0, %v3918
        %v3920 = vpop.f32.mrb[0].mxu0
        %v3921 = vadd.f32 0.0, %v3920
        %v3922 = vpop.f32.mrb[0].mxu0
        %v3923 = vadd.f32 0.0, %v3922
        %v3924 = vpop.f32.mrb[0].mxu0
        %v3925 = vadd.f32 0.0, %v3924
        %3926 = vmatprep.mubr.bf16.mxu0 0
        %3927 = vmatmul.mubr.bf16.gmra.mrb[0].mxu0 %v3876
        %v3928 = vpop.f32.mrb[0].mxu0
        %v3929 = vadd.f32 0.0, %v3928
        %v3930 = vpop.f32.mrb[0].mxu0
        %v3931 = vadd.f32 0.0, %v3930
        %v3932 = vpop.f32.mrb[0].mxu0
        %v3933 = vadd.f32 0.0, %v3932
        %v3934 = vpop.f32.mrb[0].mxu0
        %v3935 = vadd.f32 0.0, %v3934
        %3936 = vmatprep.mubr.bf16.mxu0 0
        %3937 = vmatmul.mubr.bf16.gmra.mrb[0].mxu0 %v3879
        %v3938 = vpop.f32.mrb[0].mxu0
        %v3939 = vadd.f32 0.0, %v3938
        %v3940 = vpop.f32.mrb[0].mxu0
        %v3941 = vadd.f32 0.0, %v3940
        %v3942 = vpop.f32.mrb[0].mxu0
        %v3943 = vadd.f32 0.0, %v3942
        %v3944 = vpop.f32.mrb[0].mxu0
        %v3945 = vadd.f32 0.0, %v3944
        %3946 = vmatprep.mubr.bf16.mxu0 0
        %3947 = vmatmul.mubr.bf16.gmra.mrb[0].mxu0 %v3882
        %v3948 = vpop.f32.mrb[0].mxu0
        %v3949 = vadd.f32 0.0, %v3948
        %v3950 = vpop.f32.mrb[0].mxu0
        %v3951 = vadd.f32 0.0, %v3950
        %v3952 = vpop.f32.mrb[0].mxu0
        %v3953 = vadd.f32 0.0, %v3952
        %v3954 = vpop.f32.mrb[0].mxu0
        %v3955 = vadd.f32 0.0, %v3954
        %3956 = vdwg.mxu0
        %v3957 = vadd.f32 %v3795, %v3919
        %v3958 = vadd.f32 %v3796, %v3921
        %v3959 = vadd.f32 %v3797, %v3923
        %v3960 = vadd.f32 %v3798, %v3925
        %v3961 = vadd.f32 %v3799, %v3929
        %v3962 = vadd.f32 %v3800, %v3931
        %v3963 = vadd.f32 %v3801, %v3933
        %v3964 = vadd.f32 %v3802, %v3935
        %v3965 = vadd.f32 %v3803, %v3939
        %v3966 = vadd.f32 %v3804, %v3941
        %v3967 = vadd.f32 %v3805, %v3943
        %v3968 = vadd.f32 %v3806, %v3945
        %v3969 = vadd.f32 %v3807, %v3949
        %v3970 = vadd.f32 %v3808, %v3951
        %v3971 = vadd.f32 %v3809, %v3953
        %v3972 = vadd.f32 %v3810, %v3955
        %3973 = vrot.lane.b32.xlu0 %v3422, 60
        %v3974 = vpop.permute.xlu0 %3973
        %3975 = vrot.lane.b32.xlu0 %v3423, 60
        %v3976 = vpop.permute.xlu0 %3975
        %3977 = vrot.lane.b32.xlu0 %v3424, 60
        %v3978 = vpop.permute.xlu0 %3977
        %3979 = vrot.lane.b32.xlu0 %v3425, 60
        %v3980 = vpop.permute.xlu0 %3979
        %3981 = vrot.lane.b32.xlu0 %v3426, 60
        %v3982 = vpop.permute.xlu0 %3981
        %3983 = vrot.lane.b32.xlu0 %v3427, 60
        %v3984 = vpop.permute.xlu0 %3983
        %3985 = vrot.lane.b32.xlu0 %v3428, 60
        %v3986 = vpop.permute.xlu0 %3985
        %3987 = vrot.lane.b32.xlu0 %v3429, 60
        %v3988 = vpop.permute.xlu0 %3987
        %3989 = vrot.lane.b32.xlu0 %v3430, 60
        %v3990 = vpop.permute.xlu0 %3989
        %3991 = vrot.lane.b32.xlu0 %v3431, 60
        %v3992 = vpop.permute.xlu0 %3991
        %3993 = vrot.lane.b32.xlu0 %v3432, 60
        %v3994 = vpop.permute.xlu0 %3993
        %3995 = vrot.lane.b32.xlu0 %v3433, 60
        %v3996 = vpop.permute.xlu0 %3995
        %v3997 = vsel %vm2950, %v3974, %v3976
        %v3998 = vsel %vm2950, %v3976, %v3978
        %v3999 = vsel %vm2950, %v3980, %v3982
        %v4000 = vsel %vm2950, %v3982, %v3984
        %v4001 = vsel %vm2950, %v3986, %v3988
        %v4002 = vsel %vm2950, %v3988, %v3990
        %v4003 = vsel %vm2950, %v3992, %v3994
        %v4004 = vsel %vm2950, %v3994, %v3996
        %v4013 = vsel %vm2924, %v3997, 0.0
        %v4014 = vsel %vm2925, %v3998, 0.0
        %v4015 = vsel %vm2924, %v3999, 0.0
        %v4016 = vsel %vm2925, %v4000, 0.0
        %v4017 = vsel %vm2924, %v4001, 0.0
        %v4018 = vsel %vm2925, %v4002, 0.0
        %v4019 = vsel %vm2924, %v4003, 0.0
        %v4020 = vsel %vm2925, %v4004, 0.0
        %s4021 = scalar_lea.vmem %s8, 256
        %v4022 = vld [vmem:[%s4021] sm:$0xf]
        %v4023 = vld [vmem:[%s4021 + $0x4] sm:$0xf]
        %v4024 = vld [vmem:[%s4021 + $0x8] sm:$0xf]
        %v4025 = vld [vmem:[%s4021 + $0xc] sm:$0xf]
        %v4026 = vld [vmem:[%s4021 + $0x10] sm:$0xf]
        %v4027 = vld [vmem:[%s4021 + $0x14] sm:$0xf]
        %v4028 = vld [vmem:[%s4021 + $0x18] sm:$0xf]
        %v4029 = vld [vmem:[%s4021 + $0x1c] sm:$0xf]
        %v4030 = vpack.c.bf16 %v4015, %v4013
        %v4031 = vpack.c.bf16 %v4016, %v4014
        %v4032 = vpack.c.bf16 %v4019, %v4017
        %v4033 = vpack.c.bf16 %v4020, %v4018
        %v4042 = vunpack.c.l.b16 %v4022
        %v4043 = vunpack.c.l.b16 %v4023
        %v4044 = vunpack.c.l.b16 %v4024
        %v4045 = vunpack.c.l.b16 %v4025
        %v4046 = vunpack.c.l.b16 %v4026
        %v4047 = vunpack.c.l.b16 %v4027
        %v4048 = vunpack.c.l.b16 %v4028
        %v4049 = vunpack.c.l.b16 %v4029
        %v4050 = vpack.c.b16 %v4043, %v4042
        %v4051 = vpack.c.b16 %v4045, %v4044
        %v4052 = vpack.c.b16 %v4047, %v4046
        %v4053 = vpack.c.b16 %v4049, %v4048
        %v4055 = vsel %vm2657, %v4050, 0
        %v4058 = vsel %vm2657, %v4051, 0
        %v4061 = vsel %vm2657, %v4052, 0
        %v4064 = vsel %vm2657, %v4053, 0
        %4066 = vmatprep.subr.bf16.mxu0 %v4031
        %4067 = vmatpush1.bf16.msra.mxu0 %v4030
        %4068 = vmatprep.subr.bf16.mxu0 %v4033
        %4069 = vmatpush1.bf16.msra.mxu0 %v4032
        %4070 = vmatprep.subr.bf16.mxu0 0
        %4071 = vmatpush1.bf16.msra.mxu0 0
        %4072 = vmatprep.subr.bf16.mxu0 0
        %4073 = vmatpush1.bf16.msra.mxu0 0
        %4074 = vmatprep.subr.bf16.mxu0 0
        %4075 = vmatpush1.bf16.msra.mxu0 0
        %4076 = vmatprep.subr.bf16.mxu0 0
        %4077 = vmatpush1.bf16.msra.mxu0 0
        %4078 = vmatprep.subr.bf16.mxu0 0
        %4079 = vmatpush1.bf16.msra.mxu0 0
        %4080 = vmatprep.subr.bf16.mxu0 0
        %4081 = vmatpush1.bf16.msra.mxu0 0
        %4082 = vmatprep.subr.bf16.mxu0 0
        %4083 = vmatpush1.bf16.msra.mxu0 0
        %4084 = vmatprep.subr.bf16.mxu0 0
        %4085 = vmatpush1.bf16.msra.mxu0 0
        %4086 = vmatprep.subr.bf16.mxu0 0
        %4087 = vmatpush1.bf16.msra.mxu0 0
        %4088 = vmatprep.subr.bf16.mxu0 0
        %4089 = vmatpush1.bf16.msra.mxu0 0
        %4090 = vmatprep.subr.bf16.mxu0 0
        %4091 = vmatpush1.bf16.msra.mxu0 0
        %4092 = vmatprep.subr.bf16.mxu0 0
        %4093 = vmatpush1.bf16.msra.mxu0 0
        %4094 = vmatprep.subr.bf16.mxu0 0
        %4095 = vmatpush1.bf16.msra.mxu0 0
        %4096 = vmatprep.subr.bf16.mxu0 0
        %4097 = vmatpush1.bf16.msra.mxu0 0
        %4098 = vmatprep.mubr.bf16.mxu0 0
        %4099 = vmatmul.mubr.bf16.gmra.mrb[0].mxu0 %v4055
        %v4100 = vpop.f32.mrb[0].mxu0
        %v4101 = vadd.f32 0.0, %v4100
        %v4102 = vpop.f32.mrb[0].mxu0
        %v4103 = vadd.f32 0.0, %v4102
        %v4104 = vpop.f32.mrb[0].mxu0
        %v4105 = vadd.f32 0.0, %v4104
        %v4106 = vpop.f32.mrb[0].mxu0
        %v4107 = vadd.f32 0.0, %v4106
        %4108 = vmatprep.mubr.bf16.mxu0 0
        %4109 = vmatmul.mubr.bf16.gmra.mrb[0].mxu0 %v4058
        %v4110 = vpop.f32.mrb[0].mxu0
        %v4111 = vadd.f32 0.0, %v4110
        %v4112 = vpop.f32.mrb[0].mxu0
        %v4113 = vadd.f32 0.0, %v4112
        %v4114 = vpop.f32.mrb[0].mxu0
        %v4115 = vadd.f32 0.0, %v4114
        %v4116 = vpop.f32.mrb[0].mxu0
        %v4117 = vadd.f32 0.0, %v4116
        %4118 = vmatprep.mubr.bf16.mxu0 0
        %4119 = vmatmul.mubr.bf16.gmra.mrb[0].mxu0 %v4061
        %v4120 = vpop.f32.mrb[0].mxu0
        %v4121 = vadd.f32 0.0, %v4120
        %v4122 = vpop.f32.mrb[0].mxu0
        %v4123 = vadd.f32 0.0, %v4122
        %v4124 = vpop.f32.mrb[0].mxu0
        %v4125 = vadd.f32 0.0, %v4124
        %v4126 = vpop.f32.mrb[0].mxu0
        %v4127 = vadd.f32 0.0, %v4126
        %4128 = vmatprep.mubr.bf16.mxu0 0
        %4129 = vmatmul.mubr.bf16.gmra.mrb[0].mxu0 %v4064
        %v4130 = vpop.f32.mrb[0].mxu0
        %v4131 = vadd.f32 0.0, %v4130
        %v4132 = vpop.f32.mrb[0].mxu0
        %v4133 = vadd.f32 0.0, %v4132
        %v4134 = vpop.f32.mrb[0].mxu0
        %v4135 = vadd.f32 0.0, %v4134
        %v4136 = vpop.f32.mrb[0].mxu0
        %v4137 = vadd.f32 0.0, %v4136
        %4138 = vdwg.mxu0
        %v4139 = vadd.f32 %v3957, %v4101
        %v4140 = vadd.f32 %v3958, %v4103
        %v4141 = vadd.f32 %v3959, %v4105
        %v4142 = vadd.f32 %v3960, %v4107
        %v4143 = vadd.f32 %v3961, %v4111
        %v4144 = vadd.f32 %v3962, %v4113
        %v4145 = vadd.f32 %v3963, %v4115
        %v4146 = vadd.f32 %v3964, %v4117
        %v4147 = vadd.f32 %v3965, %v4121
        %v4148 = vadd.f32 %v3966, %v4123
        %v4149 = vadd.f32 %v3967, %v4125
        %v4150 = vadd.f32 %v3968, %v4127
        %v4151 = vadd.f32 %v3969, %v4131
        %v4152 = vadd.f32 %v3970, %v4133
        %v4153 = vadd.f32 %v3971, %v4135
        %v4154 = vadd.f32 %v3972, %v4137
        %v4155 = vmax.f32 %v4139, 0.0
        %v4156 = vmax.f32 %v4140, 0.0
        %v4157 = vmax.f32 %v4141, 0.0
        %v4158 = vmax.f32 %v4142, 0.0
        %v4159 = vmax.f32 %v4143, 0.0
        %v4160 = vmax.f32 %v4144, 0.0
        %v4161 = vmax.f32 %v4145, 0.0
        %v4162 = vmax.f32 %v4146, 0.0
        %v4163 = vmax.f32 %v4147, 0.0
        %v4164 = vmax.f32 %v4148, 0.0
        %v4165 = vmax.f32 %v4149, 0.0
        %v4166 = vmax.f32 %v4150, 0.0
        %v4167 = vmax.f32 %v4151, 0.0
        %v4168 = vmax.f32 %v4152, 0.0
        %v4169 = vmax.f32 %v4153, 0.0
        %v4170 = vmax.f32 %v4154, 0.0
        %4171 = vst [vmem:[#allocation2 + $0x8] sm:$0xff] %v4155
        %4172 = vst [vmem:[#allocation2 + $0x10] sm:$0xff] %v4156
        %4173 = vst [vmem:[#allocation2 + $0x28] sm:$0xff] %v4157
        %4174 = vst [vmem:[#allocation2 + $0x30] sm:$0xff] %v4158
        %4175 = vst [vmem:[#allocation2 + $0x48] sm:$0xff] %v4159
        %4176 = vst [vmem:[#allocation2 + $0x50] sm:$0xff] %v4160
        %4177 = vst [vmem:[#allocation2 + $0x68] sm:$0xff] %v4161
        %4178 = vst [vmem:[#allocation2 + $0x70] sm:$0xff] %v4162
        %4179 = vst [vmem:[#allocation2 + $0x88] sm:$0xff] %v4163
        %4180 = vst [vmem:[#allocation2 + $0x90] sm:$0xff] %v4164
        %4181 = vst [vmem:[#allocation2 + $0xa8] sm:$0xff] %v4165
        %4182 = vst [vmem:[#allocation2 + $0xb0] sm:$0xff] %v4166
        %4183 = vst [vmem:[#allocation2 + $0xc8] sm:$0xff] %v4167
        %4184 = vst [vmem:[#allocation2 + $0xd0] sm:$0xff] %v4168
        %4185 = vst [vmem:[#allocation2 + $0xe8] sm:$0xff] %v4169
        %4186 = vst [vmem:[#allocation2 + $0xf0] sm:$0xff] %v4170
        %v4187 = vld [vmem:[%s11] sm:$0xff]
        %v4188 = vld [vmem:[%s11 + $0x8] sm:$0xff]
        %4190 = vset.pattern.permute.xlu0 0
        %4191 = vperm.xlu0 %4190, %v4187
        %v4192 = vpop.permute.xlu0 %4191
        %4195 = vset.pattern.permute.xlu0 0
        %4196 = vperm.xlu0 %4195, %v4188
        %v4197 = vpop.permute.xlu0 %4196
        %v4199 = vld [vmem:[#allocation2] sm:$0xff]
        %v4200 = vld [vmem:[#allocation2 + $0x8] sm:$0xff]
        %v4201 = vld [vmem:[#allocation2 + $0x10] sm:$0xff]
        %v4202 = vld [vmem:[#allocation2 + $0x20] sm:$0xff]
        %v4203 = vld [vmem:[#allocation2 + $0x28] sm:$0xff]
        %v4204 = vld [vmem:[#allocation2 + $0x30] sm:$0xff]
        %v4205 = vld [vmem:[#allocation2 + $0x40] sm:$0xff]
        %v4206 = vld [vmem:[#allocation2 + $0x48] sm:$0xff]
        %v4207 = vld [vmem:[#allocation2 + $0x50] sm:$0xff]
        %v4208 = vld [vmem:[#allocation2 + $0x60] sm:$0xff]
        %v4209 = vld [vmem:[#allocation2 + $0x68] sm:$0xff]
        %v4210 = vld [vmem:[#allocation2 + $0x70] sm:$0xff]
        %v4211 = vld [vmem:[#allocation2 + $0x80] sm:$0xff]
        %v4212 = vld [vmem:[#allocation2 + $0x88] sm:$0xff]
        %v4213 = vld [vmem:[#allocation2 + $0x90] sm:$0xff]
        %v4214 = vld [vmem:[#allocation2 + $0xa0] sm:$0xff]
        %v4215 = vld [vmem:[#allocation2 + $0xa8] sm:$0xff]
        %v4216 = vld [vmem:[#allocation2 + $0xb0] sm:$0xff]
        %v4217 = vld [vmem:[#allocation2 + $0xc0] sm:$0xff]
        %v4218 = vld [vmem:[#allocation2 + $0xc8] sm:$0xff]
        %v4219 = vld [vmem:[#allocation2 + $0xd0] sm:$0xff]
        %v4220 = vld [vmem:[#allocation2 + $0xe0] sm:$0xff]
        %v4221 = vld [vmem:[#allocation2 + $0xe8] sm:$0xff]
        %v4222 = vld [vmem:[#allocation2 + $0xf0] sm:$0xff]
        %4247 = vrot.lane.b32.xlu0 %v4199, 17
        %v4248 = vpop.permute.xlu0 %4247
        %4249 = vrot.lane.b32.xlu0 %v4200, 17
        %v4250 = vpop.permute.xlu0 %4249
        %4251 = vrot.lane.b32.xlu0 %v4201, 17
        %v4252 = vpop.permute.xlu0 %4251
        %4253 = vrot.lane.b32.xlu0 %v4202, 17
        %v4254 = vpop.permute.xlu0 %4253
        %4255 = vrot.lane.b32.xlu0 %v4203, 17
        %v4256 = vpop.permute.xlu0 %4255
        %4257 = vrot.lane.b32.xlu0 %v4204, 17
        %v4258 = vpop.permute.xlu0 %4257
        %4259 = vrot.lane.b32.xlu0 %v4205, 17
        %v4260 = vpop.permute.xlu0 %4259
        %4261 = vrot.lane.b32.xlu0 %v4206, 17
        %v4262 = vpop.permute.xlu0 %4261
        %4263 = vrot.lane.b32.xlu0 %v4207, 17
        %v4264 = vpop.permute.xlu0 %4263
        %4265 = vrot.lane.b32.xlu0 %v4208, 17
        %v4266 = vpop.permute.xlu0 %4265
        %4267 = vrot.lane.b32.xlu0 %v4209, 17
        %v4268 = vpop.permute.xlu0 %4267
        %4269 = vrot.lane.b32.xlu0 %v4210, 17
        %v4270 = vpop.permute.xlu0 %4269
        %4271 = vrot.lane.b32.xlu0 %v4211, 17
        %v4272 = vpop.permute.xlu0 %4271
        %4273 = vrot.lane.b32.xlu0 %v4212, 17
        %v4274 = vpop.permute.xlu0 %4273
        %4275 = vrot.lane.b32.xlu0 %v4213, 17
        %v4276 = vpop.permute.xlu0 %4275
        %4277 = vrot.lane.b32.xlu0 %v4214, 17
        %v4278 = vpop.permute.xlu0 %4277
        %4279 = vrot.lane.b32.xlu0 %v4215, 17
        %v4280 = vpop.permute.xlu0 %4279
        %4281 = vrot.lane.b32.xlu0 %v4216, 17
        %v4282 = vpop.permute.xlu0 %4281
        %4283 = vrot.lane.b32.xlu0 %v4217, 17
        %v4284 = vpop.permute.xlu0 %4283
        %4285 = vrot.lane.b32.xlu0 %v4218, 17
        %v4286 = vpop.permute.xlu0 %4285
        %4287 = vrot.lane.b32.xlu0 %v4219, 17
        %v4288 = vpop.permute.xlu0 %4287
        %4289 = vrot.lane.b32.xlu0 %v4220, 17
        %v4290 = vpop.permute.xlu0 %4289
        %4291 = vrot.lane.b32.xlu0 %v4221, 17
        %v4292 = vpop.permute.xlu0 %4291
        %4293 = vrot.lane.b32.xlu0 %v4222, 17
        %v4294 = vpop.permute.xlu0 %4293
        %v4295 = vsel %vm786, %v4248, %v4250
        %v4296 = vsel %vm786, %v4250, %v4252
        %v4297 = vsel %vm786, %v4254, %v4256
        %v4298 = vsel %vm786, %v4256, %v4258
        %v4299 = vsel %vm786, %v4260, %v4262
        %v4300 = vsel %vm786, %v4262, %v4264
        %v4301 = vsel %vm786, %v4266, %v4268
        %v4302 = vsel %vm786, %v4268, %v4270
        %v4303 = vsel %vm786, %v4272, %v4274
        %v4304 = vsel %vm786, %v4274, %v4276
        %v4305 = vsel %vm786, %v4278, %v4280
        %v4306 = vsel %vm786, %v4280, %v4282
        %v4307 = vsel %vm786, %v4284, %v4286
        %v4308 = vsel %vm786, %v4286, %v4288
        %v4309 = vsel %vm786, %v4290, %v4292
        %v4310 = vsel %vm786, %v4292, %v4294
        %v4327 = vsel %vm775, %v4295, 0.0
        %v4328 = vsel %vm776, %v4296, 0.0
        %v4329 = vsel %vm775, %v4297, 0.0
        %v4330 = vsel %vm776, %v4298, 0.0
        %v4331 = vsel %vm775, %v4299, 0.0
        %v4332 = vsel %vm776, %v4300, 0.0
        %v4333 = vsel %vm775, %v4301, 0.0
        %v4334 = vsel %vm776, %v4302, 0.0
        %v4335 = vsel %vm775, %v4303, 0.0
        %v4336 = vsel %vm776, %v4304, 0.0
        %v4337 = vsel %vm775, %v4305, 0.0
        %v4338 = vsel %vm776, %v4306, 0.0
        %v4339 = vsel %vm775, %v4307, 0.0
        %v4340 = vsel %vm776, %v4308, 0.0
        %v4341 = vsel %vm775, %v4309, 0.0
        %v4342 = vsel %vm776, %v4310, 0.0
        %v4343 = vld [vmem:[%s10] sm:$0xf]
        %v4344 = vld [vmem:[%s10 + $0x4] sm:$0xf]
        %v4345 = vpack.c.bf16 %v4329, %v4327
        %v4346 = vpack.c.bf16 %v4330, %v4328
        %v4347 = vpack.c.bf16 %v4333, %v4331
        %v4348 = vpack.c.bf16 %v4334, %v4332
        %v4349 = vpack.c.bf16 %v4337, %v4335
        %v4350 = vpack.c.bf16 %v4338, %v4336
        %v4351 = vpack.c.bf16 %v4341, %v4339
        %v4352 = vpack.c.bf16 %v4342, %v4340
        %v4355 = vunpack.c.l.b16 %v4343
        %v4356 = vunpack.c.l.b16 %v4344
        %v4357 = vpack.c.b16 %v4356, %v4355
        %v4359 = vsel %vm559, %v4357, 0
        %4361 = vmatprep.subr.bf16.mxu0 %v4346
        %4362 = vmatpush1.bf16.msra.mxu0 %v4345
        %4363 = vmatprep.subr.bf16.mxu0 %v4348
        %4364 = vmatpush1.bf16.msra.mxu0 %v4347
        %4365 = vmatprep.subr.bf16.mxu0 %v4350
        %4366 = vmatpush1.bf16.msra.mxu0 %v4349
        %4367 = vmatprep.subr.bf16.mxu0 %v4352
        %4368 = vmatpush1.bf16.msra.mxu0 %v4351
        %4369 = vmatprep.subr.bf16.mxu0 0
        %4370 = vmatpush1.bf16.msra.mxu0 0
        %4371 = vmatprep.subr.bf16.mxu0 0
        %4372 = vmatpush1.bf16.msra.mxu0 0
        %4373 = vmatprep.subr.bf16.mxu0 0
        %4374 = vmatpush1.bf16.msra.mxu0 0
        %4375 = vmatprep.subr.bf16.mxu0 0
        %4376 = vmatpush1.bf16.msra.mxu0 0
        %4377 = vmatprep.subr.bf16.mxu0 0
        %4378 = vmatpush1.bf16.msra.mxu0 0
        %4379 = vmatprep.subr.bf16.mxu0 0
        %4380 = vmatpush1.bf16.msra.mxu0 0
        %4381 = vmatprep.subr.bf16.mxu0 0
        %4382 = vmatpush1.bf16.msra.mxu0 0
        %4383 = vmatprep.subr.bf16.mxu0 0
        %4384 = vmatpush1.bf16.msra.mxu0 0
        %4385 = vmatprep.subr.bf16.mxu0 0
        %4386 = vmatpush1.bf16.msra.mxu0 0
        %4387 = vmatprep.subr.bf16.mxu0 0
        %4388 = vmatpush1.bf16.msra.mxu0 0
        %4389 = vmatprep.subr.bf16.mxu0 0
        %4390 = vmatpush1.bf16.msra.mxu0 0
        %4391 = vmatprep.subr.bf16.mxu0 0
        %4392 = vmatpush1.bf16.msra.mxu0 0
        %4393 = vmatprep.mubr.bf16.mxu0 0
        %4394 = vmatmul.mubr.bf16.gmra.mrb[0].mxu0 %v4359
        %v4395 = vpop.f32.mrb[0].mxu0
        %v4396 = vadd.f32 0.0, %v4395
        %v4397 = vpop.f32.mrb[0].mxu0
        %v4398 = vadd.f32 0.0, %v4397
        %v4399 = vpop.f32.mrb[0].mxu0
        %v4400 = vadd.f32 0.0, %v4399
        %v4401 = vpop.f32.mrb[0].mxu0
        %v4402 = vadd.f32 0.0, %v4401
        %4403 = vdwg.mxu0
        %v4404 = vadd.f32 %v4192, %v4396
        %v4405 = vadd.f32 %v4192, %v4398
        %v4406 = vadd.f32 %v4197, %v4400
        %v4407 = vadd.f32 %v4197, %v4402
        %s4408 = scalar_lea.vmem %s10, 8
        %v4409 = vld [vmem:[%s4408] sm:$0xf]
        %v4410 = vld [vmem:[%s4408 + $0x4] sm:$0xf]
        %v4411 = vpack.c.bf16 %v4202, %v4199
        %v4412 = vpack.c.bf16 %v4203, %v4200
        %v4413 = vpack.c.bf16 %v4204, %v4201
        %v4414 = vpack.c.bf16 %v4208, %v4205
        %v4415 = vpack.c.bf16 %v4209, %v4206
        %v4416 = vpack.c.bf16 %v4210, %v4207
        %v4417 = vpack.c.bf16 %v4214, %v4211
        %v4418 = vpack.c.bf16 %v4215, %v4212
        %v4419 = vpack.c.bf16 %v4216, %v4213
        %v4420 = vpack.c.bf16 %v4220, %v4217
        %v4421 = vpack.c.bf16 %v4221, %v4218
        %v4422 = vpack.c.bf16 %v4222, %v4219
        %v4425 = vunpack.c.l.b16 %v4409
        %v4426 = vunpack.c.l.b16 %v4410
        %v4427 = vpack.c.b16 %v4426, %v4425
        %4440 = vrot.lane.b32.xlu0 %v4411, 16
        %v4441 = vpop.permute.xlu0 %4440
        %4442 = vrot.lane.b32.xlu0 %v4412, 16
        %v4443 = vpop.permute.xlu0 %4442
        %4444 = vrot.lane.b32.xlu0 %v4413, 16
        %v4445 = vpop.permute.xlu0 %4444
        %4446 = vrot.lane.b32.xlu0 %v4414, 16
        %v4447 = vpop.permute.xlu0 %4446
        %4448 = vrot.lane.b32.xlu0 %v4415, 16
        %v4449 = vpop.permute.xlu0 %4448
        %4450 = vrot.lane.b32.xlu0 %v4416, 16
        %v4451 = vpop.permute.xlu0 %4450
        %4452 = vrot.lane.b32.xlu0 %v4417, 16
        %v4453 = vpop.permute.xlu0 %4452
        %4454 = vrot.lane.b32.xlu0 %v4418, 16
        %v4455 = vpop.permute.xlu0 %4454
        %4456 = vrot.lane.b32.xlu0 %v4419, 16
        %v4457 = vpop.permute.xlu0 %4456
        %4458 = vrot.lane.b32.xlu0 %v4420, 16
        %v4459 = vpop.permute.xlu0 %4458
        %4460 = vrot.lane.b32.xlu0 %v4421, 16
        %v4461 = vpop.permute.xlu0 %4460
        %4462 = vrot.lane.b32.xlu0 %v4422, 16
        %v4463 = vpop.permute.xlu0 %4462
        %v4464 = vsel %vm879, %v4441, %v4443
        %v4465 = vsel %vm879, %v4443, %v4445
        %v4466 = vsel %vm879, %v4447, %v4449
        %v4467 = vsel %vm879, %v4449, %v4451
        %v4468 = vsel %vm879, %v4453, %v4455
        %v4469 = vsel %vm879, %v4455, %v4457
        %v4470 = vsel %vm879, %v4459, %v4461
        %v4471 = vsel %vm879, %v4461, %v4463
        %v4481 = vsel %vm559, %v4427, 0
        %4483 = vmatprep.subr.bf16.mxu0 %v4465
        %4484 = vmatpush1.bf16.msra.mxu0 %v4464
        %4485 = vmatprep.subr.bf16.mxu0 %v4467
        %4486 = vmatpush1.bf16.msra.mxu0 %v4466
        %4487 = vmatprep.subr.bf16.mxu0 %v4469
        %4488 = vmatpush1.bf16.msra.mxu0 %v4468
        %4489 = vmatprep.subr.bf16.mxu0 %v4471
        %4490 = vmatpush1.bf16.msra.mxu0 %v4470
        %4491 = vmatprep.subr.bf16.mxu0 0
        %4492 = vmatpush1.bf16.msra.mxu0 0
        %4493 = vmatprep.subr.bf16.mxu0 0
        %4494 = vmatpush1.bf16.msra.mxu0 0
        %4495 = vmatprep.subr.bf16.mxu0 0
        %4496 = vmatpush1.bf16.msra.mxu0 0
        %4497 = vmatprep.subr.bf16.mxu0 0
        %4498 = vmatpush1.bf16.msra.mxu0 0
        %4499 = vmatprep.subr.bf16.mxu0 0
        %4500 = vmatpush1.bf16.msra.mxu0 0
        %4501 = vmatprep.subr.bf16.mxu0 0
        %4502 = vmatpush1.bf16.msra.mxu0 0
        %4503 = vmatprep.subr.bf16.mxu0 0
        %4504 = vmatpush1.bf16.msra.mxu0 0
        %4505 = vmatprep.subr.bf16.mxu0 0
        %4506 = vmatpush1.bf16.msra.mxu0 0
        %4507 = vmatprep.subr.bf16.mxu0 0
        %4508 = vmatpush1.bf16.msra.mxu0 0
        %4509 = vmatprep.subr.bf16.mxu0 0
        %4510 = vmatpush1.bf16.msra.mxu0 0
        %4511 = vmatprep.subr.bf16.mxu0 0
        %4512 = vmatpush1.bf16.msra.mxu0 0
        %4513 = vmatprep.subr.bf16.mxu0 0
        %4514 = vmatpush1.bf16.msra.mxu0 0
        %4515 = vmatprep.mubr.bf16.mxu0 0
        %4516 = vmatmul.mubr.bf16.gmra.mrb[0].mxu0 %v4481
        %v4517 = vpop.f32.mrb[0].mxu0
        %v4518 = vadd.f32 0.0, %v4517
        %v4519 = vpop.f32.mrb[0].mxu0
        %v4520 = vadd.f32 0.0, %v4519
        %v4521 = vpop.f32.mrb[0].mxu0
        %v4522 = vadd.f32 0.0, %v4521
        %v4523 = vpop.f32.mrb[0].mxu0
        %v4524 = vadd.f32 0.0, %v4523
        %4525 = vdwg.mxu0
        %v4526 = vadd.f32 %v4404, %v4518
        %v4527 = vadd.f32 %v4405, %v4520
        %v4528 = vadd.f32 %v4406, %v4522
        %v4529 = vadd.f32 %v4407, %v4524
        %4530 = vrot.lane.b32.xlu0 %v4199, 15
        %v4531 = vpop.permute.xlu0 %4530
        %4532 = vrot.lane.b32.xlu0 %v4200, 15
        %v4533 = vpop.permute.xlu0 %4532
        %4534 = vrot.lane.b32.xlu0 %v4201, 15
        %v4535 = vpop.permute.xlu0 %4534
        %4536 = vrot.lane.b32.xlu0 %v4202, 15
        %v4537 = vpop.permute.xlu0 %4536
        %4538 = vrot.lane.b32.xlu0 %v4203, 15
        %v4539 = vpop.permute.xlu0 %4538
        %4540 = vrot.lane.b32.xlu0 %v4204, 15
        %v4541 = vpop.permute.xlu0 %4540
        %4542 = vrot.lane.b32.xlu0 %v4205, 15
        %v4543 = vpop.permute.xlu0 %4542
        %4544 = vrot.lane.b32.xlu0 %v4206, 15
        %v4545 = vpop.permute.xlu0 %4544
        %4546 = vrot.lane.b32.xlu0 %v4207, 15
        %v4547 = vpop.permute.xlu0 %4546
        %4548 = vrot.lane.b32.xlu0 %v4208, 15
        %v4549 = vpop.permute.xlu0 %4548
        %4550 = vrot.lane.b32.xlu0 %v4209, 15
        %v4551 = vpop.permute.xlu0 %4550
        %4552 = vrot.lane.b32.xlu0 %v4210, 15
        %v4553 = vpop.permute.xlu0 %4552
        %4554 = vrot.lane.b32.xlu0 %v4211, 15
        %v4555 = vpop.permute.xlu0 %4554
        %4556 = vrot.lane.b32.xlu0 %v4212, 15
        %v4557 = vpop.permute.xlu0 %4556
        %4558 = vrot.lane.b32.xlu0 %v4213, 15
        %v4559 = vpop.permute.xlu0 %4558
        %4560 = vrot.lane.b32.xlu0 %v4214, 15
        %v4561 = vpop.permute.xlu0 %4560
        %4562 = vrot.lane.b32.xlu0 %v4215, 15
        %v4563 = vpop.permute.xlu0 %4562
        %4564 = vrot.lane.b32.xlu0 %v4216, 15
        %v4565 = vpop.permute.xlu0 %4564
        %4566 = vrot.lane.b32.xlu0 %v4217, 15
        %v4567 = vpop.permute.xlu0 %4566
        %4568 = vrot.lane.b32.xlu0 %v4218, 15
        %v4569 = vpop.permute.xlu0 %4568
        %4570 = vrot.lane.b32.xlu0 %v4219, 15
        %v4571 = vpop.permute.xlu0 %4570
        %4572 = vrot.lane.b32.xlu0 %v4220, 15
        %v4573 = vpop.permute.xlu0 %4572
        %4574 = vrot.lane.b32.xlu0 %v4221, 15
        %v4575 = vpop.permute.xlu0 %4574
        %4576 = vrot.lane.b32.xlu0 %v4222, 15
        %v4577 = vpop.permute.xlu0 %4576
        %v4578 = vsel %vm948, %v4531, %v4533
        %v4579 = vsel %vm948, %v4533, %v4535
        %v4580 = vsel %vm948, %v4537, %v4539
        %v4581 = vsel %vm948, %v4539, %v4541
        %v4582 = vsel %vm948, %v4543, %v4545
        %v4583 = vsel %vm948, %v4545, %v4547
        %v4584 = vsel %vm948, %v4549, %v4551
        %v4585 = vsel %vm948, %v4551, %v4553
        %v4586 = vsel %vm948, %v4555, %v4557
        %v4587 = vsel %vm948, %v4557, %v4559
        %v4588 = vsel %vm948, %v4561, %v4563
        %v4589 = vsel %vm948, %v4563, %v4565
        %v4590 = vsel %vm948, %v4567, %v4569
        %v4591 = vsel %vm948, %v4569, %v4571
        %v4592 = vsel %vm948, %v4573, %v4575
        %v4593 = vsel %vm948, %v4575, %v4577
        %v4610 = vsel %vm940, %v4578, 0.0
        %v4611 = vsel %vm941, %v4579, 0.0
        %v4612 = vsel %vm940, %v4580, 0.0
        %v4613 = vsel %vm941, %v4581, 0.0
        %v4614 = vsel %vm940, %v4582, 0.0
        %v4615 = vsel %vm941, %v4583, 0.0
        %v4616 = vsel %vm940, %v4584, 0.0
        %v4617 = vsel %vm941, %v4585, 0.0
        %v4618 = vsel %vm940, %v4586, 0.0
        %v4619 = vsel %vm941, %v4587, 0.0
        %v4620 = vsel %vm940, %v4588, 0.0
        %v4621 = vsel %vm941, %v4589, 0.0
        %v4622 = vsel %vm940, %v4590, 0.0
        %v4623 = vsel %vm941, %v4591, 0.0
        %v4624 = vsel %vm940, %v4592, 0.0
        %v4625 = vsel %vm941, %v4593, 0.0
        %s4626 = scalar_lea.vmem %s10, 16
        %v4627 = vld [vmem:[%s4626] sm:$0xf]
        %v4628 = vld [vmem:[%s4626 + $0x4] sm:$0xf]
        %v4629 = vpack.c.bf16 %v4612, %v4610
        %v4630 = vpack.c.bf16 %v4613, %v4611
        %v4631 = vpack.c.bf16 %v4616, %v4614
        %v4632 = vpack.c.bf16 %v4617, %v4615
        %v4633 = vpack.c.bf16 %v4620, %v4618
        %v4634 = vpack.c.bf16 %v4621, %v4619
        %v4635 = vpack.c.bf16 %v4624, %v4622
        %v4636 = vpack.c.bf16 %v4625, %v4623
        %v4639 = vunpack.c.l.b16 %v4627
        %v4640 = vunpack.c.l.b16 %v4628
        %v4641 = vpack.c.b16 %v4640, %v4639
        %v4643 = vsel %vm559, %v4641, 0
        %4645 = vmatprep.subr.bf16.mxu0 %v4630
        %4646 = vmatpush1.bf16.msra.mxu0 %v4629
        %4647 = vmatprep.subr.bf16.mxu0 %v4632
        %4648 = vmatpush1.bf16.msra.mxu0 %v4631
        %4649 = vmatprep.subr.bf16.mxu0 %v4634
        %4650 = vmatpush1.bf16.msra.mxu0 %v4633
        %4651 = vmatprep.subr.bf16.mxu0 %v4636
        %4652 = vmatpush1.bf16.msra.mxu0 %v4635
        %4653 = vmatprep.subr.bf16.mxu0 0
        %4654 = vmatpush1.bf16.msra.mxu0 0
        %4655 = vmatprep.subr.bf16.mxu0 0
        %4656 = vmatpush1.bf16.msra.mxu0 0
        %4657 = vmatprep.subr.bf16.mxu0 0
        %4658 = vmatpush1.bf16.msra.mxu0 0
        %4659 = vmatprep.subr.bf16.mxu0 0
        %4660 = vmatpush1.bf16.msra.mxu0 0
        %4661 = vmatprep.subr.bf16.mxu0 0
        %4662 = vmatpush1.bf16.msra.mxu0 0
        %4663 = vmatprep.subr.bf16.mxu0 0
        %4664 = vmatpush1.bf16.msra.mxu0 0
        %4665 = vmatprep.subr.bf16.mxu0 0
        %4666 = vmatpush1.bf16.msra.mxu0 0
        %4667 = vmatprep.subr.bf16.mxu0 0
        %4668 = vmatpush1.bf16.msra.mxu0 0
        %4669 = vmatprep.subr.bf16.mxu0 0
        %4670 = vmatpush1.bf16.msra.mxu0 0
        %4671 = vmatprep.subr.bf16.mxu0 0
        %4672 = vmatpush1.bf16.msra.mxu0 0
        %4673 = vmatprep.subr.bf16.mxu0 0
        %4674 = vmatpush1.bf16.msra.mxu0 0
        %4675 = vmatprep.subr.bf16.mxu0 0
        %4676 = vmatpush1.bf16.msra.mxu0 0
        %4677 = vmatprep.mubr.bf16.mxu0 0
        %4678 = vmatmul.mubr.bf16.gmra.mrb[0].mxu0 %v4643
        %v4679 = vpop.f32.mrb[0].mxu0
        %v4680 = vadd.f32 0.0, %v4679
        %v4681 = vpop.f32.mrb[0].mxu0
        %v4682 = vadd.f32 0.0, %v4681
        %v4683 = vpop.f32.mrb[0].mxu0
        %v4684 = vadd.f32 0.0, %v4683
        %v4685 = vpop.f32.mrb[0].mxu0
        %v4686 = vadd.f32 0.0, %v4685
        %4687 = vdwg.mxu0
        %v4688 = vadd.f32 %v4526, %v4680
        %v4689 = vadd.f32 %v4527, %v4682
        %v4690 = vadd.f32 %v4528, %v4684
        %v4691 = vadd.f32 %v4529, %v4686
        %4692 = vrot.lane.b32.xlu0 %v4199, 1
        %v4693 = vpop.permute.xlu0 %4692
        %4694 = vrot.lane.b32.xlu0 %v4200, 1
        %v4695 = vpop.permute.xlu0 %4694
        %4696 = vrot.lane.b32.xlu0 %v4201, 1
        %v4697 = vpop.permute.xlu0 %4696
        %4698 = vrot.lane.b32.xlu0 %v4202, 1
        %v4699 = vpop.permute.xlu0 %4698
        %4700 = vrot.lane.b32.xlu0 %v4203, 1
        %v4701 = vpop.permute.xlu0 %4700
        %4702 = vrot.lane.b32.xlu0 %v4204, 1
        %v4703 = vpop.permute.xlu0 %4702
        %4704 = vrot.lane.b32.xlu0 %v4205, 1
        %v4705 = vpop.permute.xlu0 %4704
        %4706 = vrot.lane.b32.xlu0 %v4206, 1
        %v4707 = vpop.permute.xlu0 %4706
        %4708 = vrot.lane.b32.xlu0 %v4207, 1
        %v4709 = vpop.permute.xlu0 %4708
        %4710 = vrot.lane.b32.xlu0 %v4208, 1
        %v4711 = vpop.permute.xlu0 %4710
        %4712 = vrot.lane.b32.xlu0 %v4209, 1
        %v4713 = vpop.permute.xlu0 %4712
        %4714 = vrot.lane.b32.xlu0 %v4210, 1
        %v4715 = vpop.permute.xlu0 %4714
        %4716 = vrot.lane.b32.xlu0 %v4211, 1
        %v4717 = vpop.permute.xlu0 %4716
        %4718 = vrot.lane.b32.xlu0 %v4212, 1
        %v4719 = vpop.permute.xlu0 %4718
        %4720 = vrot.lane.b32.xlu0 %v4213, 1
        %v4721 = vpop.permute.xlu0 %4720
        %4722 = vrot.lane.b32.xlu0 %v4214, 1
        %v4723 = vpop.permute.xlu0 %4722
        %4724 = vrot.lane.b32.xlu0 %v4215, 1
        %v4725 = vpop.permute.xlu0 %4724
        %4726 = vrot.lane.b32.xlu0 %v4216, 1
        %v4727 = vpop.permute.xlu0 %4726
        %4728 = vrot.lane.b32.xlu0 %v4217, 1
        %v4729 = vpop.permute.xlu0 %4728
        %4730 = vrot.lane.b32.xlu0 %v4218, 1
        %v4731 = vpop.permute.xlu0 %4730
        %4732 = vrot.lane.b32.xlu0 %v4219, 1
        %v4733 = vpop.permute.xlu0 %4732
        %4734 = vrot.lane.b32.xlu0 %v4220, 1
        %v4735 = vpop.permute.xlu0 %4734
        %4736 = vrot.lane.b32.xlu0 %v4221, 1
        %v4737 = vpop.permute.xlu0 %4736
        %4738 = vrot.lane.b32.xlu0 %v4222, 1
        %v4739 = vpop.permute.xlu0 %4738
        %v4740 = vsel %vm1027, %v4693, %v4695
        %v4741 = vsel %vm1027, %v4695, %v4697
        %v4742 = vsel %vm1027, %v4699, %v4701
        %v4743 = vsel %vm1027, %v4701, %v4703
        %v4744 = vsel %vm1027, %v4705, %v4707
        %v4745 = vsel %vm1027, %v4707, %v4709
        %v4746 = vsel %vm1027, %v4711, %v4713
        %v4747 = vsel %vm1027, %v4713, %v4715
        %v4748 = vsel %vm1027, %v4717, %v4719
        %v4749 = vsel %vm1027, %v4719, %v4721
        %v4750 = vsel %vm1027, %v4723, %v4725
        %v4751 = vsel %vm1027, %v4725, %v4727
        %v4752 = vsel %vm1027, %v4729, %v4731
        %v4753 = vsel %vm1027, %v4731, %v4733
        %v4754 = vsel %vm1027, %v4735, %v4737
        %v4755 = vsel %vm1027, %v4737, %v4739
        %v4772 = vsel %vm775, %v4740, 0.0
        %v4773 = vsel %vm776, %v4741, 0.0
        %v4774 = vsel %vm775, %v4742, 0.0
        %v4775 = vsel %vm776, %v4743, 0.0
        %v4776 = vsel %vm775, %v4744, 0.0
        %v4777 = vsel %vm776, %v4745, 0.0
        %v4778 = vsel %vm775, %v4746, 0.0
        %v4779 = vsel %vm776, %v4747, 0.0
        %v4780 = vsel %vm775, %v4748, 0.0
        %v4781 = vsel %vm776, %v4749, 0.0
        %v4782 = vsel %vm775, %v4750, 0.0
        %v4783 = vsel %vm776, %v4751, 0.0
        %v4784 = vsel %vm775, %v4752, 0.0
        %v4785 = vsel %vm776, %v4753, 0.0
        %v4786 = vsel %vm775, %v4754, 0.0
        %v4787 = vsel %vm776, %v4755, 0.0
        %s4788 = scalar_lea.vmem %s10, 24
        %v4789 = vld [vmem:[%s4788] sm:$0xf]
        %v4790 = vld [vmem:[%s4788 + $0x4] sm:$0xf]
        %v4791 = vpack.c.bf16 %v4774, %v4772
        %v4792 = vpack.c.bf16 %v4775, %v4773
        %v4793 = vpack.c.bf16 %v4778, %v4776
        %v4794 = vpack.c.bf16 %v4779, %v4777
        %v4795 = vpack.c.bf16 %v4782, %v4780
        %v4796 = vpack.c.bf16 %v4783, %v4781
        %v4797 = vpack.c.bf16 %v4786, %v4784
        %v4798 = vpack.c.bf16 %v4787, %v4785
        %v4801 = vunpack.c.l.b16 %v4789
        %v4802 = vunpack.c.l.b16 %v4790
        %v4803 = vpack.c.b16 %v4802, %v4801
        %v4805 = vsel %vm559, %v4803, 0
        %4807 = vmatprep.subr.bf16.mxu0 %v4792
        %4808 = vmatpush1.bf16.msra.mxu0 %v4791
        %4809 = vmatprep.subr.bf16.mxu0 %v4794
        %4810 = vmatpush1.bf16.msra.mxu0 %v4793
        %4811 = vmatprep.subr.bf16.mxu0 %v4796
        %4812 = vmatpush1.bf16.msra.mxu0 %v4795
        %4813 = vmatprep.subr.bf16.mxu0 %v4798
        %4814 = vmatpush1.bf16.msra.mxu0 %v4797
        %4815 = vmatprep.subr.bf16.mxu0 0
        %4816 = vmatpush1.bf16.msra.mxu0 0
        %4817 = vmatprep.subr.bf16.mxu0 0
        %4818 = vmatpush1.bf16.msra.mxu0 0
        %4819 = vmatprep.subr.bf16.mxu0 0
        %4820 = vmatpush1.bf16.msra.mxu0 0
        %4821 = vmatprep.subr.bf16.mxu0 0
        %4822 = vmatpush1.bf16.msra.mxu0 0
        %4823 = vmatprep.subr.bf16.mxu0 0
        %4824 = vmatpush1.bf16.msra.mxu0 0
        %4825 = vmatprep.subr.bf16.mxu0 0
        %4826 = vmatpush1.bf16.msra.mxu0 0
        %4827 = vmatprep.subr.bf16.mxu0 0
        %4828 = vmatpush1.bf16.msra.mxu0 0
        %4829 = vmatprep.subr.bf16.mxu0 0
        %4830 = vmatpush1.bf16.msra.mxu0 0
        %4831 = vmatprep.subr.bf16.mxu0 0
        %4832 = vmatpush1.bf16.msra.mxu0 0
        %4833 = vmatprep.subr.bf16.mxu0 0
        %4834 = vmatpush1.bf16.msra.mxu0 0
        %4835 = vmatprep.subr.bf16.mxu0 0
        %4836 = vmatpush1.bf16.msra.mxu0 0
        %4837 = vmatprep.subr.bf16.mxu0 0
        %4838 = vmatpush1.bf16.msra.mxu0 0
        %4839 = vmatprep.mubr.bf16.mxu0 0
        %4840 = vmatmul.mubr.bf16.gmra.mrb[0].mxu0 %v4805
        %v4841 = vpop.f32.mrb[0].mxu0
        %v4842 = vadd.f32 0.0, %v4841
        %v4843 = vpop.f32.mrb[0].mxu0
        %v4844 = vadd.f32 0.0, %v4843
        %v4845 = vpop.f32.mrb[0].mxu0
        %v4846 = vadd.f32 0.0, %v4845
        %v4847 = vpop.f32.mrb[0].mxu0
        %v4848 = vadd.f32 0.0, %v4847
        %4849 = vdwg.mxu0
        %v4850 = vadd.f32 %v4688, %v4842
        %v4851 = vadd.f32 %v4689, %v4844
        %v4852 = vadd.f32 %v4690, %v4846
        %v4853 = vadd.f32 %v4691, %v4848
        %s4854 = scalar_lea.vmem %s10, 32
        %v4855 = vld [vmem:[%s4854] sm:$0xf]
        %v4856 = vld [vmem:[%s4854 + $0x4] sm:$0xf]
        %v4859 = vunpack.c.l.b16 %v4855
        %v4860 = vunpack.c.l.b16 %v4856
        %v4861 = vpack.c.b16 %v4860, %v4859
        %v4863 = vsel %vm559, %v4861, 0
        %4865 = vmatprep.subr.bf16.mxu0 %v4413
        %4866 = vmatpush1.bf16.msra.mxu0 %v4412
        %4867 = vmatprep.subr.bf16.mxu0 %v4416
        %4868 = vmatpush1.bf16.msra.mxu0 %v4415
        %4869 = vmatprep.subr.bf16.mxu0 %v4419
        %4870 = vmatpush1.bf16.msra.mxu0 %v4418
        %4871 = vmatprep.subr.bf16.mxu0 %v4422
        %4872 = vmatpush1.bf16.msra.mxu0 %v4421
        %4873 = vmatprep.subr.bf16.mxu0 0
        %4874 = vmatpush1.bf16.msra.mxu0 0
        %4875 = vmatprep.subr.bf16.mxu0 0
        %4876 = vmatpush1.bf16.msra.mxu0 0
        %4877 = vmatprep.subr.bf16.mxu0 0
        %4878 = vmatpush1.bf16.msra.mxu0 0
        %4879 = vmatprep.subr.bf16.mxu0 0
        %4880 = vmatpush1.bf16.msra.mxu0 0
        %4881 = vmatprep.subr.bf16.mxu0 0
        %4882 = vmatpush1.bf16.msra.mxu0 0
        %4883 = vmatprep.subr.bf16.mxu0 0
        %4884 = vmatpush1.bf16.msra.mxu0 0
        %4885 = vmatprep.subr.bf16.mxu0 0
        %4886 = vmatpush1.bf16.msra.mxu0 0
        %4887 = vmatprep.subr.bf16.mxu0 0
        %4888 = vmatpush1.bf16.msra.mxu0 0
        %4889 = vmatprep.subr.bf16.mxu0 0
        %4890 = vmatpush1.bf16.msra.mxu0 0
        %4891 = vmatprep.subr.bf16.mxu0 0
        %4892 = vmatpush1.bf16.msra.mxu0 0
        %4893 = vmatprep.subr.bf16.mxu0 0
        %4894 = vmatpush1.bf16.msra.mxu0 0
        %4895 = vmatprep.subr.bf16.mxu0 0
        %4896 = vmatpush1.bf16.msra.mxu0 0
        %4897 = vmatprep.mubr.bf16.mxu0 0
        %4898 = vmatmul.mubr.bf16.gmra.mrb[0].mxu0 %v4863
        %v4899 = vpop.f32.mrb[0].mxu0
        %v4900 = vadd.f32 0.0, %v4899
        %v4901 = vpop.f32.mrb[0].mxu0
        %v4902 = vadd.f32 0.0, %v4901
        %v4903 = vpop.f32.mrb[0].mxu0
        %v4904 = vadd.f32 0.0, %v4903
        %v4905 = vpop.f32.mrb[0].mxu0
        %v4906 = vadd.f32 0.0, %v4905
        %4907 = vdwg.mxu0
        %v4908 = vadd.f32 %v4850, %v4900
        %v4909 = vadd.f32 %v4851, %v4902
        %v4910 = vadd.f32 %v4852, %v4904
        %v4911 = vadd.f32 %v4853, %v4906
        %v4912 = vld [vmem:[#allocation2 + $0x8] sm:$0xff]
        %v4913 = vld [vmem:[#allocation2 + $0x10] sm:$0xff]
        %v4914 = vld [vmem:[#allocation2 + $0x18] sm:$0xff]
        %v4915 = vld [vmem:[#allocation2 + $0x28] sm:$0xff]
        %v4916 = vld [vmem:[#allocation2 + $0x30] sm:$0xff]
        %v4917 = vld [vmem:[#allocation2 + $0x38] sm:$0xff]
        %v4918 = vld [vmem:[#allocation2 + $0x48] sm:$0xff]
        %v4919 = vld [vmem:[#allocation2 + $0x50] sm:$0xff]
        %v4920 = vld [vmem:[#allocation2 + $0x58] sm:$0xff]
        %v4921 = vld [vmem:[#allocation2 + $0x68] sm:$0xff]
        %v4922 = vld [vmem:[#allocation2 + $0x70] sm:$0xff]
        %v4923 = vld [vmem:[#allocation2 + $0x78] sm:$0xff]
        %v4924 = vld [vmem:[#allocation2 + $0x88] sm:$0xff]
        %v4925 = vld [vmem:[#allocation2 + $0x90] sm:$0xff]
        %v4926 = vld [vmem:[#allocation2 + $0x98] sm:$0xff]
        %v4927 = vld [vmem:[#allocation2 + $0xa8] sm:$0xff]
        %v4928 = vld [vmem:[#allocation2 + $0xb0] sm:$0xff]
        %v4929 = vld [vmem:[#allocation2 + $0xb8] sm:$0xff]
        %v4930 = vld [vmem:[#allocation2 + $0xc8] sm:$0xff]
        %v4931 = vld [vmem:[#allocation2 + $0xd0] sm:$0xff]
        %v4932 = vld [vmem:[#allocation2 + $0xd8] sm:$0xff]
        %v4933 = vld [vmem:[#allocation2 + $0xe8] sm:$0xff]
        %v4934 = vld [vmem:[#allocation2 + $0xf0] sm:$0xff]
        %v4935 = vld [vmem:[#allocation2 + $0xf8] sm:$0xff]
        %4960 = vrot.lane.b32.xlu0 %v4912, 127
        %v4961 = vpop.permute.xlu0 %4960
        %4962 = vrot.lane.b32.xlu0 %v4913, 127
        %v4963 = vpop.permute.xlu0 %4962
        %4964 = vrot.lane.b32.xlu0 %v4914, 127
        %v4965 = vpop.permute.xlu0 %4964
        %4966 = vrot.lane.b32.xlu0 %v4915, 127
        %v4967 = vpop.permute.xlu0 %4966
        %4968 = vrot.lane.b32.xlu0 %v4916, 127
        %v4969 = vpop.permute.xlu0 %4968
        %4970 = vrot.lane.b32.xlu0 %v4917, 127
        %v4971 = vpop.permute.xlu0 %4970
        %4972 = vrot.lane.b32.xlu0 %v4918, 127
        %v4973 = vpop.permute.xlu0 %4972
        %4974 = vrot.lane.b32.xlu0 %v4919, 127
        %v4975 = vpop.permute.xlu0 %4974
        %4976 = vrot.lane.b32.xlu0 %v4920, 127
        %v4977 = vpop.permute.xlu0 %4976
        %4978 = vrot.lane.b32.xlu0 %v4921, 127
        %v4979 = vpop.permute.xlu0 %4978
        %4980 = vrot.lane.b32.xlu0 %v4922, 127
        %v4981 = vpop.permute.xlu0 %4980
        %4982 = vrot.lane.b32.xlu0 %v4923, 127
        %v4983 = vpop.permute.xlu0 %4982
        %4984 = vrot.lane.b32.xlu0 %v4924, 127
        %v4985 = vpop.permute.xlu0 %4984
        %4986 = vrot.lane.b32.xlu0 %v4925, 127
        %v4987 = vpop.permute.xlu0 %4986
        %4988 = vrot.lane.b32.xlu0 %v4926, 127
        %v4989 = vpop.permute.xlu0 %4988
        %4990 = vrot.lane.b32.xlu0 %v4927, 127
        %v4991 = vpop.permute.xlu0 %4990
        %4992 = vrot.lane.b32.xlu0 %v4928, 127
        %v4993 = vpop.permute.xlu0 %4992
        %4994 = vrot.lane.b32.xlu0 %v4929, 127
        %v4995 = vpop.permute.xlu0 %4994
        %4996 = vrot.lane.b32.xlu0 %v4930, 127
        %v4997 = vpop.permute.xlu0 %4996
        %4998 = vrot.lane.b32.xlu0 %v4931, 127
        %v4999 = vpop.permute.xlu0 %4998
        %5000 = vrot.lane.b32.xlu0 %v4932, 127
        %v5001 = vpop.permute.xlu0 %5000
        %5002 = vrot.lane.b32.xlu0 %v4933, 127
        %v5003 = vpop.permute.xlu0 %5002
        %5004 = vrot.lane.b32.xlu0 %v4934, 127
        %v5005 = vpop.permute.xlu0 %5004
        %5006 = vrot.lane.b32.xlu0 %v4935, 127
        %v5007 = vpop.permute.xlu0 %5006
        %v5008 = vsel %vm1176, %v4961, %v4963
        %v5009 = vsel %vm1176, %v4963, %v4965
        %v5010 = vsel %vm1176, %v4967, %v4969
        %v5011 = vsel %vm1176, %v4969, %v4971
        %v5012 = vsel %vm1176, %v4973, %v4975
        %v5013 = vsel %vm1176, %v4975, %v4977
        %v5014 = vsel %vm1176, %v4979, %v4981
        %v5015 = vsel %vm1176, %v4981, %v4983
        %v5016 = vsel %vm1176, %v4985, %v4987
        %v5017 = vsel %vm1176, %v4987, %v4989
        %v5018 = vsel %vm1176, %v4991, %v4993
        %v5019 = vsel %vm1176, %v4993, %v4995
        %v5020 = vsel %vm1176, %v4997, %v4999
        %v5021 = vsel %vm1176, %v4999, %v5001
        %v5022 = vsel %vm1176, %v5003, %v5005
        %v5023 = vsel %vm1176, %v5005, %v5007
        %v5040 = vsel %vm940, %v5008, 0.0
        %v5041 = vsel %vm941, %v5009, 0.0
        %v5042 = vsel %vm940, %v5010, 0.0
        %v5043 = vsel %vm941, %v5011, 0.0
        %v5044 = vsel %vm940, %v5012, 0.0
        %v5045 = vsel %vm941, %v5013, 0.0
        %v5046 = vsel %vm940, %v5014, 0.0
        %v5047 = vsel %vm941, %v5015, 0.0
        %v5048 = vsel %vm940, %v5016, 0.0
        %v5049 = vsel %vm941, %v5017, 0.0
        %v5050 = vsel %vm940, %v5018, 0.0
        %v5051 = vsel %vm941, %v5019, 0.0
        %v5052 = vsel %vm940, %v5020, 0.0
        %v5053 = vsel %vm941, %v5021, 0.0
        %v5054 = vsel %vm940, %v5022, 0.0
        %v5055 = vsel %vm941, %v5023, 0.0
        %s5056 = scalar_lea.vmem %s10, 40
        %v5057 = vld [vmem:[%s5056] sm:$0xf]
        %v5058 = vld [vmem:[%s5056 + $0x4] sm:$0xf]
        %v5059 = vpack.c.bf16 %v5042, %v5040
        %v5060 = vpack.c.bf16 %v5043, %v5041
        %v5061 = vpack.c.bf16 %v5046, %v5044
        %v5062 = vpack.c.bf16 %v5047, %v5045
        %v5063 = vpack.c.bf16 %v5050, %v5048
        %v5064 = vpack.c.bf16 %v5051, %v5049
        %v5065 = vpack.c.bf16 %v5054, %v5052
        %v5066 = vpack.c.bf16 %v5055, %v5053
        %v5069 = vunpack.c.l.b16 %v5057
        %v5070 = vunpack.c.l.b16 %v5058
        %v5071 = vpack.c.b16 %v5070, %v5069
        %v5073 = vsel %vm559, %v5071, 0
        %5075 = vmatprep.subr.bf16.mxu0 %v5060
        %5076 = vmatpush1.bf16.msra.mxu0 %v5059
        %5077 = vmatprep.subr.bf16.mxu0 %v5062
        %5078 = vmatpush1.bf16.msra.mxu0 %v5061
        %5079 = vmatprep.subr.bf16.mxu0 %v5064
        %5080 = vmatpush1.bf16.msra.mxu0 %v5063
        %5081 = vmatprep.subr.bf16.mxu0 %v5066
        %5082 = vmatpush1.bf16.msra.mxu0 %v5065
        %5083 = vmatprep.subr.bf16.mxu0 0
        %5084 = vmatpush1.bf16.msra.mxu0 0
        %5085 = vmatprep.subr.bf16.mxu0 0
        %5086 = vmatpush1.bf16.msra.mxu0 0
        %5087 = vmatprep.subr.bf16.mxu0 0
        %5088 = vmatpush1.bf16.msra.mxu0 0
        %5089 = vmatprep.subr.bf16.mxu0 0
        %5090 = vmatpush1.bf16.msra.mxu0 0
        %5091 = vmatprep.subr.bf16.mxu0 0
        %5092 = vmatpush1.bf16.msra.mxu0 0
        %5093 = vmatprep.subr.bf16.mxu0 0
        %5094 = vmatpush1.bf16.msra.mxu0 0
        %5095 = vmatprep.subr.bf16.mxu0 0
        %5096 = vmatpush1.bf16.msra.mxu0 0
        %5097 = vmatprep.subr.bf16.mxu0 0
        %5098 = vmatpush1.bf16.msra.mxu0 0
        %5099 = vmatprep.subr.bf16.mxu0 0
        %5100 = vmatpush1.bf16.msra.mxu0 0
        %5101 = vmatprep.subr.bf16.mxu0 0
        %5102 = vmatpush1.bf16.msra.mxu0 0
        %5103 = vmatprep.subr.bf16.mxu0 0
        %5104 = vmatpush1.bf16.msra.mxu0 0
        %5105 = vmatprep.subr.bf16.mxu0 0
        %5106 = vmatpush1.bf16.msra.mxu0 0
        %5107 = vmatprep.mubr.bf16.mxu0 0
        %5108 = vmatmul.mubr.bf16.gmra.mrb[0].mxu0 %v5073
        %v5109 = vpop.f32.mrb[0].mxu0
        %v5110 = vadd.f32 0.0, %v5109
        %v5111 = vpop.f32.mrb[0].mxu0
        %v5112 = vadd.f32 0.0, %v5111
        %v5113 = vpop.f32.mrb[0].mxu0
        %v5114 = vadd.f32 0.0, %v5113
        %v5115 = vpop.f32.mrb[0].mxu0
        %v5116 = vadd.f32 0.0, %v5115
        %5117 = vdwg.mxu0
        %v5118 = vadd.f32 %v4908, %v5110
        %v5119 = vadd.f32 %v4909, %v5112
        %v5120 = vadd.f32 %v4910, %v5114
        %v5121 = vadd.f32 %v4911, %v5116
        %5122 = vrot.lane.b32.xlu0 %v4912, 113
        %v5123 = vpop.permute.xlu0 %5122
        %5124 = vrot.lane.b32.xlu0 %v4913, 113
        %v5125 = vpop.permute.xlu0 %5124
        %5126 = vrot.lane.b32.xlu0 %v4914, 113
        %v5127 = vpop.permute.xlu0 %5126
        %5128 = vrot.lane.b32.xlu0 %v4915, 113
        %v5129 = vpop.permute.xlu0 %5128
        %5130 = vrot.lane.b32.xlu0 %v4916, 113
        %v5131 = vpop.permute.xlu0 %5130
        %5132 = vrot.lane.b32.xlu0 %v4917, 113
        %v5133 = vpop.permute.xlu0 %5132
        %5134 = vrot.lane.b32.xlu0 %v4918, 113
        %v5135 = vpop.permute.xlu0 %5134
        %5136 = vrot.lane.b32.xlu0 %v4919, 113
        %v5137 = vpop.permute.xlu0 %5136
        %5138 = vrot.lane.b32.xlu0 %v4920, 113
        %v5139 = vpop.permute.xlu0 %5138
        %5140 = vrot.lane.b32.xlu0 %v4921, 113
        %v5141 = vpop.permute.xlu0 %5140
        %5142 = vrot.lane.b32.xlu0 %v4922, 113
        %v5143 = vpop.permute.xlu0 %5142
        %5144 = vrot.lane.b32.xlu0 %v4923, 113
        %v5145 = vpop.permute.xlu0 %5144
        %5146 = vrot.lane.b32.xlu0 %v4924, 113
        %v5147 = vpop.permute.xlu0 %5146
        %5148 = vrot.lane.b32.xlu0 %v4925, 113
        %v5149 = vpop.permute.xlu0 %5148
        %5150 = vrot.lane.b32.xlu0 %v4926, 113
        %v5151 = vpop.permute.xlu0 %5150
        %5152 = vrot.lane.b32.xlu0 %v4927, 113
        %v5153 = vpop.permute.xlu0 %5152
        %5154 = vrot.lane.b32.xlu0 %v4928, 113
        %v5155 = vpop.permute.xlu0 %5154
        %5156 = vrot.lane.b32.xlu0 %v4929, 113
        %v5157 = vpop.permute.xlu0 %5156
        %5158 = vrot.lane.b32.xlu0 %v4930, 113
        %v5159 = vpop.permute.xlu0 %5158
        %5160 = vrot.lane.b32.xlu0 %v4931, 113
        %v5161 = vpop.permute.xlu0 %5160
        %5162 = vrot.lane.b32.xlu0 %v4932, 113
        %v5163 = vpop.permute.xlu0 %5162
        %5164 = vrot.lane.b32.xlu0 %v4933, 113
        %v5165 = vpop.permute.xlu0 %5164
        %5166 = vrot.lane.b32.xlu0 %v4934, 113
        %v5167 = vpop.permute.xlu0 %5166
        %5168 = vrot.lane.b32.xlu0 %v4935, 113
        %v5169 = vpop.permute.xlu0 %5168
        %v5170 = vsel %vm1255, %v5123, %v5125
        %v5171 = vsel %vm1255, %v5125, %v5127
        %v5172 = vsel %vm1255, %v5129, %v5131
        %v5173 = vsel %vm1255, %v5131, %v5133
        %v5174 = vsel %vm1255, %v5135, %v5137
        %v5175 = vsel %vm1255, %v5137, %v5139
        %v5176 = vsel %vm1255, %v5141, %v5143
        %v5177 = vsel %vm1255, %v5143, %v5145
        %v5178 = vsel %vm1255, %v5147, %v5149
        %v5179 = vsel %vm1255, %v5149, %v5151
        %v5180 = vsel %vm1255, %v5153, %v5155
        %v5181 = vsel %vm1255, %v5155, %v5157
        %v5182 = vsel %vm1255, %v5159, %v5161
        %v5183 = vsel %vm1255, %v5161, %v5163
        %v5184 = vsel %vm1255, %v5165, %v5167
        %v5185 = vsel %vm1255, %v5167, %v5169
        %v5202 = vsel %vm775, %v5170, 0.0
        %v5203 = vsel %vm776, %v5171, 0.0
        %v5204 = vsel %vm775, %v5172, 0.0
        %v5205 = vsel %vm776, %v5173, 0.0
        %v5206 = vsel %vm775, %v5174, 0.0
        %v5207 = vsel %vm776, %v5175, 0.0
        %v5208 = vsel %vm775, %v5176, 0.0
        %v5209 = vsel %vm776, %v5177, 0.0
        %v5210 = vsel %vm775, %v5178, 0.0
        %v5211 = vsel %vm776, %v5179, 0.0
        %v5212 = vsel %vm775, %v5180, 0.0
        %v5213 = vsel %vm776, %v5181, 0.0
        %v5214 = vsel %vm775, %v5182, 0.0
        %v5215 = vsel %vm776, %v5183, 0.0
        %v5216 = vsel %vm775, %v5184, 0.0
        %v5217 = vsel %vm776, %v5185, 0.0
        %s5218 = scalar_lea.vmem %s10, 48
        %v5219 = vld [vmem:[%s5218] sm:$0xf]
        %v5220 = vld [vmem:[%s5218 + $0x4] sm:$0xf]
        %v5221 = vpack.c.bf16 %v5204, %v5202
        %v5222 = vpack.c.bf16 %v5205, %v5203
        %v5223 = vpack.c.bf16 %v5208, %v5206
        %v5224 = vpack.c.bf16 %v5209, %v5207
        %v5225 = vpack.c.bf16 %v5212, %v5210
        %v5226 = vpack.c.bf16 %v5213, %v5211
        %v5227 = vpack.c.bf16 %v5216, %v5214
        %v5228 = vpack.c.bf16 %v5217, %v5215
        %v5231 = vunpack.c.l.b16 %v5219
        %v5232 = vunpack.c.l.b16 %v5220
        %v5233 = vpack.c.b16 %v5232, %v5231
        %v5235 = vsel %vm559, %v5233, 0
        %5237 = vmatprep.subr.bf16.mxu0 %v5222
        %5238 = vmatpush1.bf16.msra.mxu0 %v5221
        %5239 = vmatprep.subr.bf16.mxu0 %v5224
        %5240 = vmatpush1.bf16.msra.mxu0 %v5223
        %5241 = vmatprep.subr.bf16.mxu0 %v5226
        %5242 = vmatpush1.bf16.msra.mxu0 %v5225
        %5243 = vmatprep.subr.bf16.mxu0 %v5228
        %5244 = vmatpush1.bf16.msra.mxu0 %v5227
        %5245 = vmatprep.subr.bf16.mxu0 0
        %5246 = vmatpush1.bf16.msra.mxu0 0
        %5247 = vmatprep.subr.bf16.mxu0 0
        %5248 = vmatpush1.bf16.msra.mxu0 0
        %5249 = vmatprep.subr.bf16.mxu0 0
        %5250 = vmatpush1.bf16.msra.mxu0 0
        %5251 = vmatprep.subr.bf16.mxu0 0
        %5252 = vmatpush1.bf16.msra.mxu0 0
        %5253 = vmatprep.subr.bf16.mxu0 0
        %5254 = vmatpush1.bf16.msra.mxu0 0
        %5255 = vmatprep.subr.bf16.mxu0 0
        %5256 = vmatpush1.bf16.msra.mxu0 0
        %5257 = vmatprep.subr.bf16.mxu0 0
        %5258 = vmatpush1.bf16.msra.mxu0 0
        %5259 = vmatprep.subr.bf16.mxu0 0
        %5260 = vmatpush1.bf16.msra.mxu0 0
        %5261 = vmatprep.subr.bf16.mxu0 0
        %5262 = vmatpush1.bf16.msra.mxu0 0
        %5263 = vmatprep.subr.bf16.mxu0 0
        %5264 = vmatpush1.bf16.msra.mxu0 0
        %5265 = vmatprep.subr.bf16.mxu0 0
        %5266 = vmatpush1.bf16.msra.mxu0 0
        %5267 = vmatprep.subr.bf16.mxu0 0
        %5268 = vmatpush1.bf16.msra.mxu0 0
        %5269 = vmatprep.mubr.bf16.mxu0 0
        %5270 = vmatmul.mubr.bf16.gmra.mrb[0].mxu0 %v5235
        %v5271 = vpop.f32.mrb[0].mxu0
        %v5272 = vadd.f32 0.0, %v5271
        %v5273 = vpop.f32.mrb[0].mxu0
        %v5274 = vadd.f32 0.0, %v5273
        %v5275 = vpop.f32.mrb[0].mxu0
        %v5276 = vadd.f32 0.0, %v5275
        %v5277 = vpop.f32.mrb[0].mxu0
        %v5278 = vadd.f32 0.0, %v5277
        %5279 = vdwg.mxu0
        %v5280 = vadd.f32 %v5118, %v5272
        %v5281 = vadd.f32 %v5119, %v5274
        %v5282 = vadd.f32 %v5120, %v5276
        %v5283 = vadd.f32 %v5121, %v5278
        %s5284 = scalar_lea.vmem %s10, 56
        %v5285 = vld [vmem:[%s5284] sm:$0xf]
        %v5286 = vld [vmem:[%s5284 + $0x4] sm:$0xf]
        %v5287 = vpack.c.bf16 %v4915, %v4912
        %v5288 = vpack.c.bf16 %v4916, %v4913
        %v5289 = vpack.c.bf16 %v4917, %v4914
        %v5290 = vpack.c.bf16 %v4921, %v4918
        %v5291 = vpack.c.bf16 %v4922, %v4919
        %v5292 = vpack.c.bf16 %v4923, %v4920
        %v5293 = vpack.c.bf16 %v4927, %v4924
        %v5294 = vpack.c.bf16 %v4928, %v4925
        %v5295 = vpack.c.bf16 %v4929, %v4926
        %v5296 = vpack.c.bf16 %v4933, %v4930
        %v5297 = vpack.c.bf16 %v4934, %v4931
        %v5298 = vpack.c.bf16 %v4935, %v4932
        %v5301 = vunpack.c.l.b16 %v5285
        %v5302 = vunpack.c.l.b16 %v5286
        %v5303 = vpack.c.b16 %v5302, %v5301
        %5316 = vrot.lane.b32.xlu0 %v5287, 112
        %v5317 = vpop.permute.xlu0 %5316
        %5318 = vrot.lane.b32.xlu0 %v5288, 112
        %v5319 = vpop.permute.xlu0 %5318
        %5320 = vrot.lane.b32.xlu0 %v5289, 112
        %v5321 = vpop.permute.xlu0 %5320
        %5322 = vrot.lane.b32.xlu0 %v5290, 112
        %v5323 = vpop.permute.xlu0 %5322
        %5324 = vrot.lane.b32.xlu0 %v5291, 112
        %v5325 = vpop.permute.xlu0 %5324
        %5326 = vrot.lane.b32.xlu0 %v5292, 112
        %v5327 = vpop.permute.xlu0 %5326
        %5328 = vrot.lane.b32.xlu0 %v5293, 112
        %v5329 = vpop.permute.xlu0 %5328
        %5330 = vrot.lane.b32.xlu0 %v5294, 112
        %v5331 = vpop.permute.xlu0 %5330
        %5332 = vrot.lane.b32.xlu0 %v5295, 112
        %v5333 = vpop.permute.xlu0 %5332
        %5334 = vrot.lane.b32.xlu0 %v5296, 112
        %v5335 = vpop.permute.xlu0 %5334
        %5336 = vrot.lane.b32.xlu0 %v5297, 112
        %v5337 = vpop.permute.xlu0 %5336
        %5338 = vrot.lane.b32.xlu0 %v5298, 112
        %v5339 = vpop.permute.xlu0 %5338
        %v5340 = vsel %vm1348, %v5317, %v5319
        %v5341 = vsel %vm1348, %v5319, %v5321
        %v5342 = vsel %vm1348, %v5323, %v5325
        %v5343 = vsel %vm1348, %v5325, %v5327
        %v5344 = vsel %vm1348, %v5329, %v5331
        %v5345 = vsel %vm1348, %v5331, %v5333
        %v5346 = vsel %vm1348, %v5335, %v5337
        %v5347 = vsel %vm1348, %v5337, %v5339
        %v5357 = vsel %vm559, %v5303, 0
        %5359 = vmatprep.subr.bf16.mxu0 %v5341
        %5360 = vmatpush1.bf16.msra.mxu0 %v5340
        %5361 = vmatprep.subr.bf16.mxu0 %v5343
        %5362 = vmatpush1.bf16.msra.mxu0 %v5342
        %5363 = vmatprep.subr.bf16.mxu0 %v5345
        %5364 = vmatpush1.bf16.msra.mxu0 %v5344
        %5365 = vmatprep.subr.bf16.mxu0 %v5347
        %5366 = vmatpush1.bf16.msra.mxu0 %v5346
        %5367 = vmatprep.subr.bf16.mxu0 0
        %5368 = vmatpush1.bf16.msra.mxu0 0
        %5369 = vmatprep.subr.bf16.mxu0 0
        %5370 = vmatpush1.bf16.msra.mxu0 0
        %5371 = vmatprep.subr.bf16.mxu0 0
        %5372 = vmatpush1.bf16.msra.mxu0 0
        %5373 = vmatprep.subr.bf16.mxu0 0
        %5374 = vmatpush1.bf16.msra.mxu0 0
        %5375 = vmatprep.subr.bf16.mxu0 0
        %5376 = vmatpush1.bf16.msra.mxu0 0
        %5377 = vmatprep.subr.bf16.mxu0 0
        %5378 = vmatpush1.bf16.msra.mxu0 0
        %5379 = vmatprep.subr.bf16.mxu0 0
        %5380 = vmatpush1.bf16.msra.mxu0 0
        %5381 = vmatprep.subr.bf16.mxu0 0
        %5382 = vmatpush1.bf16.msra.mxu0 0
        %5383 = vmatprep.subr.bf16.mxu0 0
        %5384 = vmatpush1.bf16.msra.mxu0 0
        %5385 = vmatprep.subr.bf16.mxu0 0
        %5386 = vmatpush1.bf16.msra.mxu0 0
        %5387 = vmatprep.subr.bf16.mxu0 0
        %5388 = vmatpush1.bf16.msra.mxu0 0
        %5389 = vmatprep.subr.bf16.mxu0 0
        %5390 = vmatpush1.bf16.msra.mxu0 0
        %5391 = vmatprep.mubr.bf16.mxu0 0
        %5392 = vmatmul.mubr.bf16.gmra.mrb[0].mxu0 %v5357
        %v5393 = vpop.f32.mrb[0].mxu0
        %v5394 = vadd.f32 0.0, %v5393
        %v5395 = vpop.f32.mrb[0].mxu0
        %v5396 = vadd.f32 0.0, %v5395
        %v5397 = vpop.f32.mrb[0].mxu0
        %v5398 = vadd.f32 0.0, %v5397
        %v5399 = vpop.f32.mrb[0].mxu0
        %v5400 = vadd.f32 0.0, %v5399
        %5401 = vdwg.mxu0
        %v5402 = vadd.f32 %v5280, %v5394
        %v5403 = vadd.f32 %v5281, %v5396
        %v5404 = vadd.f32 %v5282, %v5398
        %v5405 = vadd.f32 %v5283, %v5400
        %5406 = vrot.lane.b32.xlu0 %v4912, 111
        %v5407 = vpop.permute.xlu0 %5406
        %5408 = vrot.lane.b32.xlu0 %v4913, 111
        %v5409 = vpop.permute.xlu0 %5408
        %5410 = vrot.lane.b32.xlu0 %v4914, 111
        %v5411 = vpop.permute.xlu0 %5410
        %5412 = vrot.lane.b32.xlu0 %v4915, 111
        %v5413 = vpop.permute.xlu0 %5412
        %5414 = vrot.lane.b32.xlu0 %v4916, 111
        %v5415 = vpop.permute.xlu0 %5414
        %5416 = vrot.lane.b32.xlu0 %v4917, 111
        %v5417 = vpop.permute.xlu0 %5416
        %5418 = vrot.lane.b32.xlu0 %v4918, 111
        %v5419 = vpop.permute.xlu0 %5418
        %5420 = vrot.lane.b32.xlu0 %v4919, 111
        %v5421 = vpop.permute.xlu0 %5420
        %5422 = vrot.lane.b32.xlu0 %v4920, 111
        %v5423 = vpop.permute.xlu0 %5422
        %5424 = vrot.lane.b32.xlu0 %v4921, 111
        %v5425 = vpop.permute.xlu0 %5424
        %5426 = vrot.lane.b32.xlu0 %v4922, 111
        %v5427 = vpop.permute.xlu0 %5426
        %5428 = vrot.lane.b32.xlu0 %v4923, 111
        %v5429 = vpop.permute.xlu0 %5428
        %5430 = vrot.lane.b32.xlu0 %v4924, 111
        %v5431 = vpop.permute.xlu0 %5430
        %5432 = vrot.lane.b32.xlu0 %v4925, 111
        %v5433 = vpop.permute.xlu0 %5432
        %5434 = vrot.lane.b32.xlu0 %v4926, 111
        %v5435 = vpop.permute.xlu0 %5434
        %5436 = vrot.lane.b32.xlu0 %v4927, 111
        %v5437 = vpop.permute.xlu0 %5436
        %5438 = vrot.lane.b32.xlu0 %v4928, 111
        %v5439 = vpop.permute.xlu0 %5438
        %5440 = vrot.lane.b32.xlu0 %v4929, 111
        %v5441 = vpop.permute.xlu0 %5440
        %5442 = vrot.lane.b32.xlu0 %v4930, 111
        %v5443 = vpop.permute.xlu0 %5442
        %5444 = vrot.lane.b32.xlu0 %v4931, 111
        %v5445 = vpop.permute.xlu0 %5444
        %5446 = vrot.lane.b32.xlu0 %v4932, 111
        %v5447 = vpop.permute.xlu0 %5446
        %5448 = vrot.lane.b32.xlu0 %v4933, 111
        %v5449 = vpop.permute.xlu0 %5448
        %5450 = vrot.lane.b32.xlu0 %v4934, 111
        %v5451 = vpop.permute.xlu0 %5450
        %5452 = vrot.lane.b32.xlu0 %v4935, 111
        %v5453 = vpop.permute.xlu0 %5452
        %v5454 = vsel %vm1413, %v5407, %v5409
        %v5455 = vsel %vm1413, %v5409, %v5411
        %v5456 = vsel %vm1413, %v5413, %v5415
        %v5457 = vsel %vm1413, %v5415, %v5417
        %v5458 = vsel %vm1413, %v5419, %v5421
        %v5459 = vsel %vm1413, %v5421, %v5423
        %v5460 = vsel %vm1413, %v5425, %v5427
        %v5461 = vsel %vm1413, %v5427, %v5429
        %v5462 = vsel %vm1413, %v5431, %v5433
        %v5463 = vsel %vm1413, %v5433, %v5435
        %v5464 = vsel %vm1413, %v5437, %v5439
        %v5465 = vsel %vm1413, %v5439, %v5441
        %v5466 = vsel %vm1413, %v5443, %v5445
        %v5467 = vsel %vm1413, %v5445, %v5447
        %v5468 = vsel %vm1413, %v5449, %v5451
        %v5469 = vsel %vm1413, %v5451, %v5453
        %v5486 = vsel %vm940, %v5454, 0.0
        %v5487 = vsel %vm941, %v5455, 0.0
        %v5488 = vsel %vm940, %v5456, 0.0
        %v5489 = vsel %vm941, %v5457, 0.0
        %v5490 = vsel %vm940, %v5458, 0.0
        %v5491 = vsel %vm941, %v5459, 0.0
        %v5492 = vsel %vm940, %v5460, 0.0
        %v5493 = vsel %vm941, %v5461, 0.0
        %v5494 = vsel %vm940, %v5462, 0.0
        %v5495 = vsel %vm941, %v5463, 0.0
        %v5496 = vsel %vm940, %v5464, 0.0
        %v5497 = vsel %vm941, %v5465, 0.0
        %v5498 = vsel %vm940, %v5466, 0.0
        %v5499 = vsel %vm941, %v5467, 0.0
        %v5500 = vsel %vm940, %v5468, 0.0
        %v5501 = vsel %vm941, %v5469, 0.0
        %s5502 = scalar_lea.vmem %s10, 64
        %v5503 = vld [vmem:[%s5502] sm:$0xf]
        %v5504 = vld [vmem:[%s5502 + $0x4] sm:$0xf]
        %v5505 = vpack.c.bf16 %v5488, %v5486
        %v5506 = vpack.c.bf16 %v5489, %v5487
        %v5507 = vpack.c.bf16 %v5492, %v5490
        %v5508 = vpack.c.bf16 %v5493, %v5491
        %v5509 = vpack.c.bf16 %v5496, %v5494
        %v5510 = vpack.c.bf16 %v5497, %v5495
        %v5511 = vpack.c.bf16 %v5500, %v5498
        %v5512 = vpack.c.bf16 %v5501, %v5499
        %v5515 = vunpack.c.l.b16 %v5503
        %v5516 = vunpack.c.l.b16 %v5504
        %v5517 = vpack.c.b16 %v5516, %v5515
        %v5519 = vsel %vm559, %v5517, 0
        %5521 = vmatprep.subr.bf16.mxu0 %v5506
        %5522 = vmatpush1.bf16.msra.mxu0 %v5505
        %5523 = vmatprep.subr.bf16.mxu0 %v5508
        %5524 = vmatpush1.bf16.msra.mxu0 %v5507
        %5525 = vmatprep.subr.bf16.mxu0 %v5510
        %5526 = vmatpush1.bf16.msra.mxu0 %v5509
        %5527 = vmatprep.subr.bf16.mxu0 %v5512
        %5528 = vmatpush1.bf16.msra.mxu0 %v5511
        %5529 = vmatprep.subr.bf16.mxu0 0
        %5530 = vmatpush1.bf16.msra.mxu0 0
        %5531 = vmatprep.subr.bf16.mxu0 0
        %5532 = vmatpush1.bf16.msra.mxu0 0
        %5533 = vmatprep.subr.bf16.mxu0 0
        %5534 = vmatpush1.bf16.msra.mxu0 0
        %5535 = vmatprep.subr.bf16.mxu0 0
        %5536 = vmatpush1.bf16.msra.mxu0 0
        %5537 = vmatprep.subr.bf16.mxu0 0
        %5538 = vmatpush1.bf16.msra.mxu0 0
        %5539 = vmatprep.subr.bf16.mxu0 0
        %5540 = vmatpush1.bf16.msra.mxu0 0
        %5541 = vmatprep.subr.bf16.mxu0 0
        %5542 = vmatpush1.bf16.msra.mxu0 0
        %5543 = vmatprep.subr.bf16.mxu0 0
        %5544 = vmatpush1.bf16.msra.mxu0 0
        %5545 = vmatprep.subr.bf16.mxu0 0
        %5546 = vmatpush1.bf16.msra.mxu0 0
        %5547 = vmatprep.subr.bf16.mxu0 0
        %5548 = vmatpush1.bf16.msra.mxu0 0
        %5549 = vmatprep.subr.bf16.mxu0 0
        %5550 = vmatpush1.bf16.msra.mxu0 0
        %5551 = vmatprep.subr.bf16.mxu0 0
        %5552 = vmatpush1.bf16.msra.mxu0 0
        %5553 = vmatprep.mubr.bf16.mxu0 0
        %5554 = vmatmul.mubr.bf16.gmra.mrb[0].mxu0 %v5519
        %v5555 = vpop.f32.mrb[0].mxu0
        %v5556 = vadd.f32 0.0, %v5555
        %v5557 = vpop.f32.mrb[0].mxu0
        %v5558 = vadd.f32 0.0, %v5557
        %v5559 = vpop.f32.mrb[0].mxu0
        %v5560 = vadd.f32 0.0, %v5559
        %v5561 = vpop.f32.mrb[0].mxu0
        %v5562 = vadd.f32 0.0, %v5561
        %5563 = vdwg.mxu0
        %v5564 = vadd.f32 %v5402, %v5556
        %v5565 = vadd.f32 %v5403, %v5558
        %v5566 = vadd.f32 %v5404, %v5560
        %v5567 = vadd.f32 %v5405, %v5562
        %v5568 = vmax.f32 %v5564, 0.0
        %v5569 = vmax.f32 %v5565, 0.0
        %v5570 = vmax.f32 %v5566, 0.0
        %v5571 = vmax.f32 %v5567, 0.0
        %5572 = vst [vmem:[#allocation2 + $0x8] sm:$0xff] %v5568
        %5573 = vst [vmem:[#allocation2 + $0x10] sm:$0xff] %v5569
        %5574 = vst [vmem:[#allocation2 + $0x28] sm:$0xff] %v5570
        %5575 = vst [vmem:[#allocation2 + $0x30] sm:$0xff] %v5571
        %v5576 = vld [vmem:[#allocation3] sm:$0x1]
        %5578 = vset.pattern.permute.xlu0 0
        %5579 = vperm.xlu0 %5578, %v5576
        %v5580 = vpop.permute.xlu0 %5579
        %v5582 = vlaneseq
        %v5583 = vshrl.u32 %v5582, 7
        %v5584 = vsub.s32 0, %v5583
        %v5585 = vrot.slane %v5580, %v5584
        %v5586 = vld [vmem:[#allocation2 + $0x8] sm:$0xff]
        %v5587 = vld [vmem:[#allocation2 + $0x10] sm:$0xff]
        %v5588 = vld [vmem:[#allocation2 + $0x28] sm:$0xff]
        %v5589 = vld [vmem:[#allocation2 + $0x30] sm:$0xff]
        %v5590 = vld [vmem:[%s12] sm:$0x1]
        %v5591 = vpack.c.bf16 %v5588, %v5586
        %v5592 = vpack.c.bf16 %v5589, %v5587
        %v5594 = vsel %vm1575, %v5590, 0
        %5596 = vmatprep.subr.bf16.mxu0 %v5592
        %5597 = vmatpush1.bf16.msra.mxu0 %v5591
        %5598 = vmatprep.subr.bf16.mxu0 0
        %5599 = vmatpush1.bf16.msra.mxu0 0
        %5600 = vmatprep.subr.bf16.mxu0 0
        %5601 = vmatpush1.bf16.msra.mxu0 0
        %5602 = vmatprep.subr.bf16.mxu0 0
        %5603 = vmatpush1.bf16.msra.mxu0 0
        %5604 = vmatprep.subr.bf16.mxu0 0
        %5605 = vmatpush1.bf16.msra.mxu0 0
        %5606 = vmatprep.subr.bf16.mxu0 0
        %5607 = vmatpush1.bf16.msra.mxu0 0
        %5608 = vmatprep.subr.bf16.mxu0 0
        %5609 = vmatpush1.bf16.msra.mxu0 0
        %5610 = vmatprep.subr.bf16.mxu0 0
        %5611 = vmatpush1.bf16.msra.mxu0 0
        %5612 = vmatprep.subr.bf16.mxu0 0
        %5613 = vmatpush1.bf16.msra.mxu0 0
        %5614 = vmatprep.subr.bf16.mxu0 0
        %5615 = vmatpush1.bf16.msra.mxu0 0
        %5616 = vmatprep.subr.bf16.mxu0 0
        %5617 = vmatpush1.bf16.msra.mxu0 0
        %5618 = vmatprep.subr.bf16.mxu0 0
        %5619 = vmatpush1.bf16.msra.mxu0 0
        %5620 = vmatprep.subr.bf16.mxu0 0
        %5621 = vmatpush1.bf16.msra.mxu0 0
        %5622 = vmatprep.subr.bf16.mxu0 0
        %5623 = vmatpush1.bf16.msra.mxu0 0
        %5624 = vmatprep.subr.bf16.mxu0 0
        %5625 = vmatpush1.bf16.msra.mxu0 0
        %5626 = vmatprep.subr.bf16.mxu0 0
        %5627 = vmatpush1.bf16.msra.mxu0 0
        %5628 = vmatprep.mubr.bf16.mxu0 0
        %5629 = vmatmul.mubr.bf16.gmra.mrb[0].mxu0 %v5594
        %v5630 = vpop.f32.mrb[0].mxu0
        %v5631 = vadd.f32 0.0, %v5630
        %v5632 = vpop.f32.mrb[0].mxu0
        %v5633 = vadd.f32 0.0, %v5632
        %v5634 = vpop.f32.mrb[0].mxu0
        %v5635 = vpop.f32.mrb[0].mxu0
        %5636 = vdwg.mxu0
        %v5637 = vadd.f32 %v5585, %v5631
        %v5638 = vadd.f32 %v5585, %v5633
        %v5639 = vxor.u32 %v5637, 2147483648
        %v5640 = vxor.u32 %v5638, 2147483648
        %v5641 = vmul.f32 %v5639, 1.442695
        %v5642 = vpow.pop %v5641
        %v5643 = vmul.f32 %v5640, 1.442695
        %v5644 = vpow.pop %v5643
        %v5645 = vadd.f32 %v5642, 1.0
        %v5646 = vadd.f32 %v5644, 1.0
        %v5647 = vrcp.pop %v5645
        %v5648 = vmul.f32 1.0, %v5647
        %v5649 = vrcp.pop %v5646
        %v5650 = vmul.f32 1.0, %v5649
        %v5651 = vmul.f32 %v5648, 0.01
        %v5652 = vmul.f32 %v5650, 0.01
        %v5655 = vcombine.low %v5651, %v5652
        %v5657 = vunpack.c.l.s4 1966171168
        %v5658 = vunpack.c.0.s8 %v5657
        %v5659 = vlaneseq
        %v5660 = vshrl.u32 %v5659, 7
        %v5661 = vsub.s32 %v5658, %v5660
        %v5662 = vrot.slane %v5655, %v5661
        %v5664 = vunpack.c.l.s4 1966171168
        %v5665 = vunpack.c.0.s8 %v5664
        %v5666 = vlaneseq
        %v5667 = vshrl.u32 %v5666, 7
        %v5668 = vsub.s32 %v5665, %v5667
        %v5669 = vrot.slane %v5662, %v5668
        %v5671 = vlaneseq
        %vm5672 = vcmp.ge.s32.totalorder %v5671, 0
        %vm5673 = vcmp.lt.s32.totalorder %v5671, 256
        %vm5674 = vmand %vm5672, %vm5673
        %5675 = vst.msk [vmem:[%s488] sm:$0x3] %vm5674, %v5669
        %s5676 = sand.u32 %s347, 1
        %s5677 = scalar_lea.sflag [#allocation5], %s5676
        %s5678 = sand.u32 %s347, 1
        %s5679 = smul.addr %s5678, 2
        %s5680 = scalar_lea.vmem [#allocation4], %s5679
        // Predicated region
        $region77: #{tpu_custom_call.1} parent=75 // pred_check
          %p5681 = pneg %p357
        $region78: #{tpu_custom_call.1} parent=75 // pred_check_branch
          %5683 = sbr.rel (%p5681) target = $region80
        $region79: #{tpu_custom_call.1} parent=75 // pred_region
          %s5685 = ssub.s32 32, 32
          %5686 = vsyncadd %s5677, %s5685
          %s5687 = smul.addr %s30, 2
          %s5688 = smul.addr %s5687, 16
          %s5689 = scalar_lea.hbm %s14, %s5688
          %s5691 = sshll.u32 %s5680, 4
          %s5692 = int_to_ptr.vmem [resolvable:$true] %s5691
          %5694 = dma.vmem_to_hbm [thread:$0]  %s5692, 32, %s5689, %s5677
        $region80: #{tpu_custom_call.1} parent=75 // pred_fallthru
          _
      $region76: #{tpu_custom_call.1} parent=5 // pred_fallthru
        _
      %p5695 = scmp.le.s32.totalorder 2, %s25
      // Predicated region
      $region81: #{tpu_custom_call.1} parent=5 // pred_check
        %p5696 = pneg %p5695
      $region82: #{tpu_custom_call.1} parent=5 // pred_check_branch
        %5698 = sbr.rel (%p5696) target = $region84
      $region83: #{tpu_custom_call.1} parent=5 // pred_region
        %s5699 = ssub.s32 %s25, 2
        // Predicated region
        $region85: #{tpu_custom_call.1} parent=83 // pred_check
          %p5700 = pneg %p363
        $region86: #{tpu_custom_call.1} parent=83 // pred_check_branch
          %5702 = sbr.rel (%p5700) target = $region88
        $region87: #{tpu_custom_call.1} parent=83 // pred_region
          %s5703 = sand.u32 %s348, 1
          %s5704 = scalar_lea.sflag [#allocation5], %s5703
          %s5705 = sand.u32 %s348, 1
          %s5706 = smul.addr %s5705, 2
          %s5707 = scalar_lea.vmem [#allocation4], %s5706
          %5708 = dma.done %s5704, 32
        $region88: #{tpu_custom_call.1} parent=83 // pred_fallthru
          _
      $region84: #{tpu_custom_call.1} parent=5 // pred_fallthru
        _
    $region6: #{tpu_custom_call.1} parent=1 // loop_footer
      %s29 = sadd.s32 1, %s25
    $region7: #{tpu_custom_call.1} parent=1 // loop_footer_branch
      %24 = sbr.rel target = $region3
    $region8: #{tpu_custom_call.1} parent=1 // loop_exit
      _
    %5709 = vsyncpa [#allocation5], 1
    %s5710 = scalar_lea.sflag [#allocation5], 1
    %5711 = vsyncpa %s5710, 1

</llo_original>
